<compile_context>
chip_gen: v6e
topology: v6e:2x2x1
jax: 0.10.0
libtpu: 0.0.40
codegen_flags: <defaults>
</compile_context>

<pallas_src>
import math

import jax
import jax.numpy as jnp
from jax.experimental import pallas as pl
from jax.experimental.pallas import tpu as pltpu

# ---- hyperparameters fixed by the reference module ----
d_model = 512
d_k = d_v = 64
n_heads = 8
LN_EPS = 1e-5


def _layer_norm(y):
    mean = jnp.mean(y, axis=-1, keepdims=True)
    var = jnp.mean((y - mean) ** 2, axis=-1, keepdims=True)
    return (y - mean) * jax.lax.rsqrt(var + LN_EPS)


# ---------------------------------------------------------------------------
# One fused kernel per batch element: self-attention block + cross-attention
# block, each followed by residual + LayerNorm.  Everything stays in VMEM.
# ---------------------------------------------------------------------------
def decoder_layer_kernel(dec_ref, enc_ref, smask_ref, cmask_ref,
                         wq1_ref, wk1_ref, wv1_ref, wo1_ref,
                         wq2_ref, wk2_ref, wv2_ref, wo2_ref,
                         out_ref, sattn_ref, cattn_ref,
                         ctx_scratch):
    scale = 1.0 / math.sqrt(d_k)

    def mha(xq_f32, xkv_f32, bias, wq_ref, wk_ref, wv_ref, wo_ref, attn_ref):
        s_kv = xkv_f32.shape[0]
        xq = xq_f32.astype(jnp.bfloat16)
        xkv = xkv_f32.astype(jnp.bfloat16)

        # Fused full-width projections: one 512-wide matmul each (bf16 -> f32 acc).
        q = jnp.dot(xq, wq_ref[...], preferred_element_type=jnp.float32)    # (Sq, H*dk)
        k = jnp.dot(xkv, wk_ref[...], preferred_element_type=jnp.float32)   # (Skv, H*dk)
        v = jnp.dot(xkv, wv_ref[...], preferred_element_type=jnp.float32)   # (Skv, H*dv)
        qb = q.astype(jnp.bfloat16)
        kb = k.astype(jnp.bfloat16)
        vb = v.astype(jnp.bfloat16)

        for h in range(n_heads):                                   # static unroll
            qh = qb[:, h * d_k:(h + 1) * d_k]
            kh = kb[:, h * d_k:(h + 1) * d_k]
            vh = vb[:, h * d_v:(h + 1) * d_v]

            # q @ k^T without an explicit transpose (contract last dims on MXU).
            s = jax.lax.dot_general(qh, kh, (((1,), (1,)), ((), ())),
                                    preferred_element_type=jnp.float32)     # (Sq, Skv)
            s = s * scale + bias          # additive mask bias (head-invariant)
            # numerically-stable softmax (matches masked_fill_ + nn.Softmax)
            s = s - jnp.max(s, axis=-1, keepdims=True)
            p = jnp.exp(s)
            a = p * pl.reciprocal(jnp.sum(p, axis=-1, keepdims=True), approx=False)

            # lane-dense flattened attention output: head h -> cols [h*Skv, (h+1)*Skv)
            attn_ref[0, :, h * s_kv:(h + 1) * s_kv] = a.astype(attn_ref.dtype)

            # per-head context, assembled into a (Sq, H*dv) VMEM scratch
            ctx_scratch[:, h * d_v:(h + 1) * d_v] = jnp.dot(
                a.astype(jnp.bfloat16), vh, preferred_element_type=jnp.float32)

        # single K=512 output projection — MXU does the head accumulation
        proj = jnp.dot(ctx_scratch[...].astype(jnp.bfloat16), wo_ref[...],
                       preferred_element_type=jnp.float32)                  # (Sq, D)
        return _layer_norm(proj + xq_f32)

    dec = dec_ref[0].astype(jnp.float32)                 # (S_dec, D)
    enc = enc_ref[0].astype(jnp.float32)                 # (S_enc, D)
    self_bias = smask_ref[0] * jnp.float32(-1e9)         # (S_dec, S_dec)
    cross_bias = cmask_ref[0] * jnp.float32(-1e9)        # (S_dec, S_enc)

    out1 = mha(dec, dec, self_bias, wq1_ref, wk1_ref, wv1_ref, wo1_ref, sattn_ref)
    out2 = mha(out1, enc, cross_bias, wq2_ref, wk2_ref, wv2_ref, wo2_ref, cattn_ref)
    out_ref[0] = out2.astype(out_ref.dtype)


# ---------------------------------------------------------------------------
# Python wrapper
# ---------------------------------------------------------------------------
def decoder_layer(dec_inputs, enc_outputs, dec_self_attn_mask, dec_enc_attn_mask, params):
    """dec_inputs: [B, S_dec, d_model] f32, enc_outputs: [B, S_enc, d_model] f32,
    masks: bool, True == masked."""
    B, S_dec, D = dec_inputs.shape
    _, S_enc, _ = enc_outputs.shape
    assert D == d_model

    smask_f = dec_self_attn_mask.astype(jnp.float32)
    cmask_f = dec_enc_attn_mask.astype(jnp.float32)

    w_spec = pl.BlockSpec((d_model, d_model), lambda b: (0, 0))

    out, sattn_flat, cattn_flat = pl.pallas_call(
        decoder_layer_kernel,
        out_shape=(
            jax.ShapeDtypeStruct((B, S_dec, d_model), jnp.float32),
            jax.ShapeDtypeStruct((B, S_dec, n_heads * S_dec), jnp.float32),
            jax.ShapeDtypeStruct((B, S_dec, n_heads * S_enc), jnp.float32),
        ),
        grid=(B,),
        in_specs=[
            pl.BlockSpec((1, S_dec, d_model), lambda b: (b, 0, 0)),
            pl.BlockSpec((1, S_enc, d_model), lambda b: (b, 0, 0)),
            pl.BlockSpec((1, S_dec, S_dec), lambda b: (b, 0, 0)),
            pl.BlockSpec((1, S_dec, S_enc), lambda b: (b, 0, 0)),
            w_spec, w_spec, w_spec, w_spec,          # self-attn  W_Q W_K W_V W_O (bf16)
            w_spec, w_spec, w_spec, w_spec,          # cross-attn W_Q W_K W_V W_O (bf16)
        ],
        out_specs=(
            pl.BlockSpec((1, S_dec, d_model), lambda b: (b, 0, 0)),
            pl.BlockSpec((1, S_dec, n_heads * S_dec), lambda b: (b, 0, 0)),
            pl.BlockSpec((1, S_dec, n_heads * S_enc), lambda b: (b, 0, 0)),
        ),
        scratch_shapes=[pltpu.VMEM((S_dec, n_heads * d_v), jnp.float32)],
        compiler_params=pltpu.CompilerParams(
            dimension_semantics=("parallel",),        # shards batch over v7x's 2 TCs
            vmem_limit_bytes=48 << 20,                # <= v7x's 64 MiB physical VMEM
        ),
    )(dec_inputs, enc_outputs, smask_f, cmask_f,
      params["self"]["W_Q"], params["self"]["W_K"],
      params["self"]["W_V"], params["self"]["W_O"],
      params["cross"]["W_Q"], params["cross"]["W_K"],
      params["cross"]["W_V"], params["cross"]["W_O"])

    dec_self_attn = sattn_flat.reshape(B, S_dec, n_heads, S_dec).transpose(0, 2, 1, 3)
    dec_enc_attn = cattn_flat.reshape(B, S_dec, n_heads, S_enc).transpose(0, 2, 1, 3)
    return out, dec_self_attn, dec_enc_attn


# ---------------------------------------------------------------------------
# Pure-JAX reference (same math: bf16 matmul inputs, f32 accumulation).
# ---------------------------------------------------------------------------
def _mha_ref(xq, xkv, mask, wq, wk, wv, wo):
    B, Sq, _ = xq.shape
    Skv = xkv.shape[1]
    xqb = xq.astype(jnp.bfloat16)
    xkb = xkv.astype(jnp.bfloat16)
    q = jnp.dot(xqb, wq, preferred_element_type=jnp.float32)
    k = jnp.dot(xkb, wk, preferred_element_type=jnp.float32)
    v = jnp.dot(xkb, wv, preferred_element_type=jnp.float32)
    q = q.reshape(B, Sq, n_heads, d_k).transpose(0, 2, 1, 3)
    k = k.reshape(B, Skv, n_heads, d_k).transpose(0, 2, 1, 3)
    v = v.reshape(B, Skv, n_heads, d_v).transpose(0, 2, 1, 3)
    scores = jnp.einsum("bhqd,bhkd->bhqk", q.astype(jnp.bfloat16), k.astype(jnp.bfloat16),
                        preferred_element_type=jnp.float32) / math.sqrt(d_k)
    scores = jnp.where(mask[:, None, :, :], -1e9, scores)         # masked_fill_ semantics
    scores = scores - jnp.max(scores, axis=-1, keepdims=True)
    p = jnp.exp(scores)
    attn = p / jnp.sum(p, axis=-1, keepdims=True)
    ctx = jnp.einsum("bhqk,bhkd->bhqd", attn.astype(jnp.bfloat16), v.astype(jnp.bfloat16),
                     preferred_element_type=jnp.float32)
    ctx = ctx.transpose(0, 2, 1, 3).reshape(B, Sq, n_heads * d_v)
    out = jnp.dot(ctx.astype(jnp.bfloat16), wo, preferred_element_type=jnp.float32) + xq
    return _layer_norm(out), attn


def decoder_layer_ref(dec_inputs, enc_outputs, smask, cmask, params):
    out1, self_attn = _mha_ref(dec_inputs, dec_inputs, smask,
                               params["self"]["W_Q"], params["self"]["W_K"],
                               params["self"]["W_V"], params["self"]["W_O"])
    out2, cross_attn = _mha_ref(out1, enc_outputs, cmask,
                                params["cross"]["W_Q"], params["cross"]["W_K"],
                                params["cross"]["W_V"], params["cross"]["W_O"])
    return out2, self_attn, cross_attn


if __name__ == "__main__":
    B, S_dec, S_enc = 2, 8, 16   # small batch / sequences; feature dims fixed by module

    key = jax.random.PRNGKey(0)
    keys = jax.random.split(key, 10)

    def _w(k):
        # weights stored in bf16 (halves HBM weight traffic; f32 accumulation in-kernel)
        return (jax.random.normal(k, (d_model, d_model), jnp.float32) * 0.02).astype(jnp.bfloat16)

    params = {
        "self":  {"W_Q": _w(keys[0]), "W_K": _w(keys[1]), "W_V": _w(keys[2]), "W_O": _w(keys[3])},
        "cross": {"W_Q": _w(keys[4]), "W_K": _w(keys[5]), "W_V": _w(keys[6]), "W_O": _w(keys[7])},
    }
    # The reference DecoderLayer also builds `pos_ffn`, but forward() never uses it,
    # so no FFN weights are needed here.

    dec_inputs = jax.random.normal(keys[8], (B, S_dec, d_model), jnp.float32)
    enc_outputs = jax.random.normal(keys[9], (B, S_enc, d_model), jnp.float32)

    # decoder self-attention mask: causal OR padding of last 2 decoder key positions
    causal = jnp.triu(jnp.ones((S_dec, S_dec), jnp.bool_), k=1)
    dec_pad = jnp.arange(S_dec) >= (S_dec - 2)
    dec_self_attn_mask = jnp.broadcast_to(causal | dec_pad[None, :], (B, S_dec, S_dec))
    # decoder-encoder mask: last 3 encoder key positions padded
    enc_pad = jnp.arange(S_enc) >= (S_enc - 3)
    dec_enc_attn_mask = jnp.broadcast_to(enc_pad[None, None, :], (B, S_dec, S_enc))

    dec_out, self_attn, cross_attn = jax.jit(decoder_layer)(
        dec_inputs, enc_outputs, dec_self_attn_mask, dec_enc_attn_mask, params)
    jax.block_until_ready((dec_out, self_attn, cross_attn))

    ref_out, ref_sattn, ref_cattn = decoder_layer_ref(
        dec_inputs, enc_outputs, dec_self_attn_mask, dec_enc_attn_mask, params)

    assert dec_out.shape == (B, S_dec, d_model)
    assert self_attn.shape == (B, n_heads, S_dec, S_dec)
    assert cross_attn.shape == (B, n_heads, S_dec, S_enc)
    assert jnp.allclose(dec_out, ref_out, atol=5e-3, rtol=5e-3)
    assert jnp.allclose(self_attn, ref_sattn, atol=5e-4, rtol=1e-3)
    assert jnp.allclose(cross_attn, ref_cattn, atol=5e-4, rtol=1e-3)

    print("KERNEL_OK")
</pallas_src>

<mosaic_0001>
module attributes {stable_mosaic.version = 11 : i64} {
  func.func @decoder_layer_kernel(%arg0: i32, %arg1: memref<1x8x512xf32, #tpu.memory_space<vmem>>, %arg2: memref<1x16x512xf32, #tpu.memory_space<vmem>>, %arg3: memref<1x8x8xf32, #tpu.memory_space<vmem>>, %arg4: memref<1x8x16xf32, #tpu.memory_space<vmem>>, %arg5: memref<512x512xbf16, #tpu.memory_space<vmem>>, %arg6: memref<512x512xbf16, #tpu.memory_space<vmem>>, %arg7: memref<512x512xbf16, #tpu.memory_space<vmem>>, %arg8: memref<512x512xbf16, #tpu.memory_space<vmem>>, %arg9: memref<512x512xbf16, #tpu.memory_space<vmem>>, %arg10: memref<512x512xbf16, #tpu.memory_space<vmem>>, %arg11: memref<512x512xbf16, #tpu.memory_space<vmem>>, %arg12: memref<512x512xbf16, #tpu.memory_space<vmem>>, %arg13: memref<1x8x512xf32, #tpu.memory_space<vmem>>, %arg14: memref<1x8x64xf32, #tpu.memory_space<vmem>>, %arg15: memref<1x8x128xf32, #tpu.memory_space<vmem>>, %arg16: memref<8x512xf32, #tpu.memory_space<vmem>>) attributes {dimension_semantics = [#tpu.dimension_semantics<parallel>], iteration_bounds = array<i64: 2>, scalar_prefetch = 0 : i64, scratch_operands = 1 : i64, tpu.core_type = #tpu.core_type<tc>, window_params = [{transform_indices = @transform_0, window_bounds = array<i64: 1, 8, 512>}, {transform_indices = @transform_1, window_bounds = array<i64: 1, 16, 512>}, {transform_indices = @transform_2, window_bounds = array<i64: 1, 8, 8>}, {transform_indices = @transform_3, window_bounds = array<i64: 1, 8, 16>}, {pipeline_mode = #tpu.pipeline_mode<synchronous>, transform_indices = @transform_4, window_bounds = array<i64: 512, 512>}, {pipeline_mode = #tpu.pipeline_mode<synchronous>, transform_indices = @transform_5, window_bounds = array<i64: 512, 512>}, {pipeline_mode = #tpu.pipeline_mode<synchronous>, transform_indices = @transform_6, window_bounds = array<i64: 512, 512>}, {pipeline_mode = #tpu.pipeline_mode<synchronous>, transform_indices = @transform_7, window_bounds = array<i64: 512, 512>}, {pipeline_mode = #tpu.pipeline_mode<synchronous>, transform_indices = @transform_8, window_bounds = array<i64: 512, 512>}, {pipeline_mode = #tpu.pipeline_mode<synchronous>, transform_indices = @transform_9, window_bounds = array<i64: 512, 512>}, {pipeline_mode = #tpu.pipeline_mode<synchronous>, transform_indices = @transform_10, window_bounds = array<i64: 512, 512>}, {pipeline_mode = #tpu.pipeline_mode<synchronous>, transform_indices = @transform_11, window_bounds = array<i64: 512, 512>}, {transform_indices = @transform_12, window_bounds = array<i64: 1, 8, 512>}, {transform_indices = @transform_13, window_bounds = array<i64: 1, 8, 64>}, {transform_indices = @transform_14, window_bounds = array<i64: 1, 8, 128>}]} {
    %c0 = arith.constant 0 : index
    %c0_0 = arith.constant 0 : index
    %c0_1 = arith.constant 0 : index
    %0 = vector.load %arg1[%c0, %c0_0, %c0_1] : memref<1x8x512xf32, #tpu.memory_space<vmem>>, vector<1x8x512xf32>
    %1 = vector.shape_cast %0 : vector<1x8x512xf32> to vector<8x512xf32>
    %c0_2 = arith.constant 0 : index
    %c0_3 = arith.constant 0 : index
    %c0_4 = arith.constant 0 : index
    %2 = vector.load %arg2[%c0_2, %c0_3, %c0_4] : memref<1x16x512xf32, #tpu.memory_space<vmem>>, vector<1x16x512xf32>
    %3 = vector.shape_cast %2 : vector<1x16x512xf32> to vector<16x512xf32>
    %c0_5 = arith.constant 0 : index
    %c0_6 = arith.constant 0 : index
    %c0_7 = arith.constant 0 : index
    %4 = vector.load %arg3[%c0_5, %c0_6, %c0_7] : memref<1x8x8xf32, #tpu.memory_space<vmem>>, vector<1x8x8xf32>
    %5 = vector.shape_cast %4 : vector<1x8x8xf32> to vector<8x8xf32>
    %cst = arith.constant -1.000000e+09 : f32
    %6 = vector.broadcast %cst : f32 to vector<8x8xf32>
    %7 = arith.mulf %5, %6 : vector<8x8xf32>
    %c0_8 = arith.constant 0 : index
    %c0_9 = arith.constant 0 : index
    %c0_10 = arith.constant 0 : index
    %8 = vector.load %arg4[%c0_8, %c0_9, %c0_10] : memref<1x8x16xf32, #tpu.memory_space<vmem>>, vector<1x8x16xf32>
    %9 = vector.shape_cast %8 : vector<1x8x16xf32> to vector<8x16xf32>
    %cst_11 = arith.constant -1.000000e+09 : f32
    %10 = vector.broadcast %cst_11 : f32 to vector<8x16xf32>
    %11 = arith.mulf %9, %10 : vector<8x16xf32>
    %12 = arith.truncf %1 : vector<8x512xf32> to vector<8x512xbf16>
    %13 = arith.truncf %1 : vector<8x512xf32> to vector<8x512xbf16>
    %c0_12 = arith.constant 0 : index
    %c0_13 = arith.constant 0 : index
    %14 = vector.load %arg5[%c0_12, %c0_13] : memref<512x512xbf16, #tpu.memory_space<vmem>>, vector<512x512xbf16>
    %cst_14 = arith.constant dense<0.000000e+00> : vector<8x512xf32>
    %15 = tpu.matmul %12, %14, %cst_14 {dimension_numbers = #tpu.dot_dimension_numbers<[1], [0], [0], [1], [0, 0, 1, 1], [], []>} : vector<8x512xbf16>, vector<512x512xbf16>, vector<8x512xf32> -> vector<8x512xf32>
    %c0_15 = arith.constant 0 : index
    %c0_16 = arith.constant 0 : index
    %16 = vector.load %arg6[%c0_15, %c0_16] : memref<512x512xbf16, #tpu.memory_space<vmem>>, vector<512x512xbf16>
    %cst_17 = arith.constant dense<0.000000e+00> : vector<8x512xf32>
    %17 = tpu.matmul %13, %16, %cst_17 {dimension_numbers = #tpu.dot_dimension_numbers<[1], [0], [0], [1], [0, 0, 1, 1], [], []>} : vector<8x512xbf16>, vector<512x512xbf16>, vector<8x512xf32> -> vector<8x512xf32>
    %c0_18 = arith.constant 0 : index
    %c0_19 = arith.constant 0 : index
    %18 = vector.load %arg7[%c0_18, %c0_19] : memref<512x512xbf16, #tpu.memory_space<vmem>>, vector<512x512xbf16>
    %cst_20 = arith.constant dense<0.000000e+00> : vector<8x512xf32>
    %19 = tpu.matmul %13, %18, %cst_20 {dimension_numbers = #tpu.dot_dimension_numbers<[1], [0], [0], [1], [0, 0, 1, 1], [], []>} : vector<8x512xbf16>, vector<512x512xbf16>, vector<8x512xf32> -> vector<8x512xf32>
    %20 = arith.truncf %15 : vector<8x512xf32> to vector<8x512xbf16>
    %21 = arith.truncf %17 : vector<8x512xf32> to vector<8x512xbf16>
    %22 = arith.truncf %19 : vector<8x512xf32> to vector<8x512xbf16>
    %23 = vector.extract_strided_slice %20 {offsets = [0, 0], sizes = [8, 64], strides = [1, 1]} : vector<8x512xbf16> to vector<8x64xbf16>
    %24 = vector.extract_strided_slice %21 {offsets = [0, 0], sizes = [8, 64], strides = [1, 1]} : vector<8x512xbf16> to vector<8x64xbf16>
    %25 = vector.extract_strided_slice %22 {offsets = [0, 0], sizes = [8, 64], strides = [1, 1]} : vector<8x512xbf16> to vector<8x64xbf16>
    %cst_21 = arith.constant dense<0.000000e+00> : vector<8x8xf32>
    %26 = tpu.matmul %23, %24, %cst_21 {dimension_numbers = #tpu.dot_dimension_numbers<[1], [1], [0], [0], [0, 0, 1, 0], [], []>} : vector<8x64xbf16>, vector<8x64xbf16>, vector<8x8xf32> -> vector<8x8xf32>
    %cst_22 = arith.constant 1.250000e-01 : f32
    %27 = vector.broadcast %cst_22 : f32 to vector<8x8xf32>
    %28 = arith.mulf %26, %27 : vector<8x8xf32>
    %29 = arith.addf %28, %7 : vector<8x8xf32>
    %cst_23 = arith.constant dense<0xFF800000> : vector<8xf32>
    %30 = vector.multi_reduction <maximumf>, %29, %cst_23 [1] : vector<8x8xf32> to vector<8xf32>
    %31 = vector.shape_cast %30 : vector<8xf32> to vector<8x1xf32>
    %32 = vector.broadcast %31 : vector<8x1xf32> to vector<8x8xf32>
    %33 = arith.subf %29, %32 : vector<8x8xf32>
    %34 = math.exp %33 : vector<8x8xf32>
    %cst_24 = arith.constant dense<0.000000e+00> : vector<8xf32>
    %35 = vector.multi_reduction <add>, %34, %cst_24 [1] : vector<8x8xf32> to vector<8xf32>
    %36 = vector.shape_cast %35 : vector<8xf32> to vector<8x1xf32>
    %37 = tpu.reciprocal %36 : vector<8x1xf32> -> vector<8x1xf32>
    %38 = vector.broadcast %37 : vector<8x1xf32> to vector<8x8xf32>
    %39 = arith.mulf %34, %38 : vector<8x8xf32>
    %c0_25 = arith.constant 0 : index
    %c0_26 = arith.constant 0 : index
    %c0_27 = arith.constant 0 : index
    %40 = vector.load %arg14[%c0_25, %c0_26, %c0_27] : memref<1x8x64xf32, #tpu.memory_space<vmem>>, vector<1x8x8xf32>
    %41 = vector.shape_cast %40 : vector<1x8x8xf32> to vector<8x8xf32>
    %42 = vector.shape_cast %39 : vector<8x8xf32> to vector<1x8x8xf32>
    tpu.vector_store %arg14[%c0_25, %c0_26, %c0_27], %42 {strides = array<i32>} : memref<1x8x64xf32, #tpu.memory_space<vmem>>, vector<1x8x8xf32>,
    %43 = arith.truncf %39 : vector<8x8xf32> to vector<8x8xbf16>
    %cst_28 = arith.constant dense<0.000000e+00> : vector<8x64xf32>
    %44 = tpu.matmul %43, %25, %cst_28 {dimension_numbers = #tpu.dot_dimension_numbers<[1], [0], [0], [1], [0, 0, 1, 1], [], []>} : vector<8x8xbf16>, vector<8x64xbf16>, vector<8x64xf32> -> vector<8x64xf32>
    %c0_29 = arith.constant 0 : index
    %c0_30 = arith.constant 0 : index
    %45 = vector.load %arg16[%c0_29, %c0_30] : memref<8x512xf32, #tpu.memory_space<vmem>>, vector<8x64xf32>
    tpu.vector_store %arg16[%c0_29, %c0_30], %44 {strides = array<i32>} : memref<8x512xf32, #tpu.memory_space<vmem>>, vector<8x64xf32>,
    %46 = vector.extract_strided_slice %20 {offsets = [0, 64], sizes = [8, 64], strides = [1, 1]} : vector<8x512xbf16> to vector<8x64xbf16>
    %47 = vector.extract_strided_slice %21 {offsets = [0, 64], sizes = [8, 64], strides = [1, 1]} : vector<8x512xbf16> to vector<8x64xbf16>
    %48 = vector.extract_strided_slice %22 {offsets = [0, 64], sizes = [8, 64], strides = [1, 1]} : vector<8x512xbf16> to vector<8x64xbf16>
    %cst_31 = arith.constant dense<0.000000e+00> : vector<8x8xf32>
    %49 = tpu.matmul %46, %47, %cst_31 {dimension_numbers = #tpu.dot_dimension_numbers<[1], [1], [0], [0], [0, 0, 1, 0], [], []>} : vector<8x64xbf16>, vector<8x64xbf16>, vector<8x8xf32> -> vector<8x8xf32>
    %cst_32 = arith.constant 1.250000e-01 : f32
    %50 = vector.broadcast %cst_32 : f32 to vector<8x8xf32>
    %51 = arith.mulf %49, %50 : vector<8x8xf32>
    %52 = arith.addf %51, %7 : vector<8x8xf32>
    %cst_33 = arith.constant dense<0xFF800000> : vector<8xf32>
    %53 = vector.multi_reduction <maximumf>, %52, %cst_33 [1] : vector<8x8xf32> to vector<8xf32>
    %54 = vector.shape_cast %53 : vector<8xf32> to vector<8x1xf32>
    %55 = vector.broadcast %54 : vector<8x1xf32> to vector<8x8xf32>
    %56 = arith.subf %52, %55 : vector<8x8xf32>
    %57 = math.exp %56 : vector<8x8xf32>
    %cst_34 = arith.constant dense<0.000000e+00> : vector<8xf32>
    %58 = vector.multi_reduction <add>, %57, %cst_34 [1] : vector<8x8xf32> to vector<8xf32>
    %59 = vector.shape_cast %58 : vector<8xf32> to vector<8x1xf32>
    %60 = tpu.reciprocal %59 : vector<8x1xf32> -> vector<8x1xf32>
    %61 = vector.broadcast %60 : vector<8x1xf32> to vector<8x8xf32>
    %62 = arith.mulf %57, %61 : vector<8x8xf32>
    %c0_35 = arith.constant 0 : index
    %c0_36 = arith.constant 0 : index
    %c8 = arith.constant 8 : index
    %63 = vector.load %arg14[%c0_35, %c0_36, %c8] : memref<1x8x64xf32, #tpu.memory_space<vmem>>, vector<1x8x8xf32>
    %64 = vector.shape_cast %63 : vector<1x8x8xf32> to vector<8x8xf32>
    %65 = vector.shape_cast %62 : vector<8x8xf32> to vector<1x8x8xf32>
    tpu.vector_store %arg14[%c0_35, %c0_36, %c8], %65 {strides = array<i32>} : memref<1x8x64xf32, #tpu.memory_space<vmem>>, vector<1x8x8xf32>,
    %66 = arith.truncf %62 : vector<8x8xf32> to vector<8x8xbf16>
    %cst_37 = arith.constant dense<0.000000e+00> : vector<8x64xf32>
    %67 = tpu.matmul %66, %48, %cst_37 {dimension_numbers = #tpu.dot_dimension_numbers<[1], [0], [0], [1], [0, 0, 1, 1], [], []>} : vector<8x8xbf16>, vector<8x64xbf16>, vector<8x64xf32> -> vector<8x64xf32>
    %c0_38 = arith.constant 0 : index
    %c64 = arith.constant 64 : index
    %68 = vector.load %arg16[%c0_38, %c64] : memref<8x512xf32, #tpu.memory_space<vmem>>, vector<8x64xf32>
    tpu.vector_store %arg16[%c0_38, %c64], %67 {strides = array<i32>} : memref<8x512xf32, #tpu.memory_space<vmem>>, vector<8x64xf32>,
    %69 = vector.extract_strided_slice %20 {offsets = [0, 128], sizes = [8, 64], strides = [1, 1]} : vector<8x512xbf16> to vector<8x64xbf16>
    %70 = vector.extract_strided_slice %21 {offsets = [0, 128], sizes = [8, 64], strides = [1, 1]} : vector<8x512xbf16> to vector<8x64xbf16>
    %71 = vector.extract_strided_slice %22 {offsets = [0, 128], sizes = [8, 64], strides = [1, 1]} : vector<8x512xbf16> to vector<8x64xbf16>
    %cst_39 = arith.constant dense<0.000000e+00> : vector<8x8xf32>
    %72 = tpu.matmul %69, %70, %cst_39 {dimension_numbers = #tpu.dot_dimension_numbers<[1], [1], [0], [0], [0, 0, 1, 0], [], []>} : vector<8x64xbf16>, vector<8x64xbf16>, vector<8x8xf32> -> vector<8x8xf32>
    %cst_40 = arith.constant 1.250000e-01 : f32
    %73 = vector.broadcast %cst_40 : f32 to vector<8x8xf32>
    %74 = arith.mulf %72, %73 : vector<8x8xf32>
    %75 = arith.addf %74, %7 : vector<8x8xf32>
    %cst_41 = arith.constant dense<0xFF800000> : vector<8xf32>
    %76 = vector.multi_reduction <maximumf>, %75, %cst_41 [1] : vector<8x8xf32> to vector<8xf32>
    %77 = vector.shape_cast %76 : vector<8xf32> to vector<8x1xf32>
    %78 = vector.broadcast %77 : vector<8x1xf32> to vector<8x8xf32>
    %79 = arith.subf %75, %78 : vector<8x8xf32>
    %80 = math.exp %79 : vector<8x8xf32>
    %cst_42 = arith.constant dense<0.000000e+00> : vector<8xf32>
    %81 = vector.multi_reduction <add>, %80, %cst_42 [1] : vector<8x8xf32> to vector<8xf32>
    %82 = vector.shape_cast %81 : vector<8xf32> to vector<8x1xf32>
    %83 = tpu.reciprocal %82 : vector<8x1xf32> -> vector<8x1xf32>
    %84 = vector.broadcast %83 : vector<8x1xf32> to vector<8x8xf32>
    %85 = arith.mulf %80, %84 : vector<8x8xf32>
    %c0_43 = arith.constant 0 : index
    %c0_44 = arith.constant 0 : index
    %c16 = arith.constant 16 : index
    %86 = vector.load %arg14[%c0_43, %c0_44, %c16] : memref<1x8x64xf32, #tpu.memory_space<vmem>>, vector<1x8x8xf32>
    %87 = vector.shape_cast %86 : vector<1x8x8xf32> to vector<8x8xf32>
    %88 = vector.shape_cast %85 : vector<8x8xf32> to vector<1x8x8xf32>
    tpu.vector_store %arg14[%c0_43, %c0_44, %c16], %88 {strides = array<i32>} : memref<1x8x64xf32, #tpu.memory_space<vmem>>, vector<1x8x8xf32>,
    %89 = arith.truncf %85 : vector<8x8xf32> to vector<8x8xbf16>
    %cst_45 = arith.constant dense<0.000000e+00> : vector<8x64xf32>
    %90 = tpu.matmul %89, %71, %cst_45 {dimension_numbers = #tpu.dot_dimension_numbers<[1], [0], [0], [1], [0, 0, 1, 1], [], []>} : vector<8x8xbf16>, vector<8x64xbf16>, vector<8x64xf32> -> vector<8x64xf32>
    %c0_46 = arith.constant 0 : index
    %c128 = arith.constant 128 : index
    %91 = vector.load %arg16[%c0_46, %c128] : memref<8x512xf32, #tpu.memory_space<vmem>>, vector<8x64xf32>
    tpu.vector_store %arg16[%c0_46, %c128], %90 {strides = array<i32>} : memref<8x512xf32, #tpu.memory_space<vmem>>, vector<8x64xf32>,
    %92 = vector.extract_strided_slice %20 {offsets = [0, 192], sizes = [8, 64], strides = [1, 1]} : vector<8x512xbf16> to vector<8x64xbf16>
    %93 = vector.extract_strided_slice %21 {offsets = [0, 192], sizes = [8, 64], strides = [1, 1]} : vector<8x512xbf16> to vector<8x64xbf16>
    %94 = vector.extract_strided_slice %22 {offsets = [0, 192], sizes = [8, 64], strides = [1, 1]} : vector<8x512xbf16> to vector<8x64xbf16>
    %cst_47 = arith.constant dense<0.000000e+00> : vector<8x8xf32>
    %95 = tpu.matmul %92, %93, %cst_47 {dimension_numbers = #tpu.dot_dimension_numbers<[1], [1], [0], [0], [0, 0, 1, 0], [], []>} : vector<8x64xbf16>, vector<8x64xbf16>, vector<8x8xf32> -> vector<8x8xf32>
    %cst_48 = arith.constant 1.250000e-01 : f32
    %96 = vector.broadcast %cst_48 : f32 to vector<8x8xf32>
    %97 = arith.mulf %95, %96 : vector<8x8xf32>
    %98 = arith.addf %97, %7 : vector<8x8xf32>
    %cst_49 = arith.constant dense<0xFF800000> : vector<8xf32>
    %99 = vector.multi_reduction <maximumf>, %98, %cst_49 [1] : vector<8x8xf32> to vector<8xf32>
    %100 = vector.shape_cast %99 : vector<8xf32> to vector<8x1xf32>
    %101 = vector.broadcast %100 : vector<8x1xf32> to vector<8x8xf32>
    %102 = arith.subf %98, %101 : vector<8x8xf32>
    %103 = math.exp %102 : vector<8x8xf32>
    %cst_50 = arith.constant dense<0.000000e+00> : vector<8xf32>
    %104 = vector.multi_reduction <add>, %103, %cst_50 [1] : vector<8x8xf32> to vector<8xf32>
    %105 = vector.shape_cast %104 : vector<8xf32> to vector<8x1xf32>
    %106 = tpu.reciprocal %105 : vector<8x1xf32> -> vector<8x1xf32>
    %107 = vector.broadcast %106 : vector<8x1xf32> to vector<8x8xf32>
    %108 = arith.mulf %103, %107 : vector<8x8xf32>
    %c0_51 = arith.constant 0 : index
    %c0_52 = arith.constant 0 : index
    %c24 = arith.constant 24 : index
    %109 = vector.load %arg14[%c0_51, %c0_52, %c24] : memref<1x8x64xf32, #tpu.memory_space<vmem>>, vector<1x8x8xf32>
    %110 = vector.shape_cast %109 : vector<1x8x8xf32> to vector<8x8xf32>
    %111 = vector.shape_cast %108 : vector<8x8xf32> to vector<1x8x8xf32>
    tpu.vector_store %arg14[%c0_51, %c0_52, %c24], %111 {strides = array<i32>} : memref<1x8x64xf32, #tpu.memory_space<vmem>>, vector<1x8x8xf32>,
    %112 = arith.truncf %108 : vector<8x8xf32> to vector<8x8xbf16>
    %cst_53 = arith.constant dense<0.000000e+00> : vector<8x64xf32>
    %113 = tpu.matmul %112, %94, %cst_53 {dimension_numbers = #tpu.dot_dimension_numbers<[1], [0], [0], [1], [0, 0, 1, 1], [], []>} : vector<8x8xbf16>, vector<8x64xbf16>, vector<8x64xf32> -> vector<8x64xf32>
    %c0_54 = arith.constant 0 : index
    %c192 = arith.constant 192 : index
    %114 = vector.load %arg16[%c0_54, %c192] : memref<8x512xf32, #tpu.memory_space<vmem>>, vector<8x64xf32>
    tpu.vector_store %arg16[%c0_54, %c192], %113 {strides = array<i32>} : memref<8x512xf32, #tpu.memory_space<vmem>>, vector<8x64xf32>,
    %115 = vector.extract_strided_slice %20 {offsets = [0, 256], sizes = [8, 64], strides = [1, 1]} : vector<8x512xbf16> to vector<8x64xbf16>
    %116 = vector.extract_strided_slice %21 {offsets = [0, 256], sizes = [8, 64], strides = [1, 1]} : vector<8x512xbf16> to vector<8x64xbf16>
    %117 = vector.extract_strided_slice %22 {offsets = [0, 256], sizes = [8, 64], strides = [1, 1]} : vector<8x512xbf16> to vector<8x64xbf16>
    %cst_55 = arith.constant dense<0.000000e+00> : vector<8x8xf32>
    %118 = tpu.matmul %115, %116, %cst_55 {dimension_numbers = #tpu.dot_dimension_numbers<[1], [1], [0], [0], [0, 0, 1, 0], [], []>} : vector<8x64xbf16>, vector<8x64xbf16>, vector<8x8xf32> -> vector<8x8xf32>
    %cst_56 = arith.constant 1.250000e-01 : f32
    %119 = vector.broadcast %cst_56 : f32 to vector<8x8xf32>
    %120 = arith.mulf %118, %119 : vector<8x8xf32>
    %121 = arith.addf %120, %7 : vector<8x8xf32>
    %cst_57 = arith.constant dense<0xFF800000> : vector<8xf32>
    %122 = vector.multi_reduction <maximumf>, %121, %cst_57 [1] : vector<8x8xf32> to vector<8xf32>
    %123 = vector.shape_cast %122 : vector<8xf32> to vector<8x1xf32>
    %124 = vector.broadcast %123 : vector<8x1xf32> to vector<8x8xf32>
    %125 = arith.subf %121, %124 : vector<8x8xf32>
    %126 = math.exp %125 : vector<8x8xf32>
    %cst_58 = arith.constant dense<0.000000e+00> : vector<8xf32>
    %127 = vector.multi_reduction <add>, %126, %cst_58 [1] : vector<8x8xf32> to vector<8xf32>
    %128 = vector.shape_cast %127 : vector<8xf32> to vector<8x1xf32>
    %129 = tpu.reciprocal %128 : vector<8x1xf32> -> vector<8x1xf32>
    %130 = vector.broadcast %129 : vector<8x1xf32> to vector<8x8xf32>
    %131 = arith.mulf %126, %130 : vector<8x8xf32>
    %c0_59 = arith.constant 0 : index
    %c0_60 = arith.constant 0 : index
    %c32 = arith.constant 32 : index
    %132 = vector.load %arg14[%c0_59, %c0_60, %c32] : memref<1x8x64xf32, #tpu.memory_space<vmem>>, vector<1x8x8xf32>
    %133 = vector.shape_cast %132 : vector<1x8x8xf32> to vector<8x8xf32>
    %134 = vector.shape_cast %131 : vector<8x8xf32> to vector<1x8x8xf32>
    tpu.vector_store %arg14[%c0_59, %c0_60, %c32], %134 {strides = array<i32>} : memref<1x8x64xf32, #tpu.memory_space<vmem>>, vector<1x8x8xf32>,
    %135 = arith.truncf %131 : vector<8x8xf32> to vector<8x8xbf16>
    %cst_61 = arith.constant dense<0.000000e+00> : vector<8x64xf32>
    %136 = tpu.matmul %135, %117, %cst_61 {dimension_numbers = #tpu.dot_dimension_numbers<[1], [0], [0], [1], [0, 0, 1, 1], [], []>} : vector<8x8xbf16>, vector<8x64xbf16>, vector<8x64xf32> -> vector<8x64xf32>
    %c0_62 = arith.constant 0 : index
    %c256 = arith.constant 256 : index
    %137 = vector.load %arg16[%c0_62, %c256] : memref<8x512xf32, #tpu.memory_space<vmem>>, vector<8x64xf32>
    tpu.vector_store %arg16[%c0_62, %c256], %136 {strides = array<i32>} : memref<8x512xf32, #tpu.memory_space<vmem>>, vector<8x64xf32>,
    %138 = vector.extract_strided_slice %20 {offsets = [0, 320], sizes = [8, 64], strides = [1, 1]} : vector<8x512xbf16> to vector<8x64xbf16>
    %139 = vector.extract_strided_slice %21 {offsets = [0, 320], sizes = [8, 64], strides = [1, 1]} : vector<8x512xbf16> to vector<8x64xbf16>
    %140 = vector.extract_strided_slice %22 {offsets = [0, 320], sizes = [8, 64], strides = [1, 1]} : vector<8x512xbf16> to vector<8x64xbf16>
    %cst_63 = arith.constant dense<0.000000e+00> : vector<8x8xf32>
    %141 = tpu.matmul %138, %139, %cst_63 {dimension_numbers = #tpu.dot_dimension_numbers<[1], [1], [0], [0], [0, 0, 1, 0], [], []>} : vector<8x64xbf16>, vector<8x64xbf16>, vector<8x8xf32> -> vector<8x8xf32>
    %cst_64 = arith.constant 1.250000e-01 : f32
    %142 = vector.broadcast %cst_64 : f32 to vector<8x8xf32>
    %143 = arith.mulf %141, %142 : vector<8x8xf32>
    %144 = arith.addf %143, %7 : vector<8x8xf32>
    %cst_65 = arith.constant dense<0xFF800000> : vector<8xf32>
    %145 = vector.multi_reduction <maximumf>, %144, %cst_65 [1] : vector<8x8xf32> to vector<8xf32>
    %146 = vector.shape_cast %145 : vector<8xf32> to vector<8x1xf32>
    %147 = vector.broadcast %146 : vector<8x1xf32> to vector<8x8xf32>
    %148 = arith.subf %144, %147 : vector<8x8xf32>
    %149 = math.exp %148 : vector<8x8xf32>
    %cst_66 = arith.constant dense<0.000000e+00> : vector<8xf32>
    %150 = vector.multi_reduction <add>, %149, %cst_66 [1] : vector<8x8xf32> to vector<8xf32>
    %151 = vector.shape_cast %150 : vector<8xf32> to vector<8x1xf32>
    %152 = tpu.reciprocal %151 : vector<8x1xf32> -> vector<8x1xf32>
    %153 = vector.broadcast %152 : vector<8x1xf32> to vector<8x8xf32>
    %154 = arith.mulf %149, %153 : vector<8x8xf32>
    %c0_67 = arith.constant 0 : index
    %c0_68 = arith.constant 0 : index
    %c40 = arith.constant 40 : index
    %155 = vector.load %arg14[%c0_67, %c0_68, %c40] : memref<1x8x64xf32, #tpu.memory_space<vmem>>, vector<1x8x8xf32>
    %156 = vector.shape_cast %155 : vector<1x8x8xf32> to vector<8x8xf32>
    %157 = vector.shape_cast %154 : vector<8x8xf32> to vector<1x8x8xf32>
    tpu.vector_store %arg14[%c0_67, %c0_68, %c40], %157 {strides = array<i32>} : memref<1x8x64xf32, #tpu.memory_space<vmem>>, vector<1x8x8xf32>,
    %158 = arith.truncf %154 : vector<8x8xf32> to vector<8x8xbf16>
    %cst_69 = arith.constant dense<0.000000e+00> : vector<8x64xf32>
    %159 = tpu.matmul %158, %140, %cst_69 {dimension_numbers = #tpu.dot_dimension_numbers<[1], [0], [0], [1], [0, 0, 1, 1], [], []>} : vector<8x8xbf16>, vector<8x64xbf16>, vector<8x64xf32> -> vector<8x64xf32>
    %c0_70 = arith.constant 0 : index
    %c320 = arith.constant 320 : index
    %160 = vector.load %arg16[%c0_70, %c320] : memref<8x512xf32, #tpu.memory_space<vmem>>, vector<8x64xf32>
    tpu.vector_store %arg16[%c0_70, %c320], %159 {strides = array<i32>} : memref<8x512xf32, #tpu.memory_space<vmem>>, vector<8x64xf32>,
    %161 = vector.extract_strided_slice %20 {offsets = [0, 384], sizes = [8, 64], strides = [1, 1]} : vector<8x512xbf16> to vector<8x64xbf16>
    %162 = vector.extract_strided_slice %21 {offsets = [0, 384], sizes = [8, 64], strides = [1, 1]} : vector<8x512xbf16> to vector<8x64xbf16>
    %163 = vector.extract_strided_slice %22 {offsets = [0, 384], sizes = [8, 64], strides = [1, 1]} : vector<8x512xbf16> to vector<8x64xbf16>
    %cst_71 = arith.constant dense<0.000000e+00> : vector<8x8xf32>
    %164 = tpu.matmul %161, %162, %cst_71 {dimension_numbers = #tpu.dot_dimension_numbers<[1], [1], [0], [0], [0, 0, 1, 0], [], []>} : vector<8x64xbf16>, vector<8x64xbf16>, vector<8x8xf32> -> vector<8x8xf32>
    %cst_72 = arith.constant 1.250000e-01 : f32
    %165 = vector.broadcast %cst_72 : f32 to vector<8x8xf32>
    %166 = arith.mulf %164, %165 : vector<8x8xf32>
    %167 = arith.addf %166, %7 : vector<8x8xf32>
    %cst_73 = arith.constant dense<0xFF800000> : vector<8xf32>
    %168 = vector.multi_reduction <maximumf>, %167, %cst_73 [1] : vector<8x8xf32> to vector<8xf32>
    %169 = vector.shape_cast %168 : vector<8xf32> to vector<8x1xf32>
    %170 = vector.broadcast %169 : vector<8x1xf32> to vector<8x8xf32>
    %171 = arith.subf %167, %170 : vector<8x8xf32>
    %172 = math.exp %171 : vector<8x8xf32>
    %cst_74 = arith.constant dense<0.000000e+00> : vector<8xf32>
    %173 = vector.multi_reduction <add>, %172, %cst_74 [1] : vector<8x8xf32> to vector<8xf32>
    %174 = vector.shape_cast %173 : vector<8xf32> to vector<8x1xf32>
    %175 = tpu.reciprocal %174 : vector<8x1xf32> -> vector<8x1xf32>
    %176 = vector.broadcast %175 : vector<8x1xf32> to vector<8x8xf32>
    %177 = arith.mulf %172, %176 : vector<8x8xf32>
    %c0_75 = arith.constant 0 : index
    %c0_76 = arith.constant 0 : index
    %c48 = arith.constant 48 : index
    %178 = vector.load %arg14[%c0_75, %c0_76, %c48] : memref<1x8x64xf32, #tpu.memory_space<vmem>>, vector<1x8x8xf32>
    %179 = vector.shape_cast %178 : vector<1x8x8xf32> to vector<8x8xf32>
    %180 = vector.shape_cast %177 : vector<8x8xf32> to vector<1x8x8xf32>
    tpu.vector_store %arg14[%c0_75, %c0_76, %c48], %180 {strides = array<i32>} : memref<1x8x64xf32, #tpu.memory_space<vmem>>, vector<1x8x8xf32>,
    %181 = arith.truncf %177 : vector<8x8xf32> to vector<8x8xbf16>
    %cst_77 = arith.constant dense<0.000000e+00> : vector<8x64xf32>
    %182 = tpu.matmul %181, %163, %cst_77 {dimension_numbers = #tpu.dot_dimension_numbers<[1], [0], [0], [1], [0, 0, 1, 1], [], []>} : vector<8x8xbf16>, vector<8x64xbf16>, vector<8x64xf32> -> vector<8x64xf32>
    %c0_78 = arith.constant 0 : index
    %c384 = arith.constant 384 : index
    %183 = vector.load %arg16[%c0_78, %c384] : memref<8x512xf32, #tpu.memory_space<vmem>>, vector<8x64xf32>
    tpu.vector_store %arg16[%c0_78, %c384], %182 {strides = array<i32>} : memref<8x512xf32, #tpu.memory_space<vmem>>, vector<8x64xf32>,
    %184 = vector.extract_strided_slice %20 {offsets = [0, 448], sizes = [8, 64], strides = [1, 1]} : vector<8x512xbf16> to vector<8x64xbf16>
    %185 = vector.extract_strided_slice %21 {offsets = [0, 448], sizes = [8, 64], strides = [1, 1]} : vector<8x512xbf16> to vector<8x64xbf16>
    %186 = vector.extract_strided_slice %22 {offsets = [0, 448], sizes = [8, 64], strides = [1, 1]} : vector<8x512xbf16> to vector<8x64xbf16>
    %cst_79 = arith.constant dense<0.000000e+00> : vector<8x8xf32>
    %187 = tpu.matmul %184, %185, %cst_79 {dimension_numbers = #tpu.dot_dimension_numbers<[1], [1], [0], [0], [0, 0, 1, 0], [], []>} : vector<8x64xbf16>, vector<8x64xbf16>, vector<8x8xf32> -> vector<8x8xf32>
    %cst_80 = arith.constant 1.250000e-01 : f32
    %188 = vector.broadcast %cst_80 : f32 to vector<8x8xf32>
    %189 = arith.mulf %187, %188 : vector<8x8xf32>
    %190 = arith.addf %189, %7 : vector<8x8xf32>
    %cst_81 = arith.constant dense<0xFF800000> : vector<8xf32>
    %191 = vector.multi_reduction <maximumf>, %190, %cst_81 [1] : vector<8x8xf32> to vector<8xf32>
    %192 = vector.shape_cast %191 : vector<8xf32> to vector<8x1xf32>
    %193 = vector.broadcast %192 : vector<8x1xf32> to vector<8x8xf32>
    %194 = arith.subf %190, %193 : vector<8x8xf32>
    %195 = math.exp %194 : vector<8x8xf32>
    %cst_82 = arith.constant dense<0.000000e+00> : vector<8xf32>
    %196 = vector.multi_reduction <add>, %195, %cst_82 [1] : vector<8x8xf32> to vector<8xf32>
    %197 = vector.shape_cast %196 : vector<8xf32> to vector<8x1xf32>
    %198 = tpu.reciprocal %197 : vector<8x1xf32> -> vector<8x1xf32>
    %199 = vector.broadcast %198 : vector<8x1xf32> to vector<8x8xf32>
    %200 = arith.mulf %195, %199 : vector<8x8xf32>
    %c0_83 = arith.constant 0 : index
    %c0_84 = arith.constant 0 : index
    %c56 = arith.constant 56 : index
    %201 = vector.load %arg14[%c0_83, %c0_84, %c56] : memref<1x8x64xf32, #tpu.memory_space<vmem>>, vector<1x8x8xf32>
    %202 = vector.shape_cast %201 : vector<1x8x8xf32> to vector<8x8xf32>
    %203 = vector.shape_cast %200 : vector<8x8xf32> to vector<1x8x8xf32>
    tpu.vector_store %arg14[%c0_83, %c0_84, %c56], %203 {strides = array<i32>} : memref<1x8x64xf32, #tpu.memory_space<vmem>>, vector<1x8x8xf32>,
    %204 = arith.truncf %200 : vector<8x8xf32> to vector<8x8xbf16>
    %cst_85 = arith.constant dense<0.000000e+00> : vector<8x64xf32>
    %205 = tpu.matmul %204, %186, %cst_85 {dimension_numbers = #tpu.dot_dimension_numbers<[1], [0], [0], [1], [0, 0, 1, 1], [], []>} : vector<8x8xbf16>, vector<8x64xbf16>, vector<8x64xf32> -> vector<8x64xf32>
    %c0_86 = arith.constant 0 : index
    %c448 = arith.constant 448 : index
    %206 = vector.load %arg16[%c0_86, %c448] : memref<8x512xf32, #tpu.memory_space<vmem>>, vector<8x64xf32>
    tpu.vector_store %arg16[%c0_86, %c448], %205 {strides = array<i32>} : memref<8x512xf32, #tpu.memory_space<vmem>>, vector<8x64xf32>,
    %c0_87 = arith.constant 0 : index
    %c0_88 = arith.constant 0 : index
    %207 = vector.load %arg16[%c0_87, %c0_88] : memref<8x512xf32, #tpu.memory_space<vmem>>, vector<8x512xf32>
    %208 = arith.truncf %207 : vector<8x512xf32> to vector<8x512xbf16>
    %c0_89 = arith.constant 0 : index
    %c0_90 = arith.constant 0 : index
    %209 = vector.load %arg8[%c0_89, %c0_90] : memref<512x512xbf16, #tpu.memory_space<vmem>>, vector<512x512xbf16>
    %cst_91 = arith.constant dense<0.000000e+00> : vector<8x512xf32>
    %210 = tpu.matmul %208, %209, %cst_91 {dimension_numbers = #tpu.dot_dimension_numbers<[1], [0], [0], [1], [0, 0, 1, 1], [], []>} : vector<8x512xbf16>, vector<512x512xbf16>, vector<8x512xf32> -> vector<8x512xf32>
    %211 = arith.addf %210, %1 : vector<8x512xf32>
    %cst_92 = arith.constant dense<0.000000e+00> : vector<8xf32>
    %212 = vector.multi_reduction <add>, %211, %cst_92 [1] : vector<8x512xf32> to vector<8xf32>
    %213 = vector.shape_cast %212 : vector<8xf32> to vector<8x1xf32>
    %cst_93 = arith.constant 5.120000e+02 : f32
    %214 = vector.broadcast %cst_93 : f32 to vector<8x1xf32>
    %215 = arith.divf %213, %214 : vector<8x1xf32>
    %216 = vector.broadcast %215 : vector<8x1xf32> to vector<8x512xf32>
    %217 = arith.subf %211, %216 : vector<8x512xf32>
    %218 = arith.mulf %217, %217 : vector<8x512xf32>
    %cst_94 = arith.constant dense<0.000000e+00> : vector<8xf32>
    %219 = vector.multi_reduction <add>, %218, %cst_94 [1] : vector<8x512xf32> to vector<8xf32>
    %220 = vector.shape_cast %219 : vector<8xf32> to vector<8x1xf32>
    %cst_95 = arith.constant 5.120000e+02 : f32
    %221 = vector.broadcast %cst_95 : f32 to vector<8x1xf32>
    %222 = arith.divf %220, %221 : vector<8x1xf32>
    %223 = vector.broadcast %215 : vector<8x1xf32> to vector<8x512xf32>
    %224 = arith.subf %211, %223 : vector<8x512xf32>
    %cst_96 = arith.constant 9.99999974E-6 : f32
    %225 = vector.broadcast %cst_96 : f32 to vector<8x1xf32>
    %226 = arith.addf %222, %225 : vector<8x1xf32>
    %227 = math.rsqrt %226 : vector<8x1xf32>
    %228 = vector.broadcast %227 : vector<8x1xf32> to vector<8x512xf32>
    %229 = arith.mulf %224, %228 : vector<8x512xf32>
    %230 = arith.truncf %229 : vector<8x512xf32> to vector<8x512xbf16>
    %231 = arith.truncf %3 : vector<16x512xf32> to vector<16x512xbf16>
    %c0_97 = arith.constant 0 : index
    %c0_98 = arith.constant 0 : index
    %232 = vector.load %arg9[%c0_97, %c0_98] : memref<512x512xbf16, #tpu.memory_space<vmem>>, vector<512x512xbf16>
    %cst_99 = arith.constant dense<0.000000e+00> : vector<8x512xf32>
    %233 = tpu.matmul %230, %232, %cst_99 {dimension_numbers = #tpu.dot_dimension_numbers<[1], [0], [0], [1], [0, 0, 1, 1], [], []>} : vector<8x512xbf16>, vector<512x512xbf16>, vector<8x512xf32> -> vector<8x512xf32>
    %c0_100 = arith.constant 0 : index
    %c0_101 = arith.constant 0 : index
    %234 = vector.load %arg10[%c0_100, %c0_101] : memref<512x512xbf16, #tpu.memory_space<vmem>>, vector<512x512xbf16>
    %cst_102 = arith.constant dense<0.000000e+00> : vector<16x512xf32>
    %235 = tpu.matmul %231, %234, %cst_102 {dimension_numbers = #tpu.dot_dimension_numbers<[1], [0], [0], [1], [0, 0, 1, 1], [], []>} : vector<16x512xbf16>, vector<512x512xbf16>, vector<16x512xf32> -> vector<16x512xf32>
    %c0_103 = arith.constant 0 : index
    %c0_104 = arith.constant 0 : index
    %236 = vector.load %arg11[%c0_103, %c0_104] : memref<512x512xbf16, #tpu.memory_space<vmem>>, vector<512x512xbf16>
    %cst_105 = arith.constant dense<0.000000e+00> : vector<16x512xf32>
    %237 = tpu.matmul %231, %236, %cst_105 {dimension_numbers = #tpu.dot_dimension_numbers<[1], [0], [0], [1], [0, 0, 1, 1], [], []>} : vector<16x512xbf16>, vector<512x512xbf16>, vector<16x512xf32> -> vector<16x512xf32>
    %238 = arith.truncf %233 : vector<8x512xf32> to vector<8x512xbf16>
    %239 = arith.truncf %235 : vector<16x512xf32> to vector<16x512xbf16>
    %240 = arith.truncf %237 : vector<16x512xf32> to vector<16x512xbf16>
    %241 = vector.extract_strided_slice %238 {offsets = [0, 0], sizes = [8, 64], strides = [1, 1]} : vector<8x512xbf16> to vector<8x64xbf16>
    %242 = vector.extract_strided_slice %239 {offsets = [0, 0], sizes = [16, 64], strides = [1, 1]} : vector<16x512xbf16> to vector<16x64xbf16>
    %243 = vector.extract_strided_slice %240 {offsets = [0, 0], sizes = [16, 64], strides = [1, 1]} : vector<16x512xbf16> to vector<16x64xbf16>
    %cst_106 = arith.constant dense<0.000000e+00> : vector<8x16xf32>
    %244 = tpu.matmul %241, %242, %cst_106 {dimension_numbers = #tpu.dot_dimension_numbers<[1], [1], [0], [0], [0, 0, 1, 0], [], []>} : vector<8x64xbf16>, vector<16x64xbf16>, vector<8x16xf32> -> vector<8x16xf32>
    %cst_107 = arith.constant 1.250000e-01 : f32
    %245 = vector.broadcast %cst_107 : f32 to vector<8x16xf32>
    %246 = arith.mulf %244, %245 : vector<8x16xf32>
    %247 = arith.addf %246, %11 : vector<8x16xf32>
    %cst_108 = arith.constant dense<0xFF800000> : vector<8xf32>
    %248 = vector.multi_reduction <maximumf>, %247, %cst_108 [1] : vector<8x16xf32> to vector<8xf32>
    %249 = vector.shape_cast %248 : vector<8xf32> to vector<8x1xf32>
    %250 = vector.broadcast %249 : vector<8x1xf32> to vector<8x16xf32>
    %251 = arith.subf %247, %250 : vector<8x16xf32>
    %252 = math.exp %251 : vector<8x16xf32>
    %cst_109 = arith.constant dense<0.000000e+00> : vector<8xf32>
    %253 = vector.multi_reduction <add>, %252, %cst_109 [1] : vector<8x16xf32> to vector<8xf32>
    %254 = vector.shape_cast %253 : vector<8xf32> to vector<8x1xf32>
    %255 = tpu.reciprocal %254 : vector<8x1xf32> -> vector<8x1xf32>
    %256 = vector.broadcast %255 : vector<8x1xf32> to vector<8x16xf32>
    %257 = arith.mulf %252, %256 : vector<8x16xf32>
    %c0_110 = arith.constant 0 : index
    %c0_111 = arith.constant 0 : index
    %c0_112 = arith.constant 0 : index
    %258 = vector.load %arg15[%c0_110, %c0_111, %c0_112] : memref<1x8x128xf32, #tpu.memory_space<vmem>>, vector<1x8x16xf32>
    %259 = vector.shape_cast %258 : vector<1x8x16xf32> to vector<8x16xf32>
    %260 = vector.shape_cast %257 : vector<8x16xf32> to vector<1x8x16xf32>
    tpu.vector_store %arg15[%c0_110, %c0_111, %c0_112], %260 {strides = array<i32>} : memref<1x8x128xf32, #tpu.memory_space<vmem>>, vector<1x8x16xf32>,
    %261 = arith.truncf %257 : vector<8x16xf32> to vector<8x16xbf16>
    %cst_113 = arith.constant dense<0.000000e+00> : vector<8x64xf32>
    %262 = tpu.matmul %261, %243, %cst_113 {dimension_numbers = #tpu.dot_dimension_numbers<[1], [0], [0], [1], [0, 0, 1, 1], [], []>} : vector<8x16xbf16>, vector<16x64xbf16>, vector<8x64xf32> -> vector<8x64xf32>
    %c0_114 = arith.constant 0 : index
    %c0_115 = arith.constant 0 : index
    %263 = vector.load %arg16[%c0_114, %c0_115] : memref<8x512xf32, #tpu.memory_space<vmem>>, vector<8x64xf32>
    tpu.vector_store %arg16[%c0_114, %c0_115], %262 {strides = array<i32>} : memref<8x512xf32, #tpu.memory_space<vmem>>, vector<8x64xf32>,
    %264 = vector.extract_strided_slice %238 {offsets = [0, 64], sizes = [8, 64], strides = [1, 1]} : vector<8x512xbf16> to vector<8x64xbf16>
    %265 = vector.extract_strided_slice %239 {offsets = [0, 64], sizes = [16, 64], strides = [1, 1]} : vector<16x512xbf16> to vector<16x64xbf16>
    %266 = vector.extract_strided_slice %240 {offsets = [0, 64], sizes = [16, 64], strides = [1, 1]} : vector<16x512xbf16> to vector<16x64xbf16>
    %cst_116 = arith.constant dense<0.000000e+00> : vector<8x16xf32>
    %267 = tpu.matmul %264, %265, %cst_116 {dimension_numbers = #tpu.dot_dimension_numbers<[1], [1], [0], [0], [0, 0, 1, 0], [], []>} : vector<8x64xbf16>, vector<16x64xbf16>, vector<8x16xf32> -> vector<8x16xf32>
    %cst_117 = arith.constant 1.250000e-01 : f32
    %268 = vector.broadcast %cst_117 : f32 to vector<8x16xf32>
    %269 = arith.mulf %267, %268 : vector<8x16xf32>
    %270 = arith.addf %269, %11 : vector<8x16xf32>
    %cst_118 = arith.constant dense<0xFF800000> : vector<8xf32>
    %271 = vector.multi_reduction <maximumf>, %270, %cst_118 [1] : vector<8x16xf32> to vector<8xf32>
    %272 = vector.shape_cast %271 : vector<8xf32> to vector<8x1xf32>
    %273 = vector.broadcast %272 : vector<8x1xf32> to vector<8x16xf32>
    %274 = arith.subf %270, %273 : vector<8x16xf32>
    %275 = math.exp %274 : vector<8x16xf32>
    %cst_119 = arith.constant dense<0.000000e+00> : vector<8xf32>
    %276 = vector.multi_reduction <add>, %275, %cst_119 [1] : vector<8x16xf32> to vector<8xf32>
    %277 = vector.shape_cast %276 : vector<8xf32> to vector<8x1xf32>
    %278 = tpu.reciprocal %277 : vector<8x1xf32> -> vector<8x1xf32>
    %279 = vector.broadcast %278 : vector<8x1xf32> to vector<8x16xf32>
    %280 = arith.mulf %275, %279 : vector<8x16xf32>
    %c0_120 = arith.constant 0 : index
    %c0_121 = arith.constant 0 : index
    %c16_122 = arith.constant 16 : index
    %281 = vector.load %arg15[%c0_120, %c0_121, %c16_122] : memref<1x8x128xf32, #tpu.memory_space<vmem>>, vector<1x8x16xf32>
    %282 = vector.shape_cast %281 : vector<1x8x16xf32> to vector<8x16xf32>
    %283 = vector.shape_cast %280 : vector<8x16xf32> to vector<1x8x16xf32>
    tpu.vector_store %arg15[%c0_120, %c0_121, %c16_122], %283 {strides = array<i32>} : memref<1x8x128xf32, #tpu.memory_space<vmem>>, vector<1x8x16xf32>,
    %284 = arith.truncf %280 : vector<8x16xf32> to vector<8x16xbf16>
    %cst_123 = arith.constant dense<0.000000e+00> : vector<8x64xf32>
    %285 = tpu.matmul %284, %266, %cst_123 {dimension_numbers = #tpu.dot_dimension_numbers<[1], [0], [0], [1], [0, 0, 1, 1], [], []>} : vector<8x16xbf16>, vector<16x64xbf16>, vector<8x64xf32> -> vector<8x64xf32>
    %c0_124 = arith.constant 0 : index
    %c64_125 = arith.constant 64 : index
    %286 = vector.load %arg16[%c0_124, %c64_125] : memref<8x512xf32, #tpu.memory_space<vmem>>, vector<8x64xf32>
    tpu.vector_store %arg16[%c0_124, %c64_125], %285 {strides = array<i32>} : memref<8x512xf32, #tpu.memory_space<vmem>>, vector<8x64xf32>,
    %287 = vector.extract_strided_slice %238 {offsets = [0, 128], sizes = [8, 64], strides = [1, 1]} : vector<8x512xbf16> to vector<8x64xbf16>
    %288 = vector.extract_strided_slice %239 {offsets = [0, 128], sizes = [16, 64], strides = [1, 1]} : vector<16x512xbf16> to vector<16x64xbf16>
    %289 = vector.extract_strided_slice %240 {offsets = [0, 128], sizes = [16, 64], strides = [1, 1]} : vector<16x512xbf16> to vector<16x64xbf16>
    %cst_126 = arith.constant dense<0.000000e+00> : vector<8x16xf32>
    %290 = tpu.matmul %287, %288, %cst_126 {dimension_numbers = #tpu.dot_dimension_numbers<[1], [1], [0], [0], [0, 0, 1, 0], [], []>} : vector<8x64xbf16>, vector<16x64xbf16>, vector<8x16xf32> -> vector<8x16xf32>
    %cst_127 = arith.constant 1.250000e-01 : f32
    %291 = vector.broadcast %cst_127 : f32 to vector<8x16xf32>
    %292 = arith.mulf %290, %291 : vector<8x16xf32>
    %293 = arith.addf %292, %11 : vector<8x16xf32>
    %cst_128 = arith.constant dense<0xFF800000> : vector<8xf32>
    %294 = vector.multi_reduction <maximumf>, %293, %cst_128 [1] : vector<8x16xf32> to vector<8xf32>
    %295 = vector.shape_cast %294 : vector<8xf32> to vector<8x1xf32>
    %296 = vector.broadcast %295 : vector<8x1xf32> to vector<8x16xf32>
    %297 = arith.subf %293, %296 : vector<8x16xf32>
    %298 = math.exp %297 : vector<8x16xf32>
    %cst_129 = arith.constant dense<0.000000e+00> : vector<8xf32>
    %299 = vector.multi_reduction <add>, %298, %cst_129 [1] : vector<8x16xf32> to vector<8xf32>
    %300 = vector.shape_cast %299 : vector<8xf32> to vector<8x1xf32>
    %301 = tpu.reciprocal %300 : vector<8x1xf32> -> vector<8x1xf32>
    %302 = vector.broadcast %301 : vector<8x1xf32> to vector<8x16xf32>
    %303 = arith.mulf %298, %302 : vector<8x16xf32>
    %c0_130 = arith.constant 0 : index
    %c0_131 = arith.constant 0 : index
    %c32_132 = arith.constant 32 : index
    %304 = vector.load %arg15[%c0_130, %c0_131, %c32_132] : memref<1x8x128xf32, #tpu.memory_space<vmem>>, vector<1x8x16xf32>
    %305 = vector.shape_cast %304 : vector<1x8x16xf32> to vector<8x16xf32>
    %306 = vector.shape_cast %303 : vector<8x16xf32> to vector<1x8x16xf32>
    tpu.vector_store %arg15[%c0_130, %c0_131, %c32_132], %306 {strides = array<i32>} : memref<1x8x128xf32, #tpu.memory_space<vmem>>, vector<1x8x16xf32>,
    %307 = arith.truncf %303 : vector<8x16xf32> to vector<8x16xbf16>
    %cst_133 = arith.constant dense<0.000000e+00> : vector<8x64xf32>
    %308 = tpu.matmul %307, %289, %cst_133 {dimension_numbers = #tpu.dot_dimension_numbers<[1], [0], [0], [1], [0, 0, 1, 1], [], []>} : vector<8x16xbf16>, vector<16x64xbf16>, vector<8x64xf32> -> vector<8x64xf32>
    %c0_134 = arith.constant 0 : index
    %c128_135 = arith.constant 128 : index
    %309 = vector.load %arg16[%c0_134, %c128_135] : memref<8x512xf32, #tpu.memory_space<vmem>>, vector<8x64xf32>
    tpu.vector_store %arg16[%c0_134, %c128_135], %308 {strides = array<i32>} : memref<8x512xf32, #tpu.memory_space<vmem>>, vector<8x64xf32>,
    %310 = vector.extract_strided_slice %238 {offsets = [0, 192], sizes = [8, 64], strides = [1, 1]} : vector<8x512xbf16> to vector<8x64xbf16>
    %311 = vector.extract_strided_slice %239 {offsets = [0, 192], sizes = [16, 64], strides = [1, 1]} : vector<16x512xbf16> to vector<16x64xbf16>
    %312 = vector.extract_strided_slice %240 {offsets = [0, 192], sizes = [16, 64], strides = [1, 1]} : vector<16x512xbf16> to vector<16x64xbf16>
    %cst_136 = arith.constant dense<0.000000e+00> : vector<8x16xf32>
    %313 = tpu.matmul %310, %311, %cst_136 {dimension_numbers = #tpu.dot_dimension_numbers<[1], [1], [0], [0], [0, 0, 1, 0], [], []>} : vector<8x64xbf16>, vector<16x64xbf16>, vector<8x16xf32> -> vector<8x16xf32>
    %cst_137 = arith.constant 1.250000e-01 : f32
    %314 = vector.broadcast %cst_137 : f32 to vector<8x16xf32>
    %315 = arith.mulf %313, %314 : vector<8x16xf32>
    %316 = arith.addf %315, %11 : vector<8x16xf32>
    %cst_138 = arith.constant dense<0xFF800000> : vector<8xf32>
    %317 = vector.multi_reduction <maximumf>, %316, %cst_138 [1] : vector<8x16xf32> to vector<8xf32>
    %318 = vector.shape_cast %317 : vector<8xf32> to vector<8x1xf32>
    %319 = vector.broadcast %318 : vector<8x1xf32> to vector<8x16xf32>
    %320 = arith.subf %316, %319 : vector<8x16xf32>
    %321 = math.exp %320 : vector<8x16xf32>
    %cst_139 = arith.constant dense<0.000000e+00> : vector<8xf32>
    %322 = vector.multi_reduction <add>, %321, %cst_139 [1] : vector<8x16xf32> to vector<8xf32>
    %323 = vector.shape_cast %322 : vector<8xf32> to vector<8x1xf32>
    %324 = tpu.reciprocal %323 : vector<8x1xf32> -> vector<8x1xf32>
    %325 = vector.broadcast %324 : vector<8x1xf32> to vector<8x16xf32>
    %326 = arith.mulf %321, %325 : vector<8x16xf32>
    %c0_140 = arith.constant 0 : index
    %c0_141 = arith.constant 0 : index
    %c48_142 = arith.constant 48 : index
    %327 = vector.load %arg15[%c0_140, %c0_141, %c48_142] : memref<1x8x128xf32, #tpu.memory_space<vmem>>, vector<1x8x16xf32>
    %328 = vector.shape_cast %327 : vector<1x8x16xf32> to vector<8x16xf32>
    %329 = vector.shape_cast %326 : vector<8x16xf32> to vector<1x8x16xf32>
    tpu.vector_store %arg15[%c0_140, %c0_141, %c48_142], %329 {strides = array<i32>} : memref<1x8x128xf32, #tpu.memory_space<vmem>>, vector<1x8x16xf32>,
    %330 = arith.truncf %326 : vector<8x16xf32> to vector<8x16xbf16>
    %cst_143 = arith.constant dense<0.000000e+00> : vector<8x64xf32>
    %331 = tpu.matmul %330, %312, %cst_143 {dimension_numbers = #tpu.dot_dimension_numbers<[1], [0], [0], [1], [0, 0, 1, 1], [], []>} : vector<8x16xbf16>, vector<16x64xbf16>, vector<8x64xf32> -> vector<8x64xf32>
    %c0_144 = arith.constant 0 : index
    %c192_145 = arith.constant 192 : index
    %332 = vector.load %arg16[%c0_144, %c192_145] : memref<8x512xf32, #tpu.memory_space<vmem>>, vector<8x64xf32>
    tpu.vector_store %arg16[%c0_144, %c192_145], %331 {strides = array<i32>} : memref<8x512xf32, #tpu.memory_space<vmem>>, vector<8x64xf32>,
    %333 = vector.extract_strided_slice %238 {offsets = [0, 256], sizes = [8, 64], strides = [1, 1]} : vector<8x512xbf16> to vector<8x64xbf16>
    %334 = vector.extract_strided_slice %239 {offsets = [0, 256], sizes = [16, 64], strides = [1, 1]} : vector<16x512xbf16> to vector<16x64xbf16>
    %335 = vector.extract_strided_slice %240 {offsets = [0, 256], sizes = [16, 64], strides = [1, 1]} : vector<16x512xbf16> to vector<16x64xbf16>
    %cst_146 = arith.constant dense<0.000000e+00> : vector<8x16xf32>
    %336 = tpu.matmul %333, %334, %cst_146 {dimension_numbers = #tpu.dot_dimension_numbers<[1], [1], [0], [0], [0, 0, 1, 0], [], []>} : vector<8x64xbf16>, vector<16x64xbf16>, vector<8x16xf32> -> vector<8x16xf32>
    %cst_147 = arith.constant 1.250000e-01 : f32
    %337 = vector.broadcast %cst_147 : f32 to vector<8x16xf32>
    %338 = arith.mulf %336, %337 : vector<8x16xf32>
    %339 = arith.addf %338, %11 : vector<8x16xf32>
    %cst_148 = arith.constant dense<0xFF800000> : vector<8xf32>
    %340 = vector.multi_reduction <maximumf>, %339, %cst_148 [1] : vector<8x16xf32> to vector<8xf32>
    %341 = vector.shape_cast %340 : vector<8xf32> to vector<8x1xf32>
    %342 = vector.broadcast %341 : vector<8x1xf32> to vector<8x16xf32>
    %343 = arith.subf %339, %342 : vector<8x16xf32>
    %344 = math.exp %343 : vector<8x16xf32>
    %cst_149 = arith.constant dense<0.000000e+00> : vector<8xf32>
    %345 = vector.multi_reduction <add>, %344, %cst_149 [1] : vector<8x16xf32> to vector<8xf32>
    %346 = vector.shape_cast %345 : vector<8xf32> to vector<8x1xf32>
    %347 = tpu.reciprocal %346 : vector<8x1xf32> -> vector<8x1xf32>
    %348 = vector.broadcast %347 : vector<8x1xf32> to vector<8x16xf32>
    %349 = arith.mulf %344, %348 : vector<8x16xf32>
    %c0_150 = arith.constant 0 : index
    %c0_151 = arith.constant 0 : index
    %c64_152 = arith.constant 64 : index
    %350 = vector.load %arg15[%c0_150, %c0_151, %c64_152] : memref<1x8x128xf32, #tpu.memory_space<vmem>>, vector<1x8x16xf32>
    %351 = vector.shape_cast %350 : vector<1x8x16xf32> to vector<8x16xf32>
    %352 = vector.shape_cast %349 : vector<8x16xf32> to vector<1x8x16xf32>
    tpu.vector_store %arg15[%c0_150, %c0_151, %c64_152], %352 {strides = array<i32>} : memref<1x8x128xf32, #tpu.memory_space<vmem>>, vector<1x8x16xf32>,
    %353 = arith.truncf %349 : vector<8x16xf32> to vector<8x16xbf16>
    %cst_153 = arith.constant dense<0.000000e+00> : vector<8x64xf32>
    %354 = tpu.matmul %353, %335, %cst_153 {dimension_numbers = #tpu.dot_dimension_numbers<[1], [0], [0], [1], [0, 0, 1, 1], [], []>} : vector<8x16xbf16>, vector<16x64xbf16>, vector<8x64xf32> -> vector<8x64xf32>
    %c0_154 = arith.constant 0 : index
    %c256_155 = arith.constant 256 : index
    %355 = vector.load %arg16[%c0_154, %c256_155] : memref<8x512xf32, #tpu.memory_space<vmem>>, vector<8x64xf32>
    tpu.vector_store %arg16[%c0_154, %c256_155], %354 {strides = array<i32>} : memref<8x512xf32, #tpu.memory_space<vmem>>, vector<8x64xf32>,
    %356 = vector.extract_strided_slice %238 {offsets = [0, 320], sizes = [8, 64], strides = [1, 1]} : vector<8x512xbf16> to vector<8x64xbf16>
    %357 = vector.extract_strided_slice %239 {offsets = [0, 320], sizes = [16, 64], strides = [1, 1]} : vector<16x512xbf16> to vector<16x64xbf16>
    %358 = vector.extract_strided_slice %240 {offsets = [0, 320], sizes = [16, 64], strides = [1, 1]} : vector<16x512xbf16> to vector<16x64xbf16>
    %cst_156 = arith.constant dense<0.000000e+00> : vector<8x16xf32>
    %359 = tpu.matmul %356, %357, %cst_156 {dimension_numbers = #tpu.dot_dimension_numbers<[1], [1], [0], [0], [0, 0, 1, 0], [], []>} : vector<8x64xbf16>, vector<16x64xbf16>, vector<8x16xf32> -> vector<8x16xf32>
    %cst_157 = arith.constant 1.250000e-01 : f32
    %360 = vector.broadcast %cst_157 : f32 to vector<8x16xf32>
    %361 = arith.mulf %359, %360 : vector<8x16xf32>
    %362 = arith.addf %361, %11 : vector<8x16xf32>
    %cst_158 = arith.constant dense<0xFF800000> : vector<8xf32>
    %363 = vector.multi_reduction <maximumf>, %362, %cst_158 [1] : vector<8x16xf32> to vector<8xf32>
    %364 = vector.shape_cast %363 : vector<8xf32> to vector<8x1xf32>
    %365 = vector.broadcast %364 : vector<8x1xf32> to vector<8x16xf32>
    %366 = arith.subf %362, %365 : vector<8x16xf32>
    %367 = math.exp %366 : vector<8x16xf32>
    %cst_159 = arith.constant dense<0.000000e+00> : vector<8xf32>
    %368 = vector.multi_reduction <add>, %367, %cst_159 [1] : vector<8x16xf32> to vector<8xf32>
    %369 = vector.shape_cast %368 : vector<8xf32> to vector<8x1xf32>
    %370 = tpu.reciprocal %369 : vector<8x1xf32> -> vector<8x1xf32>
    %371 = vector.broadcast %370 : vector<8x1xf32> to vector<8x16xf32>
    %372 = arith.mulf %367, %371 : vector<8x16xf32>
    %c0_160 = arith.constant 0 : index
    %c0_161 = arith.constant 0 : index
    %c80 = arith.constant 80 : index
    %373 = vector.load %arg15[%c0_160, %c0_161, %c80] : memref<1x8x128xf32, #tpu.memory_space<vmem>>, vector<1x8x16xf32>
    %374 = vector.shape_cast %373 : vector<1x8x16xf32> to vector<8x16xf32>
    %375 = vector.shape_cast %372 : vector<8x16xf32> to vector<1x8x16xf32>
    tpu.vector_store %arg15[%c0_160, %c0_161, %c80], %375 {strides = array<i32>} : memref<1x8x128xf32, #tpu.memory_space<vmem>>, vector<1x8x16xf32>,
    %376 = arith.truncf %372 : vector<8x16xf32> to vector<8x16xbf16>
    %cst_162 = arith.constant dense<0.000000e+00> : vector<8x64xf32>
    %377 = tpu.matmul %376, %358, %cst_162 {dimension_numbers = #tpu.dot_dimension_numbers<[1], [0], [0], [1], [0, 0, 1, 1], [], []>} : vector<8x16xbf16>, vector<16x64xbf16>, vector<8x64xf32> -> vector<8x64xf32>
    %c0_163 = arith.constant 0 : index
    %c320_164 = arith.constant 320 : index
    %378 = vector.load %arg16[%c0_163, %c320_164] : memref<8x512xf32, #tpu.memory_space<vmem>>, vector<8x64xf32>
    tpu.vector_store %arg16[%c0_163, %c320_164], %377 {strides = array<i32>} : memref<8x512xf32, #tpu.memory_space<vmem>>, vector<8x64xf32>,
    %379 = vector.extract_strided_slice %238 {offsets = [0, 384], sizes = [8, 64], strides = [1, 1]} : vector<8x512xbf16> to vector<8x64xbf16>
    %380 = vector.extract_strided_slice %239 {offsets = [0, 384], sizes = [16, 64], strides = [1, 1]} : vector<16x512xbf16> to vector<16x64xbf16>
    %381 = vector.extract_strided_slice %240 {offsets = [0, 384], sizes = [16, 64], strides = [1, 1]} : vector<16x512xbf16> to vector<16x64xbf16>
    %cst_165 = arith.constant dense<0.000000e+00> : vector<8x16xf32>
    %382 = tpu.matmul %379, %380, %cst_165 {dimension_numbers = #tpu.dot_dimension_numbers<[1], [1], [0], [0], [0, 0, 1, 0], [], []>} : vector<8x64xbf16>, vector<16x64xbf16>, vector<8x16xf32> -> vector<8x16xf32>
    %cst_166 = arith.constant 1.250000e-01 : f32
    %383 = vector.broadcast %cst_166 : f32 to vector<8x16xf32>
    %384 = arith.mulf %382, %383 : vector<8x16xf32>
    %385 = arith.addf %384, %11 : vector<8x16xf32>
    %cst_167 = arith.constant dense<0xFF800000> : vector<8xf32>
    %386 = vector.multi_reduction <maximumf>, %385, %cst_167 [1] : vector<8x16xf32> to vector<8xf32>
    %387 = vector.shape_cast %386 : vector<8xf32> to vector<8x1xf32>
    %388 = vector.broadcast %387 : vector<8x1xf32> to vector<8x16xf32>
    %389 = arith.subf %385, %388 : vector<8x16xf32>
    %390 = math.exp %389 : vector<8x16xf32>
    %cst_168 = arith.constant dense<0.000000e+00> : vector<8xf32>
    %391 = vector.multi_reduction <add>, %390, %cst_168 [1] : vector<8x16xf32> to vector<8xf32>
    %392 = vector.shape_cast %391 : vector<8xf32> to vector<8x1xf32>
    %393 = tpu.reciprocal %392 : vector<8x1xf32> -> vector<8x1xf32>
    %394 = vector.broadcast %393 : vector<8x1xf32> to vector<8x16xf32>
    %395 = arith.mulf %390, %394 : vector<8x16xf32>
    %c0_169 = arith.constant 0 : index
    %c0_170 = arith.constant 0 : index
    %c96 = arith.constant 96 : index
    %396 = vector.load %arg15[%c0_169, %c0_170, %c96] : memref<1x8x128xf32, #tpu.memory_space<vmem>>, vector<1x8x16xf32>
    %397 = vector.shape_cast %396 : vector<1x8x16xf32> to vector<8x16xf32>
    %398 = vector.shape_cast %395 : vector<8x16xf32> to vector<1x8x16xf32>
    tpu.vector_store %arg15[%c0_169, %c0_170, %c96], %398 {strides = array<i32>} : memref<1x8x128xf32, #tpu.memory_space<vmem>>, vector<1x8x16xf32>,
    %399 = arith.truncf %395 : vector<8x16xf32> to vector<8x16xbf16>
    %cst_171 = arith.constant dense<0.000000e+00> : vector<8x64xf32>
    %400 = tpu.matmul %399, %381, %cst_171 {dimension_numbers = #tpu.dot_dimension_numbers<[1], [0], [0], [1], [0, 0, 1, 1], [], []>} : vector<8x16xbf16>, vector<16x64xbf16>, vector<8x64xf32> -> vector<8x64xf32>
    %c0_172 = arith.constant 0 : index
    %c384_173 = arith.constant 384 : index
    %401 = vector.load %arg16[%c0_172, %c384_173] : memref<8x512xf32, #tpu.memory_space<vmem>>, vector<8x64xf32>
    tpu.vector_store %arg16[%c0_172, %c384_173], %400 {strides = array<i32>} : memref<8x512xf32, #tpu.memory_space<vmem>>, vector<8x64xf32>,
    %402 = vector.extract_strided_slice %238 {offsets = [0, 448], sizes = [8, 64], strides = [1, 1]} : vector<8x512xbf16> to vector<8x64xbf16>
    %403 = vector.extract_strided_slice %239 {offsets = [0, 448], sizes = [16, 64], strides = [1, 1]} : vector<16x512xbf16> to vector<16x64xbf16>
    %404 = vector.extract_strided_slice %240 {offsets = [0, 448], sizes = [16, 64], strides = [1, 1]} : vector<16x512xbf16> to vector<16x64xbf16>
    %cst_174 = arith.constant dense<0.000000e+00> : vector<8x16xf32>
    %405 = tpu.matmul %402, %403, %cst_174 {dimension_numbers = #tpu.dot_dimension_numbers<[1], [1], [0], [0], [0, 0, 1, 0], [], []>} : vector<8x64xbf16>, vector<16x64xbf16>, vector<8x16xf32> -> vector<8x16xf32>
    %cst_175 = arith.constant 1.250000e-01 : f32
    %406 = vector.broadcast %cst_175 : f32 to vector<8x16xf32>
    %407 = arith.mulf %405, %406 : vector<8x16xf32>
    %408 = arith.addf %407, %11 : vector<8x16xf32>
    %cst_176 = arith.constant dense<0xFF800000> : vector<8xf32>
    %409 = vector.multi_reduction <maximumf>, %408, %cst_176 [1] : vector<8x16xf32> to vector<8xf32>
    %410 = vector.shape_cast %409 : vector<8xf32> to vector<8x1xf32>
    %411 = vector.broadcast %410 : vector<8x1xf32> to vector<8x16xf32>
    %412 = arith.subf %408, %411 : vector<8x16xf32>
    %413 = math.exp %412 : vector<8x16xf32>
    %cst_177 = arith.constant dense<0.000000e+00> : vector<8xf32>
    %414 = vector.multi_reduction <add>, %413, %cst_177 [1] : vector<8x16xf32> to vector<8xf32>
    %415 = vector.shape_cast %414 : vector<8xf32> to vector<8x1xf32>
    %416 = tpu.reciprocal %415 : vector<8x1xf32> -> vector<8x1xf32>
    %417 = vector.broadcast %416 : vector<8x1xf32> to vector<8x16xf32>
    %418 = arith.mulf %413, %417 : vector<8x16xf32>
    %c0_178 = arith.constant 0 : index
    %c0_179 = arith.constant 0 : index
    %c112 = arith.constant 112 : index
    %419 = vector.load %arg15[%c0_178, %c0_179, %c112] : memref<1x8x128xf32, #tpu.memory_space<vmem>>, vector<1x8x16xf32>
    %420 = vector.shape_cast %419 : vector<1x8x16xf32> to vector<8x16xf32>
    %421 = vector.shape_cast %418 : vector<8x16xf32> to vector<1x8x16xf32>
    tpu.vector_store %arg15[%c0_178, %c0_179, %c112], %421 {strides = array<i32>} : memref<1x8x128xf32, #tpu.memory_space<vmem>>, vector<1x8x16xf32>,
    %422 = arith.truncf %418 : vector<8x16xf32> to vector<8x16xbf16>
    %cst_180 = arith.constant dense<0.000000e+00> : vector<8x64xf32>
    %423 = tpu.matmul %422, %404, %cst_180 {dimension_numbers = #tpu.dot_dimension_numbers<[1], [0], [0], [1], [0, 0, 1, 1], [], []>} : vector<8x16xbf16>, vector<16x64xbf16>, vector<8x64xf32> -> vector<8x64xf32>
    %c0_181 = arith.constant 0 : index
    %c448_182 = arith.constant 448 : index
    %424 = vector.load %arg16[%c0_181, %c448_182] : memref<8x512xf32, #tpu.memory_space<vmem>>, vector<8x64xf32>
    tpu.vector_store %arg16[%c0_181, %c448_182], %423 {strides = array<i32>} : memref<8x512xf32, #tpu.memory_space<vmem>>, vector<8x64xf32>,
    %c0_183 = arith.constant 0 : index
    %c0_184 = arith.constant 0 : index
    %425 = vector.load %arg16[%c0_183, %c0_184] : memref<8x512xf32, #tpu.memory_space<vmem>>, vector<8x512xf32>
    %426 = arith.truncf %425 : vector<8x512xf32> to vector<8x512xbf16>
    %c0_185 = arith.constant 0 : index
    %c0_186 = arith.constant 0 : index
    %427 = vector.load %arg12[%c0_185, %c0_186] : memref<512x512xbf16, #tpu.memory_space<vmem>>, vector<512x512xbf16>
    %cst_187 = arith.constant dense<0.000000e+00> : vector<8x512xf32>
    %428 = tpu.matmul %426, %427, %cst_187 {dimension_numbers = #tpu.dot_dimension_numbers<[1], [0], [0], [1], [0, 0, 1, 1], [], []>} : vector<8x512xbf16>, vector<512x512xbf16>, vector<8x512xf32> -> vector<8x512xf32>
    %429 = arith.addf %428, %229 : vector<8x512xf32>
    %cst_188 = arith.constant dense<0.000000e+00> : vector<8xf32>
    %430 = vector.multi_reduction <add>, %429, %cst_188 [1] : vector<8x512xf32> to vector<8xf32>
    %431 = vector.shape_cast %430 : vector<8xf32> to vector<8x1xf32>
    %cst_189 = arith.constant 5.120000e+02 : f32
    %432 = vector.broadcast %cst_189 : f32 to vector<8x1xf32>
    %433 = arith.divf %431, %432 : vector<8x1xf32>
    %434 = vector.broadcast %433 : vector<8x1xf32> to vector<8x512xf32>
    %435 = arith.subf %429, %434 : vector<8x512xf32>
    %436 = arith.mulf %435, %435 : vector<8x512xf32>
    %cst_190 = arith.constant dense<0.000000e+00> : vector<8xf32>
    %437 = vector.multi_reduction <add>, %436, %cst_190 [1] : vector<8x512xf32> to vector<8xf32>
    %438 = vector.shape_cast %437 : vector<8xf32> to vector<8x1xf32>
    %cst_191 = arith.constant 5.120000e+02 : f32
    %439 = vector.broadcast %cst_191 : f32 to vector<8x1xf32>
    %440 = arith.divf %438, %439 : vector<8x1xf32>
    %441 = vector.broadcast %433 : vector<8x1xf32> to vector<8x512xf32>
    %442 = arith.subf %429, %441 : vector<8x512xf32>
    %cst_192 = arith.constant 9.99999974E-6 : f32
    %443 = vector.broadcast %cst_192 : f32 to vector<8x1xf32>
    %444 = arith.addf %440, %443 : vector<8x1xf32>
    %445 = math.rsqrt %444 : vector<8x1xf32>
    %446 = vector.broadcast %445 : vector<8x1xf32> to vector<8x512xf32>
    %447 = arith.mulf %442, %446 : vector<8x512xf32>
    %c0_193 = arith.constant 0 : index
    %c0_194 = arith.constant 0 : index
    %c0_195 = arith.constant 0 : index
    %448 = vector.load %arg13[%c0_193, %c0_194, %c0_195] : memref<1x8x512xf32, #tpu.memory_space<vmem>>, vector<1x8x512xf32>
    %449 = vector.shape_cast %448 : vector<1x8x512xf32> to vector<8x512xf32>
    %450 = vector.shape_cast %447 : vector<8x512xf32> to vector<1x8x512xf32>
    tpu.vector_store %arg13[%c0_193, %c0_194, %c0_195], %450 {strides = array<i32>} : memref<1x8x512xf32, #tpu.memory_space<vmem>>, vector<1x8x512xf32>,
    return
  }
  func.func @transform_0(%arg0: i32) -> (i32, i32, i32) {
    %c0_i32 = arith.constant 0 : i32
    %c0_i32_0 = arith.constant 0 : i32
    %c0_i32_1 = arith.constant 0 : i32
    return %arg0, %c0_i32, %c0_i32_0 : i32, i32, i32
  }
  func.func @transform_1(%arg0: i32) -> (i32, i32, i32) {
    %c0_i32 = arith.constant 0 : i32
    %c0_i32_0 = arith.constant 0 : i32
    %c0_i32_1 = arith.constant 0 : i32
    return %arg0, %c0_i32, %c0_i32_0 : i32, i32, i32
  }
  func.func @transform_2(%arg0: i32) -> (i32, i32, i32) {
    %c0_i32 = arith.constant 0 : i32
    %c0_i32_0 = arith.constant 0 : i32
    %c0_i32_1 = arith.constant 0 : i32
    return %arg0, %c0_i32, %c0_i32_0 : i32, i32, i32
  }
  func.func @transform_3(%arg0: i32) -> (i32, i32, i32) {
    %c0_i32 = arith.constant 0 : i32
    %c0_i32_0 = arith.constant 0 : i32
    %c0_i32_1 = arith.constant 0 : i32
    return %arg0, %c0_i32, %c0_i32_0 : i32, i32, i32
  }
  func.func @transform_4(%arg0: i32) -> (i32, i32) {
    %c0_i32 = arith.constant 0 : i32
    %c0_i32_0 = arith.constant 0 : i32
    %c0_i32_1 = arith.constant 0 : i32
    return %c0_i32, %c0_i32_0 : i32, i32
  }
  func.func @transform_5(%arg0: i32) -> (i32, i32) {
    %c0_i32 = arith.constant 0 : i32
    %c0_i32_0 = arith.constant 0 : i32
    %c0_i32_1 = arith.constant 0 : i32
    return %c0_i32, %c0_i32_0 : i32, i32
  }
  func.func @transform_6(%arg0: i32) -> (i32, i32) {
    %c0_i32 = arith.constant 0 : i32
    %c0_i32_0 = arith.constant 0 : i32
    %c0_i32_1 = arith.constant 0 : i32
    return %c0_i32, %c0_i32_0 : i32, i32
  }
  func.func @transform_7(%arg0: i32) -> (i32, i32) {
    %c0_i32 = arith.constant 0 : i32
    %c0_i32_0 = arith.constant 0 : i32
    %c0_i32_1 = arith.constant 0 : i32
    return %c0_i32, %c0_i32_0 : i32, i32
  }
  func.func @transform_8(%arg0: i32) -> (i32, i32) {
    %c0_i32 = arith.constant 0 : i32
    %c0_i32_0 = arith.constant 0 : i32
    %c0_i32_1 = arith.constant 0 : i32
    return %c0_i32, %c0_i32_0 : i32, i32
  }
  func.func @transform_9(%arg0: i32) -> (i32, i32) {
    %c0_i32 = arith.constant 0 : i32
    %c0_i32_0 = arith.constant 0 : i32
    %c0_i32_1 = arith.constant 0 : i32
    return %c0_i32, %c0_i32_0 : i32, i32
  }
  func.func @transform_10(%arg0: i32) -> (i32, i32) {
    %c0_i32 = arith.constant 0 : i32
    %c0_i32_0 = arith.constant 0 : i32
    %c0_i32_1 = arith.constant 0 : i32
    return %c0_i32, %c0_i32_0 : i32, i32
  }
  func.func @transform_11(%arg0: i32) -> (i32, i32) {
    %c0_i32 = arith.constant 0 : i32
    %c0_i32_0 = arith.constant 0 : i32
    %c0_i32_1 = arith.constant 0 : i32
    return %c0_i32, %c0_i32_0 : i32, i32
  }
  func.func @transform_12(%arg0: i32) -> (i32, i32, i32) {
    %c0_i32 = arith.constant 0 : i32
    %c0_i32_0 = arith.constant 0 : i32
    %c0_i32_1 = arith.constant 0 : i32
    return %arg0, %c0_i32, %c0_i32_0 : i32, i32, i32
  }
  func.func @transform_13(%arg0: i32) -> (i32, i32, i32) {
    %c0_i32 = arith.constant 0 : i32
    %c0_i32_0 = arith.constant 0 : i32
    %c0_i32_1 = arith.constant 0 : i32
    return %arg0, %c0_i32, %c0_i32_0 : i32, i32, i32
  }
  func.func @transform_14(%arg0: i32) -> (i32, i32, i32) {
    %c0_i32 = arith.constant 0 : i32
    %c0_i32_0 = arith.constant 0 : i32
    %c0_i32_1 = arith.constant 0 : i32
    return %arg0, %c0_i32, %c0_i32_0 : i32, i32, i32
  }
}

</mosaic_0001>

<llo_original>
// kernel: decoder_layer.1
$region0: #{decoder_layer.1}
  #allocation0 [shape = 'u32[]', space=smem, size = 0x4, offset = 0x4, fixed_abs, tag = 'smem constant byte address 0x4 - core index']
  #allocation1 [shape = 'u32[144,128]{1,0:T(1,128)}', space=vmem, size = 0x12000, scoped, tag = 'internal scratch']
  #allocation2 [shape = 'f32[8,512]{1,0:T(8,128)}', space=vmem, size = 0x4000, scoped, tag = 'scratch operand']
  %s0 = inlined_call_operand.hbm [shape: f32[2,8,512], index: 0, kind: input, shape index: {}]
  %s1 = inlined_call_operand.hbm [shape: f32[2,16,512], index: 1, kind: input, shape index: {}]
  %s2 = inlined_call_operand.vmem [shape: f32[2,8,8], index: 2, kind: input, shape index: {}]
  %s3 = inlined_call_operand.vmem [shape: f32[2,8,16], index: 3, kind: input, shape index: {}]
  %s4 = inlined_call_operand.hbm [shape: bf16[512,512], index: 4, kind: input, shape index: {}]
  %s5 = inlined_call_operand.hbm [shape: bf16[512,512], index: 5, kind: input, shape index: {}]
  %s6 = inlined_call_operand.hbm [shape: bf16[512,512], index: 6, kind: input, shape index: {}]
  %s7 = inlined_call_operand.hbm [shape: bf16[512,512], index: 7, kind: input, shape index: {}]
  %s8 = inlined_call_operand.hbm [shape: bf16[512,512], index: 8, kind: input, shape index: {}]
  %s9 = inlined_call_operand.hbm [shape: bf16[512,512], index: 9, kind: input, shape index: {}]
  %s10 = inlined_call_operand.hbm [shape: bf16[512,512], index: 10, kind: input, shape index: {}]
  %s11 = inlined_call_operand.hbm [shape: bf16[512,512], index: 11, kind: input, shape index: {}]
  %s12 = inlined_call_operand.hbm [shape: f32[2,8,512], index: 12, kind: output, shape index: {0}]
  %s13 = inlined_call_operand.vmem [shape: f32[2,8,64], index: 13, kind: output, shape index: {1}]
  %s14 = inlined_call_operand.vmem [shape: f32[2,8,128], index: 14, kind: output, shape index: {2}]
  %15 = xla_tuple %s12, %s13, %s14
  %s16 = sld [smem:[#allocation0]]
  $region137: #{decoder_layer.1} parent=0
    _
  %s18 = ssub.s32 1, %s16
  %s19 = scalar_select 0, %s18, %s16
  $region1: #{decoder_layer.1} parent=0
    #allocation3 [shape = 'u8[32768]{0}', space=vmem, size = 0x8000, scoped, tag = 'input window, operand 0']
    #allocation4 [shape = 's32[2]{0}', space=sflag, size = 0x8, scoped, tag = 'scoped memory for decoder_layer.1']
    #allocation5 [shape = 's32[2]{0}', space=sflag, size = 0x8, scoped, tag = 'scoped memory for decoder_layer.1']
    #allocation6 [shape = 'u8[65536]{0}', space=vmem, size = 0x10000, scoped, tag = 'input window, operand 1']
    #allocation7 [shape = 's32[2]{0}', space=sflag, size = 0x8, scoped, tag = 'scoped memory for decoder_layer.1']
    #allocation8 [shape = 'u8[524288]{0}', space=vmem, size = 0x80000, scoped, tag = 'input window, operand 4, single buffered']
    #allocation9 [shape = 'u8[524288]{0}', space=vmem, size = 0x80000, scoped, tag = 'input window, operand 5, single buffered']
    #allocation10 [shape = 's32[1]{0}', space=sflag, size = 0x4, scoped, tag = 'scoped memory for decoder_layer.1']
    #allocation11 [shape = 'u8[524288]{0}', space=vmem, size = 0x80000, scoped, tag = 'input window, operand 6, single buffered']
    #allocation12 [shape = 'u8[524288]{0}', space=vmem, size = 0x80000, scoped, tag = 'input window, operand 7, single buffered']
    #allocation13 [shape = 's32[1]{0}', space=sflag, size = 0x4, scoped, tag = 'scoped memory for decoder_layer.1']
    #allocation14 [shape = 'u8[524288]{0}', space=vmem, size = 0x80000, scoped, tag = 'input window, operand 8, single buffered']
    #allocation15 [shape = 'u8[524288]{0}', space=vmem, size = 0x80000, scoped, tag = 'input window, operand 9, single buffered']
    #allocation16 [shape = 's32[1]{0}', space=sflag, size = 0x4, scoped, tag = 'scoped memory for decoder_layer.1']
    #allocation17 [shape = 'u8[524288]{0}', space=vmem, size = 0x80000, scoped, tag = 'input window, operand 10, single buffered']
    #allocation18 [shape = 'u8[524288]{0}', space=vmem, size = 0x80000, scoped, tag = 'input window, operand 11, single buffered']
    #allocation19 [shape = 's32[1]{0}', space=sflag, size = 0x4, scoped, tag = 'scoped memory for decoder_layer.1']
    #allocation20 [shape = 'u8[32768]{0}', space=vmem, size = 0x8000, scoped, tag = 'output window, operand 0']
    %20 = vsyncpa [#allocation4], 0
    %s21 = scalar_lea.sflag [#allocation4], 1
    %22 = vsyncpa %s21, 0
    %23 = vsyncpa [#allocation7], 0
    %s24 = scalar_lea.sflag [#allocation7], 1
    %25 = vsyncpa %s24, 0
    %26 = vsyncpa [#allocation10], 0
    %27 = vsyncpa [#allocation13], 0
    %28 = vsyncpa [#allocation16], 0
    %29 = vsyncpa [#allocation19], 0
    %30 = vsyncpa [#allocation5], 0
    %s31 = scalar_lea.sflag [#allocation5], 1
    %32 = vsyncpa %s31, 0
    loop: start=0, step=1, limit=4
    $region2: #{decoder_layer.1} parent=1 // loop_pre_header
      _
    $region3: #{decoder_layer.1} parent=1 // loop_header
      %s34 = sphi 0, %s38
      %p35 = scmp.ge.s32.totalorder %s34, 4
      %s44 = sphi 0, %s46
      %s47 = sphi 0, %s44
      %s48 = sphi 0, %s47
      %s64 = sphi 0, %s48
      %s70 = sphi 0, %s72
      %s73 = sphi 0, %s70
      %s74 = sphi 0, %s73
      %s90 = sphi 0, %s74
      %s96 = sphi 0, %s98
      %s99 = sphi 0, %s96
      %s100 = sphi 0, %s99
      %s116 = sphi 0, %s100
      %s122 = sphi 0, %s124
      %s125 = sphi 0, %s122
      %s126 = sphi 0, %s125
      %s142 = sphi 0, %s126
      %s146 = sphi 0, %s146
      %s148 = sphi 0, %s146
      %s149 = sphi 0, %s148
      %s163 = sphi 0, %s149
      %s167 = sphi 0, %s167
      %s169 = sphi 0, %s167
      %s170 = sphi 0, %s169
      %s184 = sphi 0, %s170
      %s188 = sphi 0, %s188
      %s190 = sphi 0, %s188
      %s191 = sphi 0, %s190
      %s205 = sphi 0, %s191
      %s209 = sphi 0, %s209
      %s211 = sphi 0, %s209
      %s212 = sphi 0, %s211
      %s226 = sphi 0, %s212
      %s230 = sphi 0, %s230
      %s232 = sphi 0, %s230
      %s233 = sphi 0, %s232
      %s247 = sphi 0, %s233
      %s251 = sphi 0, %s251
      %s253 = sphi 0, %s251
      %s254 = sphi 0, %s253
      %s268 = sphi 0, %s254
      %s272 = sphi 0, %s272
      %s274 = sphi 0, %s272
      %s275 = sphi 0, %s274
      %s289 = sphi 0, %s275
      %s293 = sphi 0, %s293
      %s295 = sphi 0, %s293
      %s296 = sphi 0, %s295
      %s310 = sphi 0, %s296
      %s316 = sphi 0, %s318
      %s319 = sphi 0, %s316
      %s320 = sphi 0, %s319
      %s336 = sphi 0, %s320
      %s342 = sphi 0, %s344
      %s345 = sphi 0, %s342
      %s346 = sphi 0, %s345
      %s362 = sphi 0, %s346
      %s368 = sphi 0, %s370
      %s371 = sphi 0, %s368
      %s372 = sphi 0, %s371
      %s388 = sphi 0, %s372
    $region4: #{decoder_layer.1} parent=1 // loop_header_branch
      %37 = sbr.rel (%p35) target = $region8
    $region5: #{decoder_layer.1} parent=1 // loop_body
      %s39 = ssub.s32 %s34, 1
      %s40 = ssub.s32 %s34, 2
      %s41 = sadd.s32 %s34, 1
      %s42 = ssub.s32 %s34, %s41
      %p43 = scmp.eq.s32.totalorder %s42, 0
      %s45 = sadd.s32 %s44, 1
      %s46 = scalar_select %p43, %s44, %s45
      %p49 = pneg %p43
      %p50 = scmp.eq.s32.totalorder %s34, 1
      %p51 = por %p49, %p50
      %p52 = scmp.ne.s32.totalorder %s44, %s47
      %p53 = scmp.eq.s32.totalorder %s34, 0
      %p54 = por %p52, %p53
      %p55 = scmp.ne.s32.totalorder %s44, %s47
      %p56 = scmp.eq.s32.totalorder %s39, 1
      %p57 = por %p55, %p56
      %p58 = scmp.ne.s32.totalorder %s47, %s48
      %p59 = scmp.eq.s32.totalorder %s39, 0
      %p60 = por %p58, %p59
      %p61 = scmp.ne.s32.totalorder %s47, %s48
      %p62 = scmp.eq.s32.totalorder %s40, 1
      %p63 = por %p61, %p62
      %p65 = scmp.ne.s32.totalorder %s48, %s64
      %p66 = scmp.eq.s32.totalorder %s40, 0
      %p67 = por %p65, %p66
      %s68 = ssub.s32 %s34, %s41
      %p69 = scmp.eq.s32.totalorder %s68, 0
      %s71 = sadd.s32 %s70, 1
      %s72 = scalar_select %p69, %s70, %s71
      %p75 = pneg %p69
      %p76 = scmp.eq.s32.totalorder %s34, 1
      %p77 = por %p75, %p76
      %p78 = scmp.ne.s32.totalorder %s70, %s73
      %p79 = scmp.eq.s32.totalorder %s34, 0
      %p80 = por %p78, %p79
      %p81 = scmp.ne.s32.totalorder %s70, %s73
      %p82 = scmp.eq.s32.totalorder %s39, 1
      %p83 = por %p81, %p82
      %p84 = scmp.ne.s32.totalorder %s73, %s74
      %p85 = scmp.eq.s32.totalorder %s39, 0
      %p86 = por %p84, %p85
      %p87 = scmp.ne.s32.totalorder %s73, %s74
      %p88 = scmp.eq.s32.totalorder %s40, 1
      %p89 = por %p87, %p88
      %p91 = scmp.ne.s32.totalorder %s74, %s90
      %p92 = scmp.eq.s32.totalorder %s40, 0
      %p93 = por %p91, %p92
      %s94 = ssub.s32 %s34, %s41
      %p95 = scmp.eq.s32.totalorder %s94, 0
      %s97 = sadd.s32 %s96, 1
      %s98 = scalar_select %p95, %s96, %s97
      %p101 = pneg %p95
      %p102 = scmp.eq.s32.totalorder %s34, 1
      %p103 = por %p101, %p102
      %p104 = scmp.ne.s32.totalorder %s96, %s99
      %p105 = scmp.eq.s32.totalorder %s34, 0
      %p106 = por %p104, %p105
      %p107 = scmp.ne.s32.totalorder %s96, %s99
      %p108 = scmp.eq.s32.totalorder %s39, 1
      %p109 = por %p107, %p108
      %p110 = scmp.ne.s32.totalorder %s99, %s100
      %p111 = scmp.eq.s32.totalorder %s39, 0
      %p112 = por %p110, %p111
      %p113 = scmp.ne.s32.totalorder %s99, %s100
      %p114 = scmp.eq.s32.totalorder %s40, 1
      %p115 = por %p113, %p114
      %p117 = scmp.ne.s32.totalorder %s100, %s116
      %p118 = scmp.eq.s32.totalorder %s40, 0
      %p119 = por %p117, %p118
      %s120 = ssub.s32 %s34, %s41
      %p121 = scmp.eq.s32.totalorder %s120, 0
      %s123 = sadd.s32 %s122, 1
      %s124 = scalar_select %p121, %s122, %s123
      %p127 = pneg %p121
      %p128 = scmp.eq.s32.totalorder %s34, 1
      %p129 = por %p127, %p128
      %p130 = scmp.ne.s32.totalorder %s122, %s125
      %p131 = scmp.eq.s32.totalorder %s34, 0
      %p132 = por %p130, %p131
      %p133 = scmp.ne.s32.totalorder %s122, %s125
      %p134 = scmp.eq.s32.totalorder %s39, 1
      %p135 = por %p133, %p134
      %p136 = scmp.ne.s32.totalorder %s125, %s126
      %p137 = scmp.eq.s32.totalorder %s39, 0
      %p138 = por %p136, %p137
      %p139 = scmp.ne.s32.totalorder %s125, %s126
      %p140 = scmp.eq.s32.totalorder %s40, 1
      %p141 = por %p139, %p140
      %p143 = scmp.ne.s32.totalorder %s126, %s142
      %p144 = scmp.eq.s32.totalorder %s40, 0
      %p145 = por %p143, %p144
      %s147 = sadd.s32 %s146, 1
      %p150 = scmp.eq.s32.totalorder %s34, 1
      %p151 = scmp.ne.s32.totalorder %s146, %s148
      %p152 = scmp.eq.s32.totalorder %s34, 0
      %p153 = por %p151, %p152
      %p154 = scmp.ne.s32.totalorder %s146, %s148
      %p155 = scmp.eq.s32.totalorder %s39, 1
      %p156 = por %p154, %p155
      %p157 = scmp.ne.s32.totalorder %s148, %s149
      %p158 = scmp.eq.s32.totalorder %s39, 0
      %p159 = por %p157, %p158
      %p160 = scmp.ne.s32.totalorder %s148, %s149
      %p161 = scmp.eq.s32.totalorder %s40, 1
      %p162 = por %p160, %p161
      %p164 = scmp.ne.s32.totalorder %s149, %s163
      %p165 = scmp.eq.s32.totalorder %s40, 0
      %p166 = por %p164, %p165
      %s168 = sadd.s32 %s167, 1
      %p171 = scmp.eq.s32.totalorder %s34, 1
      %p172 = scmp.ne.s32.totalorder %s167, %s169
      %p173 = scmp.eq.s32.totalorder %s34, 0
      %p174 = por %p172, %p173
      %p175 = scmp.ne.s32.totalorder %s167, %s169
      %p176 = scmp.eq.s32.totalorder %s39, 1
      %p177 = por %p175, %p176
      %p178 = scmp.ne.s32.totalorder %s169, %s170
      %p179 = scmp.eq.s32.totalorder %s39, 0
      %p180 = por %p178, %p179
      %p181 = scmp.ne.s32.totalorder %s169, %s170
      %p182 = scmp.eq.s32.totalorder %s40, 1
      %p183 = por %p181, %p182
      %p185 = scmp.ne.s32.totalorder %s170, %s184
      %p186 = scmp.eq.s32.totalorder %s40, 0
      %p187 = por %p185, %p186
      %s189 = sadd.s32 %s188, 1
      %p192 = scmp.eq.s32.totalorder %s34, 1
      %p193 = scmp.ne.s32.totalorder %s188, %s190
      %p194 = scmp.eq.s32.totalorder %s34, 0
      %p195 = por %p193, %p194
      %p196 = scmp.ne.s32.totalorder %s188, %s190
      %p197 = scmp.eq.s32.totalorder %s39, 1
      %p198 = por %p196, %p197
      %p199 = scmp.ne.s32.totalorder %s190, %s191
      %p200 = scmp.eq.s32.totalorder %s39, 0
      %p201 = por %p199, %p200
      %p202 = scmp.ne.s32.totalorder %s190, %s191
      %p203 = scmp.eq.s32.totalorder %s40, 1
      %p204 = por %p202, %p203
      %p206 = scmp.ne.s32.totalorder %s191, %s205
      %p207 = scmp.eq.s32.totalorder %s40, 0
      %p208 = por %p206, %p207
      %s210 = sadd.s32 %s209, 1
      %p213 = scmp.eq.s32.totalorder %s34, 1
      %p214 = scmp.ne.s32.totalorder %s209, %s211
      %p215 = scmp.eq.s32.totalorder %s34, 0
      %p216 = por %p214, %p215
      %p217 = scmp.ne.s32.totalorder %s209, %s211
      %p218 = scmp.eq.s32.totalorder %s39, 1
      %p219 = por %p217, %p218
      %p220 = scmp.ne.s32.totalorder %s211, %s212
      %p221 = scmp.eq.s32.totalorder %s39, 0
      %p222 = por %p220, %p221
      %p223 = scmp.ne.s32.totalorder %s211, %s212
      %p224 = scmp.eq.s32.totalorder %s40, 1
      %p225 = por %p223, %p224
      %p227 = scmp.ne.s32.totalorder %s212, %s226
      %p228 = scmp.eq.s32.totalorder %s40, 0
      %p229 = por %p227, %p228
      %s231 = sadd.s32 %s230, 1
      %p234 = scmp.eq.s32.totalorder %s34, 1
      %p235 = scmp.ne.s32.totalorder %s230, %s232
      %p236 = scmp.eq.s32.totalorder %s34, 0
      %p237 = por %p235, %p236
      %p238 = scmp.ne.s32.totalorder %s230, %s232
      %p239 = scmp.eq.s32.totalorder %s39, 1
      %p240 = por %p238, %p239
      %p241 = scmp.ne.s32.totalorder %s232, %s233
      %p242 = scmp.eq.s32.totalorder %s39, 0
      %p243 = por %p241, %p242
      %p244 = scmp.ne.s32.totalorder %s232, %s233
      %p245 = scmp.eq.s32.totalorder %s40, 1
      %p246 = por %p244, %p245
      %p248 = scmp.ne.s32.totalorder %s233, %s247
      %p249 = scmp.eq.s32.totalorder %s40, 0
      %p250 = por %p248, %p249
      %s252 = sadd.s32 %s251, 1
      %p255 = scmp.eq.s32.totalorder %s34, 1
      %p256 = scmp.ne.s32.totalorder %s251, %s253
      %p257 = scmp.eq.s32.totalorder %s34, 0
      %p258 = por %p256, %p257
      %p259 = scmp.ne.s32.totalorder %s251, %s253
      %p260 = scmp.eq.s32.totalorder %s39, 1
      %p261 = por %p259, %p260
      %p262 = scmp.ne.s32.totalorder %s253, %s254
      %p263 = scmp.eq.s32.totalorder %s39, 0
      %p264 = por %p262, %p263
      %p265 = scmp.ne.s32.totalorder %s253, %s254
      %p266 = scmp.eq.s32.totalorder %s40, 1
      %p267 = por %p265, %p266
      %p269 = scmp.ne.s32.totalorder %s254, %s268
      %p270 = scmp.eq.s32.totalorder %s40, 0
      %p271 = por %p269, %p270
      %s273 = sadd.s32 %s272, 1
      %p276 = scmp.eq.s32.totalorder %s34, 1
      %p277 = scmp.ne.s32.totalorder %s272, %s274
      %p278 = scmp.eq.s32.totalorder %s34, 0
      %p279 = por %p277, %p278
      %p280 = scmp.ne.s32.totalorder %s272, %s274
      %p281 = scmp.eq.s32.totalorder %s39, 1
      %p282 = por %p280, %p281
      %p283 = scmp.ne.s32.totalorder %s274, %s275
      %p284 = scmp.eq.s32.totalorder %s39, 0
      %p285 = por %p283, %p284
      %p286 = scmp.ne.s32.totalorder %s274, %s275
      %p287 = scmp.eq.s32.totalorder %s40, 1
      %p288 = por %p286, %p287
      %p290 = scmp.ne.s32.totalorder %s275, %s289
      %p291 = scmp.eq.s32.totalorder %s40, 0
      %p292 = por %p290, %p291
      %s294 = sadd.s32 %s293, 1
      %p297 = scmp.eq.s32.totalorder %s34, 1
      %p298 = scmp.ne.s32.totalorder %s293, %s295
      %p299 = scmp.eq.s32.totalorder %s34, 0
      %p300 = por %p298, %p299
      %p301 = scmp.ne.s32.totalorder %s293, %s295
      %p302 = scmp.eq.s32.totalorder %s39, 1
      %p303 = por %p301, %p302
      %p304 = scmp.ne.s32.totalorder %s295, %s296
      %p305 = scmp.eq.s32.totalorder %s39, 0
      %p306 = por %p304, %p305
      %p307 = scmp.ne.s32.totalorder %s295, %s296
      %p308 = scmp.eq.s32.totalorder %s40, 1
      %p309 = por %p307, %p308
      %p311 = scmp.ne.s32.totalorder %s296, %s310
      %p312 = scmp.eq.s32.totalorder %s40, 0
      %p313 = por %p311, %p312
      %s314 = ssub.s32 %s34, %s41
      %p315 = scmp.eq.s32.totalorder %s314, 0
      %s317 = sadd.s32 %s316, 1
      %s318 = scalar_select %p315, %s316, %s317
      %p321 = pneg %p315
      %p322 = scmp.eq.s32.totalorder %s34, 1
      %p323 = por %p321, %p322
      %p324 = scmp.ne.s32.totalorder %s316, %s319
      %p325 = scmp.eq.s32.totalorder %s34, 0
      %p326 = por %p324, %p325
      %p327 = scmp.ne.s32.totalorder %s316, %s319
      %p328 = scmp.eq.s32.totalorder %s39, 1
      %p329 = por %p327, %p328
      %p330 = scmp.ne.s32.totalorder %s319, %s320
      %p331 = scmp.eq.s32.totalorder %s39, 0
      %p332 = por %p330, %p331
      %p333 = scmp.ne.s32.totalorder %s319, %s320
      %p334 = scmp.eq.s32.totalorder %s40, 1
      %p335 = por %p333, %p334
      %p337 = scmp.ne.s32.totalorder %s320, %s336
      %p338 = scmp.eq.s32.totalorder %s40, 0
      %p339 = por %p337, %p338
      %s340 = ssub.s32 %s34, %s41
      %p341 = scmp.eq.s32.totalorder %s340, 0
      %s343 = sadd.s32 %s342, 1
      %s344 = scalar_select %p341, %s342, %s343
      %p347 = pneg %p341
      %p348 = scmp.eq.s32.totalorder %s34, 1
      %p349 = por %p347, %p348
      %p350 = scmp.ne.s32.totalorder %s342, %s345
      %p351 = scmp.eq.s32.totalorder %s34, 0
      %p352 = por %p350, %p351
      %p353 = scmp.ne.s32.totalorder %s342, %s345
      %p354 = scmp.eq.s32.totalorder %s39, 1
      %p355 = por %p353, %p354
      %p356 = scmp.ne.s32.totalorder %s345, %s346
      %p357 = scmp.eq.s32.totalorder %s39, 0
      %p358 = por %p356, %p357
      %p359 = scmp.ne.s32.totalorder %s345, %s346
      %p360 = scmp.eq.s32.totalorder %s40, 1
      %p361 = por %p359, %p360
      %p363 = scmp.ne.s32.totalorder %s346, %s362
      %p364 = scmp.eq.s32.totalorder %s40, 0
      %p365 = por %p363, %p364
      %s366 = ssub.s32 %s34, %s41
      %p367 = scmp.eq.s32.totalorder %s366, 0
      %s369 = sadd.s32 %s368, 1
      %s370 = scalar_select %p367, %s368, %s369
      %p373 = pneg %p367
      %p374 = scmp.eq.s32.totalorder %s34, 1
      %p375 = por %p373, %p374
      %p376 = scmp.ne.s32.totalorder %s368, %s371
      %p377 = scmp.eq.s32.totalorder %s34, 0
      %p378 = por %p376, %p377
      %p379 = scmp.ne.s32.totalorder %s368, %s371
      %p380 = scmp.eq.s32.totalorder %s39, 1
      %p381 = por %p379, %p380
      %p382 = scmp.ne.s32.totalorder %s371, %s372
      %p383 = scmp.eq.s32.totalorder %s39, 0
      %p384 = por %p382, %p383
      %p385 = scmp.ne.s32.totalorder %s371, %s372
      %p386 = scmp.eq.s32.totalorder %s40, 1
      %p387 = por %p385, %p386
      %p389 = scmp.ne.s32.totalorder %s372, %s388
      %p390 = scmp.eq.s32.totalorder %s40, 0
      %p391 = por %p389, %p390
      %p392 = scmp.le.s32.totalorder 1, %s34
      %p393 = scmp.lt.s32.totalorder %s34, 3
      %p394 = pnand %p392, %p393
      %p395 = pneg %p394
      // Predicated region
      $region9: #{decoder_layer.1} parent=5 // pred_check
        _
      $region10: #{decoder_layer.1} parent=5 // pred_check_branch
        %397 = sbr.rel (%p394) target = $region12
      $region11: #{decoder_layer.1} parent=5 // pred_region
        %s398 = ssub.s32 %s34, 1
        // Predicated region
        $region13: #{decoder_layer.1} parent=11 // pred_check
          %p399 = pneg %p159
        $region14: #{decoder_layer.1} parent=11 // pred_check_branch
          %401 = sbr.rel (%p399) target = $region16
        $region15: #{decoder_layer.1} parent=11 // pred_region
          %s403 = ssub.s32 16384, 16384
          %404 = vsyncadd [#allocation7], %s403
          %s405 = sshll.u32 [#allocation8], 4
          %s406 = int_to_ptr.vmem [resolvable:$true] %s405
          %411 = dma.hbm_to_vmem [thread:$0]  %s4, 16384, %s406, [#allocation7], 256, 256, 16
        $region16: #{decoder_layer.1} parent=11 // pred_fallthru
          _
        // Predicated region
        $region17: #{decoder_layer.1} parent=11 // pred_check
          %p412 = pneg %p180
        $region18: #{decoder_layer.1} parent=11 // pred_check_branch
          %414 = sbr.rel (%p412) target = $region20
        $region19: #{decoder_layer.1} parent=11 // pred_region
          %s416 = ssub.s32 16384, 16384
          %417 = vsyncadd [#allocation10], %s416
          %s418 = sshll.u32 [#allocation9], 4
          %s419 = int_to_ptr.vmem [resolvable:$true] %s418
          %424 = dma.hbm_to_vmem [thread:$0]  %s5, 16384, %s419, [#allocation10], 256, 256, 16
        $region20: #{decoder_layer.1} parent=11 // pred_fallthru
          _
        // Predicated region
        $region21: #{decoder_layer.1} parent=11 // pred_check
          %p425 = pneg %p201
        $region22: #{decoder_layer.1} parent=11 // pred_check_branch
          %427 = sbr.rel (%p425) target = $region24
        $region23: #{decoder_layer.1} parent=11 // pred_region
          %s429 = ssub.s32 16384, 16384
          %430 = vsyncadd [#allocation10], %s429
          %s431 = sshll.u32 [#allocation11], 4
          %s432 = int_to_ptr.vmem [resolvable:$true] %s431
          %437 = dma.hbm_to_vmem [thread:$0]  %s6, 16384, %s432, [#allocation10], 256, 256, 16
        $region24: #{decoder_layer.1} parent=11 // pred_fallthru
          _
        // Predicated region
        $region25: #{decoder_layer.1} parent=11 // pred_check
          %p438 = pneg %p222
        $region26: #{decoder_layer.1} parent=11 // pred_check_branch
          %440 = sbr.rel (%p438) target = $region28
        $region27: #{decoder_layer.1} parent=11 // pred_region
          %s442 = ssub.s32 16384, 16384
          %443 = vsyncadd [#allocation13], %s442
          %s444 = sshll.u32 [#allocation12], 4
          %s445 = int_to_ptr.vmem [resolvable:$true] %s444
          %450 = dma.hbm_to_vmem [thread:$0]  %s7, 16384, %s445, [#allocation13], 256, 256, 16
        $region28: #{decoder_layer.1} parent=11 // pred_fallthru
          _
        // Predicated region
        $region29: #{decoder_layer.1} parent=11 // pred_check
          %p451 = pneg %p243
        $region30: #{decoder_layer.1} parent=11 // pred_check_branch
          %453 = sbr.rel (%p451) target = $region32
        $region31: #{decoder_layer.1} parent=11 // pred_region
          %s455 = ssub.s32 16384, 16384
          %456 = vsyncadd [#allocation13], %s455
          %s457 = sshll.u32 [#allocation14], 4
          %s458 = int_to_ptr.vmem [resolvable:$true] %s457
          %463 = dma.hbm_to_vmem [thread:$0]  %s8, 16384, %s458, [#allocation13], 256, 256, 16
        $region32: #{decoder_layer.1} parent=11 // pred_fallthru
          _
        // Predicated region
        $region33: #{decoder_layer.1} parent=11 // pred_check
          %p464 = pneg %p264
        $region34: #{decoder_layer.1} parent=11 // pred_check_branch
          %466 = sbr.rel (%p464) target = $region36
        $region35: #{decoder_layer.1} parent=11 // pred_region
          %s468 = ssub.s32 16384, 16384
          %469 = vsyncadd [#allocation16], %s468
          %s470 = sshll.u32 [#allocation15], 4
          %s471 = int_to_ptr.vmem [resolvable:$true] %s470
          %476 = dma.hbm_to_vmem [thread:$0]  %s9, 16384, %s471, [#allocation16], 256, 256, 16
        $region36: #{decoder_layer.1} parent=11 // pred_fallthru
          _
        // Predicated region
        $region37: #{decoder_layer.1} parent=11 // pred_check
          %p477 = pneg %p285
        $region38: #{decoder_layer.1} parent=11 // pred_check_branch
          %479 = sbr.rel (%p477) target = $region40
        $region39: #{decoder_layer.1} parent=11 // pred_region
          %s481 = ssub.s32 16384, 16384
          %482 = vsyncadd [#allocation16], %s481
          %s483 = sshll.u32 [#allocation17], 4
          %s484 = int_to_ptr.vmem [resolvable:$true] %s483
          %489 = dma.hbm_to_vmem [thread:$0]  %s10, 16384, %s484, [#allocation16], 256, 256, 16
        $region40: #{decoder_layer.1} parent=11 // pred_fallthru
          _
        // Predicated region
        $region41: #{decoder_layer.1} parent=11 // pred_check
          %p490 = pneg %p306
        $region42: #{decoder_layer.1} parent=11 // pred_check_branch
          %492 = sbr.rel (%p490) target = $region44
        $region43: #{decoder_layer.1} parent=11 // pred_region
          %s494 = ssub.s32 16384, 16384
          %495 = vsyncadd [#allocation19], %s494
          %s496 = sshll.u32 [#allocation18], 4
          %s497 = int_to_ptr.vmem [resolvable:$true] %s496
          %502 = dma.hbm_to_vmem [thread:$0]  %s11, 16384, %s497, [#allocation19], 256, 256, 16
        $region44: #{decoder_layer.1} parent=11 // pred_fallthru
          _
      $region12: #{decoder_layer.1} parent=5 // pred_fallthru
        _
      %p503 = scmp.lt.s32.totalorder %s34, 2
      // Predicated region
      $region45: #{decoder_layer.1} parent=5 // pred_check
        %p504 = pneg %p503
      $region46: #{decoder_layer.1} parent=5 // pred_check_branch
        %506 = sbr.rel (%p504) target = $region48
      $region47: #{decoder_layer.1} parent=5 // pred_region
        // Predicated region
        $region49: #{decoder_layer.1} parent=47 // pred_check
          %p507 = pneg %p54
        $region50: #{decoder_layer.1} parent=47 // pred_check_branch
          %509 = sbr.rel (%p507) target = $region52
        $region51: #{decoder_layer.1} parent=47 // pred_region
          %s510 = sand.u32 %s44, 1
          %s511 = scalar_lea.sflag [#allocation4], %s510
          %s512 = sand.u32 %s44, 1
          %s513 = smul.addr %s512, 32
          %s514 = scalar_lea.vmem [#allocation3], %s513
          %s516 = ssub.s32 512, 512
          %517 = vsyncadd %s511, %s516
          %s518 = smul.addr %s34, 4
          %s519 = smul.addr %s518, 128
          %s520 = scalar_lea.hbm %s0, %s519
          %s522 = sshll.u32 %s514, 4
          %s523 = int_to_ptr.vmem [resolvable:$true] %s522
          %525 = dma.hbm_to_vmem [thread:$0]  %s520, 512, %s523, %s511
        $region52: #{decoder_layer.1} parent=47 // pred_fallthru
          _
        // Predicated region
        $region53: #{decoder_layer.1} parent=47 // pred_check
          %p526 = pneg %p80
        $region54: #{decoder_layer.1} parent=47 // pred_check_branch
          %528 = sbr.rel (%p526) target = $region56
        $region55: #{decoder_layer.1} parent=47 // pred_region
          %s529 = sand.u32 %s34, 1
          %s530 = scalar_lea.sflag [#allocation7], %s529
          %s531 = sand.u32 %s70, 1
          %s532 = smul.addr %s531, 64
          %s533 = scalar_lea.vmem [#allocation6], %s532
          %s535 = ssub.s32 1024, 1024
          %536 = vsyncadd %s530, %s535
          %s537 = smul.addr %s34, 8
          %s538 = smul.addr %s537, 128
          %s539 = scalar_lea.hbm %s1, %s538
          %s540 = sshll.u32 %s533, 4
          %s541 = int_to_ptr.vmem [resolvable:$true] %s540
          %546 = dma.hbm_to_vmem [thread:$0]  %s539, 1024, %s541, %s530, 512, 512, 32
        $region56: #{decoder_layer.1} parent=47 // pred_fallthru
          _
        // Predicated region
        $region57: #{decoder_layer.1} parent=47 // pred_check
          %p547 = pneg %p106
        $region58: #{decoder_layer.1} parent=47 // pred_check_branch
          %549 = sbr.rel (%p547) target = $region60
        $region59: #{decoder_layer.1} parent=47 // pred_region
          %p550 = scmp.lt.s32.totalorder %s34, 1
          %s551 = scalar_select %p550, %s34, 1
          %s552 = smul.addr %s551, 8
          %s553 = scalar_lea.vmem %s2, %s552
        $region60: #{decoder_layer.1} parent=47 // pred_fallthru
          _
        // Predicated region
        $region61: #{decoder_layer.1} parent=47 // pred_check
          %p554 = pneg %p132
        $region62: #{decoder_layer.1} parent=47 // pred_check_branch
          %556 = sbr.rel (%p554) target = $region64
        $region63: #{decoder_layer.1} parent=47 // pred_region
          %p557 = scmp.lt.s32.totalorder %s34, 1
          %s558 = scalar_select %p557, %s34, 1
          %s559 = smul.addr %s558, 8
          %s560 = scalar_lea.vmem %s3, %s559
        $region64: #{decoder_layer.1} parent=47 // pred_fallthru
          _
      $region48: #{decoder_layer.1} parent=5 // pred_fallthru
        _
      %p561 = scmp.le.s32.totalorder 1, %s34
      %p562 = scmp.lt.s32.totalorder %s34, 3
      %p563 = pnand %p561, %p562
      %p564 = pneg %p563
      // Predicated region
      $region65: #{decoder_layer.1} parent=5 // pred_check
        _
      $region66: #{decoder_layer.1} parent=5 // pred_check_branch
        %566 = sbr.rel (%p563) target = $region68
      $region67: #{decoder_layer.1} parent=5 // pred_region
        %s567 = ssub.s32 %s34, 1
        %s568 = sand.u32 %s47, 1
        %s569 = scalar_lea.sflag [#allocation4], %s568
        %s570 = sand.u32 %s47, 1
        %s571 = smul.addr %s570, 32
        %s572 = scalar_lea.vmem [#allocation3], %s571
        // Predicated region
        $region69: #{decoder_layer.1} parent=67 // pred_check
          %p573 = pneg %p60
        $region70: #{decoder_layer.1} parent=67 // pred_check_branch
          %575 = sbr.rel (%p573) target = $region72
        $region71: #{decoder_layer.1} parent=67 // pred_region
          %576 = dma.done %s569, 512
        $region72: #{decoder_layer.1} parent=67 // pred_fallthru
          _
        %s577 = sand.u32 %s39, 1
        %s578 = scalar_lea.sflag [#allocation7], %s577
        %s579 = sand.u32 %s73, 1
        %s580 = smul.addr %s579, 64
        %s581 = scalar_lea.vmem [#allocation6], %s580
        // Predicated region
        $region73: #{decoder_layer.1} parent=67 // pred_check
          %p582 = pneg %p86
        $region74: #{decoder_layer.1} parent=67 // pred_check_branch
          %584 = sbr.rel (%p582) target = $region76
        $region75: #{decoder_layer.1} parent=67 // pred_region
          %585 = dma.done %s578, 1024
        $region76: #{decoder_layer.1} parent=67 // pred_fallthru
          _
        // Predicated region
        $region77: #{decoder_layer.1} parent=67 // pred_check
          %p586 = pneg %p159
        $region78: #{decoder_layer.1} parent=67 // pred_check_branch
          %588 = sbr.rel (%p586) target = $region80
        $region79: #{decoder_layer.1} parent=67 // pred_region
          %589 = dma.done [#allocation7], 16384
        $region80: #{decoder_layer.1} parent=67 // pred_fallthru
          _
        // Predicated region
        $region81: #{decoder_layer.1} parent=67 // pred_check
          %p590 = pneg %p180
        $region82: #{decoder_layer.1} parent=67 // pred_check_branch
          %592 = sbr.rel (%p590) target = $region84
        $region83: #{decoder_layer.1} parent=67 // pred_region
          %593 = dma.done [#allocation10], 16384
        $region84: #{decoder_layer.1} parent=67 // pred_fallthru
          _
        // Predicated region
        $region85: #{decoder_layer.1} parent=67 // pred_check
          %p594 = pneg %p201
        $region86: #{decoder_layer.1} parent=67 // pred_check_branch
          %596 = sbr.rel (%p594) target = $region88
        $region87: #{decoder_layer.1} parent=67 // pred_region
          %597 = dma.done [#allocation10], 16384
        $region88: #{decoder_layer.1} parent=67 // pred_fallthru
          _
        // Predicated region
        $region89: #{decoder_layer.1} parent=67 // pred_check
          %p598 = pneg %p222
        $region90: #{decoder_layer.1} parent=67 // pred_check_branch
          %600 = sbr.rel (%p598) target = $region92
        $region91: #{decoder_layer.1} parent=67 // pred_region
          %601 = dma.done [#allocation13], 16384
        $region92: #{decoder_layer.1} parent=67 // pred_fallthru
          _
        // Predicated region
        $region93: #{decoder_layer.1} parent=67 // pred_check
          %p602 = pneg %p243
        $region94: #{decoder_layer.1} parent=67 // pred_check_branch
          %604 = sbr.rel (%p602) target = $region96
        $region95: #{decoder_layer.1} parent=67 // pred_region
          %605 = dma.done [#allocation13], 16384
        $region96: #{decoder_layer.1} parent=67 // pred_fallthru
          _
        // Predicated region
        $region97: #{decoder_layer.1} parent=67 // pred_check
          %p606 = pneg %p264
        $region98: #{decoder_layer.1} parent=67 // pred_check_branch
          %608 = sbr.rel (%p606) target = $region100
        $region99: #{decoder_layer.1} parent=67 // pred_region
          %609 = dma.done [#allocation16], 16384
        $region100: #{decoder_layer.1} parent=67 // pred_fallthru
          _
        // Predicated region
        $region101: #{decoder_layer.1} parent=67 // pred_check
          %p610 = pneg %p285
        $region102: #{decoder_layer.1} parent=67 // pred_check_branch
          %612 = sbr.rel (%p610) target = $region104
        $region103: #{decoder_layer.1} parent=67 // pred_region
          %613 = dma.done [#allocation16], 16384
        $region104: #{decoder_layer.1} parent=67 // pred_fallthru
          _
        // Predicated region
        $region105: #{decoder_layer.1} parent=67 // pred_check
          %p614 = pneg %p306
        $region106: #{decoder_layer.1} parent=67 // pred_check_branch
          %616 = sbr.rel (%p614) target = $region108
        $region107: #{decoder_layer.1} parent=67 // pred_region
          %617 = dma.done [#allocation19], 16384
        $region108: #{decoder_layer.1} parent=67 // pred_fallthru
          _
        %s618 = sand.u32 %s47, 1
        %s619 = scalar_lea.sflag [#allocation4], %s618
        %s620 = sand.u32 %s47, 1
        %s621 = smul.addr %s620, 32
        %s622 = scalar_lea.vmem [#allocation3], %s621
        %p623 = pneg %p60
        %p624 = pneg %p57
        %s625 = sand.u32 %s39, 1
        %s626 = scalar_lea.sflag [#allocation7], %s625
        %s627 = sand.u32 %s73, 1
        %s628 = smul.addr %s627, 64
        %s629 = scalar_lea.vmem [#allocation6], %s628
        %p630 = pneg %p86
        %p631 = pneg %p83
        %p632 = scmp.lt.s32.totalorder %s39, 1
        %s633 = scalar_select %p632, %s39, 1
        %s634 = smul.addr %s633, 8
        %s635 = scalar_lea.vmem %s2, %s634
        %p636 = pneg %p112
        %p637 = pneg %p109
        %p638 = scmp.lt.s32.totalorder %s39, 1
        %s639 = scalar_select %p638, %s39, 1
        %s640 = smul.addr %s639, 8
        %s641 = scalar_lea.vmem %s3, %s640
        %p642 = pneg %p138
        %p643 = pneg %p135
        %p644 = pneg %p159
        %p645 = pneg %p156
        %p646 = pneg %p180
        %p647 = pneg %p177
        %p648 = pneg %p201
        %p649 = pneg %p198
        %p650 = pneg %p222
        %p651 = pneg %p219
        %p652 = pneg %p243
        %p653 = pneg %p240
        %p654 = pneg %p264
        %p655 = pneg %p261
        %p656 = pneg %p285
        %p657 = pneg %p282
        %p658 = pneg %p306
        %p659 = pneg %p303
        %p660 = pneg %p332
        %p661 = pneg %p329
        %s662 = sand.u32 %s319, 1
        %s663 = scalar_lea.sflag [#allocation5], %s662
        %s664 = sand.u32 %s319, 1
        %s665 = smul.addr %s664, 32
        %s666 = scalar_lea.vmem [#allocation20], %s665
        %p667 = pneg %p358
        %p668 = pneg %p355
        %p669 = scmp.lt.s32.totalorder %s39, 1
        %s670 = scalar_select %p669, %s39, 1
        %s671 = smul.addr %s670, 8
        %s672 = scalar_lea.vmem %s13, %s671
        %p673 = pneg %p384
        %p674 = pneg %p381
        %p675 = scmp.lt.s32.totalorder %s39, 1
        %s676 = scalar_select %p675, %s39, 1
        %s677 = smul.addr %s676, 8
        %s678 = scalar_lea.vmem %s14, %s677
        %p679 = scmp.lt.s32.totalorder %s39, 1
        %s680 = scalar_select %p679, %s39, 1
        %s681 = smul.addr %s680, 8
        %s682 = scalar_lea.vmem %s2, %s681
        %p683 = scmp.lt.s32.totalorder %s39, 1
        %s684 = scalar_select %p683, %s39, 1
        %s685 = smul.addr %s684, 8
        %s686 = scalar_lea.vmem %s3, %s685
        %p687 = scmp.lt.s32.totalorder %s39, 1
        %s688 = scalar_select %p687, %s39, 1
        %s689 = smul.addr %s688, 8
        %s690 = scalar_lea.vmem %s13, %s689
        %p691 = scmp.lt.s32.totalorder %s39, 1
        %s692 = scalar_select %p691, %s39, 1
        %s693 = smul.addr %s692, 8
        %s694 = scalar_lea.vmem %s14, %s693
        %v696 = vld [vmem:[%s572] sm:$0xff]
        %v697 = vld [vmem:[%s572 + $0x8] sm:$0xff]
        %v698 = vld [vmem:[%s572 + $0x10] sm:$0xff]
        %v699 = vld [vmem:[%s572 + $0x18] sm:$0xff]
        %v700 = vld [vmem:[%s581] sm:$0xff]
        %v701 = vld [vmem:[%s581 + $0x8] sm:$0xff]
        %v702 = vld [vmem:[%s581 + $0x10] sm:$0xff]
        %v703 = vld [vmem:[%s581 + $0x18] sm:$0xff]
        %v704 = vld [vmem:[%s581 + $0x20] sm:$0xff]
        %v705 = vld [vmem:[%s581 + $0x28] sm:$0xff]
        %v706 = vld [vmem:[%s581 + $0x30] sm:$0xff]
        %v707 = vld [vmem:[%s581 + $0x38] sm:$0xff]
        %v708 = vld [vmem:[%s682] sm:$0xff]
        %v709 = vmul.f32 %v708, -1e+09
        %v710 = vld [vmem:[%s686] sm:$0xff]
        %v711 = vmul.f32 %v710, -1e+09
        %v712 = vpack.c.bf16 %v696, %v696
        %v713 = vpack.c.bf16 %v697, %v697
        %v714 = vpack.c.bf16 %v698, %v698
        %v715 = vpack.c.bf16 %v699, %v699
        %v716 = vld [vmem:[#allocation8] sm:$0xff]
        %v717 = vld [vmem:[#allocation8 + $0x8] sm:$0xff]
        %v718 = vld [vmem:[#allocation8 + $0x10] sm:$0xff]
        %v719 = vld [vmem:[#allocation8 + $0x18] sm:$0xff]
        %v720 = vld [vmem:[#allocation8 + $0x20] sm:$0xff]
        %v721 = vld [vmem:[#allocation8 + $0x28] sm:$0xff]
        %v722 = vld [vmem:[#allocation8 + $0x30] sm:$0xff]
        %v723 = vld [vmem:[#allocation8 + $0x38] sm:$0xff]
        %v724 = vld [vmem:[#allocation8 + $0x40] sm:$0xff]
        %v725 = vld [vmem:[#allocation8 + $0x48] sm:$0xff]
        %v726 = vld [vmem:[#allocation8 + $0x50] sm:$0xff]
        %v727 = vld [vmem:[#allocation8 + $0x58] sm:$0xff]
        %v728 = vld [vmem:[#allocation8 + $0x60] sm:$0xff]
        %v729 = vld [vmem:[#allocation8 + $0x68] sm:$0xff]
        %v730 = vld [vmem:[#allocation8 + $0x70] sm:$0xff]
        %v731 = vld [vmem:[#allocation8 + $0x78] sm:$0xff]
        %v732 = vld [vmem:[#allocation8 + $0x80] sm:$0xff]
        %v733 = vld [vmem:[#allocation8 + $0x88] sm:$0xff]
        %v734 = vld [vmem:[#allocation8 + $0x90] sm:$0xff]
        %v735 = vld [vmem:[#allocation8 + $0x98] sm:$0xff]
        %v736 = vld [vmem:[#allocation8 + $0xa0] sm:$0xff]
        %v737 = vld [vmem:[#allocation8 + $0xa8] sm:$0xff]
        %v738 = vld [vmem:[#allocation8 + $0xb0] sm:$0xff]
        %v739 = vld [vmem:[#allocation8 + $0xb8] sm:$0xff]
        %v740 = vld [vmem:[#allocation8 + $0xc0] sm:$0xff]
        %v741 = vld [vmem:[#allocation8 + $0xc8] sm:$0xff]
        %v742 = vld [vmem:[#allocation8 + $0xd0] sm:$0xff]
        %v743 = vld [vmem:[#allocation8 + $0xd8] sm:$0xff]
        %v744 = vld [vmem:[#allocation8 + $0xe0] sm:$0xff]
        %v745 = vld [vmem:[#allocation8 + $0xe8] sm:$0xff]
        %v746 = vld [vmem:[#allocation8 + $0xf0] sm:$0xff]
        %v747 = vld [vmem:[#allocation8 + $0xf8] sm:$0xff]
        %v748 = vld [vmem:[#allocation8 + $0x100] sm:$0xff]
        %v749 = vld [vmem:[#allocation8 + $0x108] sm:$0xff]
        %v750 = vld [vmem:[#allocation8 + $0x110] sm:$0xff]
        %v751 = vld [vmem:[#allocation8 + $0x118] sm:$0xff]
        %v752 = vld [vmem:[#allocation8 + $0x120] sm:$0xff]
        %v753 = vld [vmem:[#allocation8 + $0x128] sm:$0xff]
        %v754 = vld [vmem:[#allocation8 + $0x130] sm:$0xff]
        %v755 = vld [vmem:[#allocation8 + $0x138] sm:$0xff]
        %v756 = vld [vmem:[#allocation8 + $0x140] sm:$0xff]
        %v757 = vld [vmem:[#allocation8 + $0x148] sm:$0xff]
        %v758 = vld [vmem:[#allocation8 + $0x150] sm:$0xff]
        %v759 = vld [vmem:[#allocation8 + $0x158] sm:$0xff]
        %v760 = vld [vmem:[#allocation8 + $0x160] sm:$0xff]
        %v761 = vld [vmem:[#allocation8 + $0x168] sm:$0xff]
        %v762 = vld [vmem:[#allocation8 + $0x170] sm:$0xff]
        %v763 = vld [vmem:[#allocation8 + $0x178] sm:$0xff]
        %v764 = vld [vmem:[#allocation8 + $0x180] sm:$0xff]
        %v765 = vld [vmem:[#allocation8 + $0x188] sm:$0xff]
        %v766 = vld [vmem:[#allocation8 + $0x190] sm:$0xff]
        %v767 = vld [vmem:[#allocation8 + $0x198] sm:$0xff]
        %v768 = vld [vmem:[#allocation8 + $0x1a0] sm:$0xff]
        %v769 = vld [vmem:[#allocation8 + $0x1a8] sm:$0xff]
        %v770 = vld [vmem:[#allocation8 + $0x1b0] sm:$0xff]
        %v771 = vld [vmem:[#allocation8 + $0x1b8] sm:$0xff]
        %v772 = vld [vmem:[#allocation8 + $0x1c0] sm:$0xff]
        %v773 = vld [vmem:[#allocation8 + $0x1c8] sm:$0xff]
        %v774 = vld [vmem:[#allocation8 + $0x1d0] sm:$0xff]
        %v775 = vld [vmem:[#allocation8 + $0x1d8] sm:$0xff]
        %v776 = vld [vmem:[#allocation8 + $0x1e0] sm:$0xff]
        %v777 = vld [vmem:[#allocation8 + $0x1e8] sm:$0xff]
        %v778 = vld [vmem:[#allocation8 + $0x1f0] sm:$0xff]
        %v779 = vld [vmem:[#allocation8 + $0x1f8] sm:$0xff]
        %v780 = vld [vmem:[#allocation8 + $0x200] sm:$0xff]
        %v781 = vld [vmem:[#allocation8 + $0x208] sm:$0xff]
        %v782 = vld [vmem:[#allocation8 + $0x210] sm:$0xff]
        %v783 = vld [vmem:[#allocation8 + $0x218] sm:$0xff]
        %v784 = vld [vmem:[#allocation8 + $0x220] sm:$0xff]
        %v785 = vld [vmem:[#allocation8 + $0x228] sm:$0xff]
        %v786 = vld [vmem:[#allocation8 + $0x230] sm:$0xff]
        %v787 = vld [vmem:[#allocation8 + $0x238] sm:$0xff]
        %v788 = vld [vmem:[#allocation8 + $0x240] sm:$0xff]
        %v789 = vld [vmem:[#allocation8 + $0x248] sm:$0xff]
        %v790 = vld [vmem:[#allocation8 + $0x250] sm:$0xff]
        %v791 = vld [vmem:[#allocation8 + $0x258] sm:$0xff]
        %v792 = vld [vmem:[#allocation8 + $0x260] sm:$0xff]
        %v793 = vld [vmem:[#allocation8 + $0x268] sm:$0xff]
        %v794 = vld [vmem:[#allocation8 + $0x270] sm:$0xff]
        %v795 = vld [vmem:[#allocation8 + $0x278] sm:$0xff]
        %v796 = vld [vmem:[#allocation8 + $0x280] sm:$0xff]
        %v797 = vld [vmem:[#allocation8 + $0x288] sm:$0xff]
        %v798 = vld [vmem:[#allocation8 + $0x290] sm:$0xff]
        %v799 = vld [vmem:[#allocation8 + $0x298] sm:$0xff]
        %v800 = vld [vmem:[#allocation8 + $0x2a0] sm:$0xff]
        %v801 = vld [vmem:[#allocation8 + $0x2a8] sm:$0xff]
        %v802 = vld [vmem:[#allocation8 + $0x2b0] sm:$0xff]
        %v803 = vld [vmem:[#allocation8 + $0x2b8] sm:$0xff]
        %v804 = vld [vmem:[#allocation8 + $0x2c0] sm:$0xff]
        %v805 = vld [vmem:[#allocation8 + $0x2c8] sm:$0xff]
        %v806 = vld [vmem:[#allocation8 + $0x2d0] sm:$0xff]
        %v807 = vld [vmem:[#allocation8 + $0x2d8] sm:$0xff]
        %v808 = vld [vmem:[#allocation8 + $0x2e0] sm:$0xff]
        %v809 = vld [vmem:[#allocation8 + $0x2e8] sm:$0xff]
        %v810 = vld [vmem:[#allocation8 + $0x2f0] sm:$0xff]
        %v811 = vld [vmem:[#allocation8 + $0x2f8] sm:$0xff]
        %v812 = vld [vmem:[#allocation8 + $0x300] sm:$0xff]
        %v813 = vld [vmem:[#allocation8 + $0x308] sm:$0xff]
        %v814 = vld [vmem:[#allocation8 + $0x310] sm:$0xff]
        %v815 = vld [vmem:[#allocation8 + $0x318] sm:$0xff]
        %v816 = vld [vmem:[#allocation8 + $0x320] sm:$0xff]
        %v817 = vld [vmem:[#allocation8 + $0x328] sm:$0xff]
        %v818 = vld [vmem:[#allocation8 + $0x330] sm:$0xff]
        %v819 = vld [vmem:[#allocation8 + $0x338] sm:$0xff]
        %v820 = vld [vmem:[#allocation8 + $0x340] sm:$0xff]
        %v821 = vld [vmem:[#allocation8 + $0x348] sm:$0xff]
        %v822 = vld [vmem:[#allocation8 + $0x350] sm:$0xff]
        %v823 = vld [vmem:[#allocation8 + $0x358] sm:$0xff]
        %v824 = vld [vmem:[#allocation8 + $0x360] sm:$0xff]
        %v825 = vld [vmem:[#allocation8 + $0x368] sm:$0xff]
        %v826 = vld [vmem:[#allocation8 + $0x370] sm:$0xff]
        %v827 = vld [vmem:[#allocation8 + $0x378] sm:$0xff]
        %v828 = vld [vmem:[#allocation8 + $0x380] sm:$0xff]
        %v829 = vld [vmem:[#allocation8 + $0x388] sm:$0xff]
        %v830 = vld [vmem:[#allocation8 + $0x390] sm:$0xff]
        %v831 = vld [vmem:[#allocation8 + $0x398] sm:$0xff]
        %v832 = vld [vmem:[#allocation8 + $0x3a0] sm:$0xff]
        %v833 = vld [vmem:[#allocation8 + $0x3a8] sm:$0xff]
        %v834 = vld [vmem:[#allocation8 + $0x3b0] sm:$0xff]
        %v835 = vld [vmem:[#allocation8 + $0x3b8] sm:$0xff]
        %v836 = vld [vmem:[#allocation8 + $0x3c0] sm:$0xff]
        %v837 = vld [vmem:[#allocation8 + $0x3c8] sm:$0xff]
        %v838 = vld [vmem:[#allocation8 + $0x3d0] sm:$0xff]
        %v839 = vld [vmem:[#allocation8 + $0x3d8] sm:$0xff]
        %v840 = vld [vmem:[#allocation8 + $0x3e0] sm:$0xff]
        %v841 = vld [vmem:[#allocation8 + $0x3e8] sm:$0xff]
        %v842 = vld [vmem:[#allocation8 + $0x3f0] sm:$0xff]
        %v843 = vld [vmem:[#allocation8 + $0x3f8] sm:$0xff]
        %v972 = vunpack.c.l.b16 %v716
        %v973 = vunpack.c.h.b16 %v716
        %v974 = vunpack.c.l.b16 %v717
        %v975 = vunpack.c.h.b16 %v717
        %v976 = vunpack.c.l.b16 %v718
        %v977 = vunpack.c.h.b16 %v718
        %v978 = vunpack.c.l.b16 %v719
        %v979 = vunpack.c.h.b16 %v719
        %v980 = vunpack.c.l.b16 %v720
        %v981 = vunpack.c.h.b16 %v720
        %v982 = vunpack.c.l.b16 %v721
        %v983 = vunpack.c.h.b16 %v721
        %v984 = vunpack.c.l.b16 %v722
        %v985 = vunpack.c.h.b16 %v722
        %v986 = vunpack.c.l.b16 %v723
        %v987 = vunpack.c.h.b16 %v723
        %v988 = vunpack.c.l.b16 %v724
        %v989 = vunpack.c.h.b16 %v724
        %v990 = vunpack.c.l.b16 %v725
        %v991 = vunpack.c.h.b16 %v725
        %v992 = vunpack.c.l.b16 %v726
        %v993 = vunpack.c.h.b16 %v726
        %v994 = vunpack.c.l.b16 %v727
        %v995 = vunpack.c.h.b16 %v727
        %v996 = vunpack.c.l.b16 %v728
        %v997 = vunpack.c.h.b16 %v728
        %v998 = vunpack.c.l.b16 %v729
        %v999 = vunpack.c.h.b16 %v729
        %v1000 = vunpack.c.l.b16 %v730
        %v1001 = vunpack.c.h.b16 %v730
        %v1002 = vunpack.c.l.b16 %v731
        %v1003 = vunpack.c.h.b16 %v731
        %v1004 = vunpack.c.l.b16 %v732
        %v1005 = vunpack.c.h.b16 %v732
        %v1006 = vunpack.c.l.b16 %v733
        %v1007 = vunpack.c.h.b16 %v733
        %v1008 = vunpack.c.l.b16 %v734
        %v1009 = vunpack.c.h.b16 %v734
        %v1010 = vunpack.c.l.b16 %v735
        %v1011 = vunpack.c.h.b16 %v735
        %v1012 = vunpack.c.l.b16 %v736
        %v1013 = vunpack.c.h.b16 %v736
        %v1014 = vunpack.c.l.b16 %v737
        %v1015 = vunpack.c.h.b16 %v737
        %v1016 = vunpack.c.l.b16 %v738
        %v1017 = vunpack.c.h.b16 %v738
        %v1018 = vunpack.c.l.b16 %v739
        %v1019 = vunpack.c.h.b16 %v739
        %v1020 = vunpack.c.l.b16 %v740
        %v1021 = vunpack.c.h.b16 %v740
        %v1022 = vunpack.c.l.b16 %v741
        %v1023 = vunpack.c.h.b16 %v741
        %v1024 = vunpack.c.l.b16 %v742
        %v1025 = vunpack.c.h.b16 %v742
        %v1026 = vunpack.c.l.b16 %v743
        %v1027 = vunpack.c.h.b16 %v743
        %v1028 = vunpack.c.l.b16 %v744
        %v1029 = vunpack.c.h.b16 %v744
        %v1030 = vunpack.c.l.b16 %v745
        %v1031 = vunpack.c.h.b16 %v745
        %v1032 = vunpack.c.l.b16 %v746
        %v1033 = vunpack.c.h.b16 %v746
        %v1034 = vunpack.c.l.b16 %v747
        %v1035 = vunpack.c.h.b16 %v747
        %v1036 = vunpack.c.l.b16 %v748
        %v1037 = vunpack.c.h.b16 %v748
        %v1038 = vunpack.c.l.b16 %v749
        %v1039 = vunpack.c.h.b16 %v749
        %v1040 = vunpack.c.l.b16 %v750
        %v1041 = vunpack.c.h.b16 %v750
        %v1042 = vunpack.c.l.b16 %v751
        %v1043 = vunpack.c.h.b16 %v751
        %v1044 = vunpack.c.l.b16 %v752
        %v1045 = vunpack.c.h.b16 %v752
        %v1046 = vunpack.c.l.b16 %v753
        %v1047 = vunpack.c.h.b16 %v753
        %v1048 = vunpack.c.l.b16 %v754
        %v1049 = vunpack.c.h.b16 %v754
        %v1050 = vunpack.c.l.b16 %v755
        %v1051 = vunpack.c.h.b16 %v755
        %v1052 = vunpack.c.l.b16 %v756
        %v1053 = vunpack.c.h.b16 %v756
        %v1054 = vunpack.c.l.b16 %v757
        %v1055 = vunpack.c.h.b16 %v757
        %v1056 = vunpack.c.l.b16 %v758
        %v1057 = vunpack.c.h.b16 %v758
        %v1058 = vunpack.c.l.b16 %v759
        %v1059 = vunpack.c.h.b16 %v759
        %v1060 = vunpack.c.l.b16 %v760
        %v1061 = vunpack.c.h.b16 %v760
        %v1062 = vunpack.c.l.b16 %v761
        %v1063 = vunpack.c.h.b16 %v761
        %v1064 = vunpack.c.l.b16 %v762
        %v1065 = vunpack.c.h.b16 %v762
        %v1066 = vunpack.c.l.b16 %v763
        %v1067 = vunpack.c.h.b16 %v763
        %v1068 = vunpack.c.l.b16 %v764
        %v1069 = vunpack.c.h.b16 %v764
        %v1070 = vunpack.c.l.b16 %v765
        %v1071 = vunpack.c.h.b16 %v765
        %v1072 = vunpack.c.l.b16 %v766
        %v1073 = vunpack.c.h.b16 %v766
        %v1074 = vunpack.c.l.b16 %v767
        %v1075 = vunpack.c.h.b16 %v767
        %v1076 = vunpack.c.l.b16 %v768
        %v1077 = vunpack.c.h.b16 %v768
        %v1078 = vunpack.c.l.b16 %v769
        %v1079 = vunpack.c.h.b16 %v769
        %v1080 = vunpack.c.l.b16 %v770
        %v1081 = vunpack.c.h.b16 %v770
        %v1082 = vunpack.c.l.b16 %v771
        %v1083 = vunpack.c.h.b16 %v771
        %v1084 = vunpack.c.l.b16 %v772
        %v1085 = vunpack.c.h.b16 %v772
        %v1086 = vunpack.c.l.b16 %v773
        %v1087 = vunpack.c.h.b16 %v773
        %v1088 = vunpack.c.l.b16 %v774
        %v1089 = vunpack.c.h.b16 %v774
        %v1090 = vunpack.c.l.b16 %v775
        %v1091 = vunpack.c.h.b16 %v775
        %v1092 = vunpack.c.l.b16 %v776
        %v1093 = vunpack.c.h.b16 %v776
        %v1094 = vunpack.c.l.b16 %v777
        %v1095 = vunpack.c.h.b16 %v777
        %v1096 = vunpack.c.l.b16 %v778
        %v1097 = vunpack.c.h.b16 %v778
        %v1098 = vunpack.c.l.b16 %v779
        %v1099 = vunpack.c.h.b16 %v779
        %v1100 = vunpack.c.l.b16 %v780
        %v1101 = vunpack.c.h.b16 %v780
        %v1102 = vunpack.c.l.b16 %v781
        %v1103 = vunpack.c.h.b16 %v781
        %v1104 = vunpack.c.l.b16 %v782
        %v1105 = vunpack.c.h.b16 %v782
        %v1106 = vunpack.c.l.b16 %v783
        %v1107 = vunpack.c.h.b16 %v783
        %v1108 = vunpack.c.l.b16 %v784
        %v1109 = vunpack.c.h.b16 %v784
        %v1110 = vunpack.c.l.b16 %v785
        %v1111 = vunpack.c.h.b16 %v785
        %v1112 = vunpack.c.l.b16 %v786
        %v1113 = vunpack.c.h.b16 %v786
        %v1114 = vunpack.c.l.b16 %v787
        %v1115 = vunpack.c.h.b16 %v787
        %v1116 = vunpack.c.l.b16 %v788
        %v1117 = vunpack.c.h.b16 %v788
        %v1118 = vunpack.c.l.b16 %v789
        %v1119 = vunpack.c.h.b16 %v789
        %v1120 = vunpack.c.l.b16 %v790
        %v1121 = vunpack.c.h.b16 %v790
        %v1122 = vunpack.c.l.b16 %v791
        %v1123 = vunpack.c.h.b16 %v791
        %v1124 = vunpack.c.l.b16 %v792
        %v1125 = vunpack.c.h.b16 %v792
        %v1126 = vunpack.c.l.b16 %v793
        %v1127 = vunpack.c.h.b16 %v793
        %v1128 = vunpack.c.l.b16 %v794
        %v1129 = vunpack.c.h.b16 %v794
        %v1130 = vunpack.c.l.b16 %v795
        %v1131 = vunpack.c.h.b16 %v795
        %v1132 = vunpack.c.l.b16 %v796
        %v1133 = vunpack.c.h.b16 %v796
        %v1134 = vunpack.c.l.b16 %v797
        %v1135 = vunpack.c.h.b16 %v797
        %v1136 = vunpack.c.l.b16 %v798
        %v1137 = vunpack.c.h.b16 %v798
        %v1138 = vunpack.c.l.b16 %v799
        %v1139 = vunpack.c.h.b16 %v799
        %v1140 = vunpack.c.l.b16 %v800
        %v1141 = vunpack.c.h.b16 %v800
        %v1142 = vunpack.c.l.b16 %v801
        %v1143 = vunpack.c.h.b16 %v801
        %v1144 = vunpack.c.l.b16 %v802
        %v1145 = vunpack.c.h.b16 %v802
        %v1146 = vunpack.c.l.b16 %v803
        %v1147 = vunpack.c.h.b16 %v803
        %v1148 = vunpack.c.l.b16 %v804
        %v1149 = vunpack.c.h.b16 %v804
        %v1150 = vunpack.c.l.b16 %v805
        %v1151 = vunpack.c.h.b16 %v805
        %v1152 = vunpack.c.l.b16 %v806
        %v1153 = vunpack.c.h.b16 %v806
        %v1154 = vunpack.c.l.b16 %v807
        %v1155 = vunpack.c.h.b16 %v807
        %v1156 = vunpack.c.l.b16 %v808
        %v1157 = vunpack.c.h.b16 %v808
        %v1158 = vunpack.c.l.b16 %v809
        %v1159 = vunpack.c.h.b16 %v809
        %v1160 = vunpack.c.l.b16 %v810
        %v1161 = vunpack.c.h.b16 %v810
        %v1162 = vunpack.c.l.b16 %v811
        %v1163 = vunpack.c.h.b16 %v811
        %v1164 = vunpack.c.l.b16 %v812
        %v1165 = vunpack.c.h.b16 %v812
        %v1166 = vunpack.c.l.b16 %v813
        %v1167 = vunpack.c.h.b16 %v813
        %v1168 = vunpack.c.l.b16 %v814
        %v1169 = vunpack.c.h.b16 %v814
        %v1170 = vunpack.c.l.b16 %v815
        %v1171 = vunpack.c.h.b16 %v815
        %v1172 = vunpack.c.l.b16 %v816
        %v1173 = vunpack.c.h.b16 %v816
        %v1174 = vunpack.c.l.b16 %v817
        %v1175 = vunpack.c.h.b16 %v817
        %v1176 = vunpack.c.l.b16 %v818
        %v1177 = vunpack.c.h.b16 %v818
        %v1178 = vunpack.c.l.b16 %v819
        %v1179 = vunpack.c.h.b16 %v819
        %v1180 = vunpack.c.l.b16 %v820
        %v1181 = vunpack.c.h.b16 %v820
        %v1182 = vunpack.c.l.b16 %v821
        %v1183 = vunpack.c.h.b16 %v821
        %v1184 = vunpack.c.l.b16 %v822
        %v1185 = vunpack.c.h.b16 %v822
        %v1186 = vunpack.c.l.b16 %v823
        %v1187 = vunpack.c.h.b16 %v823
        %v1188 = vunpack.c.l.b16 %v824
        %v1189 = vunpack.c.h.b16 %v824
        %v1190 = vunpack.c.l.b16 %v825
        %v1191 = vunpack.c.h.b16 %v825
        %v1192 = vunpack.c.l.b16 %v826
        %v1193 = vunpack.c.h.b16 %v826
        %v1194 = vunpack.c.l.b16 %v827
        %v1195 = vunpack.c.h.b16 %v827
        %v1196 = vunpack.c.l.b16 %v828
        %v1197 = vunpack.c.h.b16 %v828
        %v1198 = vunpack.c.l.b16 %v829
        %v1199 = vunpack.c.h.b16 %v829
        %v1200 = vunpack.c.l.b16 %v830
        %v1201 = vunpack.c.h.b16 %v830
        %v1202 = vunpack.c.l.b16 %v831
        %v1203 = vunpack.c.h.b16 %v831
        %v1204 = vunpack.c.l.b16 %v832
        %v1205 = vunpack.c.h.b16 %v832
        %v1206 = vunpack.c.l.b16 %v833
        %v1207 = vunpack.c.h.b16 %v833
        %v1208 = vunpack.c.l.b16 %v834
        %v1209 = vunpack.c.h.b16 %v834
        %v1210 = vunpack.c.l.b16 %v835
        %v1211 = vunpack.c.h.b16 %v835
        %v1212 = vunpack.c.l.b16 %v836
        %v1213 = vunpack.c.h.b16 %v836
        %v1214 = vunpack.c.l.b16 %v837
        %v1215 = vunpack.c.h.b16 %v837
        %v1216 = vunpack.c.l.b16 %v838
        %v1217 = vunpack.c.h.b16 %v838
        %v1218 = vunpack.c.l.b16 %v839
        %v1219 = vunpack.c.h.b16 %v839
        %v1220 = vunpack.c.l.b16 %v840
        %v1221 = vunpack.c.h.b16 %v840
        %v1222 = vunpack.c.l.b16 %v841
        %v1223 = vunpack.c.h.b16 %v841
        %v1224 = vunpack.c.l.b16 %v842
        %v1225 = vunpack.c.h.b16 %v842
        %v1226 = vunpack.c.l.b16 %v843
        %v1227 = vunpack.c.h.b16 %v843
        %v1228 = vpack.c.b16 %v976, %v972
        %v1229 = vpack.c.b16 %v977, %v973
        %v1230 = vpack.c.b16 %v978, %v974
        %v1231 = vpack.c.b16 %v979, %v975
        %v1232 = vpack.c.b16 %v984, %v980
        %v1233 = vpack.c.b16 %v985, %v981
        %v1234 = vpack.c.b16 %v986, %v982
        %v1235 = vpack.c.b16 %v987, %v983
        %v1236 = vpack.c.b16 %v992, %v988
        %v1237 = vpack.c.b16 %v993, %v989
        %v1238 = vpack.c.b16 %v994, %v990
        %v1239 = vpack.c.b16 %v995, %v991
        %v1240 = vpack.c.b16 %v1000, %v996
        %v1241 = vpack.c.b16 %v1001, %v997
        %v1242 = vpack.c.b16 %v1002, %v998
        %v1243 = vpack.c.b16 %v1003, %v999
        %v1244 = vpack.c.b16 %v1008, %v1004
        %v1245 = vpack.c.b16 %v1009, %v1005
        %v1246 = vpack.c.b16 %v1010, %v1006
        %v1247 = vpack.c.b16 %v1011, %v1007
        %v1248 = vpack.c.b16 %v1016, %v1012
        %v1249 = vpack.c.b16 %v1017, %v1013
        %v1250 = vpack.c.b16 %v1018, %v1014
        %v1251 = vpack.c.b16 %v1019, %v1015
        %v1252 = vpack.c.b16 %v1024, %v1020
        %v1253 = vpack.c.b16 %v1025, %v1021
        %v1254 = vpack.c.b16 %v1026, %v1022
        %v1255 = vpack.c.b16 %v1027, %v1023
        %v1256 = vpack.c.b16 %v1032, %v1028
        %v1257 = vpack.c.b16 %v1033, %v1029
        %v1258 = vpack.c.b16 %v1034, %v1030
        %v1259 = vpack.c.b16 %v1035, %v1031
        %v1260 = vpack.c.b16 %v1040, %v1036
        %v1261 = vpack.c.b16 %v1041, %v1037
        %v1262 = vpack.c.b16 %v1042, %v1038
        %v1263 = vpack.c.b16 %v1043, %v1039
        %v1264 = vpack.c.b16 %v1048, %v1044
        %v1265 = vpack.c.b16 %v1049, %v1045
        %v1266 = vpack.c.b16 %v1050, %v1046
        %v1267 = vpack.c.b16 %v1051, %v1047
        %v1268 = vpack.c.b16 %v1056, %v1052
        %v1269 = vpack.c.b16 %v1057, %v1053
        %v1270 = vpack.c.b16 %v1058, %v1054
        %v1271 = vpack.c.b16 %v1059, %v1055
        %v1272 = vpack.c.b16 %v1064, %v1060
        %v1273 = vpack.c.b16 %v1065, %v1061
        %v1274 = vpack.c.b16 %v1066, %v1062
        %v1275 = vpack.c.b16 %v1067, %v1063
        %v1276 = vpack.c.b16 %v1072, %v1068
        %v1277 = vpack.c.b16 %v1073, %v1069
        %v1278 = vpack.c.b16 %v1074, %v1070
        %v1279 = vpack.c.b16 %v1075, %v1071
        %v1280 = vpack.c.b16 %v1080, %v1076
        %v1281 = vpack.c.b16 %v1081, %v1077
        %v1282 = vpack.c.b16 %v1082, %v1078
        %v1283 = vpack.c.b16 %v1083, %v1079
        %v1284 = vpack.c.b16 %v1088, %v1084
        %v1285 = vpack.c.b16 %v1089, %v1085
        %v1286 = vpack.c.b16 %v1090, %v1086
        %v1287 = vpack.c.b16 %v1091, %v1087
        %v1288 = vpack.c.b16 %v1096, %v1092
        %v1289 = vpack.c.b16 %v1097, %v1093
        %v1290 = vpack.c.b16 %v1098, %v1094
        %v1291 = vpack.c.b16 %v1099, %v1095
        %v1292 = vpack.c.b16 %v1104, %v1100
        %v1293 = vpack.c.b16 %v1105, %v1101
        %v1294 = vpack.c.b16 %v1106, %v1102
        %v1295 = vpack.c.b16 %v1107, %v1103
        %v1296 = vpack.c.b16 %v1112, %v1108
        %v1297 = vpack.c.b16 %v1113, %v1109
        %v1298 = vpack.c.b16 %v1114, %v1110
        %v1299 = vpack.c.b16 %v1115, %v1111
        %v1300 = vpack.c.b16 %v1120, %v1116
        %v1301 = vpack.c.b16 %v1121, %v1117
        %v1302 = vpack.c.b16 %v1122, %v1118
        %v1303 = vpack.c.b16 %v1123, %v1119
        %v1304 = vpack.c.b16 %v1128, %v1124
        %v1305 = vpack.c.b16 %v1129, %v1125
        %v1306 = vpack.c.b16 %v1130, %v1126
        %v1307 = vpack.c.b16 %v1131, %v1127
        %v1308 = vpack.c.b16 %v1136, %v1132
        %v1309 = vpack.c.b16 %v1137, %v1133
        %v1310 = vpack.c.b16 %v1138, %v1134
        %v1311 = vpack.c.b16 %v1139, %v1135
        %v1312 = vpack.c.b16 %v1144, %v1140
        %v1313 = vpack.c.b16 %v1145, %v1141
        %v1314 = vpack.c.b16 %v1146, %v1142
        %v1315 = vpack.c.b16 %v1147, %v1143
        %v1316 = vpack.c.b16 %v1152, %v1148
        %v1317 = vpack.c.b16 %v1153, %v1149
        %v1318 = vpack.c.b16 %v1154, %v1150
        %v1319 = vpack.c.b16 %v1155, %v1151
        %v1320 = vpack.c.b16 %v1160, %v1156
        %v1321 = vpack.c.b16 %v1161, %v1157
        %v1322 = vpack.c.b16 %v1162, %v1158
        %v1323 = vpack.c.b16 %v1163, %v1159
        %v1324 = vpack.c.b16 %v1168, %v1164
        %v1325 = vpack.c.b16 %v1169, %v1165
        %v1326 = vpack.c.b16 %v1170, %v1166
        %v1327 = vpack.c.b16 %v1171, %v1167
        %v1328 = vpack.c.b16 %v1176, %v1172
        %v1329 = vpack.c.b16 %v1177, %v1173
        %v1330 = vpack.c.b16 %v1178, %v1174
        %v1331 = vpack.c.b16 %v1179, %v1175
        %v1332 = vpack.c.b16 %v1184, %v1180
        %v1333 = vpack.c.b16 %v1185, %v1181
        %v1334 = vpack.c.b16 %v1186, %v1182
        %v1335 = vpack.c.b16 %v1187, %v1183
        %v1336 = vpack.c.b16 %v1192, %v1188
        %v1337 = vpack.c.b16 %v1193, %v1189
        %v1338 = vpack.c.b16 %v1194, %v1190
        %v1339 = vpack.c.b16 %v1195, %v1191
        %v1340 = vpack.c.b16 %v1200, %v1196
        %v1341 = vpack.c.b16 %v1201, %v1197
        %v1342 = vpack.c.b16 %v1202, %v1198
        %v1343 = vpack.c.b16 %v1203, %v1199
        %v1344 = vpack.c.b16 %v1208, %v1204
        %v1345 = vpack.c.b16 %v1209, %v1205
        %v1346 = vpack.c.b16 %v1210, %v1206
        %v1347 = vpack.c.b16 %v1211, %v1207
        %v1348 = vpack.c.b16 %v1216, %v1212
        %v1349 = vpack.c.b16 %v1217, %v1213
        %v1350 = vpack.c.b16 %v1218, %v1214
        %v1351 = vpack.c.b16 %v1219, %v1215
        %v1352 = vpack.c.b16 %v1224, %v1220
        %v1353 = vpack.c.b16 %v1225, %v1221
        %v1354 = vpack.c.b16 %v1226, %v1222
        %v1355 = vpack.c.b16 %v1227, %v1223
        %1484 = vmatprep.subr.bf16.mxu0 %v1257
        %1485 = vmatpush1.bf16.msra.mxu0 %v1256
        %1486 = vmatprep.subr.bf16.mxu0 %v1253
        %1487 = vmatpush1.bf16.msra.mxu0 %v1252
        %1488 = vmatprep.subr.bf16.mxu0 %v1249
        %1489 = vmatpush1.bf16.msra.mxu0 %v1248
        %1490 = vmatprep.subr.bf16.mxu0 %v1245
        %1491 = vmatpush1.bf16.msra.mxu0 %v1244
        %1492 = vmatprep.subr.bf16.mxu0 %v1241
        %1493 = vmatpush1.bf16.msra.mxu0 %v1240
        %1494 = vmatprep.subr.bf16.mxu0 %v1237
        %1495 = vmatpush1.bf16.msra.mxu0 %v1236
        %1496 = vmatprep.subr.bf16.mxu0 %v1233
        %1497 = vmatpush1.bf16.msra.mxu0 %v1232
        %1498 = vmatprep.subr.bf16.mxu0 %v1229
        %1499 = vmatpush1.bf16.msra.mxu0 %v1228
        %1500 = vmatprep.subr.bf16.mxu0 %v1289
        %1501 = vmatpush2.bf16.msra.mxu0 %v1288
        %1502 = vmatprep.subr.bf16.mxu0 %v1285
        %1503 = vmatpush2.bf16.msra.mxu0 %v1284
        %1504 = vmatprep.subr.bf16.mxu0 %v1281
        %1505 = vmatpush2.bf16.msra.mxu0 %v1280
        %1506 = vmatprep.subr.bf16.mxu0 %v1277
        %1507 = vmatpush2.bf16.msra.mxu0 %v1276
        %1508 = vmatprep.subr.bf16.mxu0 %v1273
        %1509 = vmatpush2.bf16.msra.mxu0 %v1272
        %1510 = vmatprep.subr.bf16.mxu0 %v1269
        %1511 = vmatpush2.bf16.msra.mxu0 %v1268
        %1512 = vmatprep.subr.bf16.mxu0 %v1265
        %1513 = vmatpush2.bf16.msra.mxu0 %v1264
        %1514 = vmatprep.subr.bf16.mxu0 %v1261
        %1515 = vmatpush2.bf16.msra.mxu0 %v1260
        %1516 = vmatprep.mubr.bf16.mxu0 %v713
        %1517 = vmatmul.mubr.bf16.gmra.mxu0 %v712
        %v1518 = vpop.f32.mrf.mxu0
        %v1519 = vadd.f32 0.0, %v1518
        %v1520 = vpop.f32.mrf.mxu0
        %v1521 = vadd.f32 0.0, %v1520
        %v1522 = vpop.f32.mrf.mxu0
        %v1523 = vpop.f32.mrf.mxu0
        %1524 = vdwg.mxu0
        %1525 = vmatprep.subr.bf16.mxu0 %v1321
        %1526 = vmatpush1.bf16.msra.mxu0 %v1320
        %1527 = vmatprep.subr.bf16.mxu0 %v1317
        %1528 = vmatpush1.bf16.msra.mxu0 %v1316
        %1529 = vmatprep.subr.bf16.mxu0 %v1313
        %1530 = vmatpush1.bf16.msra.mxu0 %v1312
        %1531 = vmatprep.subr.bf16.mxu0 %v1309
        %1532 = vmatpush1.bf16.msra.mxu0 %v1308
        %1533 = vmatprep.subr.bf16.mxu0 %v1305
        %1534 = vmatpush1.bf16.msra.mxu0 %v1304
        %1535 = vmatprep.subr.bf16.mxu0 %v1301
        %1536 = vmatpush1.bf16.msra.mxu0 %v1300
        %1537 = vmatprep.subr.bf16.mxu0 %v1297
        %1538 = vmatpush1.bf16.msra.mxu0 %v1296
        %1539 = vmatprep.subr.bf16.mxu0 %v1293
        %1540 = vmatpush1.bf16.msra.mxu0 %v1292
        %1541 = vmatprep.subr.bf16.mxu0 %v1353
        %1542 = vmatpush2.bf16.msra.mxu0 %v1352
        %1543 = vmatprep.subr.bf16.mxu0 %v1349
        %1544 = vmatpush2.bf16.msra.mxu0 %v1348
        %1545 = vmatprep.subr.bf16.mxu0 %v1345
        %1546 = vmatpush2.bf16.msra.mxu0 %v1344
        %1547 = vmatprep.subr.bf16.mxu0 %v1341
        %1548 = vmatpush2.bf16.msra.mxu0 %v1340
        %1549 = vmatprep.subr.bf16.mxu0 %v1337
        %1550 = vmatpush2.bf16.msra.mxu0 %v1336
        %1551 = vmatprep.subr.bf16.mxu0 %v1333
        %1552 = vmatpush2.bf16.msra.mxu0 %v1332
        %1553 = vmatprep.subr.bf16.mxu0 %v1329
        %1554 = vmatpush2.bf16.msra.mxu0 %v1328
        %1555 = vmatprep.subr.bf16.mxu0 %v1325
        %1556 = vmatpush2.bf16.msra.mxu0 %v1324
        %1557 = vmatprep.mubr.bf16.mxu0 %v715
        %1558 = vmatmul.mubr.bf16.gmra.mxu0 %v714
        %v1559 = vpop.f32.mrf.mxu0
        %v1560 = vadd.f32 %v1519, %v1559
        %v1561 = vpop.f32.mrf.mxu0
        %v1562 = vadd.f32 %v1521, %v1561
        %v1563 = vpop.f32.mrf.mxu0
        %v1564 = vpop.f32.mrf.mxu0
        %1565 = vdwg.mxu0
        %1566 = vmatprep.subr.bf16.mxu0 %v1259
        %1567 = vmatpush1.bf16.msra.mxu0 %v1258
        %1568 = vmatprep.subr.bf16.mxu0 %v1255
        %1569 = vmatpush1.bf16.msra.mxu0 %v1254
        %1570 = vmatprep.subr.bf16.mxu0 %v1251
        %1571 = vmatpush1.bf16.msra.mxu0 %v1250
        %1572 = vmatprep.subr.bf16.mxu0 %v1247
        %1573 = vmatpush1.bf16.msra.mxu0 %v1246
        %1574 = vmatprep.subr.bf16.mxu0 %v1243
        %1575 = vmatpush1.bf16.msra.mxu0 %v1242
        %1576 = vmatprep.subr.bf16.mxu0 %v1239
        %1577 = vmatpush1.bf16.msra.mxu0 %v1238
        %1578 = vmatprep.subr.bf16.mxu0 %v1235
        %1579 = vmatpush1.bf16.msra.mxu0 %v1234
        %1580 = vmatprep.subr.bf16.mxu0 %v1231
        %1581 = vmatpush1.bf16.msra.mxu0 %v1230
        %1582 = vmatprep.subr.bf16.mxu0 %v1291
        %1583 = vmatpush2.bf16.msra.mxu0 %v1290
        %1584 = vmatprep.subr.bf16.mxu0 %v1287
        %1585 = vmatpush2.bf16.msra.mxu0 %v1286
        %1586 = vmatprep.subr.bf16.mxu0 %v1283
        %1587 = vmatpush2.bf16.msra.mxu0 %v1282
        %1588 = vmatprep.subr.bf16.mxu0 %v1279
        %1589 = vmatpush2.bf16.msra.mxu0 %v1278
        %1590 = vmatprep.subr.bf16.mxu0 %v1275
        %1591 = vmatpush2.bf16.msra.mxu0 %v1274
        %1592 = vmatprep.subr.bf16.mxu0 %v1271
        %1593 = vmatpush2.bf16.msra.mxu0 %v1270
        %1594 = vmatprep.subr.bf16.mxu0 %v1267
        %1595 = vmatpush2.bf16.msra.mxu0 %v1266
        %1596 = vmatprep.subr.bf16.mxu0 %v1263
        %1597 = vmatpush2.bf16.msra.mxu0 %v1262
        %1598 = vmatprep.mubr.bf16.mxu0 %v713
        %1599 = vmatmul.mubr.bf16.gmra.mxu0 %v712
        %v1600 = vpop.f32.mrf.mxu0
        %v1601 = vadd.f32 0.0, %v1600
        %v1602 = vpop.f32.mrf.mxu0
        %v1603 = vadd.f32 0.0, %v1602
        %v1604 = vpop.f32.mrf.mxu0
        %v1605 = vpop.f32.mrf.mxu0
        %1606 = vdwg.mxu0
        %1607 = vmatprep.subr.bf16.mxu0 %v1323
        %1608 = vmatpush1.bf16.msra.mxu0 %v1322
        %1609 = vmatprep.subr.bf16.mxu0 %v1319
        %1610 = vmatpush1.bf16.msra.mxu0 %v1318
        %1611 = vmatprep.subr.bf16.mxu0 %v1315
        %1612 = vmatpush1.bf16.msra.mxu0 %v1314
        %1613 = vmatprep.subr.bf16.mxu0 %v1311
        %1614 = vmatpush1.bf16.msra.mxu0 %v1310
        %1615 = vmatprep.subr.bf16.mxu0 %v1307
        %1616 = vmatpush1.bf16.msra.mxu0 %v1306
        %1617 = vmatprep.subr.bf16.mxu0 %v1303
        %1618 = vmatpush1.bf16.msra.mxu0 %v1302
        %1619 = vmatprep.subr.bf16.mxu0 %v1299
        %1620 = vmatpush1.bf16.msra.mxu0 %v1298
        %1621 = vmatprep.subr.bf16.mxu0 %v1295
        %1622 = vmatpush1.bf16.msra.mxu0 %v1294
        %1623 = vmatprep.subr.bf16.mxu0 %v1355
        %1624 = vmatpush2.bf16.msra.mxu0 %v1354
        %1625 = vmatprep.subr.bf16.mxu0 %v1351
        %1626 = vmatpush2.bf16.msra.mxu0 %v1350
        %1627 = vmatprep.subr.bf16.mxu0 %v1347
        %1628 = vmatpush2.bf16.msra.mxu0 %v1346
        %1629 = vmatprep.subr.bf16.mxu0 %v1343
        %1630 = vmatpush2.bf16.msra.mxu0 %v1342
        %1631 = vmatprep.subr.bf16.mxu0 %v1339
        %1632 = vmatpush2.bf16.msra.mxu0 %v1338
        %1633 = vmatprep.subr.bf16.mxu0 %v1335
        %1634 = vmatpush2.bf16.msra.mxu0 %v1334
        %1635 = vmatprep.subr.bf16.mxu0 %v1331
        %1636 = vmatpush2.bf16.msra.mxu0 %v1330
        %1637 = vmatprep.subr.bf16.mxu0 %v1327
        %1638 = vmatpush2.bf16.msra.mxu0 %v1326
        %1639 = vmatprep.mubr.bf16.mxu0 %v715
        %1640 = vmatmul.mubr.bf16.gmra.mxu0 %v714
        %v1641 = vpop.f32.mrf.mxu0
        %v1642 = vadd.f32 %v1601, %v1641
        %v1643 = vpop.f32.mrf.mxu0
        %v1644 = vadd.f32 %v1603, %v1643
        %v1645 = vpop.f32.mrf.mxu0
        %v1646 = vpop.f32.mrf.mxu0
        %1647 = vdwg.mxu0
        %v1648 = vld [vmem:[#allocation9] sm:$0xff]
        %v1649 = vld [vmem:[#allocation9 + $0x8] sm:$0xff]
        %v1650 = vld [vmem:[#allocation9 + $0x10] sm:$0xff]
        %v1651 = vld [vmem:[#allocation9 + $0x18] sm:$0xff]
        %v1652 = vld [vmem:[#allocation9 + $0x20] sm:$0xff]
        %v1653 = vld [vmem:[#allocation9 + $0x28] sm:$0xff]
        %v1654 = vld [vmem:[#allocation9 + $0x30] sm:$0xff]
        %v1655 = vld [vmem:[#allocation9 + $0x38] sm:$0xff]
        %v1656 = vld [vmem:[#allocation9 + $0x40] sm:$0xff]
        %v1657 = vld [vmem:[#allocation9 + $0x48] sm:$0xff]
        %v1658 = vld [vmem:[#allocation9 + $0x50] sm:$0xff]
        %v1659 = vld [vmem:[#allocation9 + $0x58] sm:$0xff]
        %v1660 = vld [vmem:[#allocation9 + $0x60] sm:$0xff]
        %v1661 = vld [vmem:[#allocation9 + $0x68] sm:$0xff]
        %v1662 = vld [vmem:[#allocation9 + $0x70] sm:$0xff]
        %v1663 = vld [vmem:[#allocation9 + $0x78] sm:$0xff]
        %v1664 = vld [vmem:[#allocation9 + $0x80] sm:$0xff]
        %v1665 = vld [vmem:[#allocation9 + $0x88] sm:$0xff]
        %v1666 = vld [vmem:[#allocation9 + $0x90] sm:$0xff]
        %v1667 = vld [vmem:[#allocation9 + $0x98] sm:$0xff]
        %v1668 = vld [vmem:[#allocation9 + $0xa0] sm:$0xff]
        %v1669 = vld [vmem:[#allocation9 + $0xa8] sm:$0xff]
        %v1670 = vld [vmem:[#allocation9 + $0xb0] sm:$0xff]
        %v1671 = vld [vmem:[#allocation9 + $0xb8] sm:$0xff]
        %v1672 = vld [vmem:[#allocation9 + $0xc0] sm:$0xff]
        %v1673 = vld [vmem:[#allocation9 + $0xc8] sm:$0xff]
        %v1674 = vld [vmem:[#allocation9 + $0xd0] sm:$0xff]
        %v1675 = vld [vmem:[#allocation9 + $0xd8] sm:$0xff]
        %v1676 = vld [vmem:[#allocation9 + $0xe0] sm:$0xff]
        %v1677 = vld [vmem:[#allocation9 + $0xe8] sm:$0xff]
        %v1678 = vld [vmem:[#allocation9 + $0xf0] sm:$0xff]
        %v1679 = vld [vmem:[#allocation9 + $0xf8] sm:$0xff]
        %v1680 = vld [vmem:[#allocation9 + $0x100] sm:$0xff]
        %v1681 = vld [vmem:[#allocation9 + $0x108] sm:$0xff]
        %v1682 = vld [vmem:[#allocation9 + $0x110] sm:$0xff]
        %v1683 = vld [vmem:[#allocation9 + $0x118] sm:$0xff]
        %v1684 = vld [vmem:[#allocation9 + $0x120] sm:$0xff]
        %v1685 = vld [vmem:[#allocation9 + $0x128] sm:$0xff]
        %v1686 = vld [vmem:[#allocation9 + $0x130] sm:$0xff]
        %v1687 = vld [vmem:[#allocation9 + $0x138] sm:$0xff]
        %v1688 = vld [vmem:[#allocation9 + $0x140] sm:$0xff]
        %v1689 = vld [vmem:[#allocation9 + $0x148] sm:$0xff]
        %v1690 = vld [vmem:[#allocation9 + $0x150] sm:$0xff]
        %v1691 = vld [vmem:[#allocation9 + $0x158] sm:$0xff]
        %v1692 = vld [vmem:[#allocation9 + $0x160] sm:$0xff]
        %v1693 = vld [vmem:[#allocation9 + $0x168] sm:$0xff]
        %v1694 = vld [vmem:[#allocation9 + $0x170] sm:$0xff]
        %v1695 = vld [vmem:[#allocation9 + $0x178] sm:$0xff]
        %v1696 = vld [vmem:[#allocation9 + $0x180] sm:$0xff]
        %v1697 = vld [vmem:[#allocation9 + $0x188] sm:$0xff]
        %v1698 = vld [vmem:[#allocation9 + $0x190] sm:$0xff]
        %v1699 = vld [vmem:[#allocation9 + $0x198] sm:$0xff]
        %v1700 = vld [vmem:[#allocation9 + $0x1a0] sm:$0xff]
        %v1701 = vld [vmem:[#allocation9 + $0x1a8] sm:$0xff]
        %v1702 = vld [vmem:[#allocation9 + $0x1b0] sm:$0xff]
        %v1703 = vld [vmem:[#allocation9 + $0x1b8] sm:$0xff]
        %v1704 = vld [vmem:[#allocation9 + $0x1c0] sm:$0xff]
        %v1705 = vld [vmem:[#allocation9 + $0x1c8] sm:$0xff]
        %v1706 = vld [vmem:[#allocation9 + $0x1d0] sm:$0xff]
        %v1707 = vld [vmem:[#allocation9 + $0x1d8] sm:$0xff]
        %v1708 = vld [vmem:[#allocation9 + $0x1e0] sm:$0xff]
        %v1709 = vld [vmem:[#allocation9 + $0x1e8] sm:$0xff]
        %v1710 = vld [vmem:[#allocation9 + $0x1f0] sm:$0xff]
        %v1711 = vld [vmem:[#allocation9 + $0x1f8] sm:$0xff]
        %v1712 = vld [vmem:[#allocation9 + $0x200] sm:$0xff]
        %v1713 = vld [vmem:[#allocation9 + $0x208] sm:$0xff]
        %v1714 = vld [vmem:[#allocation9 + $0x210] sm:$0xff]
        %v1715 = vld [vmem:[#allocation9 + $0x218] sm:$0xff]
        %v1716 = vld [vmem:[#allocation9 + $0x220] sm:$0xff]
        %v1717 = vld [vmem:[#allocation9 + $0x228] sm:$0xff]
        %v1718 = vld [vmem:[#allocation9 + $0x230] sm:$0xff]
        %v1719 = vld [vmem:[#allocation9 + $0x238] sm:$0xff]
        %v1720 = vld [vmem:[#allocation9 + $0x240] sm:$0xff]
        %v1721 = vld [vmem:[#allocation9 + $0x248] sm:$0xff]
        %v1722 = vld [vmem:[#allocation9 + $0x250] sm:$0xff]
        %v1723 = vld [vmem:[#allocation9 + $0x258] sm:$0xff]
        %v1724 = vld [vmem:[#allocation9 + $0x260] sm:$0xff]
        %v1725 = vld [vmem:[#allocation9 + $0x268] sm:$0xff]
        %v1726 = vld [vmem:[#allocation9 + $0x270] sm:$0xff]
        %v1727 = vld [vmem:[#allocation9 + $0x278] sm:$0xff]
        %v1728 = vld [vmem:[#allocation9 + $0x280] sm:$0xff]
        %v1729 = vld [vmem:[#allocation9 + $0x288] sm:$0xff]
        %v1730 = vld [vmem:[#allocation9 + $0x290] sm:$0xff]
        %v1731 = vld [vmem:[#allocation9 + $0x298] sm:$0xff]
        %v1732 = vld [vmem:[#allocation9 + $0x2a0] sm:$0xff]
        %v1733 = vld [vmem:[#allocation9 + $0x2a8] sm:$0xff]
        %v1734 = vld [vmem:[#allocation9 + $0x2b0] sm:$0xff]
        %v1735 = vld [vmem:[#allocation9 + $0x2b8] sm:$0xff]
        %v1736 = vld [vmem:[#allocation9 + $0x2c0] sm:$0xff]
        %v1737 = vld [vmem:[#allocation9 + $0x2c8] sm:$0xff]
        %v1738 = vld [vmem:[#allocation9 + $0x2d0] sm:$0xff]
        %v1739 = vld [vmem:[#allocation9 + $0x2d8] sm:$0xff]
        %v1740 = vld [vmem:[#allocation9 + $0x2e0] sm:$0xff]
        %v1741 = vld [vmem:[#allocation9 + $0x2e8] sm:$0xff]
        %v1742 = vld [vmem:[#allocation9 + $0x2f0] sm:$0xff]
        %v1743 = vld [vmem:[#allocation9 + $0x2f8] sm:$0xff]
        %v1744 = vld [vmem:[#allocation9 + $0x300] sm:$0xff]
        %v1745 = vld [vmem:[#allocation9 + $0x308] sm:$0xff]
        %v1746 = vld [vmem:[#allocation9 + $0x310] sm:$0xff]
        %v1747 = vld [vmem:[#allocation9 + $0x318] sm:$0xff]
        %v1748 = vld [vmem:[#allocation9 + $0x320] sm:$0xff]
        %v1749 = vld [vmem:[#allocation9 + $0x328] sm:$0xff]
        %v1750 = vld [vmem:[#allocation9 + $0x330] sm:$0xff]
        %v1751 = vld [vmem:[#allocation9 + $0x338] sm:$0xff]
        %v1752 = vld [vmem:[#allocation9 + $0x340] sm:$0xff]
        %v1753 = vld [vmem:[#allocation9 + $0x348] sm:$0xff]
        %v1754 = vld [vmem:[#allocation9 + $0x350] sm:$0xff]
        %v1755 = vld [vmem:[#allocation9 + $0x358] sm:$0xff]
        %v1756 = vld [vmem:[#allocation9 + $0x360] sm:$0xff]
        %v1757 = vld [vmem:[#allocation9 + $0x368] sm:$0xff]
        %v1758 = vld [vmem:[#allocation9 + $0x370] sm:$0xff]
        %v1759 = vld [vmem:[#allocation9 + $0x378] sm:$0xff]
        %v1760 = vld [vmem:[#allocation9 + $0x380] sm:$0xff]
        %v1761 = vld [vmem:[#allocation9 + $0x388] sm:$0xff]
        %v1762 = vld [vmem:[#allocation9 + $0x390] sm:$0xff]
        %v1763 = vld [vmem:[#allocation9 + $0x398] sm:$0xff]
        %v1764 = vld [vmem:[#allocation9 + $0x3a0] sm:$0xff]
        %v1765 = vld [vmem:[#allocation9 + $0x3a8] sm:$0xff]
        %v1766 = vld [vmem:[#allocation9 + $0x3b0] sm:$0xff]
        %v1767 = vld [vmem:[#allocation9 + $0x3b8] sm:$0xff]
        %v1768 = vld [vmem:[#allocation9 + $0x3c0] sm:$0xff]
        %v1769 = vld [vmem:[#allocation9 + $0x3c8] sm:$0xff]
        %v1770 = vld [vmem:[#allocation9 + $0x3d0] sm:$0xff]
        %v1771 = vld [vmem:[#allocation9 + $0x3d8] sm:$0xff]
        %v1772 = vld [vmem:[#allocation9 + $0x3e0] sm:$0xff]
        %v1773 = vld [vmem:[#allocation9 + $0x3e8] sm:$0xff]
        %v1774 = vld [vmem:[#allocation9 + $0x3f0] sm:$0xff]
        %v1775 = vld [vmem:[#allocation9 + $0x3f8] sm:$0xff]
        %v1904 = vunpack.c.l.b16 %v1648
        %v1905 = vunpack.c.h.b16 %v1648
        %v1906 = vunpack.c.l.b16 %v1649
        %v1907 = vunpack.c.h.b16 %v1649
        %v1908 = vunpack.c.l.b16 %v1650
        %v1909 = vunpack.c.h.b16 %v1650
        %v1910 = vunpack.c.l.b16 %v1651
        %v1911 = vunpack.c.h.b16 %v1651
        %v1912 = vunpack.c.l.b16 %v1652
        %v1913 = vunpack.c.h.b16 %v1652
        %v1914 = vunpack.c.l.b16 %v1653
        %v1915 = vunpack.c.h.b16 %v1653
        %v1916 = vunpack.c.l.b16 %v1654
        %v1917 = vunpack.c.h.b16 %v1654
        %v1918 = vunpack.c.l.b16 %v1655
        %v1919 = vunpack.c.h.b16 %v1655
        %v1920 = vunpack.c.l.b16 %v1656
        %v1921 = vunpack.c.h.b16 %v1656
        %v1922 = vunpack.c.l.b16 %v1657
        %v1923 = vunpack.c.h.b16 %v1657
        %v1924 = vunpack.c.l.b16 %v1658
        %v1925 = vunpack.c.h.b16 %v1658
        %v1926 = vunpack.c.l.b16 %v1659
        %v1927 = vunpack.c.h.b16 %v1659
        %v1928 = vunpack.c.l.b16 %v1660
        %v1929 = vunpack.c.h.b16 %v1660
        %v1930 = vunpack.c.l.b16 %v1661
        %v1931 = vunpack.c.h.b16 %v1661
        %v1932 = vunpack.c.l.b16 %v1662
        %v1933 = vunpack.c.h.b16 %v1662
        %v1934 = vunpack.c.l.b16 %v1663
        %v1935 = vunpack.c.h.b16 %v1663
        %v1936 = vunpack.c.l.b16 %v1664
        %v1937 = vunpack.c.h.b16 %v1664
        %v1938 = vunpack.c.l.b16 %v1665
        %v1939 = vunpack.c.h.b16 %v1665
        %v1940 = vunpack.c.l.b16 %v1666
        %v1941 = vunpack.c.h.b16 %v1666
        %v1942 = vunpack.c.l.b16 %v1667
        %v1943 = vunpack.c.h.b16 %v1667
        %v1944 = vunpack.c.l.b16 %v1668
        %v1945 = vunpack.c.h.b16 %v1668
        %v1946 = vunpack.c.l.b16 %v1669
        %v1947 = vunpack.c.h.b16 %v1669
        %v1948 = vunpack.c.l.b16 %v1670
        %v1949 = vunpack.c.h.b16 %v1670
        %v1950 = vunpack.c.l.b16 %v1671
        %v1951 = vunpack.c.h.b16 %v1671
        %v1952 = vunpack.c.l.b16 %v1672
        %v1953 = vunpack.c.h.b16 %v1672
        %v1954 = vunpack.c.l.b16 %v1673
        %v1955 = vunpack.c.h.b16 %v1673
        %v1956 = vunpack.c.l.b16 %v1674
        %v1957 = vunpack.c.h.b16 %v1674
        %v1958 = vunpack.c.l.b16 %v1675
        %v1959 = vunpack.c.h.b16 %v1675
        %v1960 = vunpack.c.l.b16 %v1676
        %v1961 = vunpack.c.h.b16 %v1676
        %v1962 = vunpack.c.l.b16 %v1677
        %v1963 = vunpack.c.h.b16 %v1677
        %v1964 = vunpack.c.l.b16 %v1678
        %v1965 = vunpack.c.h.b16 %v1678
        %v1966 = vunpack.c.l.b16 %v1679
        %v1967 = vunpack.c.h.b16 %v1679
        %v1968 = vunpack.c.l.b16 %v1680
        %v1969 = vunpack.c.h.b16 %v1680
        %v1970 = vunpack.c.l.b16 %v1681
        %v1971 = vunpack.c.h.b16 %v1681
        %v1972 = vunpack.c.l.b16 %v1682
        %v1973 = vunpack.c.h.b16 %v1682
        %v1974 = vunpack.c.l.b16 %v1683
        %v1975 = vunpack.c.h.b16 %v1683
        %v1976 = vunpack.c.l.b16 %v1684
        %v1977 = vunpack.c.h.b16 %v1684
        %v1978 = vunpack.c.l.b16 %v1685
        %v1979 = vunpack.c.h.b16 %v1685
        %v1980 = vunpack.c.l.b16 %v1686
        %v1981 = vunpack.c.h.b16 %v1686
        %v1982 = vunpack.c.l.b16 %v1687
        %v1983 = vunpack.c.h.b16 %v1687
        %v1984 = vunpack.c.l.b16 %v1688
        %v1985 = vunpack.c.h.b16 %v1688
        %v1986 = vunpack.c.l.b16 %v1689
        %v1987 = vunpack.c.h.b16 %v1689
        %v1988 = vunpack.c.l.b16 %v1690
        %v1989 = vunpack.c.h.b16 %v1690
        %v1990 = vunpack.c.l.b16 %v1691
        %v1991 = vunpack.c.h.b16 %v1691
        %v1992 = vunpack.c.l.b16 %v1692
        %v1993 = vunpack.c.h.b16 %v1692
        %v1994 = vunpack.c.l.b16 %v1693
        %v1995 = vunpack.c.h.b16 %v1693
        %v1996 = vunpack.c.l.b16 %v1694
        %v1997 = vunpack.c.h.b16 %v1694
        %v1998 = vunpack.c.l.b16 %v1695
        %v1999 = vunpack.c.h.b16 %v1695
        %v2000 = vunpack.c.l.b16 %v1696
        %v2001 = vunpack.c.h.b16 %v1696
        %v2002 = vunpack.c.l.b16 %v1697
        %v2003 = vunpack.c.h.b16 %v1697
        %v2004 = vunpack.c.l.b16 %v1698
        %v2005 = vunpack.c.h.b16 %v1698
        %v2006 = vunpack.c.l.b16 %v1699
        %v2007 = vunpack.c.h.b16 %v1699
        %v2008 = vunpack.c.l.b16 %v1700
        %v2009 = vunpack.c.h.b16 %v1700
        %v2010 = vunpack.c.l.b16 %v1701
        %v2011 = vunpack.c.h.b16 %v1701
        %v2012 = vunpack.c.l.b16 %v1702
        %v2013 = vunpack.c.h.b16 %v1702
        %v2014 = vunpack.c.l.b16 %v1703
        %v2015 = vunpack.c.h.b16 %v1703
        %v2016 = vunpack.c.l.b16 %v1704
        %v2017 = vunpack.c.h.b16 %v1704
        %v2018 = vunpack.c.l.b16 %v1705
        %v2019 = vunpack.c.h.b16 %v1705
        %v2020 = vunpack.c.l.b16 %v1706
        %v2021 = vunpack.c.h.b16 %v1706
        %v2022 = vunpack.c.l.b16 %v1707
        %v2023 = vunpack.c.h.b16 %v1707
        %v2024 = vunpack.c.l.b16 %v1708
        %v2025 = vunpack.c.h.b16 %v1708
        %v2026 = vunpack.c.l.b16 %v1709
        %v2027 = vunpack.c.h.b16 %v1709
        %v2028 = vunpack.c.l.b16 %v1710
        %v2029 = vunpack.c.h.b16 %v1710
        %v2030 = vunpack.c.l.b16 %v1711
        %v2031 = vunpack.c.h.b16 %v1711
        %v2032 = vunpack.c.l.b16 %v1712
        %v2033 = vunpack.c.h.b16 %v1712
        %v2034 = vunpack.c.l.b16 %v1713
        %v2035 = vunpack.c.h.b16 %v1713
        %v2036 = vunpack.c.l.b16 %v1714
        %v2037 = vunpack.c.h.b16 %v1714
        %v2038 = vunpack.c.l.b16 %v1715
        %v2039 = vunpack.c.h.b16 %v1715
        %v2040 = vunpack.c.l.b16 %v1716
        %v2041 = vunpack.c.h.b16 %v1716
        %v2042 = vunpack.c.l.b16 %v1717
        %v2043 = vunpack.c.h.b16 %v1717
        %v2044 = vunpack.c.l.b16 %v1718
        %v2045 = vunpack.c.h.b16 %v1718
        %v2046 = vunpack.c.l.b16 %v1719
        %v2047 = vunpack.c.h.b16 %v1719
        %v2048 = vunpack.c.l.b16 %v1720
        %v2049 = vunpack.c.h.b16 %v1720
        %v2050 = vunpack.c.l.b16 %v1721
        %v2051 = vunpack.c.h.b16 %v1721
        %v2052 = vunpack.c.l.b16 %v1722
        %v2053 = vunpack.c.h.b16 %v1722
        %v2054 = vunpack.c.l.b16 %v1723
        %v2055 = vunpack.c.h.b16 %v1723
        %v2056 = vunpack.c.l.b16 %v1724
        %v2057 = vunpack.c.h.b16 %v1724
        %v2058 = vunpack.c.l.b16 %v1725
        %v2059 = vunpack.c.h.b16 %v1725
        %v2060 = vunpack.c.l.b16 %v1726
        %v2061 = vunpack.c.h.b16 %v1726
        %v2062 = vunpack.c.l.b16 %v1727
        %v2063 = vunpack.c.h.b16 %v1727
        %v2064 = vunpack.c.l.b16 %v1728
        %v2065 = vunpack.c.h.b16 %v1728
        %v2066 = vunpack.c.l.b16 %v1729
        %v2067 = vunpack.c.h.b16 %v1729
        %v2068 = vunpack.c.l.b16 %v1730
        %v2069 = vunpack.c.h.b16 %v1730
        %v2070 = vunpack.c.l.b16 %v1731
        %v2071 = vunpack.c.h.b16 %v1731
        %v2072 = vunpack.c.l.b16 %v1732
        %v2073 = vunpack.c.h.b16 %v1732
        %v2074 = vunpack.c.l.b16 %v1733
        %v2075 = vunpack.c.h.b16 %v1733
        %v2076 = vunpack.c.l.b16 %v1734
        %v2077 = vunpack.c.h.b16 %v1734
        %v2078 = vunpack.c.l.b16 %v1735
        %v2079 = vunpack.c.h.b16 %v1735
        %v2080 = vunpack.c.l.b16 %v1736
        %v2081 = vunpack.c.h.b16 %v1736
        %v2082 = vunpack.c.l.b16 %v1737
        %v2083 = vunpack.c.h.b16 %v1737
        %v2084 = vunpack.c.l.b16 %v1738
        %v2085 = vunpack.c.h.b16 %v1738
        %v2086 = vunpack.c.l.b16 %v1739
        %v2087 = vunpack.c.h.b16 %v1739
        %v2088 = vunpack.c.l.b16 %v1740
        %v2089 = vunpack.c.h.b16 %v1740
        %v2090 = vunpack.c.l.b16 %v1741
        %v2091 = vunpack.c.h.b16 %v1741
        %v2092 = vunpack.c.l.b16 %v1742
        %v2093 = vunpack.c.h.b16 %v1742
        %v2094 = vunpack.c.l.b16 %v1743
        %v2095 = vunpack.c.h.b16 %v1743
        %v2096 = vunpack.c.l.b16 %v1744
        %v2097 = vunpack.c.h.b16 %v1744
        %v2098 = vunpack.c.l.b16 %v1745
        %v2099 = vunpack.c.h.b16 %v1745
        %v2100 = vunpack.c.l.b16 %v1746
        %v2101 = vunpack.c.h.b16 %v1746
        %v2102 = vunpack.c.l.b16 %v1747
        %v2103 = vunpack.c.h.b16 %v1747
        %v2104 = vunpack.c.l.b16 %v1748
        %v2105 = vunpack.c.h.b16 %v1748
        %v2106 = vunpack.c.l.b16 %v1749
        %v2107 = vunpack.c.h.b16 %v1749
        %v2108 = vunpack.c.l.b16 %v1750
        %v2109 = vunpack.c.h.b16 %v1750
        %v2110 = vunpack.c.l.b16 %v1751
        %v2111 = vunpack.c.h.b16 %v1751
        %v2112 = vunpack.c.l.b16 %v1752
        %v2113 = vunpack.c.h.b16 %v1752
        %v2114 = vunpack.c.l.b16 %v1753
        %v2115 = vunpack.c.h.b16 %v1753
        %v2116 = vunpack.c.l.b16 %v1754
        %v2117 = vunpack.c.h.b16 %v1754
        %v2118 = vunpack.c.l.b16 %v1755
        %v2119 = vunpack.c.h.b16 %v1755
        %v2120 = vunpack.c.l.b16 %v1756
        %v2121 = vunpack.c.h.b16 %v1756
        %v2122 = vunpack.c.l.b16 %v1757
        %v2123 = vunpack.c.h.b16 %v1757
        %v2124 = vunpack.c.l.b16 %v1758
        %v2125 = vunpack.c.h.b16 %v1758
        %v2126 = vunpack.c.l.b16 %v1759
        %v2127 = vunpack.c.h.b16 %v1759
        %v2128 = vunpack.c.l.b16 %v1760
        %v2129 = vunpack.c.h.b16 %v1760
        %v2130 = vunpack.c.l.b16 %v1761
        %v2131 = vunpack.c.h.b16 %v1761
        %v2132 = vunpack.c.l.b16 %v1762
        %v2133 = vunpack.c.h.b16 %v1762
        %v2134 = vunpack.c.l.b16 %v1763
        %v2135 = vunpack.c.h.b16 %v1763
        %v2136 = vunpack.c.l.b16 %v1764
        %v2137 = vunpack.c.h.b16 %v1764
        %v2138 = vunpack.c.l.b16 %v1765
        %v2139 = vunpack.c.h.b16 %v1765
        %v2140 = vunpack.c.l.b16 %v1766
        %v2141 = vunpack.c.h.b16 %v1766
        %v2142 = vunpack.c.l.b16 %v1767
        %v2143 = vunpack.c.h.b16 %v1767
        %v2144 = vunpack.c.l.b16 %v1768
        %v2145 = vunpack.c.h.b16 %v1768
        %v2146 = vunpack.c.l.b16 %v1769
        %v2147 = vunpack.c.h.b16 %v1769
        %v2148 = vunpack.c.l.b16 %v1770
        %v2149 = vunpack.c.h.b16 %v1770
        %v2150 = vunpack.c.l.b16 %v1771
        %v2151 = vunpack.c.h.b16 %v1771
        %v2152 = vunpack.c.l.b16 %v1772
        %v2153 = vunpack.c.h.b16 %v1772
        %v2154 = vunpack.c.l.b16 %v1773
        %v2155 = vunpack.c.h.b16 %v1773
        %v2156 = vunpack.c.l.b16 %v1774
        %v2157 = vunpack.c.h.b16 %v1774
        %v2158 = vunpack.c.l.b16 %v1775
        %v2159 = vunpack.c.h.b16 %v1775
        %v2160 = vpack.c.b16 %v1908, %v1904
        %v2161 = vpack.c.b16 %v1909, %v1905
        %v2162 = vpack.c.b16 %v1910, %v1906
        %v2163 = vpack.c.b16 %v1911, %v1907
        %v2164 = vpack.c.b16 %v1916, %v1912
        %v2165 = vpack.c.b16 %v1917, %v1913
        %v2166 = vpack.c.b16 %v1918, %v1914
        %v2167 = vpack.c.b16 %v1919, %v1915
        %v2168 = vpack.c.b16 %v1924, %v1920
        %v2169 = vpack.c.b16 %v1925, %v1921
        %v2170 = vpack.c.b16 %v1926, %v1922
        %v2171 = vpack.c.b16 %v1927, %v1923
        %v2172 = vpack.c.b16 %v1932, %v1928
        %v2173 = vpack.c.b16 %v1933, %v1929
        %v2174 = vpack.c.b16 %v1934, %v1930
        %v2175 = vpack.c.b16 %v1935, %v1931
        %v2176 = vpack.c.b16 %v1940, %v1936
        %v2177 = vpack.c.b16 %v1941, %v1937
        %v2178 = vpack.c.b16 %v1942, %v1938
        %v2179 = vpack.c.b16 %v1943, %v1939
        %v2180 = vpack.c.b16 %v1948, %v1944
        %v2181 = vpack.c.b16 %v1949, %v1945
        %v2182 = vpack.c.b16 %v1950, %v1946
        %v2183 = vpack.c.b16 %v1951, %v1947
        %v2184 = vpack.c.b16 %v1956, %v1952
        %v2185 = vpack.c.b16 %v1957, %v1953
        %v2186 = vpack.c.b16 %v1958, %v1954
        %v2187 = vpack.c.b16 %v1959, %v1955
        %v2188 = vpack.c.b16 %v1964, %v1960
        %v2189 = vpack.c.b16 %v1965, %v1961
        %v2190 = vpack.c.b16 %v1966, %v1962
        %v2191 = vpack.c.b16 %v1967, %v1963
        %v2192 = vpack.c.b16 %v1972, %v1968
        %v2193 = vpack.c.b16 %v1973, %v1969
        %v2194 = vpack.c.b16 %v1974, %v1970
        %v2195 = vpack.c.b16 %v1975, %v1971
        %v2196 = vpack.c.b16 %v1980, %v1976
        %v2197 = vpack.c.b16 %v1981, %v1977
        %v2198 = vpack.c.b16 %v1982, %v1978
        %v2199 = vpack.c.b16 %v1983, %v1979
        %v2200 = vpack.c.b16 %v1988, %v1984
        %v2201 = vpack.c.b16 %v1989, %v1985
        %v2202 = vpack.c.b16 %v1990, %v1986
        %v2203 = vpack.c.b16 %v1991, %v1987
        %v2204 = vpack.c.b16 %v1996, %v1992
        %v2205 = vpack.c.b16 %v1997, %v1993
        %v2206 = vpack.c.b16 %v1998, %v1994
        %v2207 = vpack.c.b16 %v1999, %v1995
        %v2208 = vpack.c.b16 %v2004, %v2000
        %v2209 = vpack.c.b16 %v2005, %v2001
        %v2210 = vpack.c.b16 %v2006, %v2002
        %v2211 = vpack.c.b16 %v2007, %v2003
        %v2212 = vpack.c.b16 %v2012, %v2008
        %v2213 = vpack.c.b16 %v2013, %v2009
        %v2214 = vpack.c.b16 %v2014, %v2010
        %v2215 = vpack.c.b16 %v2015, %v2011
        %v2216 = vpack.c.b16 %v2020, %v2016
        %v2217 = vpack.c.b16 %v2021, %v2017
        %v2218 = vpack.c.b16 %v2022, %v2018
        %v2219 = vpack.c.b16 %v2023, %v2019
        %v2220 = vpack.c.b16 %v2028, %v2024
        %v2221 = vpack.c.b16 %v2029, %v2025
        %v2222 = vpack.c.b16 %v2030, %v2026
        %v2223 = vpack.c.b16 %v2031, %v2027
        %v2224 = vpack.c.b16 %v2036, %v2032
        %v2225 = vpack.c.b16 %v2037, %v2033
        %v2226 = vpack.c.b16 %v2038, %v2034
        %v2227 = vpack.c.b16 %v2039, %v2035
        %v2228 = vpack.c.b16 %v2044, %v2040
        %v2229 = vpack.c.b16 %v2045, %v2041
        %v2230 = vpack.c.b16 %v2046, %v2042
        %v2231 = vpack.c.b16 %v2047, %v2043
        %v2232 = vpack.c.b16 %v2052, %v2048
        %v2233 = vpack.c.b16 %v2053, %v2049
        %v2234 = vpack.c.b16 %v2054, %v2050
        %v2235 = vpack.c.b16 %v2055, %v2051
        %v2236 = vpack.c.b16 %v2060, %v2056
        %v2237 = vpack.c.b16 %v2061, %v2057
        %v2238 = vpack.c.b16 %v2062, %v2058
        %v2239 = vpack.c.b16 %v2063, %v2059
        %v2240 = vpack.c.b16 %v2068, %v2064
        %v2241 = vpack.c.b16 %v2069, %v2065
        %v2242 = vpack.c.b16 %v2070, %v2066
        %v2243 = vpack.c.b16 %v2071, %v2067
        %v2244 = vpack.c.b16 %v2076, %v2072
        %v2245 = vpack.c.b16 %v2077, %v2073
        %v2246 = vpack.c.b16 %v2078, %v2074
        %v2247 = vpack.c.b16 %v2079, %v2075
        %v2248 = vpack.c.b16 %v2084, %v2080
        %v2249 = vpack.c.b16 %v2085, %v2081
        %v2250 = vpack.c.b16 %v2086, %v2082
        %v2251 = vpack.c.b16 %v2087, %v2083
        %v2252 = vpack.c.b16 %v2092, %v2088
        %v2253 = vpack.c.b16 %v2093, %v2089
        %v2254 = vpack.c.b16 %v2094, %v2090
        %v2255 = vpack.c.b16 %v2095, %v2091
        %v2256 = vpack.c.b16 %v2100, %v2096
        %v2257 = vpack.c.b16 %v2101, %v2097
        %v2258 = vpack.c.b16 %v2102, %v2098
        %v2259 = vpack.c.b16 %v2103, %v2099
        %v2260 = vpack.c.b16 %v2108, %v2104
        %v2261 = vpack.c.b16 %v2109, %v2105
        %v2262 = vpack.c.b16 %v2110, %v2106
        %v2263 = vpack.c.b16 %v2111, %v2107
        %v2264 = vpack.c.b16 %v2116, %v2112
        %v2265 = vpack.c.b16 %v2117, %v2113
        %v2266 = vpack.c.b16 %v2118, %v2114
        %v2267 = vpack.c.b16 %v2119, %v2115
        %v2268 = vpack.c.b16 %v2124, %v2120
        %v2269 = vpack.c.b16 %v2125, %v2121
        %v2270 = vpack.c.b16 %v2126, %v2122
        %v2271 = vpack.c.b16 %v2127, %v2123
        %v2272 = vpack.c.b16 %v2132, %v2128
        %v2273 = vpack.c.b16 %v2133, %v2129
        %v2274 = vpack.c.b16 %v2134, %v2130
        %v2275 = vpack.c.b16 %v2135, %v2131
        %v2276 = vpack.c.b16 %v2140, %v2136
        %v2277 = vpack.c.b16 %v2141, %v2137
        %v2278 = vpack.c.b16 %v2142, %v2138
        %v2279 = vpack.c.b16 %v2143, %v2139
        %v2280 = vpack.c.b16 %v2148, %v2144
        %v2281 = vpack.c.b16 %v2149, %v2145
        %v2282 = vpack.c.b16 %v2150, %v2146
        %v2283 = vpack.c.b16 %v2151, %v2147
        %v2284 = vpack.c.b16 %v2156, %v2152
        %v2285 = vpack.c.b16 %v2157, %v2153
        %v2286 = vpack.c.b16 %v2158, %v2154
        %v2287 = vpack.c.b16 %v2159, %v2155
        %2416 = vmatprep.subr.bf16.mxu0 %v2189
        %2417 = vmatpush1.bf16.msra.mxu0 %v2188
        %2418 = vmatprep.subr.bf16.mxu0 %v2185
        %2419 = vmatpush1.bf16.msra.mxu0 %v2184
        %2420 = vmatprep.subr.bf16.mxu0 %v2181
        %2421 = vmatpush1.bf16.msra.mxu0 %v2180
        %2422 = vmatprep.subr.bf16.mxu0 %v2177
        %2423 = vmatpush1.bf16.msra.mxu0 %v2176
        %2424 = vmatprep.subr.bf16.mxu0 %v2173
        %2425 = vmatpush1.bf16.msra.mxu0 %v2172
        %2426 = vmatprep.subr.bf16.mxu0 %v2169
        %2427 = vmatpush1.bf16.msra.mxu0 %v2168
        %2428 = vmatprep.subr.bf16.mxu0 %v2165
        %2429 = vmatpush1.bf16.msra.mxu0 %v2164
        %2430 = vmatprep.subr.bf16.mxu0 %v2161
        %2431 = vmatpush1.bf16.msra.mxu0 %v2160
        %2432 = vmatprep.subr.bf16.mxu0 %v2221
        %2433 = vmatpush2.bf16.msra.mxu0 %v2220
        %2434 = vmatprep.subr.bf16.mxu0 %v2217
        %2435 = vmatpush2.bf16.msra.mxu0 %v2216
        %2436 = vmatprep.subr.bf16.mxu0 %v2213
        %2437 = vmatpush2.bf16.msra.mxu0 %v2212
        %2438 = vmatprep.subr.bf16.mxu0 %v2209
        %2439 = vmatpush2.bf16.msra.mxu0 %v2208
        %2440 = vmatprep.subr.bf16.mxu0 %v2205
        %2441 = vmatpush2.bf16.msra.mxu0 %v2204
        %2442 = vmatprep.subr.bf16.mxu0 %v2201
        %2443 = vmatpush2.bf16.msra.mxu0 %v2200
        %2444 = vmatprep.subr.bf16.mxu0 %v2197
        %2445 = vmatpush2.bf16.msra.mxu0 %v2196
        %2446 = vmatprep.subr.bf16.mxu0 %v2193
        %2447 = vmatpush2.bf16.msra.mxu0 %v2192
        %2448 = vmatprep.mubr.bf16.mxu0 %v713
        %2449 = vmatmul.mubr.bf16.gmra.mxu0 %v712
        %v2450 = vpop.f32.mrf.mxu0
        %v2451 = vadd.f32 0.0, %v2450
        %v2452 = vpop.f32.mrf.mxu0
        %v2453 = vadd.f32 0.0, %v2452
        %v2454 = vpop.f32.mrf.mxu0
        %v2455 = vpop.f32.mrf.mxu0
        %2456 = vdwg.mxu0
        %2457 = vmatprep.subr.bf16.mxu0 %v2253
        %2458 = vmatpush1.bf16.msra.mxu0 %v2252
        %2459 = vmatprep.subr.bf16.mxu0 %v2249
        %2460 = vmatpush1.bf16.msra.mxu0 %v2248
        %2461 = vmatprep.subr.bf16.mxu0 %v2245
        %2462 = vmatpush1.bf16.msra.mxu0 %v2244
        %2463 = vmatprep.subr.bf16.mxu0 %v2241
        %2464 = vmatpush1.bf16.msra.mxu0 %v2240
        %2465 = vmatprep.subr.bf16.mxu0 %v2237
        %2466 = vmatpush1.bf16.msra.mxu0 %v2236
        %2467 = vmatprep.subr.bf16.mxu0 %v2233
        %2468 = vmatpush1.bf16.msra.mxu0 %v2232
        %2469 = vmatprep.subr.bf16.mxu0 %v2229
        %2470 = vmatpush1.bf16.msra.mxu0 %v2228
        %2471 = vmatprep.subr.bf16.mxu0 %v2225
        %2472 = vmatpush1.bf16.msra.mxu0 %v2224
        %2473 = vmatprep.subr.bf16.mxu0 %v2285
        %2474 = vmatpush2.bf16.msra.mxu0 %v2284
        %2475 = vmatprep.subr.bf16.mxu0 %v2281
        %2476 = vmatpush2.bf16.msra.mxu0 %v2280
        %2477 = vmatprep.subr.bf16.mxu0 %v2277
        %2478 = vmatpush2.bf16.msra.mxu0 %v2276
        %2479 = vmatprep.subr.bf16.mxu0 %v2273
        %2480 = vmatpush2.bf16.msra.mxu0 %v2272
        %2481 = vmatprep.subr.bf16.mxu0 %v2269
        %2482 = vmatpush2.bf16.msra.mxu0 %v2268
        %2483 = vmatprep.subr.bf16.mxu0 %v2265
        %2484 = vmatpush2.bf16.msra.mxu0 %v2264
        %2485 = vmatprep.subr.bf16.mxu0 %v2261
        %2486 = vmatpush2.bf16.msra.mxu0 %v2260
        %2487 = vmatprep.subr.bf16.mxu0 %v2257
        %2488 = vmatpush2.bf16.msra.mxu0 %v2256
        %2489 = vmatprep.mubr.bf16.mxu0 %v715
        %2490 = vmatmul.mubr.bf16.gmra.mxu0 %v714
        %v2491 = vpop.f32.mrf.mxu0
        %v2492 = vadd.f32 %v2451, %v2491
        %v2493 = vpop.f32.mrf.mxu0
        %v2494 = vadd.f32 %v2453, %v2493
        %v2495 = vpop.f32.mrf.mxu0
        %v2496 = vpop.f32.mrf.mxu0
        %2497 = vdwg.mxu0
        %2498 = vmatprep.subr.bf16.mxu0 %v2191
        %2499 = vmatpush1.bf16.msra.mxu0 %v2190
        %2500 = vmatprep.subr.bf16.mxu0 %v2187
        %2501 = vmatpush1.bf16.msra.mxu0 %v2186
        %2502 = vmatprep.subr.bf16.mxu0 %v2183
        %2503 = vmatpush1.bf16.msra.mxu0 %v2182
        %2504 = vmatprep.subr.bf16.mxu0 %v2179
        %2505 = vmatpush1.bf16.msra.mxu0 %v2178
        %2506 = vmatprep.subr.bf16.mxu0 %v2175
        %2507 = vmatpush1.bf16.msra.mxu0 %v2174
        %2508 = vmatprep.subr.bf16.mxu0 %v2171
        %2509 = vmatpush1.bf16.msra.mxu0 %v2170
        %2510 = vmatprep.subr.bf16.mxu0 %v2167
        %2511 = vmatpush1.bf16.msra.mxu0 %v2166
        %2512 = vmatprep.subr.bf16.mxu0 %v2163
        %2513 = vmatpush1.bf16.msra.mxu0 %v2162
        %2514 = vmatprep.subr.bf16.mxu0 %v2223
        %2515 = vmatpush2.bf16.msra.mxu0 %v2222
        %2516 = vmatprep.subr.bf16.mxu0 %v2219
        %2517 = vmatpush2.bf16.msra.mxu0 %v2218
        %2518 = vmatprep.subr.bf16.mxu0 %v2215
        %2519 = vmatpush2.bf16.msra.mxu0 %v2214
        %2520 = vmatprep.subr.bf16.mxu0 %v2211
        %2521 = vmatpush2.bf16.msra.mxu0 %v2210
        %2522 = vmatprep.subr.bf16.mxu0 %v2207
        %2523 = vmatpush2.bf16.msra.mxu0 %v2206
        %2524 = vmatprep.subr.bf16.mxu0 %v2203
        %2525 = vmatpush2.bf16.msra.mxu0 %v2202
        %2526 = vmatprep.subr.bf16.mxu0 %v2199
        %2527 = vmatpush2.bf16.msra.mxu0 %v2198
        %2528 = vmatprep.subr.bf16.mxu0 %v2195
        %2529 = vmatpush2.bf16.msra.mxu0 %v2194
        %2530 = vmatprep.mubr.bf16.mxu0 %v713
        %2531 = vmatmul.mubr.bf16.gmra.mxu0 %v712
        %v2532 = vpop.f32.mrf.mxu0
        %v2533 = vadd.f32 0.0, %v2532
        %v2534 = vpop.f32.mrf.mxu0
        %v2535 = vadd.f32 0.0, %v2534
        %v2536 = vpop.f32.mrf.mxu0
        %v2537 = vpop.f32.mrf.mxu0
        %2538 = vdwg.mxu0
        %2539 = vmatprep.subr.bf16.mxu0 %v2255
        %2540 = vmatpush1.bf16.msra.mxu0 %v2254
        %2541 = vmatprep.subr.bf16.mxu0 %v2251
        %2542 = vmatpush1.bf16.msra.mxu0 %v2250
        %2543 = vmatprep.subr.bf16.mxu0 %v2247
        %2544 = vmatpush1.bf16.msra.mxu0 %v2246
        %2545 = vmatprep.subr.bf16.mxu0 %v2243
        %2546 = vmatpush1.bf16.msra.mxu0 %v2242
        %2547 = vmatprep.subr.bf16.mxu0 %v2239
        %2548 = vmatpush1.bf16.msra.mxu0 %v2238
        %2549 = vmatprep.subr.bf16.mxu0 %v2235
        %2550 = vmatpush1.bf16.msra.mxu0 %v2234
        %2551 = vmatprep.subr.bf16.mxu0 %v2231
        %2552 = vmatpush1.bf16.msra.mxu0 %v2230
        %2553 = vmatprep.subr.bf16.mxu0 %v2227
        %2554 = vmatpush1.bf16.msra.mxu0 %v2226
        %2555 = vmatprep.subr.bf16.mxu0 %v2287
        %2556 = vmatpush2.bf16.msra.mxu0 %v2286
        %2557 = vmatprep.subr.bf16.mxu0 %v2283
        %2558 = vmatpush2.bf16.msra.mxu0 %v2282
        %2559 = vmatprep.subr.bf16.mxu0 %v2279
        %2560 = vmatpush2.bf16.msra.mxu0 %v2278
        %2561 = vmatprep.subr.bf16.mxu0 %v2275
        %2562 = vmatpush2.bf16.msra.mxu0 %v2274
        %2563 = vmatprep.subr.bf16.mxu0 %v2271
        %2564 = vmatpush2.bf16.msra.mxu0 %v2270
        %2565 = vmatprep.subr.bf16.mxu0 %v2267
        %2566 = vmatpush2.bf16.msra.mxu0 %v2266
        %2567 = vmatprep.subr.bf16.mxu0 %v2263
        %2568 = vmatpush2.bf16.msra.mxu0 %v2262
        %2569 = vmatprep.subr.bf16.mxu0 %v2259
        %2570 = vmatpush2.bf16.msra.mxu0 %v2258
        %2571 = vmatprep.mubr.bf16.mxu0 %v715
        %2572 = vmatmul.mubr.bf16.gmra.mxu0 %v714
        %v2573 = vpop.f32.mrf.mxu0
        %v2574 = vadd.f32 %v2533, %v2573
        %v2575 = vpop.f32.mrf.mxu0
        %v2576 = vadd.f32 %v2535, %v2575
        %v2577 = vpop.f32.mrf.mxu0
        %v2578 = vpop.f32.mrf.mxu0
        %2579 = vdwg.mxu0
        %v2580 = vld [vmem:[#allocation11] sm:$0xff]
        %v2581 = vld [vmem:[#allocation11 + $0x8] sm:$0xff]
        %v2582 = vld [vmem:[#allocation11 + $0x10] sm:$0xff]
        %v2583 = vld [vmem:[#allocation11 + $0x18] sm:$0xff]
        %v2584 = vld [vmem:[#allocation11 + $0x20] sm:$0xff]
        %v2585 = vld [vmem:[#allocation11 + $0x28] sm:$0xff]
        %v2586 = vld [vmem:[#allocation11 + $0x30] sm:$0xff]
        %v2587 = vld [vmem:[#allocation11 + $0x38] sm:$0xff]
        %v2588 = vld [vmem:[#allocation11 + $0x40] sm:$0xff]
        %v2589 = vld [vmem:[#allocation11 + $0x48] sm:$0xff]
        %v2590 = vld [vmem:[#allocation11 + $0x50] sm:$0xff]
        %v2591 = vld [vmem:[#allocation11 + $0x58] sm:$0xff]
        %v2592 = vld [vmem:[#allocation11 + $0x60] sm:$0xff]
        %v2593 = vld [vmem:[#allocation11 + $0x68] sm:$0xff]
        %v2594 = vld [vmem:[#allocation11 + $0x70] sm:$0xff]
        %v2595 = vld [vmem:[#allocation11 + $0x78] sm:$0xff]
        %v2596 = vld [vmem:[#allocation11 + $0x80] sm:$0xff]
        %v2597 = vld [vmem:[#allocation11 + $0x88] sm:$0xff]
        %v2598 = vld [vmem:[#allocation11 + $0x90] sm:$0xff]
        %v2599 = vld [vmem:[#allocation11 + $0x98] sm:$0xff]
        %v2600 = vld [vmem:[#allocation11 + $0xa0] sm:$0xff]
        %v2601 = vld [vmem:[#allocation11 + $0xa8] sm:$0xff]
        %v2602 = vld [vmem:[#allocation11 + $0xb0] sm:$0xff]
        %v2603 = vld [vmem:[#allocation11 + $0xb8] sm:$0xff]
        %v2604 = vld [vmem:[#allocation11 + $0xc0] sm:$0xff]
        %v2605 = vld [vmem:[#allocation11 + $0xc8] sm:$0xff]
        %v2606 = vld [vmem:[#allocation11 + $0xd0] sm:$0xff]
        %v2607 = vld [vmem:[#allocation11 + $0xd8] sm:$0xff]
        %v2608 = vld [vmem:[#allocation11 + $0xe0] sm:$0xff]
        %v2609 = vld [vmem:[#allocation11 + $0xe8] sm:$0xff]
        %v2610 = vld [vmem:[#allocation11 + $0xf0] sm:$0xff]
        %v2611 = vld [vmem:[#allocation11 + $0xf8] sm:$0xff]
        %v2612 = vld [vmem:[#allocation11 + $0x100] sm:$0xff]
        %v2613 = vld [vmem:[#allocation11 + $0x108] sm:$0xff]
        %v2614 = vld [vmem:[#allocation11 + $0x110] sm:$0xff]
        %v2615 = vld [vmem:[#allocation11 + $0x118] sm:$0xff]
        %v2616 = vld [vmem:[#allocation11 + $0x120] sm:$0xff]
        %v2617 = vld [vmem:[#allocation11 + $0x128] sm:$0xff]
        %v2618 = vld [vmem:[#allocation11 + $0x130] sm:$0xff]
        %v2619 = vld [vmem:[#allocation11 + $0x138] sm:$0xff]
        %v2620 = vld [vmem:[#allocation11 + $0x140] sm:$0xff]
        %v2621 = vld [vmem:[#allocation11 + $0x148] sm:$0xff]
        %v2622 = vld [vmem:[#allocation11 + $0x150] sm:$0xff]
        %v2623 = vld [vmem:[#allocation11 + $0x158] sm:$0xff]
        %v2624 = vld [vmem:[#allocation11 + $0x160] sm:$0xff]
        %v2625 = vld [vmem:[#allocation11 + $0x168] sm:$0xff]
        %v2626 = vld [vmem:[#allocation11 + $0x170] sm:$0xff]
        %v2627 = vld [vmem:[#allocation11 + $0x178] sm:$0xff]
        %v2628 = vld [vmem:[#allocation11 + $0x180] sm:$0xff]
        %v2629 = vld [vmem:[#allocation11 + $0x188] sm:$0xff]
        %v2630 = vld [vmem:[#allocation11 + $0x190] sm:$0xff]
        %v2631 = vld [vmem:[#allocation11 + $0x198] sm:$0xff]
        %v2632 = vld [vmem:[#allocation11 + $0x1a0] sm:$0xff]
        %v2633 = vld [vmem:[#allocation11 + $0x1a8] sm:$0xff]
        %v2634 = vld [vmem:[#allocation11 + $0x1b0] sm:$0xff]
        %v2635 = vld [vmem:[#allocation11 + $0x1b8] sm:$0xff]
        %v2636 = vld [vmem:[#allocation11 + $0x1c0] sm:$0xff]
        %v2637 = vld [vmem:[#allocation11 + $0x1c8] sm:$0xff]
        %v2638 = vld [vmem:[#allocation11 + $0x1d0] sm:$0xff]
        %v2639 = vld [vmem:[#allocation11 + $0x1d8] sm:$0xff]
        %v2640 = vld [vmem:[#allocation11 + $0x1e0] sm:$0xff]
        %v2641 = vld [vmem:[#allocation11 + $0x1e8] sm:$0xff]
        %v2642 = vld [vmem:[#allocation11 + $0x1f0] sm:$0xff]
        %v2643 = vld [vmem:[#allocation11 + $0x1f8] sm:$0xff]
        %v2644 = vld [vmem:[#allocation11 + $0x200] sm:$0xff]
        %v2645 = vld [vmem:[#allocation11 + $0x208] sm:$0xff]
        %v2646 = vld [vmem:[#allocation11 + $0x210] sm:$0xff]
        %v2647 = vld [vmem:[#allocation11 + $0x218] sm:$0xff]
        %v2648 = vld [vmem:[#allocation11 + $0x220] sm:$0xff]
        %v2649 = vld [vmem:[#allocation11 + $0x228] sm:$0xff]
        %v2650 = vld [vmem:[#allocation11 + $0x230] sm:$0xff]
        %v2651 = vld [vmem:[#allocation11 + $0x238] sm:$0xff]
        %v2652 = vld [vmem:[#allocation11 + $0x240] sm:$0xff]
        %v2653 = vld [vmem:[#allocation11 + $0x248] sm:$0xff]
        %v2654 = vld [vmem:[#allocation11 + $0x250] sm:$0xff]
        %v2655 = vld [vmem:[#allocation11 + $0x258] sm:$0xff]
        %v2656 = vld [vmem:[#allocation11 + $0x260] sm:$0xff]
        %v2657 = vld [vmem:[#allocation11 + $0x268] sm:$0xff]
        %v2658 = vld [vmem:[#allocation11 + $0x270] sm:$0xff]
        %v2659 = vld [vmem:[#allocation11 + $0x278] sm:$0xff]
        %v2660 = vld [vmem:[#allocation11 + $0x280] sm:$0xff]
        %v2661 = vld [vmem:[#allocation11 + $0x288] sm:$0xff]
        %v2662 = vld [vmem:[#allocation11 + $0x290] sm:$0xff]
        %v2663 = vld [vmem:[#allocation11 + $0x298] sm:$0xff]
        %v2664 = vld [vmem:[#allocation11 + $0x2a0] sm:$0xff]
        %v2665 = vld [vmem:[#allocation11 + $0x2a8] sm:$0xff]
        %v2666 = vld [vmem:[#allocation11 + $0x2b0] sm:$0xff]
        %v2667 = vld [vmem:[#allocation11 + $0x2b8] sm:$0xff]
        %v2668 = vld [vmem:[#allocation11 + $0x2c0] sm:$0xff]
        %v2669 = vld [vmem:[#allocation11 + $0x2c8] sm:$0xff]
        %v2670 = vld [vmem:[#allocation11 + $0x2d0] sm:$0xff]
        %v2671 = vld [vmem:[#allocation11 + $0x2d8] sm:$0xff]
        %v2672 = vld [vmem:[#allocation11 + $0x2e0] sm:$0xff]
        %v2673 = vld [vmem:[#allocation11 + $0x2e8] sm:$0xff]
        %v2674 = vld [vmem:[#allocation11 + $0x2f0] sm:$0xff]
        %v2675 = vld [vmem:[#allocation11 + $0x2f8] sm:$0xff]
        %v2676 = vld [vmem:[#allocation11 + $0x300] sm:$0xff]
        %v2677 = vld [vmem:[#allocation11 + $0x308] sm:$0xff]
        %v2678 = vld [vmem:[#allocation11 + $0x310] sm:$0xff]
        %v2679 = vld [vmem:[#allocation11 + $0x318] sm:$0xff]
        %v2680 = vld [vmem:[#allocation11 + $0x320] sm:$0xff]
        %v2681 = vld [vmem:[#allocation11 + $0x328] sm:$0xff]
        %v2682 = vld [vmem:[#allocation11 + $0x330] sm:$0xff]
        %v2683 = vld [vmem:[#allocation11 + $0x338] sm:$0xff]
        %v2684 = vld [vmem:[#allocation11 + $0x340] sm:$0xff]
        %v2685 = vld [vmem:[#allocation11 + $0x348] sm:$0xff]
        %v2686 = vld [vmem:[#allocation11 + $0x350] sm:$0xff]
        %v2687 = vld [vmem:[#allocation11 + $0x358] sm:$0xff]
        %v2688 = vld [vmem:[#allocation11 + $0x360] sm:$0xff]
        %v2689 = vld [vmem:[#allocation11 + $0x368] sm:$0xff]
        %v2690 = vld [vmem:[#allocation11 + $0x370] sm:$0xff]
        %v2691 = vld [vmem:[#allocation11 + $0x378] sm:$0xff]
        %v2692 = vld [vmem:[#allocation11 + $0x380] sm:$0xff]
        %v2693 = vld [vmem:[#allocation11 + $0x388] sm:$0xff]
        %v2694 = vld [vmem:[#allocation11 + $0x390] sm:$0xff]
        %v2695 = vld [vmem:[#allocation11 + $0x398] sm:$0xff]
        %v2696 = vld [vmem:[#allocation11 + $0x3a0] sm:$0xff]
        %v2697 = vld [vmem:[#allocation11 + $0x3a8] sm:$0xff]
        %v2698 = vld [vmem:[#allocation11 + $0x3b0] sm:$0xff]
        %v2699 = vld [vmem:[#allocation11 + $0x3b8] sm:$0xff]
        %v2700 = vld [vmem:[#allocation11 + $0x3c0] sm:$0xff]
        %v2701 = vld [vmem:[#allocation11 + $0x3c8] sm:$0xff]
        %v2702 = vld [vmem:[#allocation11 + $0x3d0] sm:$0xff]
        %v2703 = vld [vmem:[#allocation11 + $0x3d8] sm:$0xff]
        %v2704 = vld [vmem:[#allocation11 + $0x3e0] sm:$0xff]
        %v2705 = vld [vmem:[#allocation11 + $0x3e8] sm:$0xff]
        %v2706 = vld [vmem:[#allocation11 + $0x3f0] sm:$0xff]
        %v2707 = vld [vmem:[#allocation11 + $0x3f8] sm:$0xff]
        %v2836 = vunpack.c.l.b16 %v2580
        %v2837 = vunpack.c.h.b16 %v2580
        %v2838 = vunpack.c.l.b16 %v2581
        %v2839 = vunpack.c.h.b16 %v2581
        %v2840 = vunpack.c.l.b16 %v2582
        %v2841 = vunpack.c.h.b16 %v2582
        %v2842 = vunpack.c.l.b16 %v2583
        %v2843 = vunpack.c.h.b16 %v2583
        %v2844 = vunpack.c.l.b16 %v2584
        %v2845 = vunpack.c.h.b16 %v2584
        %v2846 = vunpack.c.l.b16 %v2585
        %v2847 = vunpack.c.h.b16 %v2585
        %v2848 = vunpack.c.l.b16 %v2586
        %v2849 = vunpack.c.h.b16 %v2586
        %v2850 = vunpack.c.l.b16 %v2587
        %v2851 = vunpack.c.h.b16 %v2587
        %v2852 = vunpack.c.l.b16 %v2588
        %v2853 = vunpack.c.h.b16 %v2588
        %v2854 = vunpack.c.l.b16 %v2589
        %v2855 = vunpack.c.h.b16 %v2589
        %v2856 = vunpack.c.l.b16 %v2590
        %v2857 = vunpack.c.h.b16 %v2590
        %v2858 = vunpack.c.l.b16 %v2591
        %v2859 = vunpack.c.h.b16 %v2591
        %v2860 = vunpack.c.l.b16 %v2592
        %v2861 = vunpack.c.h.b16 %v2592
        %v2862 = vunpack.c.l.b16 %v2593
        %v2863 = vunpack.c.h.b16 %v2593
        %v2864 = vunpack.c.l.b16 %v2594
        %v2865 = vunpack.c.h.b16 %v2594
        %v2866 = vunpack.c.l.b16 %v2595
        %v2867 = vunpack.c.h.b16 %v2595
        %v2868 = vunpack.c.l.b16 %v2596
        %v2869 = vunpack.c.h.b16 %v2596
        %v2870 = vunpack.c.l.b16 %v2597
        %v2871 = vunpack.c.h.b16 %v2597
        %v2872 = vunpack.c.l.b16 %v2598
        %v2873 = vunpack.c.h.b16 %v2598
        %v2874 = vunpack.c.l.b16 %v2599
        %v2875 = vunpack.c.h.b16 %v2599
        %v2876 = vunpack.c.l.b16 %v2600
        %v2877 = vunpack.c.h.b16 %v2600
        %v2878 = vunpack.c.l.b16 %v2601
        %v2879 = vunpack.c.h.b16 %v2601
        %v2880 = vunpack.c.l.b16 %v2602
        %v2881 = vunpack.c.h.b16 %v2602
        %v2882 = vunpack.c.l.b16 %v2603
        %v2883 = vunpack.c.h.b16 %v2603
        %v2884 = vunpack.c.l.b16 %v2604
        %v2885 = vunpack.c.h.b16 %v2604
        %v2886 = vunpack.c.l.b16 %v2605
        %v2887 = vunpack.c.h.b16 %v2605
        %v2888 = vunpack.c.l.b16 %v2606
        %v2889 = vunpack.c.h.b16 %v2606
        %v2890 = vunpack.c.l.b16 %v2607
        %v2891 = vunpack.c.h.b16 %v2607
        %v2892 = vunpack.c.l.b16 %v2608
        %v2893 = vunpack.c.h.b16 %v2608
        %v2894 = vunpack.c.l.b16 %v2609
        %v2895 = vunpack.c.h.b16 %v2609
        %v2896 = vunpack.c.l.b16 %v2610
        %v2897 = vunpack.c.h.b16 %v2610
        %v2898 = vunpack.c.l.b16 %v2611
        %v2899 = vunpack.c.h.b16 %v2611
        %v2900 = vunpack.c.l.b16 %v2612
        %v2901 = vunpack.c.h.b16 %v2612
        %v2902 = vunpack.c.l.b16 %v2613
        %v2903 = vunpack.c.h.b16 %v2613
        %v2904 = vunpack.c.l.b16 %v2614
        %v2905 = vunpack.c.h.b16 %v2614
        %v2906 = vunpack.c.l.b16 %v2615
        %v2907 = vunpack.c.h.b16 %v2615
        %v2908 = vunpack.c.l.b16 %v2616
        %v2909 = vunpack.c.h.b16 %v2616
        %v2910 = vunpack.c.l.b16 %v2617
        %v2911 = vunpack.c.h.b16 %v2617
        %v2912 = vunpack.c.l.b16 %v2618
        %v2913 = vunpack.c.h.b16 %v2618
        %v2914 = vunpack.c.l.b16 %v2619
        %v2915 = vunpack.c.h.b16 %v2619
        %v2916 = vunpack.c.l.b16 %v2620
        %v2917 = vunpack.c.h.b16 %v2620
        %v2918 = vunpack.c.l.b16 %v2621
        %v2919 = vunpack.c.h.b16 %v2621
        %v2920 = vunpack.c.l.b16 %v2622
        %v2921 = vunpack.c.h.b16 %v2622
        %v2922 = vunpack.c.l.b16 %v2623
        %v2923 = vunpack.c.h.b16 %v2623
        %v2924 = vunpack.c.l.b16 %v2624
        %v2925 = vunpack.c.h.b16 %v2624
        %v2926 = vunpack.c.l.b16 %v2625
        %v2927 = vunpack.c.h.b16 %v2625
        %v2928 = vunpack.c.l.b16 %v2626
        %v2929 = vunpack.c.h.b16 %v2626
        %v2930 = vunpack.c.l.b16 %v2627
        %v2931 = vunpack.c.h.b16 %v2627
        %v2932 = vunpack.c.l.b16 %v2628
        %v2933 = vunpack.c.h.b16 %v2628
        %v2934 = vunpack.c.l.b16 %v2629
        %v2935 = vunpack.c.h.b16 %v2629
        %v2936 = vunpack.c.l.b16 %v2630
        %v2937 = vunpack.c.h.b16 %v2630
        %v2938 = vunpack.c.l.b16 %v2631
        %v2939 = vunpack.c.h.b16 %v2631
        %v2940 = vunpack.c.l.b16 %v2632
        %v2941 = vunpack.c.h.b16 %v2632
        %v2942 = vunpack.c.l.b16 %v2633
        %v2943 = vunpack.c.h.b16 %v2633
        %v2944 = vunpack.c.l.b16 %v2634
        %v2945 = vunpack.c.h.b16 %v2634
        %v2946 = vunpack.c.l.b16 %v2635
        %v2947 = vunpack.c.h.b16 %v2635
        %v2948 = vunpack.c.l.b16 %v2636
        %v2949 = vunpack.c.h.b16 %v2636
        %v2950 = vunpack.c.l.b16 %v2637
        %v2951 = vunpack.c.h.b16 %v2637
        %v2952 = vunpack.c.l.b16 %v2638
        %v2953 = vunpack.c.h.b16 %v2638
        %v2954 = vunpack.c.l.b16 %v2639
        %v2955 = vunpack.c.h.b16 %v2639
        %v2956 = vunpack.c.l.b16 %v2640
        %v2957 = vunpack.c.h.b16 %v2640
        %v2958 = vunpack.c.l.b16 %v2641
        %v2959 = vunpack.c.h.b16 %v2641
        %v2960 = vunpack.c.l.b16 %v2642
        %v2961 = vunpack.c.h.b16 %v2642
        %v2962 = vunpack.c.l.b16 %v2643
        %v2963 = vunpack.c.h.b16 %v2643
        %v2964 = vunpack.c.l.b16 %v2644
        %v2965 = vunpack.c.h.b16 %v2644
        %v2966 = vunpack.c.l.b16 %v2645
        %v2967 = vunpack.c.h.b16 %v2645
        %v2968 = vunpack.c.l.b16 %v2646
        %v2969 = vunpack.c.h.b16 %v2646
        %v2970 = vunpack.c.l.b16 %v2647
        %v2971 = vunpack.c.h.b16 %v2647
        %v2972 = vunpack.c.l.b16 %v2648
        %v2973 = vunpack.c.h.b16 %v2648
        %v2974 = vunpack.c.l.b16 %v2649
        %v2975 = vunpack.c.h.b16 %v2649
        %v2976 = vunpack.c.l.b16 %v2650
        %v2977 = vunpack.c.h.b16 %v2650
        %v2978 = vunpack.c.l.b16 %v2651
        %v2979 = vunpack.c.h.b16 %v2651
        %v2980 = vunpack.c.l.b16 %v2652
        %v2981 = vunpack.c.h.b16 %v2652
        %v2982 = vunpack.c.l.b16 %v2653
        %v2983 = vunpack.c.h.b16 %v2653
        %v2984 = vunpack.c.l.b16 %v2654
        %v2985 = vunpack.c.h.b16 %v2654
        %v2986 = vunpack.c.l.b16 %v2655
        %v2987 = vunpack.c.h.b16 %v2655
        %v2988 = vunpack.c.l.b16 %v2656
        %v2989 = vunpack.c.h.b16 %v2656
        %v2990 = vunpack.c.l.b16 %v2657
        %v2991 = vunpack.c.h.b16 %v2657
        %v2992 = vunpack.c.l.b16 %v2658
        %v2993 = vunpack.c.h.b16 %v2658
        %v2994 = vunpack.c.l.b16 %v2659
        %v2995 = vunpack.c.h.b16 %v2659
        %v2996 = vunpack.c.l.b16 %v2660
        %v2997 = vunpack.c.h.b16 %v2660
        %v2998 = vunpack.c.l.b16 %v2661
        %v2999 = vunpack.c.h.b16 %v2661
        %v3000 = vunpack.c.l.b16 %v2662
        %v3001 = vunpack.c.h.b16 %v2662
        %v3002 = vunpack.c.l.b16 %v2663
        %v3003 = vunpack.c.h.b16 %v2663
        %v3004 = vunpack.c.l.b16 %v2664
        %v3005 = vunpack.c.h.b16 %v2664
        %v3006 = vunpack.c.l.b16 %v2665
        %v3007 = vunpack.c.h.b16 %v2665
        %v3008 = vunpack.c.l.b16 %v2666
        %v3009 = vunpack.c.h.b16 %v2666
        %v3010 = vunpack.c.l.b16 %v2667
        %v3011 = vunpack.c.h.b16 %v2667
        %v3012 = vunpack.c.l.b16 %v2668
        %v3013 = vunpack.c.h.b16 %v2668
        %v3014 = vunpack.c.l.b16 %v2669
        %v3015 = vunpack.c.h.b16 %v2669
        %v3016 = vunpack.c.l.b16 %v2670
        %v3017 = vunpack.c.h.b16 %v2670
        %v3018 = vunpack.c.l.b16 %v2671
        %v3019 = vunpack.c.h.b16 %v2671
        %v3020 = vunpack.c.l.b16 %v2672
        %v3021 = vunpack.c.h.b16 %v2672
        %v3022 = vunpack.c.l.b16 %v2673
        %v3023 = vunpack.c.h.b16 %v2673
        %v3024 = vunpack.c.l.b16 %v2674
        %v3025 = vunpack.c.h.b16 %v2674
        %v3026 = vunpack.c.l.b16 %v2675
        %v3027 = vunpack.c.h.b16 %v2675
        %v3028 = vunpack.c.l.b16 %v2676
        %v3029 = vunpack.c.h.b16 %v2676
        %v3030 = vunpack.c.l.b16 %v2677
        %v3031 = vunpack.c.h.b16 %v2677
        %v3032 = vunpack.c.l.b16 %v2678
        %v3033 = vunpack.c.h.b16 %v2678
        %v3034 = vunpack.c.l.b16 %v2679
        %v3035 = vunpack.c.h.b16 %v2679
        %v3036 = vunpack.c.l.b16 %v2680
        %v3037 = vunpack.c.h.b16 %v2680
        %v3038 = vunpack.c.l.b16 %v2681
        %v3039 = vunpack.c.h.b16 %v2681
        %v3040 = vunpack.c.l.b16 %v2682
        %v3041 = vunpack.c.h.b16 %v2682
        %v3042 = vunpack.c.l.b16 %v2683
        %v3043 = vunpack.c.h.b16 %v2683
        %v3044 = vunpack.c.l.b16 %v2684
        %v3045 = vunpack.c.h.b16 %v2684
        %v3046 = vunpack.c.l.b16 %v2685
        %v3047 = vunpack.c.h.b16 %v2685
        %v3048 = vunpack.c.l.b16 %v2686
        %v3049 = vunpack.c.h.b16 %v2686
        %v3050 = vunpack.c.l.b16 %v2687
        %v3051 = vunpack.c.h.b16 %v2687
        %v3052 = vunpack.c.l.b16 %v2688
        %v3053 = vunpack.c.h.b16 %v2688
        %v3054 = vunpack.c.l.b16 %v2689
        %v3055 = vunpack.c.h.b16 %v2689
        %v3056 = vunpack.c.l.b16 %v2690
        %v3057 = vunpack.c.h.b16 %v2690
        %v3058 = vunpack.c.l.b16 %v2691
        %v3059 = vunpack.c.h.b16 %v2691
        %v3060 = vunpack.c.l.b16 %v2692
        %v3061 = vunpack.c.h.b16 %v2692
        %v3062 = vunpack.c.l.b16 %v2693
        %v3063 = vunpack.c.h.b16 %v2693
        %v3064 = vunpack.c.l.b16 %v2694
        %v3065 = vunpack.c.h.b16 %v2694
        %v3066 = vunpack.c.l.b16 %v2695
        %v3067 = vunpack.c.h.b16 %v2695
        %v3068 = vunpack.c.l.b16 %v2696
        %v3069 = vunpack.c.h.b16 %v2696
        %v3070 = vunpack.c.l.b16 %v2697
        %v3071 = vunpack.c.h.b16 %v2697
        %v3072 = vunpack.c.l.b16 %v2698
        %v3073 = vunpack.c.h.b16 %v2698
        %v3074 = vunpack.c.l.b16 %v2699
        %v3075 = vunpack.c.h.b16 %v2699
        %v3076 = vunpack.c.l.b16 %v2700
        %v3077 = vunpack.c.h.b16 %v2700
        %v3078 = vunpack.c.l.b16 %v2701
        %v3079 = vunpack.c.h.b16 %v2701
        %v3080 = vunpack.c.l.b16 %v2702
        %v3081 = vunpack.c.h.b16 %v2702
        %v3082 = vunpack.c.l.b16 %v2703
        %v3083 = vunpack.c.h.b16 %v2703
        %v3084 = vunpack.c.l.b16 %v2704
        %v3085 = vunpack.c.h.b16 %v2704
        %v3086 = vunpack.c.l.b16 %v2705
        %v3087 = vunpack.c.h.b16 %v2705
        %v3088 = vunpack.c.l.b16 %v2706
        %v3089 = vunpack.c.h.b16 %v2706
        %v3090 = vunpack.c.l.b16 %v2707
        %v3091 = vunpack.c.h.b16 %v2707
        %v3092 = vpack.c.b16 %v2840, %v2836
        %v3093 = vpack.c.b16 %v2841, %v2837
        %v3094 = vpack.c.b16 %v2842, %v2838
        %v3095 = vpack.c.b16 %v2843, %v2839
        %v3096 = vpack.c.b16 %v2848, %v2844
        %v3097 = vpack.c.b16 %v2849, %v2845
        %v3098 = vpack.c.b16 %v2850, %v2846
        %v3099 = vpack.c.b16 %v2851, %v2847
        %v3100 = vpack.c.b16 %v2856, %v2852
        %v3101 = vpack.c.b16 %v2857, %v2853
        %v3102 = vpack.c.b16 %v2858, %v2854
        %v3103 = vpack.c.b16 %v2859, %v2855
        %v3104 = vpack.c.b16 %v2864, %v2860
        %v3105 = vpack.c.b16 %v2865, %v2861
        %v3106 = vpack.c.b16 %v2866, %v2862
        %v3107 = vpack.c.b16 %v2867, %v2863
        %v3108 = vpack.c.b16 %v2872, %v2868
        %v3109 = vpack.c.b16 %v2873, %v2869
        %v3110 = vpack.c.b16 %v2874, %v2870
        %v3111 = vpack.c.b16 %v2875, %v2871
        %v3112 = vpack.c.b16 %v2880, %v2876
        %v3113 = vpack.c.b16 %v2881, %v2877
        %v3114 = vpack.c.b16 %v2882, %v2878
        %v3115 = vpack.c.b16 %v2883, %v2879
        %v3116 = vpack.c.b16 %v2888, %v2884
        %v3117 = vpack.c.b16 %v2889, %v2885
        %v3118 = vpack.c.b16 %v2890, %v2886
        %v3119 = vpack.c.b16 %v2891, %v2887
        %v3120 = vpack.c.b16 %v2896, %v2892
        %v3121 = vpack.c.b16 %v2897, %v2893
        %v3122 = vpack.c.b16 %v2898, %v2894
        %v3123 = vpack.c.b16 %v2899, %v2895
        %v3124 = vpack.c.b16 %v2904, %v2900
        %v3125 = vpack.c.b16 %v2905, %v2901
        %v3126 = vpack.c.b16 %v2906, %v2902
        %v3127 = vpack.c.b16 %v2907, %v2903
        %v3128 = vpack.c.b16 %v2912, %v2908
        %v3129 = vpack.c.b16 %v2913, %v2909
        %v3130 = vpack.c.b16 %v2914, %v2910
        %v3131 = vpack.c.b16 %v2915, %v2911
        %v3132 = vpack.c.b16 %v2920, %v2916
        %v3133 = vpack.c.b16 %v2921, %v2917
        %v3134 = vpack.c.b16 %v2922, %v2918
        %v3135 = vpack.c.b16 %v2923, %v2919
        %v3136 = vpack.c.b16 %v2928, %v2924
        %v3137 = vpack.c.b16 %v2929, %v2925
        %v3138 = vpack.c.b16 %v2930, %v2926
        %v3139 = vpack.c.b16 %v2931, %v2927
        %v3140 = vpack.c.b16 %v2936, %v2932
        %v3141 = vpack.c.b16 %v2937, %v2933
        %v3142 = vpack.c.b16 %v2938, %v2934
        %v3143 = vpack.c.b16 %v2939, %v2935
        %v3144 = vpack.c.b16 %v2944, %v2940
        %v3145 = vpack.c.b16 %v2945, %v2941
        %v3146 = vpack.c.b16 %v2946, %v2942
        %v3147 = vpack.c.b16 %v2947, %v2943
        %v3148 = vpack.c.b16 %v2952, %v2948
        %v3149 = vpack.c.b16 %v2953, %v2949
        %v3150 = vpack.c.b16 %v2954, %v2950
        %v3151 = vpack.c.b16 %v2955, %v2951
        %v3152 = vpack.c.b16 %v2960, %v2956
        %v3153 = vpack.c.b16 %v2961, %v2957
        %v3154 = vpack.c.b16 %v2962, %v2958
        %v3155 = vpack.c.b16 %v2963, %v2959
        %v3156 = vpack.c.b16 %v2968, %v2964
        %v3157 = vpack.c.b16 %v2969, %v2965
        %v3158 = vpack.c.b16 %v2970, %v2966
        %v3159 = vpack.c.b16 %v2971, %v2967
        %v3160 = vpack.c.b16 %v2976, %v2972
        %v3161 = vpack.c.b16 %v2977, %v2973
        %v3162 = vpack.c.b16 %v2978, %v2974
        %v3163 = vpack.c.b16 %v2979, %v2975
        %v3164 = vpack.c.b16 %v2984, %v2980
        %v3165 = vpack.c.b16 %v2985, %v2981
        %v3166 = vpack.c.b16 %v2986, %v2982
        %v3167 = vpack.c.b16 %v2987, %v2983
        %v3168 = vpack.c.b16 %v2992, %v2988
        %v3169 = vpack.c.b16 %v2993, %v2989
        %v3170 = vpack.c.b16 %v2994, %v2990
        %v3171 = vpack.c.b16 %v2995, %v2991
        %v3172 = vpack.c.b16 %v3000, %v2996
        %v3173 = vpack.c.b16 %v3001, %v2997
        %v3174 = vpack.c.b16 %v3002, %v2998
        %v3175 = vpack.c.b16 %v3003, %v2999
        %v3176 = vpack.c.b16 %v3008, %v3004
        %v3177 = vpack.c.b16 %v3009, %v3005
        %v3178 = vpack.c.b16 %v3010, %v3006
        %v3179 = vpack.c.b16 %v3011, %v3007
        %v3180 = vpack.c.b16 %v3016, %v3012
        %v3181 = vpack.c.b16 %v3017, %v3013
        %v3182 = vpack.c.b16 %v3018, %v3014
        %v3183 = vpack.c.b16 %v3019, %v3015
        %v3184 = vpack.c.b16 %v3024, %v3020
        %v3185 = vpack.c.b16 %v3025, %v3021
        %v3186 = vpack.c.b16 %v3026, %v3022
        %v3187 = vpack.c.b16 %v3027, %v3023
        %v3188 = vpack.c.b16 %v3032, %v3028
        %v3189 = vpack.c.b16 %v3033, %v3029
        %v3190 = vpack.c.b16 %v3034, %v3030
        %v3191 = vpack.c.b16 %v3035, %v3031
        %v3192 = vpack.c.b16 %v3040, %v3036
        %v3193 = vpack.c.b16 %v3041, %v3037
        %v3194 = vpack.c.b16 %v3042, %v3038
        %v3195 = vpack.c.b16 %v3043, %v3039
        %v3196 = vpack.c.b16 %v3048, %v3044
        %v3197 = vpack.c.b16 %v3049, %v3045
        %v3198 = vpack.c.b16 %v3050, %v3046
        %v3199 = vpack.c.b16 %v3051, %v3047
        %v3200 = vpack.c.b16 %v3056, %v3052
        %v3201 = vpack.c.b16 %v3057, %v3053
        %v3202 = vpack.c.b16 %v3058, %v3054
        %v3203 = vpack.c.b16 %v3059, %v3055
        %v3204 = vpack.c.b16 %v3064, %v3060
        %v3205 = vpack.c.b16 %v3065, %v3061
        %v3206 = vpack.c.b16 %v3066, %v3062
        %v3207 = vpack.c.b16 %v3067, %v3063
        %v3208 = vpack.c.b16 %v3072, %v3068
        %v3209 = vpack.c.b16 %v3073, %v3069
        %v3210 = vpack.c.b16 %v3074, %v3070
        %v3211 = vpack.c.b16 %v3075, %v3071
        %v3212 = vpack.c.b16 %v3080, %v3076
        %v3213 = vpack.c.b16 %v3081, %v3077
        %v3214 = vpack.c.b16 %v3082, %v3078
        %v3215 = vpack.c.b16 %v3083, %v3079
        %v3216 = vpack.c.b16 %v3088, %v3084
        %v3217 = vpack.c.b16 %v3089, %v3085
        %v3218 = vpack.c.b16 %v3090, %v3086
        %v3219 = vpack.c.b16 %v3091, %v3087
        %3348 = vmatprep.subr.bf16.mxu0 %v3121
        %3349 = vmatpush1.bf16.msra.mxu0 %v3120
        %3350 = vmatprep.subr.bf16.mxu0 %v3117
        %3351 = vmatpush1.bf16.msra.mxu0 %v3116
        %3352 = vmatprep.subr.bf16.mxu0 %v3113
        %3353 = vmatpush1.bf16.msra.mxu0 %v3112
        %3354 = vmatprep.subr.bf16.mxu0 %v3109
        %3355 = vmatpush1.bf16.msra.mxu0 %v3108
        %3356 = vmatprep.subr.bf16.mxu0 %v3105
        %3357 = vmatpush1.bf16.msra.mxu0 %v3104
        %3358 = vmatprep.subr.bf16.mxu0 %v3101
        %3359 = vmatpush1.bf16.msra.mxu0 %v3100
        %3360 = vmatprep.subr.bf16.mxu0 %v3097
        %3361 = vmatpush1.bf16.msra.mxu0 %v3096
        %3362 = vmatprep.subr.bf16.mxu0 %v3093
        %3363 = vmatpush1.bf16.msra.mxu0 %v3092
        %3364 = vmatprep.subr.bf16.mxu0 %v3153
        %3365 = vmatpush2.bf16.msra.mxu0 %v3152
        %3366 = vmatprep.subr.bf16.mxu0 %v3149
        %3367 = vmatpush2.bf16.msra.mxu0 %v3148
        %3368 = vmatprep.subr.bf16.mxu0 %v3145
        %3369 = vmatpush2.bf16.msra.mxu0 %v3144
        %3370 = vmatprep.subr.bf16.mxu0 %v3141
        %3371 = vmatpush2.bf16.msra.mxu0 %v3140
        %3372 = vmatprep.subr.bf16.mxu0 %v3137
        %3373 = vmatpush2.bf16.msra.mxu0 %v3136
        %3374 = vmatprep.subr.bf16.mxu0 %v3133
        %3375 = vmatpush2.bf16.msra.mxu0 %v3132
        %3376 = vmatprep.subr.bf16.mxu0 %v3129
        %3377 = vmatpush2.bf16.msra.mxu0 %v3128
        %3378 = vmatprep.subr.bf16.mxu0 %v3125
        %3379 = vmatpush2.bf16.msra.mxu0 %v3124
        %3380 = vmatprep.mubr.bf16.mxu0 %v713
        %3381 = vmatmul.mubr.bf16.gmra.mxu0 %v712
        %v3382 = vpop.f32.mrf.mxu0
        %v3383 = vadd.f32 0.0, %v3382
        %v3384 = vpop.f32.mrf.mxu0
        %v3385 = vadd.f32 0.0, %v3384
        %v3386 = vpop.f32.mrf.mxu0
        %v3387 = vpop.f32.mrf.mxu0
        %3388 = vdwg.mxu0
        %3389 = vmatprep.subr.bf16.mxu0 %v3185
        %3390 = vmatpush1.bf16.msra.mxu0 %v3184
        %3391 = vmatprep.subr.bf16.mxu0 %v3181
        %3392 = vmatpush1.bf16.msra.mxu0 %v3180
        %3393 = vmatprep.subr.bf16.mxu0 %v3177
        %3394 = vmatpush1.bf16.msra.mxu0 %v3176
        %3395 = vmatprep.subr.bf16.mxu0 %v3173
        %3396 = vmatpush1.bf16.msra.mxu0 %v3172
        %3397 = vmatprep.subr.bf16.mxu0 %v3169
        %3398 = vmatpush1.bf16.msra.mxu0 %v3168
        %3399 = vmatprep.subr.bf16.mxu0 %v3165
        %3400 = vmatpush1.bf16.msra.mxu0 %v3164
        %3401 = vmatprep.subr.bf16.mxu0 %v3161
        %3402 = vmatpush1.bf16.msra.mxu0 %v3160
        %3403 = vmatprep.subr.bf16.mxu0 %v3157
        %3404 = vmatpush1.bf16.msra.mxu0 %v3156
        %3405 = vmatprep.subr.bf16.mxu0 %v3217
        %3406 = vmatpush2.bf16.msra.mxu0 %v3216
        %3407 = vmatprep.subr.bf16.mxu0 %v3213
        %3408 = vmatpush2.bf16.msra.mxu0 %v3212
        %3409 = vmatprep.subr.bf16.mxu0 %v3209
        %3410 = vmatpush2.bf16.msra.mxu0 %v3208
        %3411 = vmatprep.subr.bf16.mxu0 %v3205
        %3412 = vmatpush2.bf16.msra.mxu0 %v3204
        %3413 = vmatprep.subr.bf16.mxu0 %v3201
        %3414 = vmatpush2.bf16.msra.mxu0 %v3200
        %3415 = vmatprep.subr.bf16.mxu0 %v3197
        %3416 = vmatpush2.bf16.msra.mxu0 %v3196
        %3417 = vmatprep.subr.bf16.mxu0 %v3193
        %3418 = vmatpush2.bf16.msra.mxu0 %v3192
        %3419 = vmatprep.subr.bf16.mxu0 %v3189
        %3420 = vmatpush2.bf16.msra.mxu0 %v3188
        %3421 = vmatprep.mubr.bf16.mxu0 %v715
        %3422 = vmatmul.mubr.bf16.gmra.mxu0 %v714
        %v3423 = vpop.f32.mrf.mxu0
        %v3424 = vadd.f32 %v3383, %v3423
        %v3425 = vpop.f32.mrf.mxu0
        %v3426 = vadd.f32 %v3385, %v3425
        %v3427 = vpop.f32.mrf.mxu0
        %v3428 = vpop.f32.mrf.mxu0
        %3429 = vdwg.mxu0
        %3430 = vmatprep.subr.bf16.mxu0 %v3123
        %3431 = vmatpush1.bf16.msra.mxu0 %v3122
        %3432 = vmatprep.subr.bf16.mxu0 %v3119
        %3433 = vmatpush1.bf16.msra.mxu0 %v3118
        %3434 = vmatprep.subr.bf16.mxu0 %v3115
        %3435 = vmatpush1.bf16.msra.mxu0 %v3114
        %3436 = vmatprep.subr.bf16.mxu0 %v3111
        %3437 = vmatpush1.bf16.msra.mxu0 %v3110
        %3438 = vmatprep.subr.bf16.mxu0 %v3107
        %3439 = vmatpush1.bf16.msra.mxu0 %v3106
        %3440 = vmatprep.subr.bf16.mxu0 %v3103
        %3441 = vmatpush1.bf16.msra.mxu0 %v3102
        %3442 = vmatprep.subr.bf16.mxu0 %v3099
        %3443 = vmatpush1.bf16.msra.mxu0 %v3098
        %3444 = vmatprep.subr.bf16.mxu0 %v3095
        %3445 = vmatpush1.bf16.msra.mxu0 %v3094
        %3446 = vmatprep.subr.bf16.mxu0 %v3155
        %3447 = vmatpush2.bf16.msra.mxu0 %v3154
        %3448 = vmatprep.subr.bf16.mxu0 %v3151
        %3449 = vmatpush2.bf16.msra.mxu0 %v3150
        %3450 = vmatprep.subr.bf16.mxu0 %v3147
        %3451 = vmatpush2.bf16.msra.mxu0 %v3146
        %3452 = vmatprep.subr.bf16.mxu0 %v3143
        %3453 = vmatpush2.bf16.msra.mxu0 %v3142
        %3454 = vmatprep.subr.bf16.mxu0 %v3139
        %3455 = vmatpush2.bf16.msra.mxu0 %v3138
        %3456 = vmatprep.subr.bf16.mxu0 %v3135
        %3457 = vmatpush2.bf16.msra.mxu0 %v3134
        %3458 = vmatprep.subr.bf16.mxu0 %v3131
        %3459 = vmatpush2.bf16.msra.mxu0 %v3130
        %3460 = vmatprep.subr.bf16.mxu0 %v3127
        %3461 = vmatpush2.bf16.msra.mxu0 %v3126
        %3462 = vmatprep.mubr.bf16.mxu0 %v713
        %3463 = vmatmul.mubr.bf16.gmra.mxu0 %v712
        %v3464 = vpop.f32.mrf.mxu0
        %v3465 = vadd.f32 0.0, %v3464
        %v3466 = vpop.f32.mrf.mxu0
        %v3467 = vadd.f32 0.0, %v3466
        %v3468 = vpop.f32.mrf.mxu0
        %v3469 = vpop.f32.mrf.mxu0
        %3470 = vdwg.mxu0
        %3471 = vmatprep.subr.bf16.mxu0 %v3187
        %3472 = vmatpush1.bf16.msra.mxu0 %v3186
        %3473 = vmatprep.subr.bf16.mxu0 %v3183
        %3474 = vmatpush1.bf16.msra.mxu0 %v3182
        %3475 = vmatprep.subr.bf16.mxu0 %v3179
        %3476 = vmatpush1.bf16.msra.mxu0 %v3178
        %3477 = vmatprep.subr.bf16.mxu0 %v3175
        %3478 = vmatpush1.bf16.msra.mxu0 %v3174
        %3479 = vmatprep.subr.bf16.mxu0 %v3171
        %3480 = vmatpush1.bf16.msra.mxu0 %v3170
        %3481 = vmatprep.subr.bf16.mxu0 %v3167
        %3482 = vmatpush1.bf16.msra.mxu0 %v3166
        %3483 = vmatprep.subr.bf16.mxu0 %v3163
        %3484 = vmatpush1.bf16.msra.mxu0 %v3162
        %3485 = vmatprep.subr.bf16.mxu0 %v3159
        %3486 = vmatpush1.bf16.msra.mxu0 %v3158
        %3487 = vmatprep.subr.bf16.mxu0 %v3219
        %3488 = vmatpush2.bf16.msra.mxu0 %v3218
        %3489 = vmatprep.subr.bf16.mxu0 %v3215
        %3490 = vmatpush2.bf16.msra.mxu0 %v3214
        %3491 = vmatprep.subr.bf16.mxu0 %v3211
        %3492 = vmatpush2.bf16.msra.mxu0 %v3210
        %3493 = vmatprep.subr.bf16.mxu0 %v3207
        %3494 = vmatpush2.bf16.msra.mxu0 %v3206
        %3495 = vmatprep.subr.bf16.mxu0 %v3203
        %3496 = vmatpush2.bf16.msra.mxu0 %v3202
        %3497 = vmatprep.subr.bf16.mxu0 %v3199
        %3498 = vmatpush2.bf16.msra.mxu0 %v3198
        %3499 = vmatprep.subr.bf16.mxu0 %v3195
        %3500 = vmatpush2.bf16.msra.mxu0 %v3194
        %3501 = vmatprep.subr.bf16.mxu0 %v3191
        %3502 = vmatpush2.bf16.msra.mxu0 %v3190
        %3503 = vmatprep.mubr.bf16.mxu0 %v715
        %3504 = vmatmul.mubr.bf16.gmra.mxu0 %v714
        %v3505 = vpop.f32.mrf.mxu0
        %v3506 = vadd.f32 %v3465, %v3505
        %v3507 = vpop.f32.mrf.mxu0
        %v3508 = vadd.f32 %v3467, %v3507
        %v3509 = vpop.f32.mrf.mxu0
        %v3510 = vpop.f32.mrf.mxu0
        %3511 = vdwg.mxu0
        %v3512 = vpack.c.bf16 %v1560, %v1560
        %v3513 = vpack.c.bf16 %v1562, %v1562
        %v3514 = vpack.c.bf16 %v1642, %v1642
        %v3515 = vpack.c.bf16 %v1644, %v1644
        %v3516 = vpack.c.bf16 %v2492, %v2492
        %v3517 = vpack.c.bf16 %v2494, %v2494
        %v3518 = vpack.c.bf16 %v2574, %v2574
        %v3519 = vpack.c.bf16 %v2576, %v2576
        %v3520 = vpack.c.bf16 %v3424, %v3424
        %v3521 = vpack.c.bf16 %v3426, %v3426
        %v3522 = vpack.c.bf16 %v3506, %v3506
        %v3523 = vpack.c.bf16 %v3508, %v3508
        %vm3524 = vcmask 523264
        %v3526 = vsel %vm3524, %v3512, 0
        %v3529 = vsel %vm3524, %v3516, 0
        %3531 = vmatprep.subr.bf16.mxu0 0
        %3532 = vmatpush1.bf16.xpose.msra.mxu0 0
        %3533 = vmatprep.subr.bf16.mxu0 0
        %3534 = vmatpush1.bf16.xpose.msra.mxu0 0
        %3535 = vmatprep.subr.bf16.mxu0 0
        %3536 = vmatpush1.bf16.xpose.msra.mxu0 0
        %3537 = vmatprep.subr.bf16.mxu0 0
        %3538 = vmatpush1.bf16.xpose.msra.mxu0 0
        %3539 = vmatprep.subr.bf16.mxu0 0
        %3540 = vmatpush1.bf16.xpose.msra.mxu0 0
        %3541 = vmatprep.subr.bf16.mxu0 0
        %3542 = vmatpush1.bf16.xpose.msra.mxu0 0
        %3543 = vmatprep.subr.bf16.mxu0 0
        %3544 = vmatpush1.bf16.xpose.msra.mxu0 0
        %3545 = vmatprep.subr.bf16.mxu0 0
        %3546 = vmatpush1.bf16.xpose.msra.mxu0 %v3529
        %3547 = vmatprep.subr.bf16.mxu0 0
        %3548 = vmatpush2.bf16.xpose.msra.mxu0 0
        %3549 = vmatprep.subr.bf16.mxu0 0
        %3550 = vmatpush2.bf16.xpose.msra.mxu0 0
        %3551 = vmatprep.subr.bf16.mxu0 0
        %3552 = vmatpush2.bf16.xpose.msra.mxu0 0
        %3553 = vmatprep.subr.bf16.mxu0 0
        %3554 = vmatpush2.bf16.xpose.msra.mxu0 0
        %3555 = vmatprep.subr.bf16.mxu0 0
        %3556 = vmatpush2.bf16.xpose.msra.mxu0 0
        %3557 = vmatprep.subr.bf16.mxu0 0
        %3558 = vmatpush2.bf16.xpose.msra.mxu0 0
        %3559 = vmatprep.subr.bf16.mxu0 0
        %3560 = vmatpush2.bf16.xpose.msra.mxu0 0
        %3561 = vmatprep.subr.bf16.mxu0 0
        %3562 = vmatpush2.bf16.xpose.msra.mxu0 0
        %3563 = vmatprep.mubr.bf16.mxu0 0
        %3564 = vmatmul.mubr.bf16.gmra.mxu0 %v3526
        %v3565 = vpop.f32.mrf.mxu0
        %v3566 = vadd.f32 0.0, %v3565
        %v3567 = vpop.f32.mrf.mxu0
        %v3568 = vpop.f32.mrf.mxu0
        %v3569 = vpop.f32.mrf.mxu0
        %3570 = vdwg.mxu0
        %v3571 = vmul.f32 %v3566, 0.125
        %v3572 = vadd.f32 %v3571, %v709
        %vm3573 = vcmask 64512
        %v3574 = vsel %vm3573, %v3572, -inf
        %3575 = vmax.xlane.f32.xlu0 %v3574
        %v3576 = vpop.xlane.xlu0 %3575
        %v3577 = vsub.f32 %v3572, %v3576
        %v3578 = vmul.f32 %v3577, 1.442695
        %v3579 = vpow.pop %v3578
        %v3580 = vsel %vm3573, %v3579, 0.0
        %3581 = vadd.xlane.f32.xlu0 %v3580
        %v3582 = vpop.xlane.xlu0 %3581
        %v3583 = vrcp.pop %v3582
        %v3584 = vmul.f32 %v3579, %v3583
        %3585 = vst.msk [vmem:[%s690] sm:$0xff] %vm3573, %v3584
        %v3586 = vpack.c.bf16 %v3584, %v3584
        %v3588 = vsel %vm3573, %v3586, 0
        %vm3590 = vcmask 1043456
        %v3592 = vsel %vm3590, %v3520, 0
        %3594 = vmatprep.subr.bf16.mxu0 0
        %3595 = vmatpush1.bf16.msra.mxu0 0
        %3596 = vmatprep.subr.bf16.mxu0 0
        %3597 = vmatpush1.bf16.msra.mxu0 0
        %3598 = vmatprep.subr.bf16.mxu0 0
        %3599 = vmatpush1.bf16.msra.mxu0 0
        %3600 = vmatprep.subr.bf16.mxu0 0
        %3601 = vmatpush1.bf16.msra.mxu0 0
        %3602 = vmatprep.subr.bf16.mxu0 0
        %3603 = vmatpush1.bf16.msra.mxu0 0
        %3604 = vmatprep.subr.bf16.mxu0 0
        %3605 = vmatpush1.bf16.msra.mxu0 0
        %3606 = vmatprep.subr.bf16.mxu0 0
        %3607 = vmatpush1.bf16.msra.mxu0 0
        %3608 = vmatprep.subr.bf16.mxu0 0
        %3609 = vmatpush1.bf16.msra.mxu0 %v3592
        %3610 = vmatprep.subr.bf16.mxu0 0
        %3611 = vmatpush2.bf16.msra.mxu0 0
        %3612 = vmatprep.subr.bf16.mxu0 0
        %3613 = vmatpush2.bf16.msra.mxu0 0
        %3614 = vmatprep.subr.bf16.mxu0 0
        %3615 = vmatpush2.bf16.msra.mxu0 0
        %3616 = vmatprep.subr.bf16.mxu0 0
        %3617 = vmatpush2.bf16.msra.mxu0 0
        %3618 = vmatprep.subr.bf16.mxu0 0
        %3619 = vmatpush2.bf16.msra.mxu0 0
        %3620 = vmatprep.subr.bf16.mxu0 0
        %3621 = vmatpush2.bf16.msra.mxu0 0
        %3622 = vmatprep.subr.bf16.mxu0 0
        %3623 = vmatpush2.bf16.msra.mxu0 0
        %3624 = vmatprep.subr.bf16.mxu0 0
        %3625 = vmatpush2.bf16.msra.mxu0 0
        %3626 = vmatprep.mubr.bf16.mxu0 0
        %3627 = vmatmul.mubr.bf16.gmra.mxu0 %v3588
        %v3628 = vpop.f32.mrf.mxu0
        %v3629 = vadd.f32 0.0, %v3628
        %v3630 = vpop.f32.mrf.mxu0
        %v3631 = vpop.f32.mrf.mxu0
        %v3632 = vpop.f32.mrf.mxu0
        %3633 = vdwg.mxu0
        %3634 = vst.msk [vmem:[#allocation2] sm:$0xff] %vm3524, %v3629
        %3636 = vrot.lane.b32.xlu0 %v3512, 64
        %v3637 = vpop.permute.xlu0 %3636
        %3639 = vrot.lane.b32.xlu0 %v3516, 64
        %v3640 = vpop.permute.xlu0 %3639
        %v3642 = vsel %vm3524, %v3637, 0
        %v3645 = vsel %vm3524, %v3640, 0
        %3647 = vmatprep.subr.bf16.mxu0 0
        %3648 = vmatpush1.bf16.xpose.msra.mxu0 0
        %3649 = vmatprep.subr.bf16.mxu0 0
        %3650 = vmatpush1.bf16.xpose.msra.mxu0 0
        %3651 = vmatprep.subr.bf16.mxu0 0
        %3652 = vmatpush1.bf16.xpose.msra.mxu0 0
        %3653 = vmatprep.subr.bf16.mxu0 0
        %3654 = vmatpush1.bf16.xpose.msra.mxu0 0
        %3655 = vmatprep.subr.bf16.mxu0 0
        %3656 = vmatpush1.bf16.xpose.msra.mxu0 0
        %3657 = vmatprep.subr.bf16.mxu0 0
        %3658 = vmatpush1.bf16.xpose.msra.mxu0 0
        %3659 = vmatprep.subr.bf16.mxu0 0
        %3660 = vmatpush1.bf16.xpose.msra.mxu0 0
        %3661 = vmatprep.subr.bf16.mxu0 0
        %3662 = vmatpush1.bf16.xpose.msra.mxu0 %v3645
        %3663 = vmatprep.subr.bf16.mxu0 0
        %3664 = vmatpush2.bf16.xpose.msra.mxu0 0
        %3665 = vmatprep.subr.bf16.mxu0 0
        %3666 = vmatpush2.bf16.xpose.msra.mxu0 0
        %3667 = vmatprep.subr.bf16.mxu0 0
        %3668 = vmatpush2.bf16.xpose.msra.mxu0 0
        %3669 = vmatprep.subr.bf16.mxu0 0
        %3670 = vmatpush2.bf16.xpose.msra.mxu0 0
        %3671 = vmatprep.subr.bf16.mxu0 0
        %3672 = vmatpush2.bf16.xpose.msra.mxu0 0
        %3673 = vmatprep.subr.bf16.mxu0 0
        %3674 = vmatpush2.bf16.xpose.msra.mxu0 0
        %3675 = vmatprep.subr.bf16.mxu0 0
        %3676 = vmatpush2.bf16.xpose.msra.mxu0 0
        %3677 = vmatprep.subr.bf16.mxu0 0
        %3678 = vmatpush2.bf16.xpose.msra.mxu0 0
        %3679 = vmatprep.mubr.bf16.mxu0 0
        %3680 = vmatmul.mubr.bf16.gmra.mxu0 %v3642
        %v3681 = vpop.f32.mrf.mxu0
        %v3682 = vadd.f32 0.0, %v3681
        %v3683 = vpop.f32.mrf.mxu0
        %v3684 = vpop.f32.mrf.mxu0
        %v3685 = vpop.f32.mrf.mxu0
        %3686 = vdwg.mxu0
        %v3687 = vmul.f32 %v3682, 0.125
        %v3688 = vadd.f32 %v3687, %v709
        %v3689 = vsel %vm3573, %v3688, -inf
        %3690 = vmax.xlane.f32.xlu0 %v3689
        %v3691 = vpop.xlane.xlu0 %3690
        %v3692 = vsub.f32 %v3688, %v3691
        %v3693 = vmul.f32 %v3692, 1.442695
        %v3694 = vpow.pop %v3693
        %v3695 = vsel %vm3573, %v3694, 0.0
        %3696 = vadd.xlane.f32.xlu0 %v3695
        %v3697 = vpop.xlane.xlu0 %3696
        %v3698 = vrcp.pop %v3697
        %v3699 = vmul.f32 %v3694, %v3698
        %3701 = vrot.lane.b32.xlu0 %v3699, 8
        %v3702 = vpop.permute.xlu0 %3701
        %vm3704 = vcmask 130112
        %3705 = vst.msk [vmem:[%s690] sm:$0xff] %vm3704, %v3702
        %v3706 = vpack.c.bf16 %v3699, %v3699
        %3708 = vrot.lane.b32.xlu0 %v3520, 64
        %v3709 = vpop.permute.xlu0 %3708
        %v3711 = vsel %vm3573, %v3706, 0
        %v3714 = vsel %vm3590, %v3709, 0
        %3716 = vmatprep.subr.bf16.mxu0 0
        %3717 = vmatpush1.bf16.msra.mxu0 0
        %3718 = vmatprep.subr.bf16.mxu0 0
        %3719 = vmatpush1.bf16.msra.mxu0 0
        %3720 = vmatprep.subr.bf16.mxu0 0
        %3721 = vmatpush1.bf16.msra.mxu0 0
        %3722 = vmatprep.subr.bf16.mxu0 0
        %3723 = vmatpush1.bf16.msra.mxu0 0
        %3724 = vmatprep.subr.bf16.mxu0 0
        %3725 = vmatpush1.bf16.msra.mxu0 0
        %3726 = vmatprep.subr.bf16.mxu0 0
        %3727 = vmatpush1.bf16.msra.mxu0 0
        %3728 = vmatprep.subr.bf16.mxu0 0
        %3729 = vmatpush1.bf16.msra.mxu0 0
        %3730 = vmatprep.subr.bf16.mxu0 0
        %3731 = vmatpush1.bf16.msra.mxu0 %v3714
        %3732 = vmatprep.subr.bf16.mxu0 0
        %3733 = vmatpush2.bf16.msra.mxu0 0
        %3734 = vmatprep.subr.bf16.mxu0 0
        %3735 = vmatpush2.bf16.msra.mxu0 0
        %3736 = vmatprep.subr.bf16.mxu0 0
        %3737 = vmatpush2.bf16.msra.mxu0 0
        %3738 = vmatprep.subr.bf16.mxu0 0
        %3739 = vmatpush2.bf16.msra.mxu0 0
        %3740 = vmatprep.subr.bf16.mxu0 0
        %3741 = vmatpush2.bf16.msra.mxu0 0
        %3742 = vmatprep.subr.bf16.mxu0 0
        %3743 = vmatpush2.bf16.msra.mxu0 0
        %3744 = vmatprep.subr.bf16.mxu0 0
        %3745 = vmatpush2.bf16.msra.mxu0 0
        %3746 = vmatprep.subr.bf16.mxu0 0
        %3747 = vmatpush2.bf16.msra.mxu0 0
        %3748 = vmatprep.mubr.bf16.mxu0 0
        %3749 = vmatmul.mubr.bf16.gmra.mxu0 %v3711
        %v3750 = vpop.f32.mrf.mxu0
        %v3751 = vadd.f32 0.0, %v3750
        %v3752 = vpop.f32.mrf.mxu0
        %v3753 = vpop.f32.mrf.mxu0
        %v3754 = vpop.f32.mrf.mxu0
        %3755 = vdwg.mxu0
        %3757 = vrot.lane.b32.xlu0 %v3751, 64
        %v3758 = vpop.permute.xlu0 %3757
        %vm3760 = vcmask 1048064
        %3761 = vst.msk [vmem:[#allocation2] sm:$0xff] %vm3760, %v3758
        %v3763 = vsel %vm3524, %v3513, 0
        %v3766 = vsel %vm3524, %v3517, 0
        %3768 = vmatprep.subr.bf16.mxu0 0
        %3769 = vmatpush1.bf16.xpose.msra.mxu0 0
        %3770 = vmatprep.subr.bf16.mxu0 0
        %3771 = vmatpush1.bf16.xpose.msra.mxu0 0
        %3772 = vmatprep.subr.bf16.mxu0 0
        %3773 = vmatpush1.bf16.xpose.msra.mxu0 0
        %3774 = vmatprep.subr.bf16.mxu0 0
        %3775 = vmatpush1.bf16.xpose.msra.mxu0 0
        %3776 = vmatprep.subr.bf16.mxu0 0
        %3777 = vmatpush1.bf16.xpose.msra.mxu0 0
        %3778 = vmatprep.subr.bf16.mxu0 0
        %3779 = vmatpush1.bf16.xpose.msra.mxu0 0
        %3780 = vmatprep.subr.bf16.mxu0 0
        %3781 = vmatpush1.bf16.xpose.msra.mxu0 0
        %3782 = vmatprep.subr.bf16.mxu0 0
        %3783 = vmatpush1.bf16.xpose.msra.mxu0 %v3766
        %3784 = vmatprep.subr.bf16.mxu0 0
        %3785 = vmatpush2.bf16.xpose.msra.mxu0 0
        %3786 = vmatprep.subr.bf16.mxu0 0
        %3787 = vmatpush2.bf16.xpose.msra.mxu0 0
        %3788 = vmatprep.subr.bf16.mxu0 0
        %3789 = vmatpush2.bf16.xpose.msra.mxu0 0
        %3790 = vmatprep.subr.bf16.mxu0 0
        %3791 = vmatpush2.bf16.xpose.msra.mxu0 0
        %3792 = vmatprep.subr.bf16.mxu0 0
        %3793 = vmatpush2.bf16.xpose.msra.mxu0 0
        %3794 = vmatprep.subr.bf16.mxu0 0
        %3795 = vmatpush2.bf16.xpose.msra.mxu0 0
        %3796 = vmatprep.subr.bf16.mxu0 0
        %3797 = vmatpush2.bf16.xpose.msra.mxu0 0
        %3798 = vmatprep.subr.bf16.mxu0 0
        %3799 = vmatpush2.bf16.xpose.msra.mxu0 0
        %3800 = vmatprep.mubr.bf16.mxu0 0
        %3801 = vmatmul.mubr.bf16.gmra.mxu0 %v3763
        %v3802 = vpop.f32.mrf.mxu0
        %v3803 = vadd.f32 0.0, %v3802
        %v3804 = vpop.f32.mrf.mxu0
        %v3805 = vpop.f32.mrf.mxu0
        %v3806 = vpop.f32.mrf.mxu0
        %3807 = vdwg.mxu0
        %v3808 = vmul.f32 %v3803, 0.125
        %v3809 = vadd.f32 %v3808, %v709
        %v3810 = vsel %vm3573, %v3809, -inf
        %3811 = vmax.xlane.f32.xlu0 %v3810
        %v3812 = vpop.xlane.xlu0 %3811
        %v3813 = vsub.f32 %v3809, %v3812
        %v3814 = vmul.f32 %v3813, 1.442695
        %v3815 = vpow.pop %v3814
        %v3816 = vsel %vm3573, %v3815, 0.0
        %3817 = vadd.xlane.f32.xlu0 %v3816
        %v3818 = vpop.xlane.xlu0 %3817
        %v3819 = vrcp.pop %v3818
        %v3820 = vmul.f32 %v3815, %v3819
        %3822 = vrot.lane.b32.xlu0 %v3820, 16
        %v3823 = vpop.permute.xlu0 %3822
        %vm3825 = vcmask 195712
        %3826 = vst.msk [vmem:[%s690] sm:$0xff] %vm3825, %v3823
        %v3827 = vpack.c.bf16 %v3820, %v3820
        %v3829 = vsel %vm3573, %v3827, 0
        %v3832 = vsel %vm3590, %v3521, 0
        %3834 = vmatprep.subr.bf16.mxu0 0
        %3835 = vmatpush1.bf16.msra.mxu0 0
        %3836 = vmatprep.subr.bf16.mxu0 0
        %3837 = vmatpush1.bf16.msra.mxu0 0
        %3838 = vmatprep.subr.bf16.mxu0 0
        %3839 = vmatpush1.bf16.msra.mxu0 0
        %3840 = vmatprep.subr.bf16.mxu0 0
        %3841 = vmatpush1.bf16.msra.mxu0 0
        %3842 = vmatprep.subr.bf16.mxu0 0
        %3843 = vmatpush1.bf16.msra.mxu0 0
        %3844 = vmatprep.subr.bf16.mxu0 0
        %3845 = vmatpush1.bf16.msra.mxu0 0
        %3846 = vmatprep.subr.bf16.mxu0 0
        %3847 = vmatpush1.bf16.msra.mxu0 0
        %3848 = vmatprep.subr.bf16.mxu0 0
        %3849 = vmatpush1.bf16.msra.mxu0 %v3832
        %3850 = vmatprep.subr.bf16.mxu0 0
        %3851 = vmatpush2.bf16.msra.mxu0 0
        %3852 = vmatprep.subr.bf16.mxu0 0
        %3853 = vmatpush2.bf16.msra.mxu0 0
        %3854 = vmatprep.subr.bf16.mxu0 0
        %3855 = vmatpush2.bf16.msra.mxu0 0
        %3856 = vmatprep.subr.bf16.mxu0 0
        %3857 = vmatpush2.bf16.msra.mxu0 0
        %3858 = vmatprep.subr.bf16.mxu0 0
        %3859 = vmatpush2.bf16.msra.mxu0 0
        %3860 = vmatprep.subr.bf16.mxu0 0
        %3861 = vmatpush2.bf16.msra.mxu0 0
        %3862 = vmatprep.subr.bf16.mxu0 0
        %3863 = vmatpush2.bf16.msra.mxu0 0
        %3864 = vmatprep.subr.bf16.mxu0 0
        %3865 = vmatpush2.bf16.msra.mxu0 0
        %3866 = vmatprep.mubr.bf16.mxu0 0
        %3867 = vmatmul.mubr.bf16.gmra.mxu0 %v3829
        %v3868 = vpop.f32.mrf.mxu0
        %v3869 = vadd.f32 0.0, %v3868
        %v3870 = vpop.f32.mrf.mxu0
        %v3871 = vpop.f32.mrf.mxu0
        %v3872 = vpop.f32.mrf.mxu0
        %3873 = vdwg.mxu0
        %3874 = vst.msk [vmem:[#allocation2 + $0x8] sm:$0xff] %vm3524, %v3869
        %3876 = vrot.lane.b32.xlu0 %v3513, 64
        %v3877 = vpop.permute.xlu0 %3876
        %3879 = vrot.lane.b32.xlu0 %v3517, 64
        %v3880 = vpop.permute.xlu0 %3879
        %v3882 = vsel %vm3524, %v3877, 0
        %v3885 = vsel %vm3524, %v3880, 0
        %3887 = vmatprep.subr.bf16.mxu0 0
        %3888 = vmatpush1.bf16.xpose.msra.mxu0 0
        %3889 = vmatprep.subr.bf16.mxu0 0
        %3890 = vmatpush1.bf16.xpose.msra.mxu0 0
        %3891 = vmatprep.subr.bf16.mxu0 0
        %3892 = vmatpush1.bf16.xpose.msra.mxu0 0
        %3893 = vmatprep.subr.bf16.mxu0 0
        %3894 = vmatpush1.bf16.xpose.msra.mxu0 0
        %3895 = vmatprep.subr.bf16.mxu0 0
        %3896 = vmatpush1.bf16.xpose.msra.mxu0 0
        %3897 = vmatprep.subr.bf16.mxu0 0
        %3898 = vmatpush1.bf16.xpose.msra.mxu0 0
        %3899 = vmatprep.subr.bf16.mxu0 0
        %3900 = vmatpush1.bf16.xpose.msra.mxu0 0
        %3901 = vmatprep.subr.bf16.mxu0 0
        %3902 = vmatpush1.bf16.xpose.msra.mxu0 %v3885
        %3903 = vmatprep.subr.bf16.mxu0 0
        %3904 = vmatpush2.bf16.xpose.msra.mxu0 0
        %3905 = vmatprep.subr.bf16.mxu0 0
        %3906 = vmatpush2.bf16.xpose.msra.mxu0 0
        %3907 = vmatprep.subr.bf16.mxu0 0
        %3908 = vmatpush2.bf16.xpose.msra.mxu0 0
        %3909 = vmatprep.subr.bf16.mxu0 0
        %3910 = vmatpush2.bf16.xpose.msra.mxu0 0
        %3911 = vmatprep.subr.bf16.mxu0 0
        %3912 = vmatpush2.bf16.xpose.msra.mxu0 0
        %3913 = vmatprep.subr.bf16.mxu0 0
        %3914 = vmatpush2.bf16.xpose.msra.mxu0 0
        %3915 = vmatprep.subr.bf16.mxu0 0
        %3916 = vmatpush2.bf16.xpose.msra.mxu0 0
        %3917 = vmatprep.subr.bf16.mxu0 0
        %3918 = vmatpush2.bf16.xpose.msra.mxu0 0
        %3919 = vmatprep.mubr.bf16.mxu0 0
        %3920 = vmatmul.mubr.bf16.gmra.mxu0 %v3882
        %v3921 = vpop.f32.mrf.mxu0
        %v3922 = vadd.f32 0.0, %v3921
        %v3923 = vpop.f32.mrf.mxu0
        %v3924 = vpop.f32.mrf.mxu0
        %v3925 = vpop.f32.mrf.mxu0
        %3926 = vdwg.mxu0
        %v3927 = vmul.f32 %v3922, 0.125
        %v3928 = vadd.f32 %v3927, %v709
        %v3929 = vsel %vm3573, %v3928, -inf
        %3930 = vmax.xlane.f32.xlu0 %v3929
        %v3931 = vpop.xlane.xlu0 %3930
        %v3932 = vsub.f32 %v3928, %v3931
        %v3933 = vmul.f32 %v3932, 1.442695
        %v3934 = vpow.pop %v3933
        %v3935 = vsel %vm3573, %v3934, 0.0
        %3936 = vadd.xlane.f32.xlu0 %v3935
        %v3937 = vpop.xlane.xlu0 %3936
        %v3938 = vrcp.pop %v3937
        %v3939 = vmul.f32 %v3934, %v3938
        %3941 = vrot.lane.b32.xlu0 %v3939, 24
        %v3942 = vpop.permute.xlu0 %3941
        %vm3944 = vcmask 261312
        %3945 = vst.msk [vmem:[%s690] sm:$0xff] %vm3944, %v3942
        %v3946 = vpack.c.bf16 %v3939, %v3939
        %3948 = vrot.lane.b32.xlu0 %v3521, 64
        %v3949 = vpop.permute.xlu0 %3948
        %v3951 = vsel %vm3573, %v3946, 0
        %v3954 = vsel %vm3590, %v3949, 0
        %3956 = vmatprep.subr.bf16.mxu0 0
        %3957 = vmatpush1.bf16.msra.mxu0 0
        %3958 = vmatprep.subr.bf16.mxu0 0
        %3959 = vmatpush1.bf16.msra.mxu0 0
        %3960 = vmatprep.subr.bf16.mxu0 0
        %3961 = vmatpush1.bf16.msra.mxu0 0
        %3962 = vmatprep.subr.bf16.mxu0 0
        %3963 = vmatpush1.bf16.msra.mxu0 0
        %3964 = vmatprep.subr.bf16.mxu0 0
        %3965 = vmatpush1.bf16.msra.mxu0 0
        %3966 = vmatprep.subr.bf16.mxu0 0
        %3967 = vmatpush1.bf16.msra.mxu0 0
        %3968 = vmatprep.subr.bf16.mxu0 0
        %3969 = vmatpush1.bf16.msra.mxu0 0
        %3970 = vmatprep.subr.bf16.mxu0 0
        %3971 = vmatpush1.bf16.msra.mxu0 %v3954
        %3972 = vmatprep.subr.bf16.mxu0 0
        %3973 = vmatpush2.bf16.msra.mxu0 0
        %3974 = vmatprep.subr.bf16.mxu0 0
        %3975 = vmatpush2.bf16.msra.mxu0 0
        %3976 = vmatprep.subr.bf16.mxu0 0
        %3977 = vmatpush2.bf16.msra.mxu0 0
        %3978 = vmatprep.subr.bf16.mxu0 0
        %3979 = vmatpush2.bf16.msra.mxu0 0
        %3980 = vmatprep.subr.bf16.mxu0 0
        %3981 = vmatpush2.bf16.msra.mxu0 0
        %3982 = vmatprep.subr.bf16.mxu0 0
        %3983 = vmatpush2.bf16.msra.mxu0 0
        %3984 = vmatprep.subr.bf16.mxu0 0
        %3985 = vmatpush2.bf16.msra.mxu0 0
        %3986 = vmatprep.subr.bf16.mxu0 0
        %3987 = vmatpush2.bf16.msra.mxu0 0
        %3988 = vmatprep.mubr.bf16.mxu0 0
        %3989 = vmatmul.mubr.bf16.gmra.mxu0 %v3951
        %v3990 = vpop.f32.mrf.mxu0
        %v3991 = vadd.f32 0.0, %v3990
        %v3992 = vpop.f32.mrf.mxu0
        %v3993 = vpop.f32.mrf.mxu0
        %v3994 = vpop.f32.mrf.mxu0
        %3995 = vdwg.mxu0
        %3997 = vrot.lane.b32.xlu0 %v3991, 64
        %v3998 = vpop.permute.xlu0 %3997
        %4000 = vst.msk [vmem:[#allocation2 + $0x8] sm:$0xff] %vm3760, %v3998
        %v4002 = vsel %vm3524, %v3514, 0
        %v4005 = vsel %vm3524, %v3518, 0
        %4007 = vmatprep.subr.bf16.mxu0 0
        %4008 = vmatpush1.bf16.xpose.msra.mxu0 0
        %4009 = vmatprep.subr.bf16.mxu0 0
        %4010 = vmatpush1.bf16.xpose.msra.mxu0 0
        %4011 = vmatprep.subr.bf16.mxu0 0
        %4012 = vmatpush1.bf16.xpose.msra.mxu0 0
        %4013 = vmatprep.subr.bf16.mxu0 0
        %4014 = vmatpush1.bf16.xpose.msra.mxu0 0
        %4015 = vmatprep.subr.bf16.mxu0 0
        %4016 = vmatpush1.bf16.xpose.msra.mxu0 0
        %4017 = vmatprep.subr.bf16.mxu0 0
        %4018 = vmatpush1.bf16.xpose.msra.mxu0 0
        %4019 = vmatprep.subr.bf16.mxu0 0
        %4020 = vmatpush1.bf16.xpose.msra.mxu0 0
        %4021 = vmatprep.subr.bf16.mxu0 0
        %4022 = vmatpush1.bf16.xpose.msra.mxu0 %v4005
        %4023 = vmatprep.subr.bf16.mxu0 0
        %4024 = vmatpush2.bf16.xpose.msra.mxu0 0
        %4025 = vmatprep.subr.bf16.mxu0 0
        %4026 = vmatpush2.bf16.xpose.msra.mxu0 0
        %4027 = vmatprep.subr.bf16.mxu0 0
        %4028 = vmatpush2.bf16.xpose.msra.mxu0 0
        %4029 = vmatprep.subr.bf16.mxu0 0
        %4030 = vmatpush2.bf16.xpose.msra.mxu0 0
        %4031 = vmatprep.subr.bf16.mxu0 0
        %4032 = vmatpush2.bf16.xpose.msra.mxu0 0
        %4033 = vmatprep.subr.bf16.mxu0 0
        %4034 = vmatpush2.bf16.xpose.msra.mxu0 0
        %4035 = vmatprep.subr.bf16.mxu0 0
        %4036 = vmatpush2.bf16.xpose.msra.mxu0 0
        %4037 = vmatprep.subr.bf16.mxu0 0
        %4038 = vmatpush2.bf16.xpose.msra.mxu0 0
        %4039 = vmatprep.mubr.bf16.mxu0 0
        %4040 = vmatmul.mubr.bf16.gmra.mxu0 %v4002
        %v4041 = vpop.f32.mrf.mxu0
        %v4042 = vadd.f32 0.0, %v4041
        %v4043 = vpop.f32.mrf.mxu0
        %v4044 = vpop.f32.mrf.mxu0
        %v4045 = vpop.f32.mrf.mxu0
        %4046 = vdwg.mxu0
        %v4047 = vmul.f32 %v4042, 0.125
        %v4048 = vadd.f32 %v4047, %v709
        %v4049 = vsel %vm3573, %v4048, -inf
        %4050 = vmax.xlane.f32.xlu0 %v4049
        %v4051 = vpop.xlane.xlu0 %4050
        %v4052 = vsub.f32 %v4048, %v4051
        %v4053 = vmul.f32 %v4052, 1.442695
        %v4054 = vpow.pop %v4053
        %v4055 = vsel %vm3573, %v4054, 0.0
        %4056 = vadd.xlane.f32.xlu0 %v4055
        %v4057 = vpop.xlane.xlu0 %4056
        %v4058 = vrcp.pop %v4057
        %v4059 = vmul.f32 %v4054, %v4058
        %4061 = vrot.lane.b32.xlu0 %v4059, 32
        %v4062 = vpop.permute.xlu0 %4061
        %vm4064 = vcmask 326912
        %4065 = vst.msk [vmem:[%s690] sm:$0xff] %vm4064, %v4062
        %v4066 = vpack.c.bf16 %v4059, %v4059
        %v4068 = vsel %vm3573, %v4066, 0
        %v4071 = vsel %vm3590, %v3522, 0
        %4073 = vmatprep.subr.bf16.mxu0 0
        %4074 = vmatpush1.bf16.msra.mxu0 0
        %4075 = vmatprep.subr.bf16.mxu0 0
        %4076 = vmatpush1.bf16.msra.mxu0 0
        %4077 = vmatprep.subr.bf16.mxu0 0
        %4078 = vmatpush1.bf16.msra.mxu0 0
        %4079 = vmatprep.subr.bf16.mxu0 0
        %4080 = vmatpush1.bf16.msra.mxu0 0
        %4081 = vmatprep.subr.bf16.mxu0 0
        %4082 = vmatpush1.bf16.msra.mxu0 0
        %4083 = vmatprep.subr.bf16.mxu0 0
        %4084 = vmatpush1.bf16.msra.mxu0 0
        %4085 = vmatprep.subr.bf16.mxu0 0
        %4086 = vmatpush1.bf16.msra.mxu0 0
        %4087 = vmatprep.subr.bf16.mxu0 0
        %4088 = vmatpush1.bf16.msra.mxu0 %v4071
        %4089 = vmatprep.subr.bf16.mxu0 0
        %4090 = vmatpush2.bf16.msra.mxu0 0
        %4091 = vmatprep.subr.bf16.mxu0 0
        %4092 = vmatpush2.bf16.msra.mxu0 0
        %4093 = vmatprep.subr.bf16.mxu0 0
        %4094 = vmatpush2.bf16.msra.mxu0 0
        %4095 = vmatprep.subr.bf16.mxu0 0
        %4096 = vmatpush2.bf16.msra.mxu0 0
        %4097 = vmatprep.subr.bf16.mxu0 0
        %4098 = vmatpush2.bf16.msra.mxu0 0
        %4099 = vmatprep.subr.bf16.mxu0 0
        %4100 = vmatpush2.bf16.msra.mxu0 0
        %4101 = vmatprep.subr.bf16.mxu0 0
        %4102 = vmatpush2.bf16.msra.mxu0 0
        %4103 = vmatprep.subr.bf16.mxu0 0
        %4104 = vmatpush2.bf16.msra.mxu0 0
        %4105 = vmatprep.mubr.bf16.mxu0 0
        %4106 = vmatmul.mubr.bf16.gmra.mxu0 %v4068
        %v4107 = vpop.f32.mrf.mxu0
        %v4108 = vadd.f32 0.0, %v4107
        %v4109 = vpop.f32.mrf.mxu0
        %v4110 = vpop.f32.mrf.mxu0
        %v4111 = vpop.f32.mrf.mxu0
        %4112 = vdwg.mxu0
        %4113 = vst.msk [vmem:[#allocation2 + $0x10] sm:$0xff] %vm3524, %v4108
        %4115 = vrot.lane.b32.xlu0 %v3514, 64
        %v4116 = vpop.permute.xlu0 %4115
        %4118 = vrot.lane.b32.xlu0 %v3518, 64
        %v4119 = vpop.permute.xlu0 %4118
        %v4121 = vsel %vm3524, %v4116, 0
        %v4124 = vsel %vm3524, %v4119, 0
        %4126 = vmatprep.subr.bf16.mxu0 0
        %4127 = vmatpush1.bf16.xpose.msra.mxu0 0
        %4128 = vmatprep.subr.bf16.mxu0 0
        %4129 = vmatpush1.bf16.xpose.msra.mxu0 0
        %4130 = vmatprep.subr.bf16.mxu0 0
        %4131 = vmatpush1.bf16.xpose.msra.mxu0 0
        %4132 = vmatprep.subr.bf16.mxu0 0
        %4133 = vmatpush1.bf16.xpose.msra.mxu0 0
        %4134 = vmatprep.subr.bf16.mxu0 0
        %4135 = vmatpush1.bf16.xpose.msra.mxu0 0
        %4136 = vmatprep.subr.bf16.mxu0 0
        %4137 = vmatpush1.bf16.xpose.msra.mxu0 0
        %4138 = vmatprep.subr.bf16.mxu0 0
        %4139 = vmatpush1.bf16.xpose.msra.mxu0 0
        %4140 = vmatprep.subr.bf16.mxu0 0
        %4141 = vmatpush1.bf16.xpose.msra.mxu0 %v4124
        %4142 = vmatprep.subr.bf16.mxu0 0
        %4143 = vmatpush2.bf16.xpose.msra.mxu0 0
        %4144 = vmatprep.subr.bf16.mxu0 0
        %4145 = vmatpush2.bf16.xpose.msra.mxu0 0
        %4146 = vmatprep.subr.bf16.mxu0 0
        %4147 = vmatpush2.bf16.xpose.msra.mxu0 0
        %4148 = vmatprep.subr.bf16.mxu0 0
        %4149 = vmatpush2.bf16.xpose.msra.mxu0 0
        %4150 = vmatprep.subr.bf16.mxu0 0
        %4151 = vmatpush2.bf16.xpose.msra.mxu0 0
        %4152 = vmatprep.subr.bf16.mxu0 0
        %4153 = vmatpush2.bf16.xpose.msra.mxu0 0
        %4154 = vmatprep.subr.bf16.mxu0 0
        %4155 = vmatpush2.bf16.xpose.msra.mxu0 0
        %4156 = vmatprep.subr.bf16.mxu0 0
        %4157 = vmatpush2.bf16.xpose.msra.mxu0 0
        %4158 = vmatprep.mubr.bf16.mxu0 0
        %4159 = vmatmul.mubr.bf16.gmra.mxu0 %v4121
        %v4160 = vpop.f32.mrf.mxu0
        %v4161 = vadd.f32 0.0, %v4160
        %v4162 = vpop.f32.mrf.mxu0
        %v4163 = vpop.f32.mrf.mxu0
        %v4164 = vpop.f32.mrf.mxu0
        %4165 = vdwg.mxu0
        %v4166 = vmul.f32 %v4161, 0.125
        %v4167 = vadd.f32 %v4166, %v709
        %v4168 = vsel %vm3573, %v4167, -inf
        %4169 = vmax.xlane.f32.xlu0 %v4168
        %v4170 = vpop.xlane.xlu0 %4169
        %v4171 = vsub.f32 %v4167, %v4170
        %v4172 = vmul.f32 %v4171, 1.442695
        %v4173 = vpow.pop %v4172
        %v4174 = vsel %vm3573, %v4173, 0.0
        %4175 = vadd.xlane.f32.xlu0 %v4174
        %v4176 = vpop.xlane.xlu0 %4175
        %v4177 = vrcp.pop %v4176
        %v4178 = vmul.f32 %v4173, %v4177
        %4180 = vrot.lane.b32.xlu0 %v4178, 40
        %v4181 = vpop.permute.xlu0 %4180
        %vm4183 = vcmask 392512
        %4184 = vst.msk [vmem:[%s690] sm:$0xff] %vm4183, %v4181
        %v4185 = vpack.c.bf16 %v4178, %v4178
        %4187 = vrot.lane.b32.xlu0 %v3522, 64
        %v4188 = vpop.permute.xlu0 %4187
        %v4190 = vsel %vm3573, %v4185, 0
        %v4193 = vsel %vm3590, %v4188, 0
        %4195 = vmatprep.subr.bf16.mxu0 0
        %4196 = vmatpush1.bf16.msra.mxu0 0
        %4197 = vmatprep.subr.bf16.mxu0 0
        %4198 = vmatpush1.bf16.msra.mxu0 0
        %4199 = vmatprep.subr.bf16.mxu0 0
        %4200 = vmatpush1.bf16.msra.mxu0 0
        %4201 = vmatprep.subr.bf16.mxu0 0
        %4202 = vmatpush1.bf16.msra.mxu0 0
        %4203 = vmatprep.subr.bf16.mxu0 0
        %4204 = vmatpush1.bf16.msra.mxu0 0
        %4205 = vmatprep.subr.bf16.mxu0 0
        %4206 = vmatpush1.bf16.msra.mxu0 0
        %4207 = vmatprep.subr.bf16.mxu0 0
        %4208 = vmatpush1.bf16.msra.mxu0 0
        %4209 = vmatprep.subr.bf16.mxu0 0
        %4210 = vmatpush1.bf16.msra.mxu0 %v4193
        %4211 = vmatprep.subr.bf16.mxu0 0
        %4212 = vmatpush2.bf16.msra.mxu0 0
        %4213 = vmatprep.subr.bf16.mxu0 0
        %4214 = vmatpush2.bf16.msra.mxu0 0
        %4215 = vmatprep.subr.bf16.mxu0 0
        %4216 = vmatpush2.bf16.msra.mxu0 0
        %4217 = vmatprep.subr.bf16.mxu0 0
        %4218 = vmatpush2.bf16.msra.mxu0 0
        %4219 = vmatprep.subr.bf16.mxu0 0
        %4220 = vmatpush2.bf16.msra.mxu0 0
        %4221 = vmatprep.subr.bf16.mxu0 0
        %4222 = vmatpush2.bf16.msra.mxu0 0
        %4223 = vmatprep.subr.bf16.mxu0 0
        %4224 = vmatpush2.bf16.msra.mxu0 0
        %4225 = vmatprep.subr.bf16.mxu0 0
        %4226 = vmatpush2.bf16.msra.mxu0 0
        %4227 = vmatprep.mubr.bf16.mxu0 0
        %4228 = vmatmul.mubr.bf16.gmra.mxu0 %v4190
        %v4229 = vpop.f32.mrf.mxu0
        %v4230 = vadd.f32 0.0, %v4229
        %v4231 = vpop.f32.mrf.mxu0
        %v4232 = vpop.f32.mrf.mxu0
        %v4233 = vpop.f32.mrf.mxu0
        %4234 = vdwg.mxu0
        %4236 = vrot.lane.b32.xlu0 %v4230, 64
        %v4237 = vpop.permute.xlu0 %4236
        %4239 = vst.msk [vmem:[#allocation2 + $0x10] sm:$0xff] %vm3760, %v4237
        %v4241 = vsel %vm3524, %v3515, 0
        %v4244 = vsel %vm3524, %v3519, 0
        %4246 = vmatprep.subr.bf16.mxu0 0
        %4247 = vmatpush1.bf16.xpose.msra.mxu0 0
        %4248 = vmatprep.subr.bf16.mxu0 0
        %4249 = vmatpush1.bf16.xpose.msra.mxu0 0
        %4250 = vmatprep.subr.bf16.mxu0 0
        %4251 = vmatpush1.bf16.xpose.msra.mxu0 0
        %4252 = vmatprep.subr.bf16.mxu0 0
        %4253 = vmatpush1.bf16.xpose.msra.mxu0 0
        %4254 = vmatprep.subr.bf16.mxu0 0
        %4255 = vmatpush1.bf16.xpose.msra.mxu0 0
        %4256 = vmatprep.subr.bf16.mxu0 0
        %4257 = vmatpush1.bf16.xpose.msra.mxu0 0
        %4258 = vmatprep.subr.bf16.mxu0 0
        %4259 = vmatpush1.bf16.xpose.msra.mxu0 0
        %4260 = vmatprep.subr.bf16.mxu0 0
        %4261 = vmatpush1.bf16.xpose.msra.mxu0 %v4244
        %4262 = vmatprep.subr.bf16.mxu0 0
        %4263 = vmatpush2.bf16.xpose.msra.mxu0 0
        %4264 = vmatprep.subr.bf16.mxu0 0
        %4265 = vmatpush2.bf16.xpose.msra.mxu0 0
        %4266 = vmatprep.subr.bf16.mxu0 0
        %4267 = vmatpush2.bf16.xpose.msra.mxu0 0
        %4268 = vmatprep.subr.bf16.mxu0 0
        %4269 = vmatpush2.bf16.xpose.msra.mxu0 0
        %4270 = vmatprep.subr.bf16.mxu0 0
        %4271 = vmatpush2.bf16.xpose.msra.mxu0 0
        %4272 = vmatprep.subr.bf16.mxu0 0
        %4273 = vmatpush2.bf16.xpose.msra.mxu0 0
        %4274 = vmatprep.subr.bf16.mxu0 0
        %4275 = vmatpush2.bf16.xpose.msra.mxu0 0
        %4276 = vmatprep.subr.bf16.mxu0 0
        %4277 = vmatpush2.bf16.xpose.msra.mxu0 0
        %4278 = vmatprep.mubr.bf16.mxu0 0
        %4279 = vmatmul.mubr.bf16.gmra.mxu0 %v4241
        %v4280 = vpop.f32.mrf.mxu0
        %v4281 = vadd.f32 0.0, %v4280
        %v4282 = vpop.f32.mrf.mxu0
        %v4283 = vpop.f32.mrf.mxu0
        %v4284 = vpop.f32.mrf.mxu0
        %4285 = vdwg.mxu0
        %v4286 = vmul.f32 %v4281, 0.125
        %v4287 = vadd.f32 %v4286, %v709
        %v4288 = vsel %vm3573, %v4287, -inf
        %4289 = vmax.xlane.f32.xlu0 %v4288
        %v4290 = vpop.xlane.xlu0 %4289
        %v4291 = vsub.f32 %v4287, %v4290
        %v4292 = vmul.f32 %v4291, 1.442695
        %v4293 = vpow.pop %v4292
        %v4294 = vsel %vm3573, %v4293, 0.0
        %4295 = vadd.xlane.f32.xlu0 %v4294
        %v4296 = vpop.xlane.xlu0 %4295
        %v4297 = vrcp.pop %v4296
        %v4298 = vmul.f32 %v4293, %v4297
        %4300 = vrot.lane.b32.xlu0 %v4298, 48
        %v4301 = vpop.permute.xlu0 %4300
        %vm4303 = vcmask 458112
        %4304 = vst.msk [vmem:[%s690] sm:$0xff] %vm4303, %v4301
        %v4305 = vpack.c.bf16 %v4298, %v4298
        %v4307 = vsel %vm3573, %v4305, 0
        %v4310 = vsel %vm3590, %v3523, 0
        %4312 = vmatprep.subr.bf16.mxu0 0
        %4313 = vmatpush1.bf16.msra.mxu0 0
        %4314 = vmatprep.subr.bf16.mxu0 0
        %4315 = vmatpush1.bf16.msra.mxu0 0
        %4316 = vmatprep.subr.bf16.mxu0 0
        %4317 = vmatpush1.bf16.msra.mxu0 0
        %4318 = vmatprep.subr.bf16.mxu0 0
        %4319 = vmatpush1.bf16.msra.mxu0 0
        %4320 = vmatprep.subr.bf16.mxu0 0
        %4321 = vmatpush1.bf16.msra.mxu0 0
        %4322 = vmatprep.subr.bf16.mxu0 0
        %4323 = vmatpush1.bf16.msra.mxu0 0
        %4324 = vmatprep.subr.bf16.mxu0 0
        %4325 = vmatpush1.bf16.msra.mxu0 0
        %4326 = vmatprep.subr.bf16.mxu0 0
        %4327 = vmatpush1.bf16.msra.mxu0 %v4310
        %4328 = vmatprep.subr.bf16.mxu0 0
        %4329 = vmatpush2.bf16.msra.mxu0 0
        %4330 = vmatprep.subr.bf16.mxu0 0
        %4331 = vmatpush2.bf16.msra.mxu0 0
        %4332 = vmatprep.subr.bf16.mxu0 0
        %4333 = vmatpush2.bf16.msra.mxu0 0
        %4334 = vmatprep.subr.bf16.mxu0 0
        %4335 = vmatpush2.bf16.msra.mxu0 0
        %4336 = vmatprep.subr.bf16.mxu0 0
        %4337 = vmatpush2.bf16.msra.mxu0 0
        %4338 = vmatprep.subr.bf16.mxu0 0
        %4339 = vmatpush2.bf16.msra.mxu0 0
        %4340 = vmatprep.subr.bf16.mxu0 0
        %4341 = vmatpush2.bf16.msra.mxu0 0
        %4342 = vmatprep.subr.bf16.mxu0 0
        %4343 = vmatpush2.bf16.msra.mxu0 0
        %4344 = vmatprep.mubr.bf16.mxu0 0
        %4345 = vmatmul.mubr.bf16.gmra.mxu0 %v4307
        %v4346 = vpop.f32.mrf.mxu0
        %v4347 = vadd.f32 0.0, %v4346
        %v4348 = vpop.f32.mrf.mxu0
        %v4349 = vpop.f32.mrf.mxu0
        %v4350 = vpop.f32.mrf.mxu0
        %4351 = vdwg.mxu0
        %4352 = vst.msk [vmem:[#allocation2 + $0x18] sm:$0xff] %vm3524, %v4347
        %4354 = vrot.lane.b32.xlu0 %v3515, 64
        %v4355 = vpop.permute.xlu0 %4354
        %4357 = vrot.lane.b32.xlu0 %v3519, 64
        %v4358 = vpop.permute.xlu0 %4357
        %v4360 = vsel %vm3524, %v4355, 0
        %v4363 = vsel %vm3524, %v4358, 0
        %4365 = vmatprep.subr.bf16.mxu0 0
        %4366 = vmatpush1.bf16.xpose.msra.mxu0 0
        %4367 = vmatprep.subr.bf16.mxu0 0
        %4368 = vmatpush1.bf16.xpose.msra.mxu0 0
        %4369 = vmatprep.subr.bf16.mxu0 0
        %4370 = vmatpush1.bf16.xpose.msra.mxu0 0
        %4371 = vmatprep.subr.bf16.mxu0 0
        %4372 = vmatpush1.bf16.xpose.msra.mxu0 0
        %4373 = vmatprep.subr.bf16.mxu0 0
        %4374 = vmatpush1.bf16.xpose.msra.mxu0 0
        %4375 = vmatprep.subr.bf16.mxu0 0
        %4376 = vmatpush1.bf16.xpose.msra.mxu0 0
        %4377 = vmatprep.subr.bf16.mxu0 0
        %4378 = vmatpush1.bf16.xpose.msra.mxu0 0
        %4379 = vmatprep.subr.bf16.mxu0 0
        %4380 = vmatpush1.bf16.xpose.msra.mxu0 %v4363
        %4381 = vmatprep.subr.bf16.mxu0 0
        %4382 = vmatpush2.bf16.xpose.msra.mxu0 0
        %4383 = vmatprep.subr.bf16.mxu0 0
        %4384 = vmatpush2.bf16.xpose.msra.mxu0 0
        %4385 = vmatprep.subr.bf16.mxu0 0
        %4386 = vmatpush2.bf16.xpose.msra.mxu0 0
        %4387 = vmatprep.subr.bf16.mxu0 0
        %4388 = vmatpush2.bf16.xpose.msra.mxu0 0
        %4389 = vmatprep.subr.bf16.mxu0 0
        %4390 = vmatpush2.bf16.xpose.msra.mxu0 0
        %4391 = vmatprep.subr.bf16.mxu0 0
        %4392 = vmatpush2.bf16.xpose.msra.mxu0 0
        %4393 = vmatprep.subr.bf16.mxu0 0
        %4394 = vmatpush2.bf16.xpose.msra.mxu0 0
        %4395 = vmatprep.subr.bf16.mxu0 0
        %4396 = vmatpush2.bf16.xpose.msra.mxu0 0
        %4397 = vmatprep.mubr.bf16.mxu0 0
        %4398 = vmatmul.mubr.bf16.gmra.mxu0 %v4360
        %v4399 = vpop.f32.mrf.mxu0
        %v4400 = vadd.f32 0.0, %v4399
        %v4401 = vpop.f32.mrf.mxu0
        %v4402 = vpop.f32.mrf.mxu0
        %v4403 = vpop.f32.mrf.mxu0
        %4404 = vdwg.mxu0
        %v4405 = vmul.f32 %v4400, 0.125
        %v4406 = vadd.f32 %v4405, %v709
        %v4407 = vsel %vm3573, %v4406, -inf
        %4408 = vmax.xlane.f32.xlu0 %v4407
        %v4409 = vpop.xlane.xlu0 %4408
        %v4410 = vsub.f32 %v4406, %v4409
        %v4411 = vmul.f32 %v4410, 1.442695
        %v4412 = vpow.pop %v4411
        %v4413 = vsel %vm3573, %v4412, 0.0
        %4414 = vadd.xlane.f32.xlu0 %v4413
        %v4415 = vpop.xlane.xlu0 %4414
        %v4416 = vrcp.pop %v4415
        %v4417 = vmul.f32 %v4412, %v4416
        %4419 = vrot.lane.b32.xlu0 %v4417, 56
        %v4420 = vpop.permute.xlu0 %4419
        %vm4422 = vcmask 523712
        %4423 = vst.msk [vmem:[%s690] sm:$0xff] %vm4422, %v4420
        %v4424 = vpack.c.bf16 %v4417, %v4417
        %4426 = vrot.lane.b32.xlu0 %v3523, 64
        %v4427 = vpop.permute.xlu0 %4426
        %v4429 = vsel %vm3573, %v4424, 0
        %v4432 = vsel %vm3590, %v4427, 0
        %4434 = vmatprep.subr.bf16.mxu0 0
        %4435 = vmatpush1.bf16.msra.mxu0 0
        %4436 = vmatprep.subr.bf16.mxu0 0
        %4437 = vmatpush1.bf16.msra.mxu0 0
        %4438 = vmatprep.subr.bf16.mxu0 0
        %4439 = vmatpush1.bf16.msra.mxu0 0
        %4440 = vmatprep.subr.bf16.mxu0 0
        %4441 = vmatpush1.bf16.msra.mxu0 0
        %4442 = vmatprep.subr.bf16.mxu0 0
        %4443 = vmatpush1.bf16.msra.mxu0 0
        %4444 = vmatprep.subr.bf16.mxu0 0
        %4445 = vmatpush1.bf16.msra.mxu0 0
        %4446 = vmatprep.subr.bf16.mxu0 0
        %4447 = vmatpush1.bf16.msra.mxu0 0
        %4448 = vmatprep.subr.bf16.mxu0 0
        %4449 = vmatpush1.bf16.msra.mxu0 %v4432
        %4450 = vmatprep.subr.bf16.mxu0 0
        %4451 = vmatpush2.bf16.msra.mxu0 0
        %4452 = vmatprep.subr.bf16.mxu0 0
        %4453 = vmatpush2.bf16.msra.mxu0 0
        %4454 = vmatprep.subr.bf16.mxu0 0
        %4455 = vmatpush2.bf16.msra.mxu0 0
        %4456 = vmatprep.subr.bf16.mxu0 0
        %4457 = vmatpush2.bf16.msra.mxu0 0
        %4458 = vmatprep.subr.bf16.mxu0 0
        %4459 = vmatpush2.bf16.msra.mxu0 0
        %4460 = vmatprep.subr.bf16.mxu0 0
        %4461 = vmatpush2.bf16.msra.mxu0 0
        %4462 = vmatprep.subr.bf16.mxu0 0
        %4463 = vmatpush2.bf16.msra.mxu0 0
        %4464 = vmatprep.subr.bf16.mxu0 0
        %4465 = vmatpush2.bf16.msra.mxu0 0
        %4466 = vmatprep.mubr.bf16.mxu0 0
        %4467 = vmatmul.mubr.bf16.gmra.mxu0 %v4429
        %v4468 = vpop.f32.mrf.mxu0
        %v4469 = vadd.f32 0.0, %v4468
        %v4470 = vpop.f32.mrf.mxu0
        %v4471 = vpop.f32.mrf.mxu0
        %v4472 = vpop.f32.mrf.mxu0
        %4473 = vdwg.mxu0
        %4475 = vrot.lane.b32.xlu0 %v4469, 64
        %v4476 = vpop.permute.xlu0 %4475
        %4478 = vst.msk [vmem:[#allocation2 + $0x18] sm:$0xff] %vm3760, %v4476
        %v4479 = vld [vmem:[#allocation2] sm:$0xff]
        %v4480 = vld [vmem:[#allocation2 + $0x8] sm:$0xff]
        %v4481 = vld [vmem:[#allocation2 + $0x10] sm:$0xff]
        %v4482 = vld [vmem:[#allocation2 + $0x18] sm:$0xff]
        %v4483 = vpack.c.bf16 %v4479, %v4479
        %v4484 = vpack.c.bf16 %v4480, %v4480
        %v4485 = vpack.c.bf16 %v4481, %v4481
        %v4486 = vpack.c.bf16 %v4482, %v4482
        %v4487 = vld [vmem:[#allocation12] sm:$0xff]
        %v4488 = vld [vmem:[#allocation12 + $0x8] sm:$0xff]
        %v4489 = vld [vmem:[#allocation12 + $0x10] sm:$0xff]
        %v4490 = vld [vmem:[#allocation12 + $0x18] sm:$0xff]
        %v4491 = vld [vmem:[#allocation12 + $0x20] sm:$0xff]
        %v4492 = vld [vmem:[#allocation12 + $0x28] sm:$0xff]
        %v4493 = vld [vmem:[#allocation12 + $0x30] sm:$0xff]
        %v4494 = vld [vmem:[#allocation12 + $0x38] sm:$0xff]
        %v4495 = vld [vmem:[#allocation12 + $0x40] sm:$0xff]
        %v4496 = vld [vmem:[#allocation12 + $0x48] sm:$0xff]
        %v4497 = vld [vmem:[#allocation12 + $0x50] sm:$0xff]
        %v4498 = vld [vmem:[#allocation12 + $0x58] sm:$0xff]
        %v4499 = vld [vmem:[#allocation12 + $0x60] sm:$0xff]
        %v4500 = vld [vmem:[#allocation12 + $0x68] sm:$0xff]
        %v4501 = vld [vmem:[#allocation12 + $0x70] sm:$0xff]
        %v4502 = vld [vmem:[#allocation12 + $0x78] sm:$0xff]
        %v4503 = vld [vmem:[#allocation12 + $0x80] sm:$0xff]
        %v4504 = vld [vmem:[#allocation12 + $0x88] sm:$0xff]
        %v4505 = vld [vmem:[#allocation12 + $0x90] sm:$0xff]
        %v4506 = vld [vmem:[#allocation12 + $0x98] sm:$0xff]
        %v4507 = vld [vmem:[#allocation12 + $0xa0] sm:$0xff]
        %v4508 = vld [vmem:[#allocation12 + $0xa8] sm:$0xff]
        %v4509 = vld [vmem:[#allocation12 + $0xb0] sm:$0xff]
        %v4510 = vld [vmem:[#allocation12 + $0xb8] sm:$0xff]
        %v4511 = vld [vmem:[#allocation12 + $0xc0] sm:$0xff]
        %v4512 = vld [vmem:[#allocation12 + $0xc8] sm:$0xff]
        %v4513 = vld [vmem:[#allocation12 + $0xd0] sm:$0xff]
        %v4514 = vld [vmem:[#allocation12 + $0xd8] sm:$0xff]
        %v4515 = vld [vmem:[#allocation12 + $0xe0] sm:$0xff]
        %v4516 = vld [vmem:[#allocation12 + $0xe8] sm:$0xff]
        %v4517 = vld [vmem:[#allocation12 + $0xf0] sm:$0xff]
        %v4518 = vld [vmem:[#allocation12 + $0xf8] sm:$0xff]
        %v4519 = vld [vmem:[#allocation12 + $0x100] sm:$0xff]
        %v4520 = vld [vmem:[#allocation12 + $0x108] sm:$0xff]
        %v4521 = vld [vmem:[#allocation12 + $0x110] sm:$0xff]
        %v4522 = vld [vmem:[#allocation12 + $0x118] sm:$0xff]
        %v4523 = vld [vmem:[#allocation12 + $0x120] sm:$0xff]
        %v4524 = vld [vmem:[#allocation12 + $0x128] sm:$0xff]
        %v4525 = vld [vmem:[#allocation12 + $0x130] sm:$0xff]
        %v4526 = vld [vmem:[#allocation12 + $0x138] sm:$0xff]
        %v4527 = vld [vmem:[#allocation12 + $0x140] sm:$0xff]
        %v4528 = vld [vmem:[#allocation12 + $0x148] sm:$0xff]
        %v4529 = vld [vmem:[#allocation12 + $0x150] sm:$0xff]
        %v4530 = vld [vmem:[#allocation12 + $0x158] sm:$0xff]
        %v4531 = vld [vmem:[#allocation12 + $0x160] sm:$0xff]
        %v4532 = vld [vmem:[#allocation12 + $0x168] sm:$0xff]
        %v4533 = vld [vmem:[#allocation12 + $0x170] sm:$0xff]
        %v4534 = vld [vmem:[#allocation12 + $0x178] sm:$0xff]
        %v4535 = vld [vmem:[#allocation12 + $0x180] sm:$0xff]
        %v4536 = vld [vmem:[#allocation12 + $0x188] sm:$0xff]
        %v4537 = vld [vmem:[#allocation12 + $0x190] sm:$0xff]
        %v4538 = vld [vmem:[#allocation12 + $0x198] sm:$0xff]
        %v4539 = vld [vmem:[#allocation12 + $0x1a0] sm:$0xff]
        %v4540 = vld [vmem:[#allocation12 + $0x1a8] sm:$0xff]
        %v4541 = vld [vmem:[#allocation12 + $0x1b0] sm:$0xff]
        %v4542 = vld [vmem:[#allocation12 + $0x1b8] sm:$0xff]
        %v4543 = vld [vmem:[#allocation12 + $0x1c0] sm:$0xff]
        %v4544 = vld [vmem:[#allocation12 + $0x1c8] sm:$0xff]
        %v4545 = vld [vmem:[#allocation12 + $0x1d0] sm:$0xff]
        %v4546 = vld [vmem:[#allocation12 + $0x1d8] sm:$0xff]
        %v4547 = vld [vmem:[#allocation12 + $0x1e0] sm:$0xff]
        %v4548 = vld [vmem:[#allocation12 + $0x1e8] sm:$0xff]
        %v4549 = vld [vmem:[#allocation12 + $0x1f0] sm:$0xff]
        %v4550 = vld [vmem:[#allocation12 + $0x1f8] sm:$0xff]
        %v4551 = vld [vmem:[#allocation12 + $0x200] sm:$0xff]
        %v4552 = vld [vmem:[#allocation12 + $0x208] sm:$0xff]
        %v4553 = vld [vmem:[#allocation12 + $0x210] sm:$0xff]
        %v4554 = vld [vmem:[#allocation12 + $0x218] sm:$0xff]
        %v4555 = vld [vmem:[#allocation12 + $0x220] sm:$0xff]
        %v4556 = vld [vmem:[#allocation12 + $0x228] sm:$0xff]
        %v4557 = vld [vmem:[#allocation12 + $0x230] sm:$0xff]
        %v4558 = vld [vmem:[#allocation12 + $0x238] sm:$0xff]
        %v4559 = vld [vmem:[#allocation12 + $0x240] sm:$0xff]
        %v4560 = vld [vmem:[#allocation12 + $0x248] sm:$0xff]
        %v4561 = vld [vmem:[#allocation12 + $0x250] sm:$0xff]
        %v4562 = vld [vmem:[#allocation12 + $0x258] sm:$0xff]
        %v4563 = vld [vmem:[#allocation12 + $0x260] sm:$0xff]
        %v4564 = vld [vmem:[#allocation12 + $0x268] sm:$0xff]
        %v4565 = vld [vmem:[#allocation12 + $0x270] sm:$0xff]
        %v4566 = vld [vmem:[#allocation12 + $0x278] sm:$0xff]
        %v4567 = vld [vmem:[#allocation12 + $0x280] sm:$0xff]
        %v4568 = vld [vmem:[#allocation12 + $0x288] sm:$0xff]
        %v4569 = vld [vmem:[#allocation12 + $0x290] sm:$0xff]
        %v4570 = vld [vmem:[#allocation12 + $0x298] sm:$0xff]
        %v4571 = vld [vmem:[#allocation12 + $0x2a0] sm:$0xff]
        %v4572 = vld [vmem:[#allocation12 + $0x2a8] sm:$0xff]
        %v4573 = vld [vmem:[#allocation12 + $0x2b0] sm:$0xff]
        %v4574 = vld [vmem:[#allocation12 + $0x2b8] sm:$0xff]
        %v4575 = vld [vmem:[#allocation12 + $0x2c0] sm:$0xff]
        %v4576 = vld [vmem:[#allocation12 + $0x2c8] sm:$0xff]
        %v4577 = vld [vmem:[#allocation12 + $0x2d0] sm:$0xff]
        %v4578 = vld [vmem:[#allocation12 + $0x2d8] sm:$0xff]
        %v4579 = vld [vmem:[#allocation12 + $0x2e0] sm:$0xff]
        %v4580 = vld [vmem:[#allocation12 + $0x2e8] sm:$0xff]
        %v4581 = vld [vmem:[#allocation12 + $0x2f0] sm:$0xff]
        %v4582 = vld [vmem:[#allocation12 + $0x2f8] sm:$0xff]
        %v4583 = vld [vmem:[#allocation12 + $0x300] sm:$0xff]
        %v4584 = vld [vmem:[#allocation12 + $0x308] sm:$0xff]
        %v4585 = vld [vmem:[#allocation12 + $0x310] sm:$0xff]
        %v4586 = vld [vmem:[#allocation12 + $0x318] sm:$0xff]
        %v4587 = vld [vmem:[#allocation12 + $0x320] sm:$0xff]
        %v4588 = vld [vmem:[#allocation12 + $0x328] sm:$0xff]
        %v4589 = vld [vmem:[#allocation12 + $0x330] sm:$0xff]
        %v4590 = vld [vmem:[#allocation12 + $0x338] sm:$0xff]
        %v4591 = vld [vmem:[#allocation12 + $0x340] sm:$0xff]
        %v4592 = vld [vmem:[#allocation12 + $0x348] sm:$0xff]
        %v4593 = vld [vmem:[#allocation12 + $0x350] sm:$0xff]
        %v4594 = vld [vmem:[#allocation12 + $0x358] sm:$0xff]
        %v4595 = vld [vmem:[#allocation12 + $0x360] sm:$0xff]
        %v4596 = vld [vmem:[#allocation12 + $0x368] sm:$0xff]
        %v4597 = vld [vmem:[#allocation12 + $0x370] sm:$0xff]
        %v4598 = vld [vmem:[#allocation12 + $0x378] sm:$0xff]
        %v4599 = vld [vmem:[#allocation12 + $0x380] sm:$0xff]
        %v4600 = vld [vmem:[#allocation12 + $0x388] sm:$0xff]
        %v4601 = vld [vmem:[#allocation12 + $0x390] sm:$0xff]
        %v4602 = vld [vmem:[#allocation12 + $0x398] sm:$0xff]
        %v4603 = vld [vmem:[#allocation12 + $0x3a0] sm:$0xff]
        %v4604 = vld [vmem:[#allocation12 + $0x3a8] sm:$0xff]
        %v4605 = vld [vmem:[#allocation12 + $0x3b0] sm:$0xff]
        %v4606 = vld [vmem:[#allocation12 + $0x3b8] sm:$0xff]
        %v4607 = vld [vmem:[#allocation12 + $0x3c0] sm:$0xff]
        %v4608 = vld [vmem:[#allocation12 + $0x3c8] sm:$0xff]
        %v4609 = vld [vmem:[#allocation12 + $0x3d0] sm:$0xff]
        %v4610 = vld [vmem:[#allocation12 + $0x3d8] sm:$0xff]
        %v4611 = vld [vmem:[#allocation12 + $0x3e0] sm:$0xff]
        %v4612 = vld [vmem:[#allocation12 + $0x3e8] sm:$0xff]
        %v4613 = vld [vmem:[#allocation12 + $0x3f0] sm:$0xff]
        %v4614 = vld [vmem:[#allocation12 + $0x3f8] sm:$0xff]
        %v4743 = vunpack.c.l.b16 %v4487
        %v4744 = vunpack.c.h.b16 %v4487
        %v4745 = vunpack.c.l.b16 %v4488
        %v4746 = vunpack.c.h.b16 %v4488
        %v4747 = vunpack.c.l.b16 %v4489
        %v4748 = vunpack.c.h.b16 %v4489
        %v4749 = vunpack.c.l.b16 %v4490
        %v4750 = vunpack.c.h.b16 %v4490
        %v4751 = vunpack.c.l.b16 %v4491
        %v4752 = vunpack.c.h.b16 %v4491
        %v4753 = vunpack.c.l.b16 %v4492
        %v4754 = vunpack.c.h.b16 %v4492
        %v4755 = vunpack.c.l.b16 %v4493
        %v4756 = vunpack.c.h.b16 %v4493
        %v4757 = vunpack.c.l.b16 %v4494
        %v4758 = vunpack.c.h.b16 %v4494
        %v4759 = vunpack.c.l.b16 %v4495
        %v4760 = vunpack.c.h.b16 %v4495
        %v4761 = vunpack.c.l.b16 %v4496
        %v4762 = vunpack.c.h.b16 %v4496
        %v4763 = vunpack.c.l.b16 %v4497
        %v4764 = vunpack.c.h.b16 %v4497
        %v4765 = vunpack.c.l.b16 %v4498
        %v4766 = vunpack.c.h.b16 %v4498
        %v4767 = vunpack.c.l.b16 %v4499
        %v4768 = vunpack.c.h.b16 %v4499
        %v4769 = vunpack.c.l.b16 %v4500
        %v4770 = vunpack.c.h.b16 %v4500
        %v4771 = vunpack.c.l.b16 %v4501
        %v4772 = vunpack.c.h.b16 %v4501
        %v4773 = vunpack.c.l.b16 %v4502
        %v4774 = vunpack.c.h.b16 %v4502
        %v4775 = vunpack.c.l.b16 %v4503
        %v4776 = vunpack.c.h.b16 %v4503
        %v4777 = vunpack.c.l.b16 %v4504
        %v4778 = vunpack.c.h.b16 %v4504
        %v4779 = vunpack.c.l.b16 %v4505
        %v4780 = vunpack.c.h.b16 %v4505
        %v4781 = vunpack.c.l.b16 %v4506
        %v4782 = vunpack.c.h.b16 %v4506
        %v4783 = vunpack.c.l.b16 %v4507
        %v4784 = vunpack.c.h.b16 %v4507
        %v4785 = vunpack.c.l.b16 %v4508
        %v4786 = vunpack.c.h.b16 %v4508
        %v4787 = vunpack.c.l.b16 %v4509
        %v4788 = vunpack.c.h.b16 %v4509
        %v4789 = vunpack.c.l.b16 %v4510
        %v4790 = vunpack.c.h.b16 %v4510
        %v4791 = vunpack.c.l.b16 %v4511
        %v4792 = vunpack.c.h.b16 %v4511
        %v4793 = vunpack.c.l.b16 %v4512
        %v4794 = vunpack.c.h.b16 %v4512
        %v4795 = vunpack.c.l.b16 %v4513
        %v4796 = vunpack.c.h.b16 %v4513
        %v4797 = vunpack.c.l.b16 %v4514
        %v4798 = vunpack.c.h.b16 %v4514
        %v4799 = vunpack.c.l.b16 %v4515
        %v4800 = vunpack.c.h.b16 %v4515
        %v4801 = vunpack.c.l.b16 %v4516
        %v4802 = vunpack.c.h.b16 %v4516
        %v4803 = vunpack.c.l.b16 %v4517
        %v4804 = vunpack.c.h.b16 %v4517
        %v4805 = vunpack.c.l.b16 %v4518
        %v4806 = vunpack.c.h.b16 %v4518
        %v4807 = vunpack.c.l.b16 %v4519
        %v4808 = vunpack.c.h.b16 %v4519
        %v4809 = vunpack.c.l.b16 %v4520
        %v4810 = vunpack.c.h.b16 %v4520
        %v4811 = vunpack.c.l.b16 %v4521
        %v4812 = vunpack.c.h.b16 %v4521
        %v4813 = vunpack.c.l.b16 %v4522
        %v4814 = vunpack.c.h.b16 %v4522
        %v4815 = vunpack.c.l.b16 %v4523
        %v4816 = vunpack.c.h.b16 %v4523
        %v4817 = vunpack.c.l.b16 %v4524
        %v4818 = vunpack.c.h.b16 %v4524
        %v4819 = vunpack.c.l.b16 %v4525
        %v4820 = vunpack.c.h.b16 %v4525
        %v4821 = vunpack.c.l.b16 %v4526
        %v4822 = vunpack.c.h.b16 %v4526
        %v4823 = vunpack.c.l.b16 %v4527
        %v4824 = vunpack.c.h.b16 %v4527
        %v4825 = vunpack.c.l.b16 %v4528
        %v4826 = vunpack.c.h.b16 %v4528
        %v4827 = vunpack.c.l.b16 %v4529
        %v4828 = vunpack.c.h.b16 %v4529
        %v4829 = vunpack.c.l.b16 %v4530
        %v4830 = vunpack.c.h.b16 %v4530
        %v4831 = vunpack.c.l.b16 %v4531
        %v4832 = vunpack.c.h.b16 %v4531
        %v4833 = vunpack.c.l.b16 %v4532
        %v4834 = vunpack.c.h.b16 %v4532
        %v4835 = vunpack.c.l.b16 %v4533
        %v4836 = vunpack.c.h.b16 %v4533
        %v4837 = vunpack.c.l.b16 %v4534
        %v4838 = vunpack.c.h.b16 %v4534
        %v4839 = vunpack.c.l.b16 %v4535
        %v4840 = vunpack.c.h.b16 %v4535
        %v4841 = vunpack.c.l.b16 %v4536
        %v4842 = vunpack.c.h.b16 %v4536
        %v4843 = vunpack.c.l.b16 %v4537
        %v4844 = vunpack.c.h.b16 %v4537
        %v4845 = vunpack.c.l.b16 %v4538
        %v4846 = vunpack.c.h.b16 %v4538
        %v4847 = vunpack.c.l.b16 %v4539
        %v4848 = vunpack.c.h.b16 %v4539
        %v4849 = vunpack.c.l.b16 %v4540
        %v4850 = vunpack.c.h.b16 %v4540
        %v4851 = vunpack.c.l.b16 %v4541
        %v4852 = vunpack.c.h.b16 %v4541
        %v4853 = vunpack.c.l.b16 %v4542
        %v4854 = vunpack.c.h.b16 %v4542
        %v4855 = vunpack.c.l.b16 %v4543
        %v4856 = vunpack.c.h.b16 %v4543
        %v4857 = vunpack.c.l.b16 %v4544
        %v4858 = vunpack.c.h.b16 %v4544
        %v4859 = vunpack.c.l.b16 %v4545
        %v4860 = vunpack.c.h.b16 %v4545
        %v4861 = vunpack.c.l.b16 %v4546
        %v4862 = vunpack.c.h.b16 %v4546
        %v4863 = vunpack.c.l.b16 %v4547
        %v4864 = vunpack.c.h.b16 %v4547
        %v4865 = vunpack.c.l.b16 %v4548
        %v4866 = vunpack.c.h.b16 %v4548
        %v4867 = vunpack.c.l.b16 %v4549
        %v4868 = vunpack.c.h.b16 %v4549
        %v4869 = vunpack.c.l.b16 %v4550
        %v4870 = vunpack.c.h.b16 %v4550
        %v4871 = vunpack.c.l.b16 %v4551
        %v4872 = vunpack.c.h.b16 %v4551
        %v4873 = vunpack.c.l.b16 %v4552
        %v4874 = vunpack.c.h.b16 %v4552
        %v4875 = vunpack.c.l.b16 %v4553
        %v4876 = vunpack.c.h.b16 %v4553
        %v4877 = vunpack.c.l.b16 %v4554
        %v4878 = vunpack.c.h.b16 %v4554
        %v4879 = vunpack.c.l.b16 %v4555
        %v4880 = vunpack.c.h.b16 %v4555
        %v4881 = vunpack.c.l.b16 %v4556
        %v4882 = vunpack.c.h.b16 %v4556
        %v4883 = vunpack.c.l.b16 %v4557
        %v4884 = vunpack.c.h.b16 %v4557
        %v4885 = vunpack.c.l.b16 %v4558
        %v4886 = vunpack.c.h.b16 %v4558
        %v4887 = vunpack.c.l.b16 %v4559
        %v4888 = vunpack.c.h.b16 %v4559
        %v4889 = vunpack.c.l.b16 %v4560
        %v4890 = vunpack.c.h.b16 %v4560
        %v4891 = vunpack.c.l.b16 %v4561
        %v4892 = vunpack.c.h.b16 %v4561
        %v4893 = vunpack.c.l.b16 %v4562
        %v4894 = vunpack.c.h.b16 %v4562
        %v4895 = vunpack.c.l.b16 %v4563
        %v4896 = vunpack.c.h.b16 %v4563
        %v4897 = vunpack.c.l.b16 %v4564
        %v4898 = vunpack.c.h.b16 %v4564
        %v4899 = vunpack.c.l.b16 %v4565
        %v4900 = vunpack.c.h.b16 %v4565
        %v4901 = vunpack.c.l.b16 %v4566
        %v4902 = vunpack.c.h.b16 %v4566
        %v4903 = vunpack.c.l.b16 %v4567
        %v4904 = vunpack.c.h.b16 %v4567
        %v4905 = vunpack.c.l.b16 %v4568
        %v4906 = vunpack.c.h.b16 %v4568
        %v4907 = vunpack.c.l.b16 %v4569
        %v4908 = vunpack.c.h.b16 %v4569
        %v4909 = vunpack.c.l.b16 %v4570
        %v4910 = vunpack.c.h.b16 %v4570
        %v4911 = vunpack.c.l.b16 %v4571
        %v4912 = vunpack.c.h.b16 %v4571
        %v4913 = vunpack.c.l.b16 %v4572
        %v4914 = vunpack.c.h.b16 %v4572
        %v4915 = vunpack.c.l.b16 %v4573
        %v4916 = vunpack.c.h.b16 %v4573
        %v4917 = vunpack.c.l.b16 %v4574
        %v4918 = vunpack.c.h.b16 %v4574
        %v4919 = vunpack.c.l.b16 %v4575
        %v4920 = vunpack.c.h.b16 %v4575
        %v4921 = vunpack.c.l.b16 %v4576
        %v4922 = vunpack.c.h.b16 %v4576
        %v4923 = vunpack.c.l.b16 %v4577
        %v4924 = vunpack.c.h.b16 %v4577
        %v4925 = vunpack.c.l.b16 %v4578
        %v4926 = vunpack.c.h.b16 %v4578
        %v4927 = vunpack.c.l.b16 %v4579
        %v4928 = vunpack.c.h.b16 %v4579
        %v4929 = vunpack.c.l.b16 %v4580
        %v4930 = vunpack.c.h.b16 %v4580
        %v4931 = vunpack.c.l.b16 %v4581
        %v4932 = vunpack.c.h.b16 %v4581
        %v4933 = vunpack.c.l.b16 %v4582
        %v4934 = vunpack.c.h.b16 %v4582
        %v4935 = vunpack.c.l.b16 %v4583
        %v4936 = vunpack.c.h.b16 %v4583
        %v4937 = vunpack.c.l.b16 %v4584
        %v4938 = vunpack.c.h.b16 %v4584
        %v4939 = vunpack.c.l.b16 %v4585
        %v4940 = vunpack.c.h.b16 %v4585
        %v4941 = vunpack.c.l.b16 %v4586
        %v4942 = vunpack.c.h.b16 %v4586
        %v4943 = vunpack.c.l.b16 %v4587
        %v4944 = vunpack.c.h.b16 %v4587
        %v4945 = vunpack.c.l.b16 %v4588
        %v4946 = vunpack.c.h.b16 %v4588
        %v4947 = vunpack.c.l.b16 %v4589
        %v4948 = vunpack.c.h.b16 %v4589
        %v4949 = vunpack.c.l.b16 %v4590
        %v4950 = vunpack.c.h.b16 %v4590
        %v4951 = vunpack.c.l.b16 %v4591
        %v4952 = vunpack.c.h.b16 %v4591
        %v4953 = vunpack.c.l.b16 %v4592
        %v4954 = vunpack.c.h.b16 %v4592
        %v4955 = vunpack.c.l.b16 %v4593
        %v4956 = vunpack.c.h.b16 %v4593
        %v4957 = vunpack.c.l.b16 %v4594
        %v4958 = vunpack.c.h.b16 %v4594
        %v4959 = vunpack.c.l.b16 %v4595
        %v4960 = vunpack.c.h.b16 %v4595
        %v4961 = vunpack.c.l.b16 %v4596
        %v4962 = vunpack.c.h.b16 %v4596
        %v4963 = vunpack.c.l.b16 %v4597
        %v4964 = vunpack.c.h.b16 %v4597
        %v4965 = vunpack.c.l.b16 %v4598
        %v4966 = vunpack.c.h.b16 %v4598
        %v4967 = vunpack.c.l.b16 %v4599
        %v4968 = vunpack.c.h.b16 %v4599
        %v4969 = vunpack.c.l.b16 %v4600
        %v4970 = vunpack.c.h.b16 %v4600
        %v4971 = vunpack.c.l.b16 %v4601
        %v4972 = vunpack.c.h.b16 %v4601
        %v4973 = vunpack.c.l.b16 %v4602
        %v4974 = vunpack.c.h.b16 %v4602
        %v4975 = vunpack.c.l.b16 %v4603
        %v4976 = vunpack.c.h.b16 %v4603
        %v4977 = vunpack.c.l.b16 %v4604
        %v4978 = vunpack.c.h.b16 %v4604
        %v4979 = vunpack.c.l.b16 %v4605
        %v4980 = vunpack.c.h.b16 %v4605
        %v4981 = vunpack.c.l.b16 %v4606
        %v4982 = vunpack.c.h.b16 %v4606
        %v4983 = vunpack.c.l.b16 %v4607
        %v4984 = vunpack.c.h.b16 %v4607
        %v4985 = vunpack.c.l.b16 %v4608
        %v4986 = vunpack.c.h.b16 %v4608
        %v4987 = vunpack.c.l.b16 %v4609
        %v4988 = vunpack.c.h.b16 %v4609
        %v4989 = vunpack.c.l.b16 %v4610
        %v4990 = vunpack.c.h.b16 %v4610
        %v4991 = vunpack.c.l.b16 %v4611
        %v4992 = vunpack.c.h.b16 %v4611
        %v4993 = vunpack.c.l.b16 %v4612
        %v4994 = vunpack.c.h.b16 %v4612
        %v4995 = vunpack.c.l.b16 %v4613
        %v4996 = vunpack.c.h.b16 %v4613
        %v4997 = vunpack.c.l.b16 %v4614
        %v4998 = vunpack.c.h.b16 %v4614
        %v4999 = vpack.c.b16 %v4747, %v4743
        %v5000 = vpack.c.b16 %v4748, %v4744
        %v5001 = vpack.c.b16 %v4749, %v4745
        %v5002 = vpack.c.b16 %v4750, %v4746
        %v5003 = vpack.c.b16 %v4755, %v4751
        %v5004 = vpack.c.b16 %v4756, %v4752
        %v5005 = vpack.c.b16 %v4757, %v4753
        %v5006 = vpack.c.b16 %v4758, %v4754
        %v5007 = vpack.c.b16 %v4763, %v4759
        %v5008 = vpack.c.b16 %v4764, %v4760
        %v5009 = vpack.c.b16 %v4765, %v4761
        %v5010 = vpack.c.b16 %v4766, %v4762
        %v5011 = vpack.c.b16 %v4771, %v4767
        %v5012 = vpack.c.b16 %v4772, %v4768
        %v5013 = vpack.c.b16 %v4773, %v4769
        %v5014 = vpack.c.b16 %v4774, %v4770
        %v5015 = vpack.c.b16 %v4779, %v4775
        %v5016 = vpack.c.b16 %v4780, %v4776
        %v5017 = vpack.c.b16 %v4781, %v4777
        %v5018 = vpack.c.b16 %v4782, %v4778
        %v5019 = vpack.c.b16 %v4787, %v4783
        %v5020 = vpack.c.b16 %v4788, %v4784
        %v5021 = vpack.c.b16 %v4789, %v4785
        %v5022 = vpack.c.b16 %v4790, %v4786
        %v5023 = vpack.c.b16 %v4795, %v4791
        %v5024 = vpack.c.b16 %v4796, %v4792
        %v5025 = vpack.c.b16 %v4797, %v4793
        %v5026 = vpack.c.b16 %v4798, %v4794
        %v5027 = vpack.c.b16 %v4803, %v4799
        %v5028 = vpack.c.b16 %v4804, %v4800
        %v5029 = vpack.c.b16 %v4805, %v4801
        %v5030 = vpack.c.b16 %v4806, %v4802
        %v5031 = vpack.c.b16 %v4811, %v4807
        %v5032 = vpack.c.b16 %v4812, %v4808
        %v5033 = vpack.c.b16 %v4813, %v4809
        %v5034 = vpack.c.b16 %v4814, %v4810
        %v5035 = vpack.c.b16 %v4819, %v4815
        %v5036 = vpack.c.b16 %v4820, %v4816
        %v5037 = vpack.c.b16 %v4821, %v4817
        %v5038 = vpack.c.b16 %v4822, %v4818
        %v5039 = vpack.c.b16 %v4827, %v4823
        %v5040 = vpack.c.b16 %v4828, %v4824
        %v5041 = vpack.c.b16 %v4829, %v4825
        %v5042 = vpack.c.b16 %v4830, %v4826
        %v5043 = vpack.c.b16 %v4835, %v4831
        %v5044 = vpack.c.b16 %v4836, %v4832
        %v5045 = vpack.c.b16 %v4837, %v4833
        %v5046 = vpack.c.b16 %v4838, %v4834
        %v5047 = vpack.c.b16 %v4843, %v4839
        %v5048 = vpack.c.b16 %v4844, %v4840
        %v5049 = vpack.c.b16 %v4845, %v4841
        %v5050 = vpack.c.b16 %v4846, %v4842
        %v5051 = vpack.c.b16 %v4851, %v4847
        %v5052 = vpack.c.b16 %v4852, %v4848
        %v5053 = vpack.c.b16 %v4853, %v4849
        %v5054 = vpack.c.b16 %v4854, %v4850
        %v5055 = vpack.c.b16 %v4859, %v4855
        %v5056 = vpack.c.b16 %v4860, %v4856
        %v5057 = vpack.c.b16 %v4861, %v4857
        %v5058 = vpack.c.b16 %v4862, %v4858
        %v5059 = vpack.c.b16 %v4867, %v4863
        %v5060 = vpack.c.b16 %v4868, %v4864
        %v5061 = vpack.c.b16 %v4869, %v4865
        %v5062 = vpack.c.b16 %v4870, %v4866
        %v5063 = vpack.c.b16 %v4875, %v4871
        %v5064 = vpack.c.b16 %v4876, %v4872
        %v5065 = vpack.c.b16 %v4877, %v4873
        %v5066 = vpack.c.b16 %v4878, %v4874
        %v5067 = vpack.c.b16 %v4883, %v4879
        %v5068 = vpack.c.b16 %v4884, %v4880
        %v5069 = vpack.c.b16 %v4885, %v4881
        %v5070 = vpack.c.b16 %v4886, %v4882
        %v5071 = vpack.c.b16 %v4891, %v4887
        %v5072 = vpack.c.b16 %v4892, %v4888
        %v5073 = vpack.c.b16 %v4893, %v4889
        %v5074 = vpack.c.b16 %v4894, %v4890
        %v5075 = vpack.c.b16 %v4899, %v4895
        %v5076 = vpack.c.b16 %v4900, %v4896
        %v5077 = vpack.c.b16 %v4901, %v4897
        %v5078 = vpack.c.b16 %v4902, %v4898
        %v5079 = vpack.c.b16 %v4907, %v4903
        %v5080 = vpack.c.b16 %v4908, %v4904
        %v5081 = vpack.c.b16 %v4909, %v4905
        %v5082 = vpack.c.b16 %v4910, %v4906
        %v5083 = vpack.c.b16 %v4915, %v4911
        %v5084 = vpack.c.b16 %v4916, %v4912
        %v5085 = vpack.c.b16 %v4917, %v4913
        %v5086 = vpack.c.b16 %v4918, %v4914
        %v5087 = vpack.c.b16 %v4923, %v4919
        %v5088 = vpack.c.b16 %v4924, %v4920
        %v5089 = vpack.c.b16 %v4925, %v4921
        %v5090 = vpack.c.b16 %v4926, %v4922
        %v5091 = vpack.c.b16 %v4931, %v4927
        %v5092 = vpack.c.b16 %v4932, %v4928
        %v5093 = vpack.c.b16 %v4933, %v4929
        %v5094 = vpack.c.b16 %v4934, %v4930
        %v5095 = vpack.c.b16 %v4939, %v4935
        %v5096 = vpack.c.b16 %v4940, %v4936
        %v5097 = vpack.c.b16 %v4941, %v4937
        %v5098 = vpack.c.b16 %v4942, %v4938
        %v5099 = vpack.c.b16 %v4947, %v4943
        %v5100 = vpack.c.b16 %v4948, %v4944
        %v5101 = vpack.c.b16 %v4949, %v4945
        %v5102 = vpack.c.b16 %v4950, %v4946
        %v5103 = vpack.c.b16 %v4955, %v4951
        %v5104 = vpack.c.b16 %v4956, %v4952
        %v5105 = vpack.c.b16 %v4957, %v4953
        %v5106 = vpack.c.b16 %v4958, %v4954
        %v5107 = vpack.c.b16 %v4963, %v4959
        %v5108 = vpack.c.b16 %v4964, %v4960
        %v5109 = vpack.c.b16 %v4965, %v4961
        %v5110 = vpack.c.b16 %v4966, %v4962
        %v5111 = vpack.c.b16 %v4971, %v4967
        %v5112 = vpack.c.b16 %v4972, %v4968
        %v5113 = vpack.c.b16 %v4973, %v4969
        %v5114 = vpack.c.b16 %v4974, %v4970
        %v5115 = vpack.c.b16 %v4979, %v4975
        %v5116 = vpack.c.b16 %v4980, %v4976
        %v5117 = vpack.c.b16 %v4981, %v4977
        %v5118 = vpack.c.b16 %v4982, %v4978
        %v5119 = vpack.c.b16 %v4987, %v4983
        %v5120 = vpack.c.b16 %v4988, %v4984
        %v5121 = vpack.c.b16 %v4989, %v4985
        %v5122 = vpack.c.b16 %v4990, %v4986
        %v5123 = vpack.c.b16 %v4995, %v4991
        %v5124 = vpack.c.b16 %v4996, %v4992
        %v5125 = vpack.c.b16 %v4997, %v4993
        %v5126 = vpack.c.b16 %v4998, %v4994
        %5255 = vmatprep.subr.bf16.mxu0 %v5028
        %5256 = vmatpush1.bf16.msra.mxu0 %v5027
        %5257 = vmatprep.subr.bf16.mxu0 %v5024
        %5258 = vmatpush1.bf16.msra.mxu0 %v5023
        %5259 = vmatprep.subr.bf16.mxu0 %v5020
        %5260 = vmatpush1.bf16.msra.mxu0 %v5019
        %5261 = vmatprep.subr.bf16.mxu0 %v5016
        %5262 = vmatpush1.bf16.msra.mxu0 %v5015
        %5263 = vmatprep.subr.bf16.mxu0 %v5012
        %5264 = vmatpush1.bf16.msra.mxu0 %v5011
        %5265 = vmatprep.subr.bf16.mxu0 %v5008
        %5266 = vmatpush1.bf16.msra.mxu0 %v5007
        %5267 = vmatprep.subr.bf16.mxu0 %v5004
        %5268 = vmatpush1.bf16.msra.mxu0 %v5003
        %5269 = vmatprep.subr.bf16.mxu0 %v5000
        %5270 = vmatpush1.bf16.msra.mxu0 %v4999
        %5271 = vmatprep.subr.bf16.mxu0 %v5060
        %5272 = vmatpush2.bf16.msra.mxu0 %v5059
        %5273 = vmatprep.subr.bf16.mxu0 %v5056
        %5274 = vmatpush2.bf16.msra.mxu0 %v5055
        %5275 = vmatprep.subr.bf16.mxu0 %v5052
        %5276 = vmatpush2.bf16.msra.mxu0 %v5051
        %5277 = vmatprep.subr.bf16.mxu0 %v5048
        %5278 = vmatpush2.bf16.msra.mxu0 %v5047
        %5279 = vmatprep.subr.bf16.mxu0 %v5044
        %5280 = vmatpush2.bf16.msra.mxu0 %v5043
        %5281 = vmatprep.subr.bf16.mxu0 %v5040
        %5282 = vmatpush2.bf16.msra.mxu0 %v5039
        %5283 = vmatprep.subr.bf16.mxu0 %v5036
        %5284 = vmatpush2.bf16.msra.mxu0 %v5035
        %5285 = vmatprep.subr.bf16.mxu0 %v5032
        %5286 = vmatpush2.bf16.msra.mxu0 %v5031
        %5287 = vmatprep.mubr.bf16.mxu0 %v4484
        %5288 = vmatmul.mubr.bf16.gmra.mxu0 %v4483
        %v5289 = vpop.f32.mrf.mxu0
        %v5290 = vadd.f32 %v696, %v5289
        %v5291 = vpop.f32.mrf.mxu0
        %v5292 = vadd.f32 %v697, %v5291
        %v5293 = vpop.f32.mrf.mxu0
        %v5294 = vpop.f32.mrf.mxu0
        %5295 = vdwg.mxu0
        %5296 = vmatprep.subr.bf16.mxu0 %v5092
        %5297 = vmatpush1.bf16.msra.mxu0 %v5091
        %5298 = vmatprep.subr.bf16.mxu0 %v5088
        %5299 = vmatpush1.bf16.msra.mxu0 %v5087
        %5300 = vmatprep.subr.bf16.mxu0 %v5084
        %5301 = vmatpush1.bf16.msra.mxu0 %v5083
        %5302 = vmatprep.subr.bf16.mxu0 %v5080
        %5303 = vmatpush1.bf16.msra.mxu0 %v5079
        %5304 = vmatprep.subr.bf16.mxu0 %v5076
        %5305 = vmatpush1.bf16.msra.mxu0 %v5075
        %5306 = vmatprep.subr.bf16.mxu0 %v5072
        %5307 = vmatpush1.bf16.msra.mxu0 %v5071
        %5308 = vmatprep.subr.bf16.mxu0 %v5068
        %5309 = vmatpush1.bf16.msra.mxu0 %v5067
        %5310 = vmatprep.subr.bf16.mxu0 %v5064
        %5311 = vmatpush1.bf16.msra.mxu0 %v5063
        %5312 = vmatprep.subr.bf16.mxu0 %v5124
        %5313 = vmatpush2.bf16.msra.mxu0 %v5123
        %5314 = vmatprep.subr.bf16.mxu0 %v5120
        %5315 = vmatpush2.bf16.msra.mxu0 %v5119
        %5316 = vmatprep.subr.bf16.mxu0 %v5116
        %5317 = vmatpush2.bf16.msra.mxu0 %v5115
        %5318 = vmatprep.subr.bf16.mxu0 %v5112
        %5319 = vmatpush2.bf16.msra.mxu0 %v5111
        %5320 = vmatprep.subr.bf16.mxu0 %v5108
        %5321 = vmatpush2.bf16.msra.mxu0 %v5107
        %5322 = vmatprep.subr.bf16.mxu0 %v5104
        %5323 = vmatpush2.bf16.msra.mxu0 %v5103
        %5324 = vmatprep.subr.bf16.mxu0 %v5100
        %5325 = vmatpush2.bf16.msra.mxu0 %v5099
        %5326 = vmatprep.subr.bf16.mxu0 %v5096
        %5327 = vmatpush2.bf16.msra.mxu0 %v5095
        %5328 = vmatprep.mubr.bf16.mxu0 %v4486
        %5329 = vmatmul.mubr.bf16.gmra.mxu0 %v4485
        %v5330 = vpop.f32.mrf.mxu0
        %v5331 = vadd.f32 %v5290, %v5330
        %v5332 = vpop.f32.mrf.mxu0
        %v5333 = vadd.f32 %v5292, %v5332
        %v5334 = vpop.f32.mrf.mxu0
        %v5335 = vpop.f32.mrf.mxu0
        %5336 = vdwg.mxu0
        %5337 = vmatprep.subr.bf16.mxu0 %v5030
        %5338 = vmatpush1.bf16.msra.mxu0 %v5029
        %5339 = vmatprep.subr.bf16.mxu0 %v5026
        %5340 = vmatpush1.bf16.msra.mxu0 %v5025
        %5341 = vmatprep.subr.bf16.mxu0 %v5022
        %5342 = vmatpush1.bf16.msra.mxu0 %v5021
        %5343 = vmatprep.subr.bf16.mxu0 %v5018
        %5344 = vmatpush1.bf16.msra.mxu0 %v5017
        %5345 = vmatprep.subr.bf16.mxu0 %v5014
        %5346 = vmatpush1.bf16.msra.mxu0 %v5013
        %5347 = vmatprep.subr.bf16.mxu0 %v5010
        %5348 = vmatpush1.bf16.msra.mxu0 %v5009
        %5349 = vmatprep.subr.bf16.mxu0 %v5006
        %5350 = vmatpush1.bf16.msra.mxu0 %v5005
        %5351 = vmatprep.subr.bf16.mxu0 %v5002
        %5352 = vmatpush1.bf16.msra.mxu0 %v5001
        %5353 = vmatprep.subr.bf16.mxu0 %v5062
        %5354 = vmatpush2.bf16.msra.mxu0 %v5061
        %5355 = vmatprep.subr.bf16.mxu0 %v5058
        %5356 = vmatpush2.bf16.msra.mxu0 %v5057
        %5357 = vmatprep.subr.bf16.mxu0 %v5054
        %5358 = vmatpush2.bf16.msra.mxu0 %v5053
        %5359 = vmatprep.subr.bf16.mxu0 %v5050
        %5360 = vmatpush2.bf16.msra.mxu0 %v5049
        %5361 = vmatprep.subr.bf16.mxu0 %v5046
        %5362 = vmatpush2.bf16.msra.mxu0 %v5045
        %5363 = vmatprep.subr.bf16.mxu0 %v5042
        %5364 = vmatpush2.bf16.msra.mxu0 %v5041
        %5365 = vmatprep.subr.bf16.mxu0 %v5038
        %5366 = vmatpush2.bf16.msra.mxu0 %v5037
        %5367 = vmatprep.subr.bf16.mxu0 %v5034
        %5368 = vmatpush2.bf16.msra.mxu0 %v5033
        %5369 = vmatprep.mubr.bf16.mxu0 %v4484
        %5370 = vmatmul.mubr.bf16.gmra.mxu0 %v4483
        %v5371 = vpop.f32.mrf.mxu0
        %v5372 = vadd.f32 %v698, %v5371
        %v5373 = vpop.f32.mrf.mxu0
        %v5374 = vadd.f32 %v699, %v5373
        %v5375 = vpop.f32.mrf.mxu0
        %v5376 = vpop.f32.mrf.mxu0
        %5377 = vdwg.mxu0
        %5378 = vmatprep.subr.bf16.mxu0 %v5094
        %5379 = vmatpush1.bf16.msra.mxu0 %v5093
        %5380 = vmatprep.subr.bf16.mxu0 %v5090
        %5381 = vmatpush1.bf16.msra.mxu0 %v5089
        %5382 = vmatprep.subr.bf16.mxu0 %v5086
        %5383 = vmatpush1.bf16.msra.mxu0 %v5085
        %5384 = vmatprep.subr.bf16.mxu0 %v5082
        %5385 = vmatpush1.bf16.msra.mxu0 %v5081
        %5386 = vmatprep.subr.bf16.mxu0 %v5078
        %5387 = vmatpush1.bf16.msra.mxu0 %v5077
        %5388 = vmatprep.subr.bf16.mxu0 %v5074
        %5389 = vmatpush1.bf16.msra.mxu0 %v5073
        %5390 = vmatprep.subr.bf16.mxu0 %v5070
        %5391 = vmatpush1.bf16.msra.mxu0 %v5069
        %5392 = vmatprep.subr.bf16.mxu0 %v5066
        %5393 = vmatpush1.bf16.msra.mxu0 %v5065
        %5394 = vmatprep.subr.bf16.mxu0 %v5126
        %5395 = vmatpush2.bf16.msra.mxu0 %v5125
        %5396 = vmatprep.subr.bf16.mxu0 %v5122
        %5397 = vmatpush2.bf16.msra.mxu0 %v5121
        %5398 = vmatprep.subr.bf16.mxu0 %v5118
        %5399 = vmatpush2.bf16.msra.mxu0 %v5117
        %5400 = vmatprep.subr.bf16.mxu0 %v5114
        %5401 = vmatpush2.bf16.msra.mxu0 %v5113
        %5402 = vmatprep.subr.bf16.mxu0 %v5110
        %5403 = vmatpush2.bf16.msra.mxu0 %v5109
        %5404 = vmatprep.subr.bf16.mxu0 %v5106
        %5405 = vmatpush2.bf16.msra.mxu0 %v5105
        %5406 = vmatprep.subr.bf16.mxu0 %v5102
        %5407 = vmatpush2.bf16.msra.mxu0 %v5101
        %5408 = vmatprep.subr.bf16.mxu0 %v5098
        %5409 = vmatpush2.bf16.msra.mxu0 %v5097
        %5410 = vmatprep.mubr.bf16.mxu0 %v4486
        %5411 = vmatmul.mubr.bf16.gmra.mxu0 %v4485
        %v5412 = vpop.f32.mrf.mxu0
        %v5413 = vadd.f32 %v5372, %v5412
        %v5414 = vpop.f32.mrf.mxu0
        %v5415 = vadd.f32 %v5374, %v5414
        %v5416 = vpop.f32.mrf.mxu0
        %v5417 = vpop.f32.mrf.mxu0
        %5418 = vdwg.mxu0
        %v5419 = vadd.f32 %v5331, %v5333
        %v5420 = vadd.f32 %v5419, %v5413
        %v5421 = vadd.f32 %v5420, %v5415
        %5422 = vadd.xlane.f32.xlu0 %v5421
        %v5423 = vpop.xlane.xlu0 %5422
        %v5424 = vrcp.pop 512.0
        %v5425 = vmul.f32 %v5423, %v5424
        %v5426 = vsub.f32 %v5331, %v5425
        %v5427 = vsub.f32 %v5333, %v5425
        %v5428 = vsub.f32 %v5413, %v5425
        %v5429 = vsub.f32 %v5415, %v5425
        %v5430 = vmul.f32 %v5426, %v5426
        %v5431 = vmul.f32 %v5427, %v5427
        %v5432 = vmul.f32 %v5428, %v5428
        %v5433 = vmul.f32 %v5429, %v5429
        %v5434 = vadd.f32 %v5430, %v5431
        %v5435 = vadd.f32 %v5434, %v5432
        %v5436 = vadd.f32 %v5435, %v5433
        %5437 = vadd.xlane.f32.xlu0 %v5436
        %v5438 = vpop.xlane.xlu0 %5437
        %v5439 = vmul.f32 %v5438, %v5424
        %v5440 = vadd.f32 %v5439, 1e-05
        %v5441 = vrsqrt.pop %v5440
        %v5442 = vmul.f32 %v5426, %v5441
        %v5443 = vmul.f32 %v5427, %v5441
        %v5444 = vmul.f32 %v5428, %v5441
        %v5445 = vmul.f32 %v5429, %v5441
        %v5446 = vpack.c.bf16 %v5442, %v5442
        %v5447 = vpack.c.bf16 %v5443, %v5443
        %v5448 = vpack.c.bf16 %v5444, %v5444
        %v5449 = vpack.c.bf16 %v5445, %v5445
        %v5450 = vpack.c.bf16 %v704, %v700
        %v5451 = vpack.c.bf16 %v705, %v701
        %v5452 = vpack.c.bf16 %v706, %v702
        %v5453 = vpack.c.bf16 %v707, %v703
        %v5454 = vld [vmem:[#allocation14] sm:$0xff]
        %v5455 = vld [vmem:[#allocation14 + $0x8] sm:$0xff]
        %v5456 = vld [vmem:[#allocation14 + $0x10] sm:$0xff]
        %v5457 = vld [vmem:[#allocation14 + $0x18] sm:$0xff]
        %v5458 = vld [vmem:[#allocation14 + $0x20] sm:$0xff]
        %v5459 = vld [vmem:[#allocation14 + $0x28] sm:$0xff]
        %v5460 = vld [vmem:[#allocation14 + $0x30] sm:$0xff]
        %v5461 = vld [vmem:[#allocation14 + $0x38] sm:$0xff]
        %v5462 = vld [vmem:[#allocation14 + $0x40] sm:$0xff]
        %v5463 = vld [vmem:[#allocation14 + $0x48] sm:$0xff]
        %v5464 = vld [vmem:[#allocation14 + $0x50] sm:$0xff]
        %v5465 = vld [vmem:[#allocation14 + $0x58] sm:$0xff]
        %v5466 = vld [vmem:[#allocation14 + $0x60] sm:$0xff]
        %v5467 = vld [vmem:[#allocation14 + $0x68] sm:$0xff]
        %v5468 = vld [vmem:[#allocation14 + $0x70] sm:$0xff]
        %v5469 = vld [vmem:[#allocation14 + $0x78] sm:$0xff]
        %v5470 = vld [vmem:[#allocation14 + $0x80] sm:$0xff]
        %v5471 = vld [vmem:[#allocation14 + $0x88] sm:$0xff]
        %v5472 = vld [vmem:[#allocation14 + $0x90] sm:$0xff]
        %v5473 = vld [vmem:[#allocation14 + $0x98] sm:$0xff]
        %v5474 = vld [vmem:[#allocation14 + $0xa0] sm:$0xff]
        %v5475 = vld [vmem:[#allocation14 + $0xa8] sm:$0xff]
        %v5476 = vld [vmem:[#allocation14 + $0xb0] sm:$0xff]
        %v5477 = vld [vmem:[#allocation14 + $0xb8] sm:$0xff]
        %v5478 = vld [vmem:[#allocation14 + $0xc0] sm:$0xff]
        %v5479 = vld [vmem:[#allocation14 + $0xc8] sm:$0xff]
        %v5480 = vld [vmem:[#allocation14 + $0xd0] sm:$0xff]
        %v5481 = vld [vmem:[#allocation14 + $0xd8] sm:$0xff]
        %v5482 = vld [vmem:[#allocation14 + $0xe0] sm:$0xff]
        %v5483 = vld [vmem:[#allocation14 + $0xe8] sm:$0xff]
        %v5484 = vld [vmem:[#allocation14 + $0xf0] sm:$0xff]
        %v5485 = vld [vmem:[#allocation14 + $0xf8] sm:$0xff]
        %v5486 = vld [vmem:[#allocation14 + $0x100] sm:$0xff]
        %v5487 = vld [vmem:[#allocation14 + $0x108] sm:$0xff]
        %v5488 = vld [vmem:[#allocation14 + $0x110] sm:$0xff]
        %v5489 = vld [vmem:[#allocation14 + $0x118] sm:$0xff]
        %v5490 = vld [vmem:[#allocation14 + $0x120] sm:$0xff]
        %v5491 = vld [vmem:[#allocation14 + $0x128] sm:$0xff]
        %v5492 = vld [vmem:[#allocation14 + $0x130] sm:$0xff]
        %v5493 = vld [vmem:[#allocation14 + $0x138] sm:$0xff]
        %v5494 = vld [vmem:[#allocation14 + $0x140] sm:$0xff]
        %v5495 = vld [vmem:[#allocation14 + $0x148] sm:$0xff]
        %v5496 = vld [vmem:[#allocation14 + $0x150] sm:$0xff]
        %v5497 = vld [vmem:[#allocation14 + $0x158] sm:$0xff]
        %v5498 = vld [vmem:[#allocation14 + $0x160] sm:$0xff]
        %v5499 = vld [vmem:[#allocation14 + $0x168] sm:$0xff]
        %v5500 = vld [vmem:[#allocation14 + $0x170] sm:$0xff]
        %v5501 = vld [vmem:[#allocation14 + $0x178] sm:$0xff]
        %v5502 = vld [vmem:[#allocation14 + $0x180] sm:$0xff]
        %v5503 = vld [vmem:[#allocation14 + $0x188] sm:$0xff]
        %v5504 = vld [vmem:[#allocation14 + $0x190] sm:$0xff]
        %v5505 = vld [vmem:[#allocation14 + $0x198] sm:$0xff]
        %v5506 = vld [vmem:[#allocation14 + $0x1a0] sm:$0xff]
        %v5507 = vld [vmem:[#allocation14 + $0x1a8] sm:$0xff]
        %v5508 = vld [vmem:[#allocation14 + $0x1b0] sm:$0xff]
        %v5509 = vld [vmem:[#allocation14 + $0x1b8] sm:$0xff]
        %v5510 = vld [vmem:[#allocation14 + $0x1c0] sm:$0xff]
        %v5511 = vld [vmem:[#allocation14 + $0x1c8] sm:$0xff]
        %v5512 = vld [vmem:[#allocation14 + $0x1d0] sm:$0xff]
        %v5513 = vld [vmem:[#allocation14 + $0x1d8] sm:$0xff]
        %v5514 = vld [vmem:[#allocation14 + $0x1e0] sm:$0xff]
        %v5515 = vld [vmem:[#allocation14 + $0x1e8] sm:$0xff]
        %v5516 = vld [vmem:[#allocation14 + $0x1f0] sm:$0xff]
        %v5517 = vld [vmem:[#allocation14 + $0x1f8] sm:$0xff]
        %v5518 = vld [vmem:[#allocation14 + $0x200] sm:$0xff]
        %v5519 = vld [vmem:[#allocation14 + $0x208] sm:$0xff]
        %v5520 = vld [vmem:[#allocation14 + $0x210] sm:$0xff]
        %v5521 = vld [vmem:[#allocation14 + $0x218] sm:$0xff]
        %v5522 = vld [vmem:[#allocation14 + $0x220] sm:$0xff]
        %v5523 = vld [vmem:[#allocation14 + $0x228] sm:$0xff]
        %v5524 = vld [vmem:[#allocation14 + $0x230] sm:$0xff]
        %v5525 = vld [vmem:[#allocation14 + $0x238] sm:$0xff]
        %v5526 = vld [vmem:[#allocation14 + $0x240] sm:$0xff]
        %v5527 = vld [vmem:[#allocation14 + $0x248] sm:$0xff]
        %v5528 = vld [vmem:[#allocation14 + $0x250] sm:$0xff]
        %v5529 = vld [vmem:[#allocation14 + $0x258] sm:$0xff]
        %v5530 = vld [vmem:[#allocation14 + $0x260] sm:$0xff]
        %v5531 = vld [vmem:[#allocation14 + $0x268] sm:$0xff]
        %v5532 = vld [vmem:[#allocation14 + $0x270] sm:$0xff]
        %v5533 = vld [vmem:[#allocation14 + $0x278] sm:$0xff]
        %v5534 = vld [vmem:[#allocation14 + $0x280] sm:$0xff]
        %v5535 = vld [vmem:[#allocation14 + $0x288] sm:$0xff]
        %v5536 = vld [vmem:[#allocation14 + $0x290] sm:$0xff]
        %v5537 = vld [vmem:[#allocation14 + $0x298] sm:$0xff]
        %v5538 = vld [vmem:[#allocation14 + $0x2a0] sm:$0xff]
        %v5539 = vld [vmem:[#allocation14 + $0x2a8] sm:$0xff]
        %v5540 = vld [vmem:[#allocation14 + $0x2b0] sm:$0xff]
        %v5541 = vld [vmem:[#allocation14 + $0x2b8] sm:$0xff]
        %v5542 = vld [vmem:[#allocation14 + $0x2c0] sm:$0xff]
        %v5543 = vld [vmem:[#allocation14 + $0x2c8] sm:$0xff]
        %v5544 = vld [vmem:[#allocation14 + $0x2d0] sm:$0xff]
        %v5545 = vld [vmem:[#allocation14 + $0x2d8] sm:$0xff]
        %v5546 = vld [vmem:[#allocation14 + $0x2e0] sm:$0xff]
        %v5547 = vld [vmem:[#allocation14 + $0x2e8] sm:$0xff]
        %v5548 = vld [vmem:[#allocation14 + $0x2f0] sm:$0xff]
        %v5549 = vld [vmem:[#allocation14 + $0x2f8] sm:$0xff]
        %v5550 = vld [vmem:[#allocation14 + $0x300] sm:$0xff]
        %v5551 = vld [vmem:[#allocation14 + $0x308] sm:$0xff]
        %v5552 = vld [vmem:[#allocation14 + $0x310] sm:$0xff]
        %v5553 = vld [vmem:[#allocation14 + $0x318] sm:$0xff]
        %v5554 = vld [vmem:[#allocation14 + $0x320] sm:$0xff]
        %v5555 = vld [vmem:[#allocation14 + $0x328] sm:$0xff]
        %v5556 = vld [vmem:[#allocation14 + $0x330] sm:$0xff]
        %v5557 = vld [vmem:[#allocation14 + $0x338] sm:$0xff]
        %v5558 = vld [vmem:[#allocation14 + $0x340] sm:$0xff]
        %v5559 = vld [vmem:[#allocation14 + $0x348] sm:$0xff]
        %v5560 = vld [vmem:[#allocation14 + $0x350] sm:$0xff]
        %v5561 = vld [vmem:[#allocation14 + $0x358] sm:$0xff]
        %v5562 = vld [vmem:[#allocation14 + $0x360] sm:$0xff]
        %v5563 = vld [vmem:[#allocation14 + $0x368] sm:$0xff]
        %v5564 = vld [vmem:[#allocation14 + $0x370] sm:$0xff]
        %v5565 = vld [vmem:[#allocation14 + $0x378] sm:$0xff]
        %v5566 = vld [vmem:[#allocation14 + $0x380] sm:$0xff]
        %v5567 = vld [vmem:[#allocation14 + $0x388] sm:$0xff]
        %v5568 = vld [vmem:[#allocation14 + $0x390] sm:$0xff]
        %v5569 = vld [vmem:[#allocation14 + $0x398] sm:$0xff]
        %v5570 = vld [vmem:[#allocation14 + $0x3a0] sm:$0xff]
        %v5571 = vld [vmem:[#allocation14 + $0x3a8] sm:$0xff]
        %v5572 = vld [vmem:[#allocation14 + $0x3b0] sm:$0xff]
        %v5573 = vld [vmem:[#allocation14 + $0x3b8] sm:$0xff]
        %v5574 = vld [vmem:[#allocation14 + $0x3c0] sm:$0xff]
        %v5575 = vld [vmem:[#allocation14 + $0x3c8] sm:$0xff]
        %v5576 = vld [vmem:[#allocation14 + $0x3d0] sm:$0xff]
        %v5577 = vld [vmem:[#allocation14 + $0x3d8] sm:$0xff]
        %v5578 = vld [vmem:[#allocation14 + $0x3e0] sm:$0xff]
        %v5579 = vld [vmem:[#allocation14 + $0x3e8] sm:$0xff]
        %v5580 = vld [vmem:[#allocation14 + $0x3f0] sm:$0xff]
        %v5581 = vld [vmem:[#allocation14 + $0x3f8] sm:$0xff]
        %v5710 = vunpack.c.l.b16 %v5454
        %v5711 = vunpack.c.h.b16 %v5454
        %v5712 = vunpack.c.l.b16 %v5455
        %v5713 = vunpack.c.h.b16 %v5455
        %v5714 = vunpack.c.l.b16 %v5456
        %v5715 = vunpack.c.h.b16 %v5456
        %v5716 = vunpack.c.l.b16 %v5457
        %v5717 = vunpack.c.h.b16 %v5457
        %v5718 = vunpack.c.l.b16 %v5458
        %v5719 = vunpack.c.h.b16 %v5458
        %v5720 = vunpack.c.l.b16 %v5459
        %v5721 = vunpack.c.h.b16 %v5459
        %v5722 = vunpack.c.l.b16 %v5460
        %v5723 = vunpack.c.h.b16 %v5460
        %v5724 = vunpack.c.l.b16 %v5461
        %v5725 = vunpack.c.h.b16 %v5461
        %v5726 = vunpack.c.l.b16 %v5462
        %v5727 = vunpack.c.h.b16 %v5462
        %v5728 = vunpack.c.l.b16 %v5463
        %v5729 = vunpack.c.h.b16 %v5463
        %v5730 = vunpack.c.l.b16 %v5464
        %v5731 = vunpack.c.h.b16 %v5464
        %v5732 = vunpack.c.l.b16 %v5465
        %v5733 = vunpack.c.h.b16 %v5465
        %v5734 = vunpack.c.l.b16 %v5466
        %v5735 = vunpack.c.h.b16 %v5466
        %v5736 = vunpack.c.l.b16 %v5467
        %v5737 = vunpack.c.h.b16 %v5467
        %v5738 = vunpack.c.l.b16 %v5468
        %v5739 = vunpack.c.h.b16 %v5468
        %v5740 = vunpack.c.l.b16 %v5469
        %v5741 = vunpack.c.h.b16 %v5469
        %v5742 = vunpack.c.l.b16 %v5470
        %v5743 = vunpack.c.h.b16 %v5470
        %v5744 = vunpack.c.l.b16 %v5471
        %v5745 = vunpack.c.h.b16 %v5471
        %v5746 = vunpack.c.l.b16 %v5472
        %v5747 = vunpack.c.h.b16 %v5472
        %v5748 = vunpack.c.l.b16 %v5473
        %v5749 = vunpack.c.h.b16 %v5473
        %v5750 = vunpack.c.l.b16 %v5474
        %v5751 = vunpack.c.h.b16 %v5474
        %v5752 = vunpack.c.l.b16 %v5475
        %v5753 = vunpack.c.h.b16 %v5475
        %v5754 = vunpack.c.l.b16 %v5476
        %v5755 = vunpack.c.h.b16 %v5476
        %v5756 = vunpack.c.l.b16 %v5477
        %v5757 = vunpack.c.h.b16 %v5477
        %v5758 = vunpack.c.l.b16 %v5478
        %v5759 = vunpack.c.h.b16 %v5478
        %v5760 = vunpack.c.l.b16 %v5479
        %v5761 = vunpack.c.h.b16 %v5479
        %v5762 = vunpack.c.l.b16 %v5480
        %v5763 = vunpack.c.h.b16 %v5480
        %v5764 = vunpack.c.l.b16 %v5481
        %v5765 = vunpack.c.h.b16 %v5481
        %v5766 = vunpack.c.l.b16 %v5482
        %v5767 = vunpack.c.h.b16 %v5482
        %v5768 = vunpack.c.l.b16 %v5483
        %v5769 = vunpack.c.h.b16 %v5483
        %v5770 = vunpack.c.l.b16 %v5484
        %v5771 = vunpack.c.h.b16 %v5484
        %v5772 = vunpack.c.l.b16 %v5485
        %v5773 = vunpack.c.h.b16 %v5485
        %v5774 = vunpack.c.l.b16 %v5486
        %v5775 = vunpack.c.h.b16 %v5486
        %v5776 = vunpack.c.l.b16 %v5487
        %v5777 = vunpack.c.h.b16 %v5487
        %v5778 = vunpack.c.l.b16 %v5488
        %v5779 = vunpack.c.h.b16 %v5488
        %v5780 = vunpack.c.l.b16 %v5489
        %v5781 = vunpack.c.h.b16 %v5489
        %v5782 = vunpack.c.l.b16 %v5490
        %v5783 = vunpack.c.h.b16 %v5490
        %v5784 = vunpack.c.l.b16 %v5491
        %v5785 = vunpack.c.h.b16 %v5491
        %v5786 = vunpack.c.l.b16 %v5492
        %v5787 = vunpack.c.h.b16 %v5492
        %v5788 = vunpack.c.l.b16 %v5493
        %v5789 = vunpack.c.h.b16 %v5493
        %v5790 = vunpack.c.l.b16 %v5494
        %v5791 = vunpack.c.h.b16 %v5494
        %v5792 = vunpack.c.l.b16 %v5495
        %v5793 = vunpack.c.h.b16 %v5495
        %v5794 = vunpack.c.l.b16 %v5496
        %v5795 = vunpack.c.h.b16 %v5496
        %v5796 = vunpack.c.l.b16 %v5497
        %v5797 = vunpack.c.h.b16 %v5497
        %v5798 = vunpack.c.l.b16 %v5498
        %v5799 = vunpack.c.h.b16 %v5498
        %v5800 = vunpack.c.l.b16 %v5499
        %v5801 = vunpack.c.h.b16 %v5499
        %v5802 = vunpack.c.l.b16 %v5500
        %v5803 = vunpack.c.h.b16 %v5500
        %v5804 = vunpack.c.l.b16 %v5501
        %v5805 = vunpack.c.h.b16 %v5501
        %v5806 = vunpack.c.l.b16 %v5502
        %v5807 = vunpack.c.h.b16 %v5502
        %v5808 = vunpack.c.l.b16 %v5503
        %v5809 = vunpack.c.h.b16 %v5503
        %v5810 = vunpack.c.l.b16 %v5504
        %v5811 = vunpack.c.h.b16 %v5504
        %v5812 = vunpack.c.l.b16 %v5505
        %v5813 = vunpack.c.h.b16 %v5505
        %v5814 = vunpack.c.l.b16 %v5506
        %v5815 = vunpack.c.h.b16 %v5506
        %v5816 = vunpack.c.l.b16 %v5507
        %v5817 = vunpack.c.h.b16 %v5507
        %v5818 = vunpack.c.l.b16 %v5508
        %v5819 = vunpack.c.h.b16 %v5508
        %v5820 = vunpack.c.l.b16 %v5509
        %v5821 = vunpack.c.h.b16 %v5509
        %v5822 = vunpack.c.l.b16 %v5510
        %v5823 = vunpack.c.h.b16 %v5510
        %v5824 = vunpack.c.l.b16 %v5511
        %v5825 = vunpack.c.h.b16 %v5511
        %v5826 = vunpack.c.l.b16 %v5512
        %v5827 = vunpack.c.h.b16 %v5512
        %v5828 = vunpack.c.l.b16 %v5513
        %v5829 = vunpack.c.h.b16 %v5513
        %v5830 = vunpack.c.l.b16 %v5514
        %v5831 = vunpack.c.h.b16 %v5514
        %v5832 = vunpack.c.l.b16 %v5515
        %v5833 = vunpack.c.h.b16 %v5515
        %v5834 = vunpack.c.l.b16 %v5516
        %v5835 = vunpack.c.h.b16 %v5516
        %v5836 = vunpack.c.l.b16 %v5517
        %v5837 = vunpack.c.h.b16 %v5517
        %v5838 = vunpack.c.l.b16 %v5518
        %v5839 = vunpack.c.h.b16 %v5518
        %v5840 = vunpack.c.l.b16 %v5519
        %v5841 = vunpack.c.h.b16 %v5519
        %v5842 = vunpack.c.l.b16 %v5520
        %v5843 = vunpack.c.h.b16 %v5520
        %v5844 = vunpack.c.l.b16 %v5521
        %v5845 = vunpack.c.h.b16 %v5521
        %v5846 = vunpack.c.l.b16 %v5522
        %v5847 = vunpack.c.h.b16 %v5522
        %v5848 = vunpack.c.l.b16 %v5523
        %v5849 = vunpack.c.h.b16 %v5523
        %v5850 = vunpack.c.l.b16 %v5524
        %v5851 = vunpack.c.h.b16 %v5524
        %v5852 = vunpack.c.l.b16 %v5525
        %v5853 = vunpack.c.h.b16 %v5525
        %v5854 = vunpack.c.l.b16 %v5526
        %v5855 = vunpack.c.h.b16 %v5526
        %v5856 = vunpack.c.l.b16 %v5527
        %v5857 = vunpack.c.h.b16 %v5527
        %v5858 = vunpack.c.l.b16 %v5528
        %v5859 = vunpack.c.h.b16 %v5528
        %v5860 = vunpack.c.l.b16 %v5529
        %v5861 = vunpack.c.h.b16 %v5529
        %v5862 = vunpack.c.l.b16 %v5530
        %v5863 = vunpack.c.h.b16 %v5530
        %v5864 = vunpack.c.l.b16 %v5531
        %v5865 = vunpack.c.h.b16 %v5531
        %v5866 = vunpack.c.l.b16 %v5532
        %v5867 = vunpack.c.h.b16 %v5532
        %v5868 = vunpack.c.l.b16 %v5533
        %v5869 = vunpack.c.h.b16 %v5533
        %v5870 = vunpack.c.l.b16 %v5534
        %v5871 = vunpack.c.h.b16 %v5534
        %v5872 = vunpack.c.l.b16 %v5535
        %v5873 = vunpack.c.h.b16 %v5535
        %v5874 = vunpack.c.l.b16 %v5536
        %v5875 = vunpack.c.h.b16 %v5536
        %v5876 = vunpack.c.l.b16 %v5537
        %v5877 = vunpack.c.h.b16 %v5537
        %v5878 = vunpack.c.l.b16 %v5538
        %v5879 = vunpack.c.h.b16 %v5538
        %v5880 = vunpack.c.l.b16 %v5539
        %v5881 = vunpack.c.h.b16 %v5539
        %v5882 = vunpack.c.l.b16 %v5540
        %v5883 = vunpack.c.h.b16 %v5540
        %v5884 = vunpack.c.l.b16 %v5541
        %v5885 = vunpack.c.h.b16 %v5541
        %v5886 = vunpack.c.l.b16 %v5542
        %v5887 = vunpack.c.h.b16 %v5542
        %v5888 = vunpack.c.l.b16 %v5543
        %v5889 = vunpack.c.h.b16 %v5543
        %v5890 = vunpack.c.l.b16 %v5544
        %v5891 = vunpack.c.h.b16 %v5544
        %v5892 = vunpack.c.l.b16 %v5545
        %v5893 = vunpack.c.h.b16 %v5545
        %v5894 = vunpack.c.l.b16 %v5546
        %v5895 = vunpack.c.h.b16 %v5546
        %v5896 = vunpack.c.l.b16 %v5547
        %v5897 = vunpack.c.h.b16 %v5547
        %v5898 = vunpack.c.l.b16 %v5548
        %v5899 = vunpack.c.h.b16 %v5548
        %v5900 = vunpack.c.l.b16 %v5549
        %v5901 = vunpack.c.h.b16 %v5549
        %v5902 = vunpack.c.l.b16 %v5550
        %v5903 = vunpack.c.h.b16 %v5550
        %v5904 = vunpack.c.l.b16 %v5551
        %v5905 = vunpack.c.h.b16 %v5551
        %v5906 = vunpack.c.l.b16 %v5552
        %v5907 = vunpack.c.h.b16 %v5552
        %v5908 = vunpack.c.l.b16 %v5553
        %v5909 = vunpack.c.h.b16 %v5553
        %v5910 = vunpack.c.l.b16 %v5554
        %v5911 = vunpack.c.h.b16 %v5554
        %v5912 = vunpack.c.l.b16 %v5555
        %v5913 = vunpack.c.h.b16 %v5555
        %v5914 = vunpack.c.l.b16 %v5556
        %v5915 = vunpack.c.h.b16 %v5556
        %v5916 = vunpack.c.l.b16 %v5557
        %v5917 = vunpack.c.h.b16 %v5557
        %v5918 = vunpack.c.l.b16 %v5558
        %v5919 = vunpack.c.h.b16 %v5558
        %v5920 = vunpack.c.l.b16 %v5559
        %v5921 = vunpack.c.h.b16 %v5559
        %v5922 = vunpack.c.l.b16 %v5560
        %v5923 = vunpack.c.h.b16 %v5560
        %v5924 = vunpack.c.l.b16 %v5561
        %v5925 = vunpack.c.h.b16 %v5561
        %v5926 = vunpack.c.l.b16 %v5562
        %v5927 = vunpack.c.h.b16 %v5562
        %v5928 = vunpack.c.l.b16 %v5563
        %v5929 = vunpack.c.h.b16 %v5563
        %v5930 = vunpack.c.l.b16 %v5564
        %v5931 = vunpack.c.h.b16 %v5564
        %v5932 = vunpack.c.l.b16 %v5565
        %v5933 = vunpack.c.h.b16 %v5565
        %v5934 = vunpack.c.l.b16 %v5566
        %v5935 = vunpack.c.h.b16 %v5566
        %v5936 = vunpack.c.l.b16 %v5567
        %v5937 = vunpack.c.h.b16 %v5567
        %v5938 = vunpack.c.l.b16 %v5568
        %v5939 = vunpack.c.h.b16 %v5568
        %v5940 = vunpack.c.l.b16 %v5569
        %v5941 = vunpack.c.h.b16 %v5569
        %v5942 = vunpack.c.l.b16 %v5570
        %v5943 = vunpack.c.h.b16 %v5570
        %v5944 = vunpack.c.l.b16 %v5571
        %v5945 = vunpack.c.h.b16 %v5571
        %v5946 = vunpack.c.l.b16 %v5572
        %v5947 = vunpack.c.h.b16 %v5572
        %v5948 = vunpack.c.l.b16 %v5573
        %v5949 = vunpack.c.h.b16 %v5573
        %v5950 = vunpack.c.l.b16 %v5574
        %v5951 = vunpack.c.h.b16 %v5574
        %v5952 = vunpack.c.l.b16 %v5575
        %v5953 = vunpack.c.h.b16 %v5575
        %v5954 = vunpack.c.l.b16 %v5576
        %v5955 = vunpack.c.h.b16 %v5576
        %v5956 = vunpack.c.l.b16 %v5577
        %v5957 = vunpack.c.h.b16 %v5577
        %v5958 = vunpack.c.l.b16 %v5578
        %v5959 = vunpack.c.h.b16 %v5578
        %v5960 = vunpack.c.l.b16 %v5579
        %v5961 = vunpack.c.h.b16 %v5579
        %v5962 = vunpack.c.l.b16 %v5580
        %v5963 = vunpack.c.h.b16 %v5580
        %v5964 = vunpack.c.l.b16 %v5581
        %v5965 = vunpack.c.h.b16 %v5581
        %v5966 = vpack.c.b16 %v5714, %v5710
        %v5967 = vpack.c.b16 %v5715, %v5711
        %v5968 = vpack.c.b16 %v5716, %v5712
        %v5969 = vpack.c.b16 %v5717, %v5713
        %v5970 = vpack.c.b16 %v5722, %v5718
        %v5971 = vpack.c.b16 %v5723, %v5719
        %v5972 = vpack.c.b16 %v5724, %v5720
        %v5973 = vpack.c.b16 %v5725, %v5721
        %v5974 = vpack.c.b16 %v5730, %v5726
        %v5975 = vpack.c.b16 %v5731, %v5727
        %v5976 = vpack.c.b16 %v5732, %v5728
        %v5977 = vpack.c.b16 %v5733, %v5729
        %v5978 = vpack.c.b16 %v5738, %v5734
        %v5979 = vpack.c.b16 %v5739, %v5735
        %v5980 = vpack.c.b16 %v5740, %v5736
        %v5981 = vpack.c.b16 %v5741, %v5737
        %v5982 = vpack.c.b16 %v5746, %v5742
        %v5983 = vpack.c.b16 %v5747, %v5743
        %v5984 = vpack.c.b16 %v5748, %v5744
        %v5985 = vpack.c.b16 %v5749, %v5745
        %v5986 = vpack.c.b16 %v5754, %v5750
        %v5987 = vpack.c.b16 %v5755, %v5751
        %v5988 = vpack.c.b16 %v5756, %v5752
        %v5989 = vpack.c.b16 %v5757, %v5753
        %v5990 = vpack.c.b16 %v5762, %v5758
        %v5991 = vpack.c.b16 %v5763, %v5759
        %v5992 = vpack.c.b16 %v5764, %v5760
        %v5993 = vpack.c.b16 %v5765, %v5761
        %v5994 = vpack.c.b16 %v5770, %v5766
        %v5995 = vpack.c.b16 %v5771, %v5767
        %v5996 = vpack.c.b16 %v5772, %v5768
        %v5997 = vpack.c.b16 %v5773, %v5769
        %v5998 = vpack.c.b16 %v5778, %v5774
        %v5999 = vpack.c.b16 %v5779, %v5775
        %v6000 = vpack.c.b16 %v5780, %v5776
        %v6001 = vpack.c.b16 %v5781, %v5777
        %v6002 = vpack.c.b16 %v5786, %v5782
        %v6003 = vpack.c.b16 %v5787, %v5783
        %v6004 = vpack.c.b16 %v5788, %v5784
        %v6005 = vpack.c.b16 %v5789, %v5785
        %v6006 = vpack.c.b16 %v5794, %v5790
        %v6007 = vpack.c.b16 %v5795, %v5791
        %v6008 = vpack.c.b16 %v5796, %v5792
        %v6009 = vpack.c.b16 %v5797, %v5793
        %v6010 = vpack.c.b16 %v5802, %v5798
        %v6011 = vpack.c.b16 %v5803, %v5799
        %v6012 = vpack.c.b16 %v5804, %v5800
        %v6013 = vpack.c.b16 %v5805, %v5801
        %v6014 = vpack.c.b16 %v5810, %v5806
        %v6015 = vpack.c.b16 %v5811, %v5807
        %v6016 = vpack.c.b16 %v5812, %v5808
        %v6017 = vpack.c.b16 %v5813, %v5809
        %v6018 = vpack.c.b16 %v5818, %v5814
        %v6019 = vpack.c.b16 %v5819, %v5815
        %v6020 = vpack.c.b16 %v5820, %v5816
        %v6021 = vpack.c.b16 %v5821, %v5817
        %v6022 = vpack.c.b16 %v5826, %v5822
        %v6023 = vpack.c.b16 %v5827, %v5823
        %v6024 = vpack.c.b16 %v5828, %v5824
        %v6025 = vpack.c.b16 %v5829, %v5825
        %v6026 = vpack.c.b16 %v5834, %v5830
        %v6027 = vpack.c.b16 %v5835, %v5831
        %v6028 = vpack.c.b16 %v5836, %v5832
        %v6029 = vpack.c.b16 %v5837, %v5833
        %v6030 = vpack.c.b16 %v5842, %v5838
        %v6031 = vpack.c.b16 %v5843, %v5839
        %v6032 = vpack.c.b16 %v5844, %v5840
        %v6033 = vpack.c.b16 %v5845, %v5841
        %v6034 = vpack.c.b16 %v5850, %v5846
        %v6035 = vpack.c.b16 %v5851, %v5847
        %v6036 = vpack.c.b16 %v5852, %v5848
        %v6037 = vpack.c.b16 %v5853, %v5849
        %v6038 = vpack.c.b16 %v5858, %v5854
        %v6039 = vpack.c.b16 %v5859, %v5855
        %v6040 = vpack.c.b16 %v5860, %v5856
        %v6041 = vpack.c.b16 %v5861, %v5857
        %v6042 = vpack.c.b16 %v5866, %v5862
        %v6043 = vpack.c.b16 %v5867, %v5863
        %v6044 = vpack.c.b16 %v5868, %v5864
        %v6045 = vpack.c.b16 %v5869, %v5865
        %v6046 = vpack.c.b16 %v5874, %v5870
        %v6047 = vpack.c.b16 %v5875, %v5871
        %v6048 = vpack.c.b16 %v5876, %v5872
        %v6049 = vpack.c.b16 %v5877, %v5873
        %v6050 = vpack.c.b16 %v5882, %v5878
        %v6051 = vpack.c.b16 %v5883, %v5879
        %v6052 = vpack.c.b16 %v5884, %v5880
        %v6053 = vpack.c.b16 %v5885, %v5881
        %v6054 = vpack.c.b16 %v5890, %v5886
        %v6055 = vpack.c.b16 %v5891, %v5887
        %v6056 = vpack.c.b16 %v5892, %v5888
        %v6057 = vpack.c.b16 %v5893, %v5889
        %v6058 = vpack.c.b16 %v5898, %v5894
        %v6059 = vpack.c.b16 %v5899, %v5895
        %v6060 = vpack.c.b16 %v5900, %v5896
        %v6061 = vpack.c.b16 %v5901, %v5897
        %v6062 = vpack.c.b16 %v5906, %v5902
        %v6063 = vpack.c.b16 %v5907, %v5903
        %v6064 = vpack.c.b16 %v5908, %v5904
        %v6065 = vpack.c.b16 %v5909, %v5905
        %v6066 = vpack.c.b16 %v5914, %v5910
        %v6067 = vpack.c.b16 %v5915, %v5911
        %v6068 = vpack.c.b16 %v5916, %v5912
        %v6069 = vpack.c.b16 %v5917, %v5913
        %v6070 = vpack.c.b16 %v5922, %v5918
        %v6071 = vpack.c.b16 %v5923, %v5919
        %v6072 = vpack.c.b16 %v5924, %v5920
        %v6073 = vpack.c.b16 %v5925, %v5921
        %v6074 = vpack.c.b16 %v5930, %v5926
        %v6075 = vpack.c.b16 %v5931, %v5927
        %v6076 = vpack.c.b16 %v5932, %v5928
        %v6077 = vpack.c.b16 %v5933, %v5929
        %v6078 = vpack.c.b16 %v5938, %v5934
        %v6079 = vpack.c.b16 %v5939, %v5935
        %v6080 = vpack.c.b16 %v5940, %v5936
        %v6081 = vpack.c.b16 %v5941, %v5937
        %v6082 = vpack.c.b16 %v5946, %v5942
        %v6083 = vpack.c.b16 %v5947, %v5943
        %v6084 = vpack.c.b16 %v5948, %v5944
        %v6085 = vpack.c.b16 %v5949, %v5945
        %v6086 = vpack.c.b16 %v5954, %v5950
        %v6087 = vpack.c.b16 %v5955, %v5951
        %v6088 = vpack.c.b16 %v5956, %v5952
        %v6089 = vpack.c.b16 %v5957, %v5953
        %v6090 = vpack.c.b16 %v5962, %v5958
        %v6091 = vpack.c.b16 %v5963, %v5959
        %v6092 = vpack.c.b16 %v5964, %v5960
        %v6093 = vpack.c.b16 %v5965, %v5961
        %6222 = vmatprep.subr.bf16.mxu0 %v5995
        %6223 = vmatpush1.bf16.msra.mxu0 %v5994
        %6224 = vmatprep.subr.bf16.mxu0 %v5991
        %6225 = vmatpush1.bf16.msra.mxu0 %v5990
        %6226 = vmatprep.subr.bf16.mxu0 %v5987
        %6227 = vmatpush1.bf16.msra.mxu0 %v5986
        %6228 = vmatprep.subr.bf16.mxu0 %v5983
        %6229 = vmatpush1.bf16.msra.mxu0 %v5982
        %6230 = vmatprep.subr.bf16.mxu0 %v5979
        %6231 = vmatpush1.bf16.msra.mxu0 %v5978
        %6232 = vmatprep.subr.bf16.mxu0 %v5975
        %6233 = vmatpush1.bf16.msra.mxu0 %v5974
        %6234 = vmatprep.subr.bf16.mxu0 %v5971
        %6235 = vmatpush1.bf16.msra.mxu0 %v5970
        %6236 = vmatprep.subr.bf16.mxu0 %v5967
        %6237 = vmatpush1.bf16.msra.mxu0 %v5966
        %6238 = vmatprep.subr.bf16.mxu0 %v6027
        %6239 = vmatpush2.bf16.msra.mxu0 %v6026
        %6240 = vmatprep.subr.bf16.mxu0 %v6023
        %6241 = vmatpush2.bf16.msra.mxu0 %v6022
        %6242 = vmatprep.subr.bf16.mxu0 %v6019
        %6243 = vmatpush2.bf16.msra.mxu0 %v6018
        %6244 = vmatprep.subr.bf16.mxu0 %v6015
        %6245 = vmatpush2.bf16.msra.mxu0 %v6014
        %6246 = vmatprep.subr.bf16.mxu0 %v6011
        %6247 = vmatpush2.bf16.msra.mxu0 %v6010
        %6248 = vmatprep.subr.bf16.mxu0 %v6007
        %6249 = vmatpush2.bf16.msra.mxu0 %v6006
        %6250 = vmatprep.subr.bf16.mxu0 %v6003
        %6251 = vmatpush2.bf16.msra.mxu0 %v6002
        %6252 = vmatprep.subr.bf16.mxu0 %v5999
        %6253 = vmatpush2.bf16.msra.mxu0 %v5998
        %6254 = vmatprep.mubr.bf16.mxu0 %v5447
        %6255 = vmatmul.mubr.bf16.gmra.mxu0 %v5446
        %v6256 = vpop.f32.mrf.mxu0
        %v6257 = vadd.f32 0.0, %v6256
        %v6258 = vpop.f32.mrf.mxu0
        %v6259 = vadd.f32 0.0, %v6258
        %v6260 = vpop.f32.mrf.mxu0
        %v6261 = vpop.f32.mrf.mxu0
        %6262 = vdwg.mxu0
        %6263 = vmatprep.subr.bf16.mxu0 %v6059
        %6264 = vmatpush1.bf16.msra.mxu0 %v6058
        %6265 = vmatprep.subr.bf16.mxu0 %v6055
        %6266 = vmatpush1.bf16.msra.mxu0 %v6054
        %6267 = vmatprep.subr.bf16.mxu0 %v6051
        %6268 = vmatpush1.bf16.msra.mxu0 %v6050
        %6269 = vmatprep.subr.bf16.mxu0 %v6047
        %6270 = vmatpush1.bf16.msra.mxu0 %v6046
        %6271 = vmatprep.subr.bf16.mxu0 %v6043
        %6272 = vmatpush1.bf16.msra.mxu0 %v6042
        %6273 = vmatprep.subr.bf16.mxu0 %v6039
        %6274 = vmatpush1.bf16.msra.mxu0 %v6038
        %6275 = vmatprep.subr.bf16.mxu0 %v6035
        %6276 = vmatpush1.bf16.msra.mxu0 %v6034
        %6277 = vmatprep.subr.bf16.mxu0 %v6031
        %6278 = vmatpush1.bf16.msra.mxu0 %v6030
        %6279 = vmatprep.subr.bf16.mxu0 %v6091
        %6280 = vmatpush2.bf16.msra.mxu0 %v6090
        %6281 = vmatprep.subr.bf16.mxu0 %v6087
        %6282 = vmatpush2.bf16.msra.mxu0 %v6086
        %6283 = vmatprep.subr.bf16.mxu0 %v6083
        %6284 = vmatpush2.bf16.msra.mxu0 %v6082
        %6285 = vmatprep.subr.bf16.mxu0 %v6079
        %6286 = vmatpush2.bf16.msra.mxu0 %v6078
        %6287 = vmatprep.subr.bf16.mxu0 %v6075
        %6288 = vmatpush2.bf16.msra.mxu0 %v6074
        %6289 = vmatprep.subr.bf16.mxu0 %v6071
        %6290 = vmatpush2.bf16.msra.mxu0 %v6070
        %6291 = vmatprep.subr.bf16.mxu0 %v6067
        %6292 = vmatpush2.bf16.msra.mxu0 %v6066
        %6293 = vmatprep.subr.bf16.mxu0 %v6063
        %6294 = vmatpush2.bf16.msra.mxu0 %v6062
        %6295 = vmatprep.mubr.bf16.mxu0 %v5449
        %6296 = vmatmul.mubr.bf16.gmra.mxu0 %v5448
        %v6297 = vpop.f32.mrf.mxu0
        %v6298 = vadd.f32 %v6257, %v6297
        %v6299 = vpop.f32.mrf.mxu0
        %v6300 = vadd.f32 %v6259, %v6299
        %v6301 = vpop.f32.mrf.mxu0
        %v6302 = vpop.f32.mrf.mxu0
        %6303 = vdwg.mxu0
        %6304 = vmatprep.subr.bf16.mxu0 %v5997
        %6305 = vmatpush1.bf16.msra.mxu0 %v5996
        %6306 = vmatprep.subr.bf16.mxu0 %v5993
        %6307 = vmatpush1.bf16.msra.mxu0 %v5992
        %6308 = vmatprep.subr.bf16.mxu0 %v5989
        %6309 = vmatpush1.bf16.msra.mxu0 %v5988
        %6310 = vmatprep.subr.bf16.mxu0 %v5985
        %6311 = vmatpush1.bf16.msra.mxu0 %v5984
        %6312 = vmatprep.subr.bf16.mxu0 %v5981
        %6313 = vmatpush1.bf16.msra.mxu0 %v5980
        %6314 = vmatprep.subr.bf16.mxu0 %v5977
        %6315 = vmatpush1.bf16.msra.mxu0 %v5976
        %6316 = vmatprep.subr.bf16.mxu0 %v5973
        %6317 = vmatpush1.bf16.msra.mxu0 %v5972
        %6318 = vmatprep.subr.bf16.mxu0 %v5969
        %6319 = vmatpush1.bf16.msra.mxu0 %v5968
        %6320 = vmatprep.subr.bf16.mxu0 %v6029
        %6321 = vmatpush2.bf16.msra.mxu0 %v6028
        %6322 = vmatprep.subr.bf16.mxu0 %v6025
        %6323 = vmatpush2.bf16.msra.mxu0 %v6024
        %6324 = vmatprep.subr.bf16.mxu0 %v6021
        %6325 = vmatpush2.bf16.msra.mxu0 %v6020
        %6326 = vmatprep.subr.bf16.mxu0 %v6017
        %6327 = vmatpush2.bf16.msra.mxu0 %v6016
        %6328 = vmatprep.subr.bf16.mxu0 %v6013
        %6329 = vmatpush2.bf16.msra.mxu0 %v6012
        %6330 = vmatprep.subr.bf16.mxu0 %v6009
        %6331 = vmatpush2.bf16.msra.mxu0 %v6008
        %6332 = vmatprep.subr.bf16.mxu0 %v6005
        %6333 = vmatpush2.bf16.msra.mxu0 %v6004
        %6334 = vmatprep.subr.bf16.mxu0 %v6001
        %6335 = vmatpush2.bf16.msra.mxu0 %v6000
        %6336 = vmatprep.mubr.bf16.mxu0 %v5447
        %6337 = vmatmul.mubr.bf16.gmra.mxu0 %v5446
        %v6338 = vpop.f32.mrf.mxu0
        %v6339 = vadd.f32 0.0, %v6338
        %v6340 = vpop.f32.mrf.mxu0
        %v6341 = vadd.f32 0.0, %v6340
        %v6342 = vpop.f32.mrf.mxu0
        %v6343 = vpop.f32.mrf.mxu0
        %6344 = vdwg.mxu0
        %6345 = vmatprep.subr.bf16.mxu0 %v6061
        %6346 = vmatpush1.bf16.msra.mxu0 %v6060
        %6347 = vmatprep.subr.bf16.mxu0 %v6057
        %6348 = vmatpush1.bf16.msra.mxu0 %v6056
        %6349 = vmatprep.subr.bf16.mxu0 %v6053
        %6350 = vmatpush1.bf16.msra.mxu0 %v6052
        %6351 = vmatprep.subr.bf16.mxu0 %v6049
        %6352 = vmatpush1.bf16.msra.mxu0 %v6048
        %6353 = vmatprep.subr.bf16.mxu0 %v6045
        %6354 = vmatpush1.bf16.msra.mxu0 %v6044
        %6355 = vmatprep.subr.bf16.mxu0 %v6041
        %6356 = vmatpush1.bf16.msra.mxu0 %v6040
        %6357 = vmatprep.subr.bf16.mxu0 %v6037
        %6358 = vmatpush1.bf16.msra.mxu0 %v6036
        %6359 = vmatprep.subr.bf16.mxu0 %v6033
        %6360 = vmatpush1.bf16.msra.mxu0 %v6032
        %6361 = vmatprep.subr.bf16.mxu0 %v6093
        %6362 = vmatpush2.bf16.msra.mxu0 %v6092
        %6363 = vmatprep.subr.bf16.mxu0 %v6089
        %6364 = vmatpush2.bf16.msra.mxu0 %v6088
        %6365 = vmatprep.subr.bf16.mxu0 %v6085
        %6366 = vmatpush2.bf16.msra.mxu0 %v6084
        %6367 = vmatprep.subr.bf16.mxu0 %v6081
        %6368 = vmatpush2.bf16.msra.mxu0 %v6080
        %6369 = vmatprep.subr.bf16.mxu0 %v6077
        %6370 = vmatpush2.bf16.msra.mxu0 %v6076
        %6371 = vmatprep.subr.bf16.mxu0 %v6073
        %6372 = vmatpush2.bf16.msra.mxu0 %v6072
        %6373 = vmatprep.subr.bf16.mxu0 %v6069
        %6374 = vmatpush2.bf16.msra.mxu0 %v6068
        %6375 = vmatprep.subr.bf16.mxu0 %v6065
        %6376 = vmatpush2.bf16.msra.mxu0 %v6064
        %6377 = vmatprep.mubr.bf16.mxu0 %v5449
        %6378 = vmatmul.mubr.bf16.gmra.mxu0 %v5448
        %v6379 = vpop.f32.mrf.mxu0
        %v6380 = vadd.f32 %v6339, %v6379
        %v6381 = vpop.f32.mrf.mxu0
        %v6382 = vadd.f32 %v6341, %v6381
        %v6383 = vpop.f32.mrf.mxu0
        %v6384 = vpop.f32.mrf.mxu0
        %6385 = vdwg.mxu0
        %v6386 = vld [vmem:[#allocation15] sm:$0xff]
        %v6387 = vld [vmem:[#allocation15 + $0x8] sm:$0xff]
        %v6388 = vld [vmem:[#allocation15 + $0x10] sm:$0xff]
        %v6389 = vld [vmem:[#allocation15 + $0x18] sm:$0xff]
        %v6390 = vld [vmem:[#allocation15 + $0x20] sm:$0xff]
        %v6391 = vld [vmem:[#allocation15 + $0x28] sm:$0xff]
        %v6392 = vld [vmem:[#allocation15 + $0x30] sm:$0xff]
        %v6393 = vld [vmem:[#allocation15 + $0x38] sm:$0xff]
        %v6394 = vld [vmem:[#allocation15 + $0x40] sm:$0xff]
        %v6395 = vld [vmem:[#allocation15 + $0x48] sm:$0xff]
        %v6396 = vld [vmem:[#allocation15 + $0x50] sm:$0xff]
        %v6397 = vld [vmem:[#allocation15 + $0x58] sm:$0xff]
        %v6398 = vld [vmem:[#allocation15 + $0x60] sm:$0xff]
        %v6399 = vld [vmem:[#allocation15 + $0x68] sm:$0xff]
        %v6400 = vld [vmem:[#allocation15 + $0x70] sm:$0xff]
        %v6401 = vld [vmem:[#allocation15 + $0x78] sm:$0xff]
        %v6402 = vld [vmem:[#allocation15 + $0x80] sm:$0xff]
        %v6403 = vld [vmem:[#allocation15 + $0x88] sm:$0xff]
        %v6404 = vld [vmem:[#allocation15 + $0x90] sm:$0xff]
        %v6405 = vld [vmem:[#allocation15 + $0x98] sm:$0xff]
        %v6406 = vld [vmem:[#allocation15 + $0xa0] sm:$0xff]
        %v6407 = vld [vmem:[#allocation15 + $0xa8] sm:$0xff]
        %v6408 = vld [vmem:[#allocation15 + $0xb0] sm:$0xff]
        %v6409 = vld [vmem:[#allocation15 + $0xb8] sm:$0xff]
        %v6410 = vld [vmem:[#allocation15 + $0xc0] sm:$0xff]
        %v6411 = vld [vmem:[#allocation15 + $0xc8] sm:$0xff]
        %v6412 = vld [vmem:[#allocation15 + $0xd0] sm:$0xff]
        %v6413 = vld [vmem:[#allocation15 + $0xd8] sm:$0xff]
        %v6414 = vld [vmem:[#allocation15 + $0xe0] sm:$0xff]
        %v6415 = vld [vmem:[#allocation15 + $0xe8] sm:$0xff]
        %v6416 = vld [vmem:[#allocation15 + $0xf0] sm:$0xff]
        %v6417 = vld [vmem:[#allocation15 + $0xf8] sm:$0xff]
        %v6418 = vld [vmem:[#allocation15 + $0x100] sm:$0xff]
        %v6419 = vld [vmem:[#allocation15 + $0x108] sm:$0xff]
        %v6420 = vld [vmem:[#allocation15 + $0x110] sm:$0xff]
        %v6421 = vld [vmem:[#allocation15 + $0x118] sm:$0xff]
        %v6422 = vld [vmem:[#allocation15 + $0x120] sm:$0xff]
        %v6423 = vld [vmem:[#allocation15 + $0x128] sm:$0xff]
        %v6424 = vld [vmem:[#allocation15 + $0x130] sm:$0xff]
        %v6425 = vld [vmem:[#allocation15 + $0x138] sm:$0xff]
        %v6426 = vld [vmem:[#allocation15 + $0x140] sm:$0xff]
        %v6427 = vld [vmem:[#allocation15 + $0x148] sm:$0xff]
        %v6428 = vld [vmem:[#allocation15 + $0x150] sm:$0xff]
        %v6429 = vld [vmem:[#allocation15 + $0x158] sm:$0xff]
        %v6430 = vld [vmem:[#allocation15 + $0x160] sm:$0xff]
        %v6431 = vld [vmem:[#allocation15 + $0x168] sm:$0xff]
        %v6432 = vld [vmem:[#allocation15 + $0x170] sm:$0xff]
        %v6433 = vld [vmem:[#allocation15 + $0x178] sm:$0xff]
        %v6434 = vld [vmem:[#allocation15 + $0x180] sm:$0xff]
        %v6435 = vld [vmem:[#allocation15 + $0x188] sm:$0xff]
        %v6436 = vld [vmem:[#allocation15 + $0x190] sm:$0xff]
        %v6437 = vld [vmem:[#allocation15 + $0x198] sm:$0xff]
        %v6438 = vld [vmem:[#allocation15 + $0x1a0] sm:$0xff]
        %v6439 = vld [vmem:[#allocation15 + $0x1a8] sm:$0xff]
        %v6440 = vld [vmem:[#allocation15 + $0x1b0] sm:$0xff]
        %v6441 = vld [vmem:[#allocation15 + $0x1b8] sm:$0xff]
        %v6442 = vld [vmem:[#allocation15 + $0x1c0] sm:$0xff]
        %v6443 = vld [vmem:[#allocation15 + $0x1c8] sm:$0xff]
        %v6444 = vld [vmem:[#allocation15 + $0x1d0] sm:$0xff]
        %v6445 = vld [vmem:[#allocation15 + $0x1d8] sm:$0xff]
        %v6446 = vld [vmem:[#allocation15 + $0x1e0] sm:$0xff]
        %v6447 = vld [vmem:[#allocation15 + $0x1e8] sm:$0xff]
        %v6448 = vld [vmem:[#allocation15 + $0x1f0] sm:$0xff]
        %v6449 = vld [vmem:[#allocation15 + $0x1f8] sm:$0xff]
        %v6450 = vld [vmem:[#allocation15 + $0x200] sm:$0xff]
        %v6451 = vld [vmem:[#allocation15 + $0x208] sm:$0xff]
        %v6452 = vld [vmem:[#allocation15 + $0x210] sm:$0xff]
        %v6453 = vld [vmem:[#allocation15 + $0x218] sm:$0xff]
        %v6454 = vld [vmem:[#allocation15 + $0x220] sm:$0xff]
        %v6455 = vld [vmem:[#allocation15 + $0x228] sm:$0xff]
        %v6456 = vld [vmem:[#allocation15 + $0x230] sm:$0xff]
        %v6457 = vld [vmem:[#allocation15 + $0x238] sm:$0xff]
        %v6458 = vld [vmem:[#allocation15 + $0x240] sm:$0xff]
        %v6459 = vld [vmem:[#allocation15 + $0x248] sm:$0xff]
        %v6460 = vld [vmem:[#allocation15 + $0x250] sm:$0xff]
        %v6461 = vld [vmem:[#allocation15 + $0x258] sm:$0xff]
        %v6462 = vld [vmem:[#allocation15 + $0x260] sm:$0xff]
        %v6463 = vld [vmem:[#allocation15 + $0x268] sm:$0xff]
        %v6464 = vld [vmem:[#allocation15 + $0x270] sm:$0xff]
        %v6465 = vld [vmem:[#allocation15 + $0x278] sm:$0xff]
        %v6466 = vld [vmem:[#allocation15 + $0x280] sm:$0xff]
        %v6467 = vld [vmem:[#allocation15 + $0x288] sm:$0xff]
        %v6468 = vld [vmem:[#allocation15 + $0x290] sm:$0xff]
        %v6469 = vld [vmem:[#allocation15 + $0x298] sm:$0xff]
        %v6470 = vld [vmem:[#allocation15 + $0x2a0] sm:$0xff]
        %v6471 = vld [vmem:[#allocation15 + $0x2a8] sm:$0xff]
        %v6472 = vld [vmem:[#allocation15 + $0x2b0] sm:$0xff]
        %v6473 = vld [vmem:[#allocation15 + $0x2b8] sm:$0xff]
        %v6474 = vld [vmem:[#allocation15 + $0x2c0] sm:$0xff]
        %v6475 = vld [vmem:[#allocation15 + $0x2c8] sm:$0xff]
        %v6476 = vld [vmem:[#allocation15 + $0x2d0] sm:$0xff]
        %v6477 = vld [vmem:[#allocation15 + $0x2d8] sm:$0xff]
        %v6478 = vld [vmem:[#allocation15 + $0x2e0] sm:$0xff]
        %v6479 = vld [vmem:[#allocation15 + $0x2e8] sm:$0xff]
        %v6480 = vld [vmem:[#allocation15 + $0x2f0] sm:$0xff]
        %v6481 = vld [vmem:[#allocation15 + $0x2f8] sm:$0xff]
        %v6482 = vld [vmem:[#allocation15 + $0x300] sm:$0xff]
        %v6483 = vld [vmem:[#allocation15 + $0x308] sm:$0xff]
        %v6484 = vld [vmem:[#allocation15 + $0x310] sm:$0xff]
        %v6485 = vld [vmem:[#allocation15 + $0x318] sm:$0xff]
        %v6486 = vld [vmem:[#allocation15 + $0x320] sm:$0xff]
        %v6487 = vld [vmem:[#allocation15 + $0x328] sm:$0xff]
        %v6488 = vld [vmem:[#allocation15 + $0x330] sm:$0xff]
        %v6489 = vld [vmem:[#allocation15 + $0x338] sm:$0xff]
        %v6490 = vld [vmem:[#allocation15 + $0x340] sm:$0xff]
        %v6491 = vld [vmem:[#allocation15 + $0x348] sm:$0xff]
        %v6492 = vld [vmem:[#allocation15 + $0x350] sm:$0xff]
        %v6493 = vld [vmem:[#allocation15 + $0x358] sm:$0xff]
        %v6494 = vld [vmem:[#allocation15 + $0x360] sm:$0xff]
        %v6495 = vld [vmem:[#allocation15 + $0x368] sm:$0xff]
        %v6496 = vld [vmem:[#allocation15 + $0x370] sm:$0xff]
        %v6497 = vld [vmem:[#allocation15 + $0x378] sm:$0xff]
        %v6498 = vld [vmem:[#allocation15 + $0x380] sm:$0xff]
        %v6499 = vld [vmem:[#allocation15 + $0x388] sm:$0xff]
        %v6500 = vld [vmem:[#allocation15 + $0x390] sm:$0xff]
        %v6501 = vld [vmem:[#allocation15 + $0x398] sm:$0xff]
        %v6502 = vld [vmem:[#allocation15 + $0x3a0] sm:$0xff]
        %v6503 = vld [vmem:[#allocation15 + $0x3a8] sm:$0xff]
        %v6504 = vld [vmem:[#allocation15 + $0x3b0] sm:$0xff]
        %v6505 = vld [vmem:[#allocation15 + $0x3b8] sm:$0xff]
        %v6506 = vld [vmem:[#allocation15 + $0x3c0] sm:$0xff]
        %v6507 = vld [vmem:[#allocation15 + $0x3c8] sm:$0xff]
        %v6508 = vld [vmem:[#allocation15 + $0x3d0] sm:$0xff]
        %v6509 = vld [vmem:[#allocation15 + $0x3d8] sm:$0xff]
        %v6510 = vld [vmem:[#allocation15 + $0x3e0] sm:$0xff]
        %v6511 = vld [vmem:[#allocation15 + $0x3e8] sm:$0xff]
        %v6512 = vld [vmem:[#allocation15 + $0x3f0] sm:$0xff]
        %v6513 = vld [vmem:[#allocation15 + $0x3f8] sm:$0xff]
        %v6642 = vunpack.c.l.b16 %v6386
        %v6643 = vunpack.c.h.b16 %v6386
        %v6644 = vunpack.c.l.b16 %v6387
        %v6645 = vunpack.c.h.b16 %v6387
        %v6646 = vunpack.c.l.b16 %v6388
        %v6647 = vunpack.c.h.b16 %v6388
        %v6648 = vunpack.c.l.b16 %v6389
        %v6649 = vunpack.c.h.b16 %v6389
        %v6650 = vunpack.c.l.b16 %v6390
        %v6651 = vunpack.c.h.b16 %v6390
        %v6652 = vunpack.c.l.b16 %v6391
        %v6653 = vunpack.c.h.b16 %v6391
        %v6654 = vunpack.c.l.b16 %v6392
        %v6655 = vunpack.c.h.b16 %v6392
        %v6656 = vunpack.c.l.b16 %v6393
        %v6657 = vunpack.c.h.b16 %v6393
        %v6658 = vunpack.c.l.b16 %v6394
        %v6659 = vunpack.c.h.b16 %v6394
        %v6660 = vunpack.c.l.b16 %v6395
        %v6661 = vunpack.c.h.b16 %v6395
        %v6662 = vunpack.c.l.b16 %v6396
        %v6663 = vunpack.c.h.b16 %v6396
        %v6664 = vunpack.c.l.b16 %v6397
        %v6665 = vunpack.c.h.b16 %v6397
        %v6666 = vunpack.c.l.b16 %v6398
        %v6667 = vunpack.c.h.b16 %v6398
        %v6668 = vunpack.c.l.b16 %v6399
        %v6669 = vunpack.c.h.b16 %v6399
        %v6670 = vunpack.c.l.b16 %v6400
        %v6671 = vunpack.c.h.b16 %v6400
        %v6672 = vunpack.c.l.b16 %v6401
        %v6673 = vunpack.c.h.b16 %v6401
        %v6674 = vunpack.c.l.b16 %v6402
        %v6675 = vunpack.c.h.b16 %v6402
        %v6676 = vunpack.c.l.b16 %v6403
        %v6677 = vunpack.c.h.b16 %v6403
        %v6678 = vunpack.c.l.b16 %v6404
        %v6679 = vunpack.c.h.b16 %v6404
        %v6680 = vunpack.c.l.b16 %v6405
        %v6681 = vunpack.c.h.b16 %v6405
        %v6682 = vunpack.c.l.b16 %v6406
        %v6683 = vunpack.c.h.b16 %v6406
        %v6684 = vunpack.c.l.b16 %v6407
        %v6685 = vunpack.c.h.b16 %v6407
        %v6686 = vunpack.c.l.b16 %v6408
        %v6687 = vunpack.c.h.b16 %v6408
        %v6688 = vunpack.c.l.b16 %v6409
        %v6689 = vunpack.c.h.b16 %v6409
        %v6690 = vunpack.c.l.b16 %v6410
        %v6691 = vunpack.c.h.b16 %v6410
        %v6692 = vunpack.c.l.b16 %v6411
        %v6693 = vunpack.c.h.b16 %v6411
        %v6694 = vunpack.c.l.b16 %v6412
        %v6695 = vunpack.c.h.b16 %v6412
        %v6696 = vunpack.c.l.b16 %v6413
        %v6697 = vunpack.c.h.b16 %v6413
        %v6698 = vunpack.c.l.b16 %v6414
        %v6699 = vunpack.c.h.b16 %v6414
        %v6700 = vunpack.c.l.b16 %v6415
        %v6701 = vunpack.c.h.b16 %v6415
        %v6702 = vunpack.c.l.b16 %v6416
        %v6703 = vunpack.c.h.b16 %v6416
        %v6704 = vunpack.c.l.b16 %v6417
        %v6705 = vunpack.c.h.b16 %v6417
        %v6706 = vunpack.c.l.b16 %v6418
        %v6707 = vunpack.c.h.b16 %v6418
        %v6708 = vunpack.c.l.b16 %v6419
        %v6709 = vunpack.c.h.b16 %v6419
        %v6710 = vunpack.c.l.b16 %v6420
        %v6711 = vunpack.c.h.b16 %v6420
        %v6712 = vunpack.c.l.b16 %v6421
        %v6713 = vunpack.c.h.b16 %v6421
        %v6714 = vunpack.c.l.b16 %v6422
        %v6715 = vunpack.c.h.b16 %v6422
        %v6716 = vunpack.c.l.b16 %v6423
        %v6717 = vunpack.c.h.b16 %v6423
        %v6718 = vunpack.c.l.b16 %v6424
        %v6719 = vunpack.c.h.b16 %v6424
        %v6720 = vunpack.c.l.b16 %v6425
        %v6721 = vunpack.c.h.b16 %v6425
        %v6722 = vunpack.c.l.b16 %v6426
        %v6723 = vunpack.c.h.b16 %v6426
        %v6724 = vunpack.c.l.b16 %v6427
        %v6725 = vunpack.c.h.b16 %v6427
        %v6726 = vunpack.c.l.b16 %v6428
        %v6727 = vunpack.c.h.b16 %v6428
        %v6728 = vunpack.c.l.b16 %v6429
        %v6729 = vunpack.c.h.b16 %v6429
        %v6730 = vunpack.c.l.b16 %v6430
        %v6731 = vunpack.c.h.b16 %v6430
        %v6732 = vunpack.c.l.b16 %v6431
        %v6733 = vunpack.c.h.b16 %v6431
        %v6734 = vunpack.c.l.b16 %v6432
        %v6735 = vunpack.c.h.b16 %v6432
        %v6736 = vunpack.c.l.b16 %v6433
        %v6737 = vunpack.c.h.b16 %v6433
        %v6738 = vunpack.c.l.b16 %v6434
        %v6739 = vunpack.c.h.b16 %v6434
        %v6740 = vunpack.c.l.b16 %v6435
        %v6741 = vunpack.c.h.b16 %v6435
        %v6742 = vunpack.c.l.b16 %v6436
        %v6743 = vunpack.c.h.b16 %v6436
        %v6744 = vunpack.c.l.b16 %v6437
        %v6745 = vunpack.c.h.b16 %v6437
        %v6746 = vunpack.c.l.b16 %v6438
        %v6747 = vunpack.c.h.b16 %v6438
        %v6748 = vunpack.c.l.b16 %v6439
        %v6749 = vunpack.c.h.b16 %v6439
        %v6750 = vunpack.c.l.b16 %v6440
        %v6751 = vunpack.c.h.b16 %v6440
        %v6752 = vunpack.c.l.b16 %v6441
        %v6753 = vunpack.c.h.b16 %v6441
        %v6754 = vunpack.c.l.b16 %v6442
        %v6755 = vunpack.c.h.b16 %v6442
        %v6756 = vunpack.c.l.b16 %v6443
        %v6757 = vunpack.c.h.b16 %v6443
        %v6758 = vunpack.c.l.b16 %v6444
        %v6759 = vunpack.c.h.b16 %v6444
        %v6760 = vunpack.c.l.b16 %v6445
        %v6761 = vunpack.c.h.b16 %v6445
        %v6762 = vunpack.c.l.b16 %v6446
        %v6763 = vunpack.c.h.b16 %v6446
        %v6764 = vunpack.c.l.b16 %v6447
        %v6765 = vunpack.c.h.b16 %v6447
        %v6766 = vunpack.c.l.b16 %v6448
        %v6767 = vunpack.c.h.b16 %v6448
        %v6768 = vunpack.c.l.b16 %v6449
        %v6769 = vunpack.c.h.b16 %v6449
        %v6770 = vunpack.c.l.b16 %v6450
        %v6771 = vunpack.c.h.b16 %v6450
        %v6772 = vunpack.c.l.b16 %v6451
        %v6773 = vunpack.c.h.b16 %v6451
        %v6774 = vunpack.c.l.b16 %v6452
        %v6775 = vunpack.c.h.b16 %v6452
        %v6776 = vunpack.c.l.b16 %v6453
        %v6777 = vunpack.c.h.b16 %v6453
        %v6778 = vunpack.c.l.b16 %v6454
        %v6779 = vunpack.c.h.b16 %v6454
        %v6780 = vunpack.c.l.b16 %v6455
        %v6781 = vunpack.c.h.b16 %v6455
        %v6782 = vunpack.c.l.b16 %v6456
        %v6783 = vunpack.c.h.b16 %v6456
        %v6784 = vunpack.c.l.b16 %v6457
        %v6785 = vunpack.c.h.b16 %v6457
        %v6786 = vunpack.c.l.b16 %v6458
        %v6787 = vunpack.c.h.b16 %v6458
        %v6788 = vunpack.c.l.b16 %v6459
        %v6789 = vunpack.c.h.b16 %v6459
        %v6790 = vunpack.c.l.b16 %v6460
        %v6791 = vunpack.c.h.b16 %v6460
        %v6792 = vunpack.c.l.b16 %v6461
        %v6793 = vunpack.c.h.b16 %v6461
        %v6794 = vunpack.c.l.b16 %v6462
        %v6795 = vunpack.c.h.b16 %v6462
        %v6796 = vunpack.c.l.b16 %v6463
        %v6797 = vunpack.c.h.b16 %v6463
        %v6798 = vunpack.c.l.b16 %v6464
        %v6799 = vunpack.c.h.b16 %v6464
        %v6800 = vunpack.c.l.b16 %v6465
        %v6801 = vunpack.c.h.b16 %v6465
        %v6802 = vunpack.c.l.b16 %v6466
        %v6803 = vunpack.c.h.b16 %v6466
        %v6804 = vunpack.c.l.b16 %v6467
        %v6805 = vunpack.c.h.b16 %v6467
        %v6806 = vunpack.c.l.b16 %v6468
        %v6807 = vunpack.c.h.b16 %v6468
        %v6808 = vunpack.c.l.b16 %v6469
        %v6809 = vunpack.c.h.b16 %v6469
        %v6810 = vunpack.c.l.b16 %v6470
        %v6811 = vunpack.c.h.b16 %v6470
        %v6812 = vunpack.c.l.b16 %v6471
        %v6813 = vunpack.c.h.b16 %v6471
        %v6814 = vunpack.c.l.b16 %v6472
        %v6815 = vunpack.c.h.b16 %v6472
        %v6816 = vunpack.c.l.b16 %v6473
        %v6817 = vunpack.c.h.b16 %v6473
        %v6818 = vunpack.c.l.b16 %v6474
        %v6819 = vunpack.c.h.b16 %v6474
        %v6820 = vunpack.c.l.b16 %v6475
        %v6821 = vunpack.c.h.b16 %v6475
        %v6822 = vunpack.c.l.b16 %v6476
        %v6823 = vunpack.c.h.b16 %v6476
        %v6824 = vunpack.c.l.b16 %v6477
        %v6825 = vunpack.c.h.b16 %v6477
        %v6826 = vunpack.c.l.b16 %v6478
        %v6827 = vunpack.c.h.b16 %v6478
        %v6828 = vunpack.c.l.b16 %v6479
        %v6829 = vunpack.c.h.b16 %v6479
        %v6830 = vunpack.c.l.b16 %v6480
        %v6831 = vunpack.c.h.b16 %v6480
        %v6832 = vunpack.c.l.b16 %v6481
        %v6833 = vunpack.c.h.b16 %v6481
        %v6834 = vunpack.c.l.b16 %v6482
        %v6835 = vunpack.c.h.b16 %v6482
        %v6836 = vunpack.c.l.b16 %v6483
        %v6837 = vunpack.c.h.b16 %v6483
        %v6838 = vunpack.c.l.b16 %v6484
        %v6839 = vunpack.c.h.b16 %v6484
        %v6840 = vunpack.c.l.b16 %v6485
        %v6841 = vunpack.c.h.b16 %v6485
        %v6842 = vunpack.c.l.b16 %v6486
        %v6843 = vunpack.c.h.b16 %v6486
        %v6844 = vunpack.c.l.b16 %v6487
        %v6845 = vunpack.c.h.b16 %v6487
        %v6846 = vunpack.c.l.b16 %v6488
        %v6847 = vunpack.c.h.b16 %v6488
        %v6848 = vunpack.c.l.b16 %v6489
        %v6849 = vunpack.c.h.b16 %v6489
        %v6850 = vunpack.c.l.b16 %v6490
        %v6851 = vunpack.c.h.b16 %v6490
        %v6852 = vunpack.c.l.b16 %v6491
        %v6853 = vunpack.c.h.b16 %v6491
        %v6854 = vunpack.c.l.b16 %v6492
        %v6855 = vunpack.c.h.b16 %v6492
        %v6856 = vunpack.c.l.b16 %v6493
        %v6857 = vunpack.c.h.b16 %v6493
        %v6858 = vunpack.c.l.b16 %v6494
        %v6859 = vunpack.c.h.b16 %v6494
        %v6860 = vunpack.c.l.b16 %v6495
        %v6861 = vunpack.c.h.b16 %v6495
        %v6862 = vunpack.c.l.b16 %v6496
        %v6863 = vunpack.c.h.b16 %v6496
        %v6864 = vunpack.c.l.b16 %v6497
        %v6865 = vunpack.c.h.b16 %v6497
        %v6866 = vunpack.c.l.b16 %v6498
        %v6867 = vunpack.c.h.b16 %v6498
        %v6868 = vunpack.c.l.b16 %v6499
        %v6869 = vunpack.c.h.b16 %v6499
        %v6870 = vunpack.c.l.b16 %v6500
        %v6871 = vunpack.c.h.b16 %v6500
        %v6872 = vunpack.c.l.b16 %v6501
        %v6873 = vunpack.c.h.b16 %v6501
        %v6874 = vunpack.c.l.b16 %v6502
        %v6875 = vunpack.c.h.b16 %v6502
        %v6876 = vunpack.c.l.b16 %v6503
        %v6877 = vunpack.c.h.b16 %v6503
        %v6878 = vunpack.c.l.b16 %v6504
        %v6879 = vunpack.c.h.b16 %v6504
        %v6880 = vunpack.c.l.b16 %v6505
        %v6881 = vunpack.c.h.b16 %v6505
        %v6882 = vunpack.c.l.b16 %v6506
        %v6883 = vunpack.c.h.b16 %v6506
        %v6884 = vunpack.c.l.b16 %v6507
        %v6885 = vunpack.c.h.b16 %v6507
        %v6886 = vunpack.c.l.b16 %v6508
        %v6887 = vunpack.c.h.b16 %v6508
        %v6888 = vunpack.c.l.b16 %v6509
        %v6889 = vunpack.c.h.b16 %v6509
        %v6890 = vunpack.c.l.b16 %v6510
        %v6891 = vunpack.c.h.b16 %v6510
        %v6892 = vunpack.c.l.b16 %v6511
        %v6893 = vunpack.c.h.b16 %v6511
        %v6894 = vunpack.c.l.b16 %v6512
        %v6895 = vunpack.c.h.b16 %v6512
        %v6896 = vunpack.c.l.b16 %v6513
        %v6897 = vunpack.c.h.b16 %v6513
        %v6898 = vpack.c.b16 %v6646, %v6642
        %v6899 = vpack.c.b16 %v6647, %v6643
        %v6900 = vpack.c.b16 %v6648, %v6644
        %v6901 = vpack.c.b16 %v6649, %v6645
        %v6902 = vpack.c.b16 %v6654, %v6650
        %v6903 = vpack.c.b16 %v6655, %v6651
        %v6904 = vpack.c.b16 %v6656, %v6652
        %v6905 = vpack.c.b16 %v6657, %v6653
        %v6906 = vpack.c.b16 %v6662, %v6658
        %v6907 = vpack.c.b16 %v6663, %v6659
        %v6908 = vpack.c.b16 %v6664, %v6660
        %v6909 = vpack.c.b16 %v6665, %v6661
        %v6910 = vpack.c.b16 %v6670, %v6666
        %v6911 = vpack.c.b16 %v6671, %v6667
        %v6912 = vpack.c.b16 %v6672, %v6668
        %v6913 = vpack.c.b16 %v6673, %v6669
        %v6914 = vpack.c.b16 %v6678, %v6674
        %v6915 = vpack.c.b16 %v6679, %v6675
        %v6916 = vpack.c.b16 %v6680, %v6676
        %v6917 = vpack.c.b16 %v6681, %v6677
        %v6918 = vpack.c.b16 %v6686, %v6682
        %v6919 = vpack.c.b16 %v6687, %v6683
        %v6920 = vpack.c.b16 %v6688, %v6684
        %v6921 = vpack.c.b16 %v6689, %v6685
        %v6922 = vpack.c.b16 %v6694, %v6690
        %v6923 = vpack.c.b16 %v6695, %v6691
        %v6924 = vpack.c.b16 %v6696, %v6692
        %v6925 = vpack.c.b16 %v6697, %v6693
        %v6926 = vpack.c.b16 %v6702, %v6698
        %v6927 = vpack.c.b16 %v6703, %v6699
        %v6928 = vpack.c.b16 %v6704, %v6700
        %v6929 = vpack.c.b16 %v6705, %v6701
        %v6930 = vpack.c.b16 %v6710, %v6706
        %v6931 = vpack.c.b16 %v6711, %v6707
        %v6932 = vpack.c.b16 %v6712, %v6708
        %v6933 = vpack.c.b16 %v6713, %v6709
        %v6934 = vpack.c.b16 %v6718, %v6714
        %v6935 = vpack.c.b16 %v6719, %v6715
        %v6936 = vpack.c.b16 %v6720, %v6716
        %v6937 = vpack.c.b16 %v6721, %v6717
        %v6938 = vpack.c.b16 %v6726, %v6722
        %v6939 = vpack.c.b16 %v6727, %v6723
        %v6940 = vpack.c.b16 %v6728, %v6724
        %v6941 = vpack.c.b16 %v6729, %v6725
        %v6942 = vpack.c.b16 %v6734, %v6730
        %v6943 = vpack.c.b16 %v6735, %v6731
        %v6944 = vpack.c.b16 %v6736, %v6732
        %v6945 = vpack.c.b16 %v6737, %v6733
        %v6946 = vpack.c.b16 %v6742, %v6738
        %v6947 = vpack.c.b16 %v6743, %v6739
        %v6948 = vpack.c.b16 %v6744, %v6740
        %v6949 = vpack.c.b16 %v6745, %v6741
        %v6950 = vpack.c.b16 %v6750, %v6746
        %v6951 = vpack.c.b16 %v6751, %v6747
        %v6952 = vpack.c.b16 %v6752, %v6748
        %v6953 = vpack.c.b16 %v6753, %v6749
        %v6954 = vpack.c.b16 %v6758, %v6754
        %v6955 = vpack.c.b16 %v6759, %v6755
        %v6956 = vpack.c.b16 %v6760, %v6756
        %v6957 = vpack.c.b16 %v6761, %v6757
        %v6958 = vpack.c.b16 %v6766, %v6762
        %v6959 = vpack.c.b16 %v6767, %v6763
        %v6960 = vpack.c.b16 %v6768, %v6764
        %v6961 = vpack.c.b16 %v6769, %v6765
        %v6962 = vpack.c.b16 %v6774, %v6770
        %v6963 = vpack.c.b16 %v6775, %v6771
        %v6964 = vpack.c.b16 %v6776, %v6772
        %v6965 = vpack.c.b16 %v6777, %v6773
        %v6966 = vpack.c.b16 %v6782, %v6778
        %v6967 = vpack.c.b16 %v6783, %v6779
        %v6968 = vpack.c.b16 %v6784, %v6780
        %v6969 = vpack.c.b16 %v6785, %v6781
        %v6970 = vpack.c.b16 %v6790, %v6786
        %v6971 = vpack.c.b16 %v6791, %v6787
        %v6972 = vpack.c.b16 %v6792, %v6788
        %v6973 = vpack.c.b16 %v6793, %v6789
        %v6974 = vpack.c.b16 %v6798, %v6794
        %v6975 = vpack.c.b16 %v6799, %v6795
        %v6976 = vpack.c.b16 %v6800, %v6796
        %v6977 = vpack.c.b16 %v6801, %v6797
        %v6978 = vpack.c.b16 %v6806, %v6802
        %v6979 = vpack.c.b16 %v6807, %v6803
        %v6980 = vpack.c.b16 %v6808, %v6804
        %v6981 = vpack.c.b16 %v6809, %v6805
        %v6982 = vpack.c.b16 %v6814, %v6810
        %v6983 = vpack.c.b16 %v6815, %v6811
        %v6984 = vpack.c.b16 %v6816, %v6812
        %v6985 = vpack.c.b16 %v6817, %v6813
        %v6986 = vpack.c.b16 %v6822, %v6818
        %v6987 = vpack.c.b16 %v6823, %v6819
        %v6988 = vpack.c.b16 %v6824, %v6820
        %v6989 = vpack.c.b16 %v6825, %v6821
        %v6990 = vpack.c.b16 %v6830, %v6826
        %v6991 = vpack.c.b16 %v6831, %v6827
        %v6992 = vpack.c.b16 %v6832, %v6828
        %v6993 = vpack.c.b16 %v6833, %v6829
        %v6994 = vpack.c.b16 %v6838, %v6834
        %v6995 = vpack.c.b16 %v6839, %v6835
        %v6996 = vpack.c.b16 %v6840, %v6836
        %v6997 = vpack.c.b16 %v6841, %v6837
        %v6998 = vpack.c.b16 %v6846, %v6842
        %v6999 = vpack.c.b16 %v6847, %v6843
        %v7000 = vpack.c.b16 %v6848, %v6844
        %v7001 = vpack.c.b16 %v6849, %v6845
        %v7002 = vpack.c.b16 %v6854, %v6850
        %v7003 = vpack.c.b16 %v6855, %v6851
        %v7004 = vpack.c.b16 %v6856, %v6852
        %v7005 = vpack.c.b16 %v6857, %v6853
        %v7006 = vpack.c.b16 %v6862, %v6858
        %v7007 = vpack.c.b16 %v6863, %v6859
        %v7008 = vpack.c.b16 %v6864, %v6860
        %v7009 = vpack.c.b16 %v6865, %v6861
        %v7010 = vpack.c.b16 %v6870, %v6866
        %v7011 = vpack.c.b16 %v6871, %v6867
        %v7012 = vpack.c.b16 %v6872, %v6868
        %v7013 = vpack.c.b16 %v6873, %v6869
        %v7014 = vpack.c.b16 %v6878, %v6874
        %v7015 = vpack.c.b16 %v6879, %v6875
        %v7016 = vpack.c.b16 %v6880, %v6876
        %v7017 = vpack.c.b16 %v6881, %v6877
        %v7018 = vpack.c.b16 %v6886, %v6882
        %v7019 = vpack.c.b16 %v6887, %v6883
        %v7020 = vpack.c.b16 %v6888, %v6884
        %v7021 = vpack.c.b16 %v6889, %v6885
        %v7022 = vpack.c.b16 %v6894, %v6890
        %v7023 = vpack.c.b16 %v6895, %v6891
        %v7024 = vpack.c.b16 %v6896, %v6892
        %v7025 = vpack.c.b16 %v6897, %v6893
        %7154 = vmatprep.subr.bf16.mxu0 %v6927
        %7155 = vmatpush1.bf16.msra.mxu0 %v6926
        %7156 = vmatprep.subr.bf16.mxu0 %v6923
        %7157 = vmatpush1.bf16.msra.mxu0 %v6922
        %7158 = vmatprep.subr.bf16.mxu0 %v6919
        %7159 = vmatpush1.bf16.msra.mxu0 %v6918
        %7160 = vmatprep.subr.bf16.mxu0 %v6915
        %7161 = vmatpush1.bf16.msra.mxu0 %v6914
        %7162 = vmatprep.subr.bf16.mxu0 %v6911
        %7163 = vmatpush1.bf16.msra.mxu0 %v6910
        %7164 = vmatprep.subr.bf16.mxu0 %v6907
        %7165 = vmatpush1.bf16.msra.mxu0 %v6906
        %7166 = vmatprep.subr.bf16.mxu0 %v6903
        %7167 = vmatpush1.bf16.msra.mxu0 %v6902
        %7168 = vmatprep.subr.bf16.mxu0 %v6899
        %7169 = vmatpush1.bf16.msra.mxu0 %v6898
        %7170 = vmatprep.subr.bf16.mxu0 %v6959
        %7171 = vmatpush2.bf16.msra.mxu0 %v6958
        %7172 = vmatprep.subr.bf16.mxu0 %v6955
        %7173 = vmatpush2.bf16.msra.mxu0 %v6954
        %7174 = vmatprep.subr.bf16.mxu0 %v6951
        %7175 = vmatpush2.bf16.msra.mxu0 %v6950
        %7176 = vmatprep.subr.bf16.mxu0 %v6947
        %7177 = vmatpush2.bf16.msra.mxu0 %v6946
        %7178 = vmatprep.subr.bf16.mxu0 %v6943
        %7179 = vmatpush2.bf16.msra.mxu0 %v6942
        %7180 = vmatprep.subr.bf16.mxu0 %v6939
        %7181 = vmatpush2.bf16.msra.mxu0 %v6938
        %7182 = vmatprep.subr.bf16.mxu0 %v6935
        %7183 = vmatpush2.bf16.msra.mxu0 %v6934
        %7184 = vmatprep.subr.bf16.mxu0 %v6931
        %7185 = vmatpush2.bf16.msra.mxu0 %v6930
        %7186 = vmatprep.mubr.bf16.mxu0 %v5451
        %7187 = vmatmul.mubr.bf16.gmra.mxu0 %v5450
        %v7188 = vpop.f32.mrf.mxu0
        %v7189 = vadd.f32 0.0, %v7188
        %v7190 = vpop.f32.mrf.mxu0
        %v7191 = vadd.f32 0.0, %v7190
        %v7192 = vpop.f32.mrf.mxu0
        %v7193 = vadd.f32 0.0, %v7192
        %v7194 = vpop.f32.mrf.mxu0
        %v7195 = vadd.f32 0.0, %v7194
        %7196 = vdwg.mxu0
        %7197 = vmatprep.subr.bf16.mxu0 %v6991
        %7198 = vmatpush1.bf16.msra.mxu0 %v6990
        %7199 = vmatprep.subr.bf16.mxu0 %v6987
        %7200 = vmatpush1.bf16.msra.mxu0 %v6986
        %7201 = vmatprep.subr.bf16.mxu0 %v6983
        %7202 = vmatpush1.bf16.msra.mxu0 %v6982
        %7203 = vmatprep.subr.bf16.mxu0 %v6979
        %7204 = vmatpush1.bf16.msra.mxu0 %v6978
        %7205 = vmatprep.subr.bf16.mxu0 %v6975
        %7206 = vmatpush1.bf16.msra.mxu0 %v6974
        %7207 = vmatprep.subr.bf16.mxu0 %v6971
        %7208 = vmatpush1.bf16.msra.mxu0 %v6970
        %7209 = vmatprep.subr.bf16.mxu0 %v6967
        %7210 = vmatpush1.bf16.msra.mxu0 %v6966
        %7211 = vmatprep.subr.bf16.mxu0 %v6963
        %7212 = vmatpush1.bf16.msra.mxu0 %v6962
        %7213 = vmatprep.subr.bf16.mxu0 %v7023
        %7214 = vmatpush2.bf16.msra.mxu0 %v7022
        %7215 = vmatprep.subr.bf16.mxu0 %v7019
        %7216 = vmatpush2.bf16.msra.mxu0 %v7018
        %7217 = vmatprep.subr.bf16.mxu0 %v7015
        %7218 = vmatpush2.bf16.msra.mxu0 %v7014
        %7219 = vmatprep.subr.bf16.mxu0 %v7011
        %7220 = vmatpush2.bf16.msra.mxu0 %v7010
        %7221 = vmatprep.subr.bf16.mxu0 %v7007
        %7222 = vmatpush2.bf16.msra.mxu0 %v7006
        %7223 = vmatprep.subr.bf16.mxu0 %v7003
        %7224 = vmatpush2.bf16.msra.mxu0 %v7002
        %7225 = vmatprep.subr.bf16.mxu0 %v6999
        %7226 = vmatpush2.bf16.msra.mxu0 %v6998
        %7227 = vmatprep.subr.bf16.mxu0 %v6995
        %7228 = vmatpush2.bf16.msra.mxu0 %v6994
        %7229 = vmatprep.mubr.bf16.mxu0 %v5453
        %7230 = vmatmul.mubr.bf16.gmra.mxu0 %v5452
        %v7231 = vpop.f32.mrf.mxu0
        %v7232 = vadd.f32 %v7189, %v7231
        %v7233 = vpop.f32.mrf.mxu0
        %v7234 = vadd.f32 %v7191, %v7233
        %v7235 = vpop.f32.mrf.mxu0
        %v7236 = vadd.f32 %v7193, %v7235
        %v7237 = vpop.f32.mrf.mxu0
        %v7238 = vadd.f32 %v7195, %v7237
        %7239 = vdwg.mxu0
        %7240 = vmatprep.subr.bf16.mxu0 %v6929
        %7241 = vmatpush1.bf16.msra.mxu0 %v6928
        %7242 = vmatprep.subr.bf16.mxu0 %v6925
        %7243 = vmatpush1.bf16.msra.mxu0 %v6924
        %7244 = vmatprep.subr.bf16.mxu0 %v6921
        %7245 = vmatpush1.bf16.msra.mxu0 %v6920
        %7246 = vmatprep.subr.bf16.mxu0 %v6917
        %7247 = vmatpush1.bf16.msra.mxu0 %v6916
        %7248 = vmatprep.subr.bf16.mxu0 %v6913
        %7249 = vmatpush1.bf16.msra.mxu0 %v6912
        %7250 = vmatprep.subr.bf16.mxu0 %v6909
        %7251 = vmatpush1.bf16.msra.mxu0 %v6908
        %7252 = vmatprep.subr.bf16.mxu0 %v6905
        %7253 = vmatpush1.bf16.msra.mxu0 %v6904
        %7254 = vmatprep.subr.bf16.mxu0 %v6901
        %7255 = vmatpush1.bf16.msra.mxu0 %v6900
        %7256 = vmatprep.subr.bf16.mxu0 %v6961
        %7257 = vmatpush2.bf16.msra.mxu0 %v6960
        %7258 = vmatprep.subr.bf16.mxu0 %v6957
        %7259 = vmatpush2.bf16.msra.mxu0 %v6956
        %7260 = vmatprep.subr.bf16.mxu0 %v6953
        %7261 = vmatpush2.bf16.msra.mxu0 %v6952
        %7262 = vmatprep.subr.bf16.mxu0 %v6949
        %7263 = vmatpush2.bf16.msra.mxu0 %v6948
        %7264 = vmatprep.subr.bf16.mxu0 %v6945
        %7265 = vmatpush2.bf16.msra.mxu0 %v6944
        %7266 = vmatprep.subr.bf16.mxu0 %v6941
        %7267 = vmatpush2.bf16.msra.mxu0 %v6940
        %7268 = vmatprep.subr.bf16.mxu0 %v6937
        %7269 = vmatpush2.bf16.msra.mxu0 %v6936
        %7270 = vmatprep.subr.bf16.mxu0 %v6933
        %7271 = vmatpush2.bf16.msra.mxu0 %v6932
        %7272 = vmatprep.mubr.bf16.mxu0 %v5451
        %7273 = vmatmul.mubr.bf16.gmra.mxu0 %v5450
        %v7274 = vpop.f32.mrf.mxu0
        %v7275 = vadd.f32 0.0, %v7274
        %v7276 = vpop.f32.mrf.mxu0
        %v7277 = vadd.f32 0.0, %v7276
        %v7278 = vpop.f32.mrf.mxu0
        %v7279 = vadd.f32 0.0, %v7278
        %v7280 = vpop.f32.mrf.mxu0
        %v7281 = vadd.f32 0.0, %v7280
        %7282 = vdwg.mxu0
        %7283 = vmatprep.subr.bf16.mxu0 %v6993
        %7284 = vmatpush1.bf16.msra.mxu0 %v6992
        %7285 = vmatprep.subr.bf16.mxu0 %v6989
        %7286 = vmatpush1.bf16.msra.mxu0 %v6988
        %7287 = vmatprep.subr.bf16.mxu0 %v6985
        %7288 = vmatpush1.bf16.msra.mxu0 %v6984
        %7289 = vmatprep.subr.bf16.mxu0 %v6981
        %7290 = vmatpush1.bf16.msra.mxu0 %v6980
        %7291 = vmatprep.subr.bf16.mxu0 %v6977
        %7292 = vmatpush1.bf16.msra.mxu0 %v6976
        %7293 = vmatprep.subr.bf16.mxu0 %v6973
        %7294 = vmatpush1.bf16.msra.mxu0 %v6972
        %7295 = vmatprep.subr.bf16.mxu0 %v6969
        %7296 = vmatpush1.bf16.msra.mxu0 %v6968
        %7297 = vmatprep.subr.bf16.mxu0 %v6965
        %7298 = vmatpush1.bf16.msra.mxu0 %v6964
        %7299 = vmatprep.subr.bf16.mxu0 %v7025
        %7300 = vmatpush2.bf16.msra.mxu0 %v7024
        %7301 = vmatprep.subr.bf16.mxu0 %v7021
        %7302 = vmatpush2.bf16.msra.mxu0 %v7020
        %7303 = vmatprep.subr.bf16.mxu0 %v7017
        %7304 = vmatpush2.bf16.msra.mxu0 %v7016
        %7305 = vmatprep.subr.bf16.mxu0 %v7013
        %7306 = vmatpush2.bf16.msra.mxu0 %v7012
        %7307 = vmatprep.subr.bf16.mxu0 %v7009
        %7308 = vmatpush2.bf16.msra.mxu0 %v7008
        %7309 = vmatprep.subr.bf16.mxu0 %v7005
        %7310 = vmatpush2.bf16.msra.mxu0 %v7004
        %7311 = vmatprep.subr.bf16.mxu0 %v7001
        %7312 = vmatpush2.bf16.msra.mxu0 %v7000
        %7313 = vmatprep.subr.bf16.mxu0 %v6997
        %7314 = vmatpush2.bf16.msra.mxu0 %v6996
        %7315 = vmatprep.mubr.bf16.mxu0 %v5453
        %7316 = vmatmul.mubr.bf16.gmra.mxu0 %v5452
        %v7317 = vpop.f32.mrf.mxu0
        %v7318 = vadd.f32 %v7275, %v7317
        %v7319 = vpop.f32.mrf.mxu0
        %v7320 = vadd.f32 %v7277, %v7319
        %v7321 = vpop.f32.mrf.mxu0
        %v7322 = vadd.f32 %v7279, %v7321
        %v7323 = vpop.f32.mrf.mxu0
        %v7324 = vadd.f32 %v7281, %v7323
        %7325 = vdwg.mxu0
        %v7326 = vld [vmem:[#allocation17] sm:$0xff]
        %v7327 = vld [vmem:[#allocation17 + $0x8] sm:$0xff]
        %v7328 = vld [vmem:[#allocation17 + $0x10] sm:$0xff]
        %v7329 = vld [vmem:[#allocation17 + $0x18] sm:$0xff]
        %v7330 = vld [vmem:[#allocation17 + $0x20] sm:$0xff]
        %v7331 = vld [vmem:[#allocation17 + $0x28] sm:$0xff]
        %v7332 = vld [vmem:[#allocation17 + $0x30] sm:$0xff]
        %v7333 = vld [vmem:[#allocation17 + $0x38] sm:$0xff]
        %v7334 = vld [vmem:[#allocation17 + $0x40] sm:$0xff]
        %v7335 = vld [vmem:[#allocation17 + $0x48] sm:$0xff]
        %v7336 = vld [vmem:[#allocation17 + $0x50] sm:$0xff]
        %v7337 = vld [vmem:[#allocation17 + $0x58] sm:$0xff]
        %v7338 = vld [vmem:[#allocation17 + $0x60] sm:$0xff]
        %v7339 = vld [vmem:[#allocation17 + $0x68] sm:$0xff]
        %v7340 = vld [vmem:[#allocation17 + $0x70] sm:$0xff]
        %v7341 = vld [vmem:[#allocation17 + $0x78] sm:$0xff]
        %v7342 = vld [vmem:[#allocation17 + $0x80] sm:$0xff]
        %v7343 = vld [vmem:[#allocation17 + $0x88] sm:$0xff]
        %v7344 = vld [vmem:[#allocation17 + $0x90] sm:$0xff]
        %v7345 = vld [vmem:[#allocation17 + $0x98] sm:$0xff]
        %v7346 = vld [vmem:[#allocation17 + $0xa0] sm:$0xff]
        %v7347 = vld [vmem:[#allocation17 + $0xa8] sm:$0xff]
        %v7348 = vld [vmem:[#allocation17 + $0xb0] sm:$0xff]
        %v7349 = vld [vmem:[#allocation17 + $0xb8] sm:$0xff]
        %v7350 = vld [vmem:[#allocation17 + $0xc0] sm:$0xff]
        %v7351 = vld [vmem:[#allocation17 + $0xc8] sm:$0xff]
        %v7352 = vld [vmem:[#allocation17 + $0xd0] sm:$0xff]
        %v7353 = vld [vmem:[#allocation17 + $0xd8] sm:$0xff]
        %v7354 = vld [vmem:[#allocation17 + $0xe0] sm:$0xff]
        %v7355 = vld [vmem:[#allocation17 + $0xe8] sm:$0xff]
        %v7356 = vld [vmem:[#allocation17 + $0xf0] sm:$0xff]
        %v7357 = vld [vmem:[#allocation17 + $0xf8] sm:$0xff]
        %v7358 = vld [vmem:[#allocation17 + $0x100] sm:$0xff]
        %v7359 = vld [vmem:[#allocation17 + $0x108] sm:$0xff]
        %v7360 = vld [vmem:[#allocation17 + $0x110] sm:$0xff]
        %v7361 = vld [vmem:[#allocation17 + $0x118] sm:$0xff]
        %v7362 = vld [vmem:[#allocation17 + $0x120] sm:$0xff]
        %v7363 = vld [vmem:[#allocation17 + $0x128] sm:$0xff]
        %v7364 = vld [vmem:[#allocation17 + $0x130] sm:$0xff]
        %v7365 = vld [vmem:[#allocation17 + $0x138] sm:$0xff]
        %v7366 = vld [vmem:[#allocation17 + $0x140] sm:$0xff]
        %v7367 = vld [vmem:[#allocation17 + $0x148] sm:$0xff]
        %v7368 = vld [vmem:[#allocation17 + $0x150] sm:$0xff]
        %v7369 = vld [vmem:[#allocation17 + $0x158] sm:$0xff]
        %v7370 = vld [vmem:[#allocation17 + $0x160] sm:$0xff]
        %v7371 = vld [vmem:[#allocation17 + $0x168] sm:$0xff]
        %v7372 = vld [vmem:[#allocation17 + $0x170] sm:$0xff]
        %v7373 = vld [vmem:[#allocation17 + $0x178] sm:$0xff]
        %v7374 = vld [vmem:[#allocation17 + $0x180] sm:$0xff]
        %v7375 = vld [vmem:[#allocation17 + $0x188] sm:$0xff]
        %v7376 = vld [vmem:[#allocation17 + $0x190] sm:$0xff]
        %v7377 = vld [vmem:[#allocation17 + $0x198] sm:$0xff]
        %v7378 = vld [vmem:[#allocation17 + $0x1a0] sm:$0xff]
        %v7379 = vld [vmem:[#allocation17 + $0x1a8] sm:$0xff]
        %v7380 = vld [vmem:[#allocation17 + $0x1b0] sm:$0xff]
        %v7381 = vld [vmem:[#allocation17 + $0x1b8] sm:$0xff]
        %v7382 = vld [vmem:[#allocation17 + $0x1c0] sm:$0xff]
        %v7383 = vld [vmem:[#allocation17 + $0x1c8] sm:$0xff]
        %v7384 = vld [vmem:[#allocation17 + $0x1d0] sm:$0xff]
        %v7385 = vld [vmem:[#allocation17 + $0x1d8] sm:$0xff]
        %v7386 = vld [vmem:[#allocation17 + $0x1e0] sm:$0xff]
        %v7387 = vld [vmem:[#allocation17 + $0x1e8] sm:$0xff]
        %v7388 = vld [vmem:[#allocation17 + $0x1f0] sm:$0xff]
        %v7389 = vld [vmem:[#allocation17 + $0x1f8] sm:$0xff]
        %v7390 = vld [vmem:[#allocation17 + $0x200] sm:$0xff]
        %v7391 = vld [vmem:[#allocation17 + $0x208] sm:$0xff]
        %v7392 = vld [vmem:[#allocation17 + $0x210] sm:$0xff]
        %v7393 = vld [vmem:[#allocation17 + $0x218] sm:$0xff]
        %v7394 = vld [vmem:[#allocation17 + $0x220] sm:$0xff]
        %v7395 = vld [vmem:[#allocation17 + $0x228] sm:$0xff]
        %v7396 = vld [vmem:[#allocation17 + $0x230] sm:$0xff]
        %v7397 = vld [vmem:[#allocation17 + $0x238] sm:$0xff]
        %v7398 = vld [vmem:[#allocation17 + $0x240] sm:$0xff]
        %v7399 = vld [vmem:[#allocation17 + $0x248] sm:$0xff]
        %v7400 = vld [vmem:[#allocation17 + $0x250] sm:$0xff]
        %v7401 = vld [vmem:[#allocation17 + $0x258] sm:$0xff]
        %v7402 = vld [vmem:[#allocation17 + $0x260] sm:$0xff]
        %v7403 = vld [vmem:[#allocation17 + $0x268] sm:$0xff]
        %v7404 = vld [vmem:[#allocation17 + $0x270] sm:$0xff]
        %v7405 = vld [vmem:[#allocation17 + $0x278] sm:$0xff]
        %v7406 = vld [vmem:[#allocation17 + $0x280] sm:$0xff]
        %v7407 = vld [vmem:[#allocation17 + $0x288] sm:$0xff]
        %v7408 = vld [vmem:[#allocation17 + $0x290] sm:$0xff]
        %v7409 = vld [vmem:[#allocation17 + $0x298] sm:$0xff]
        %v7410 = vld [vmem:[#allocation17 + $0x2a0] sm:$0xff]
        %v7411 = vld [vmem:[#allocation17 + $0x2a8] sm:$0xff]
        %v7412 = vld [vmem:[#allocation17 + $0x2b0] sm:$0xff]
        %v7413 = vld [vmem:[#allocation17 + $0x2b8] sm:$0xff]
        %v7414 = vld [vmem:[#allocation17 + $0x2c0] sm:$0xff]
        %v7415 = vld [vmem:[#allocation17 + $0x2c8] sm:$0xff]
        %v7416 = vld [vmem:[#allocation17 + $0x2d0] sm:$0xff]
        %v7417 = vld [vmem:[#allocation17 + $0x2d8] sm:$0xff]
        %v7418 = vld [vmem:[#allocation17 + $0x2e0] sm:$0xff]
        %v7419 = vld [vmem:[#allocation17 + $0x2e8] sm:$0xff]
        %v7420 = vld [vmem:[#allocation17 + $0x2f0] sm:$0xff]
        %v7421 = vld [vmem:[#allocation17 + $0x2f8] sm:$0xff]
        %v7422 = vld [vmem:[#allocation17 + $0x300] sm:$0xff]
        %v7423 = vld [vmem:[#allocation17 + $0x308] sm:$0xff]
        %v7424 = vld [vmem:[#allocation17 + $0x310] sm:$0xff]
        %v7425 = vld [vmem:[#allocation17 + $0x318] sm:$0xff]
        %v7426 = vld [vmem:[#allocation17 + $0x320] sm:$0xff]
        %v7427 = vld [vmem:[#allocation17 + $0x328] sm:$0xff]
        %v7428 = vld [vmem:[#allocation17 + $0x330] sm:$0xff]
        %v7429 = vld [vmem:[#allocation17 + $0x338] sm:$0xff]
        %v7430 = vld [vmem:[#allocation17 + $0x340] sm:$0xff]
        %v7431 = vld [vmem:[#allocation17 + $0x348] sm:$0xff]
        %v7432 = vld [vmem:[#allocation17 + $0x350] sm:$0xff]
        %v7433 = vld [vmem:[#allocation17 + $0x358] sm:$0xff]
        %v7434 = vld [vmem:[#allocation17 + $0x360] sm:$0xff]
        %v7435 = vld [vmem:[#allocation17 + $0x368] sm:$0xff]
        %v7436 = vld [vmem:[#allocation17 + $0x370] sm:$0xff]
        %v7437 = vld [vmem:[#allocation17 + $0x378] sm:$0xff]
        %v7438 = vld [vmem:[#allocation17 + $0x380] sm:$0xff]
        %v7439 = vld [vmem:[#allocation17 + $0x388] sm:$0xff]
        %v7440 = vld [vmem:[#allocation17 + $0x390] sm:$0xff]
        %v7441 = vld [vmem:[#allocation17 + $0x398] sm:$0xff]
        %v7442 = vld [vmem:[#allocation17 + $0x3a0] sm:$0xff]
        %v7443 = vld [vmem:[#allocation17 + $0x3a8] sm:$0xff]
        %v7444 = vld [vmem:[#allocation17 + $0x3b0] sm:$0xff]
        %v7445 = vld [vmem:[#allocation17 + $0x3b8] sm:$0xff]
        %v7446 = vld [vmem:[#allocation17 + $0x3c0] sm:$0xff]
        %v7447 = vld [vmem:[#allocation17 + $0x3c8] sm:$0xff]
        %v7448 = vld [vmem:[#allocation17 + $0x3d0] sm:$0xff]
        %v7449 = vld [vmem:[#allocation17 + $0x3d8] sm:$0xff]
        %v7450 = vld [vmem:[#allocation17 + $0x3e0] sm:$0xff]
        %v7451 = vld [vmem:[#allocation17 + $0x3e8] sm:$0xff]
        %v7452 = vld [vmem:[#allocation17 + $0x3f0] sm:$0xff]
        %v7453 = vld [vmem:[#allocation17 + $0x3f8] sm:$0xff]
        %v7582 = vunpack.c.l.b16 %v7326
        %v7583 = vunpack.c.h.b16 %v7326
        %v7584 = vunpack.c.l.b16 %v7327
        %v7585 = vunpack.c.h.b16 %v7327
        %v7586 = vunpack.c.l.b16 %v7328
        %v7587 = vunpack.c.h.b16 %v7328
        %v7588 = vunpack.c.l.b16 %v7329
        %v7589 = vunpack.c.h.b16 %v7329
        %v7590 = vunpack.c.l.b16 %v7330
        %v7591 = vunpack.c.h.b16 %v7330
        %v7592 = vunpack.c.l.b16 %v7331
        %v7593 = vunpack.c.h.b16 %v7331
        %v7594 = vunpack.c.l.b16 %v7332
        %v7595 = vunpack.c.h.b16 %v7332
        %v7596 = vunpack.c.l.b16 %v7333
        %v7597 = vunpack.c.h.b16 %v7333
        %v7598 = vunpack.c.l.b16 %v7334
        %v7599 = vunpack.c.h.b16 %v7334
        %v7600 = vunpack.c.l.b16 %v7335
        %v7601 = vunpack.c.h.b16 %v7335
        %v7602 = vunpack.c.l.b16 %v7336
        %v7603 = vunpack.c.h.b16 %v7336
        %v7604 = vunpack.c.l.b16 %v7337
        %v7605 = vunpack.c.h.b16 %v7337
        %v7606 = vunpack.c.l.b16 %v7338
        %v7607 = vunpack.c.h.b16 %v7338
        %v7608 = vunpack.c.l.b16 %v7339
        %v7609 = vunpack.c.h.b16 %v7339
        %v7610 = vunpack.c.l.b16 %v7340
        %v7611 = vunpack.c.h.b16 %v7340
        %v7612 = vunpack.c.l.b16 %v7341
        %v7613 = vunpack.c.h.b16 %v7341
        %v7614 = vunpack.c.l.b16 %v7342
        %v7615 = vunpack.c.h.b16 %v7342
        %v7616 = vunpack.c.l.b16 %v7343
        %v7617 = vunpack.c.h.b16 %v7343
        %v7618 = vunpack.c.l.b16 %v7344
        %v7619 = vunpack.c.h.b16 %v7344
        %v7620 = vunpack.c.l.b16 %v7345
        %v7621 = vunpack.c.h.b16 %v7345
        %v7622 = vunpack.c.l.b16 %v7346
        %v7623 = vunpack.c.h.b16 %v7346
        %v7624 = vunpack.c.l.b16 %v7347
        %v7625 = vunpack.c.h.b16 %v7347
        %v7626 = vunpack.c.l.b16 %v7348
        %v7627 = vunpack.c.h.b16 %v7348
        %v7628 = vunpack.c.l.b16 %v7349
        %v7629 = vunpack.c.h.b16 %v7349
        %v7630 = vunpack.c.l.b16 %v7350
        %v7631 = vunpack.c.h.b16 %v7350
        %v7632 = vunpack.c.l.b16 %v7351
        %v7633 = vunpack.c.h.b16 %v7351
        %v7634 = vunpack.c.l.b16 %v7352
        %v7635 = vunpack.c.h.b16 %v7352
        %v7636 = vunpack.c.l.b16 %v7353
        %v7637 = vunpack.c.h.b16 %v7353
        %v7638 = vunpack.c.l.b16 %v7354
        %v7639 = vunpack.c.h.b16 %v7354
        %v7640 = vunpack.c.l.b16 %v7355
        %v7641 = vunpack.c.h.b16 %v7355
        %v7642 = vunpack.c.l.b16 %v7356
        %v7643 = vunpack.c.h.b16 %v7356
        %v7644 = vunpack.c.l.b16 %v7357
        %v7645 = vunpack.c.h.b16 %v7357
        %v7646 = vunpack.c.l.b16 %v7358
        %v7647 = vunpack.c.h.b16 %v7358
        %v7648 = vunpack.c.l.b16 %v7359
        %v7649 = vunpack.c.h.b16 %v7359
        %v7650 = vunpack.c.l.b16 %v7360
        %v7651 = vunpack.c.h.b16 %v7360
        %v7652 = vunpack.c.l.b16 %v7361
        %v7653 = vunpack.c.h.b16 %v7361
        %v7654 = vunpack.c.l.b16 %v7362
        %v7655 = vunpack.c.h.b16 %v7362
        %v7656 = vunpack.c.l.b16 %v7363
        %v7657 = vunpack.c.h.b16 %v7363
        %v7658 = vunpack.c.l.b16 %v7364
        %v7659 = vunpack.c.h.b16 %v7364
        %v7660 = vunpack.c.l.b16 %v7365
        %v7661 = vunpack.c.h.b16 %v7365
        %v7662 = vunpack.c.l.b16 %v7366
        %v7663 = vunpack.c.h.b16 %v7366
        %v7664 = vunpack.c.l.b16 %v7367
        %v7665 = vunpack.c.h.b16 %v7367
        %v7666 = vunpack.c.l.b16 %v7368
        %v7667 = vunpack.c.h.b16 %v7368
        %v7668 = vunpack.c.l.b16 %v7369
        %v7669 = vunpack.c.h.b16 %v7369
        %v7670 = vunpack.c.l.b16 %v7370
        %v7671 = vunpack.c.h.b16 %v7370
        %v7672 = vunpack.c.l.b16 %v7371
        %v7673 = vunpack.c.h.b16 %v7371
        %v7674 = vunpack.c.l.b16 %v7372
        %v7675 = vunpack.c.h.b16 %v7372
        %v7676 = vunpack.c.l.b16 %v7373
        %v7677 = vunpack.c.h.b16 %v7373
        %v7678 = vunpack.c.l.b16 %v7374
        %v7679 = vunpack.c.h.b16 %v7374
        %v7680 = vunpack.c.l.b16 %v7375
        %v7681 = vunpack.c.h.b16 %v7375
        %v7682 = vunpack.c.l.b16 %v7376
        %v7683 = vunpack.c.h.b16 %v7376
        %v7684 = vunpack.c.l.b16 %v7377
        %v7685 = vunpack.c.h.b16 %v7377
        %v7686 = vunpack.c.l.b16 %v7378
        %v7687 = vunpack.c.h.b16 %v7378
        %v7688 = vunpack.c.l.b16 %v7379
        %v7689 = vunpack.c.h.b16 %v7379
        %v7690 = vunpack.c.l.b16 %v7380
        %v7691 = vunpack.c.h.b16 %v7380
        %v7692 = vunpack.c.l.b16 %v7381
        %v7693 = vunpack.c.h.b16 %v7381
        %v7694 = vunpack.c.l.b16 %v7382
        %v7695 = vunpack.c.h.b16 %v7382
        %v7696 = vunpack.c.l.b16 %v7383
        %v7697 = vunpack.c.h.b16 %v7383
        %v7698 = vunpack.c.l.b16 %v7384
        %v7699 = vunpack.c.h.b16 %v7384
        %v7700 = vunpack.c.l.b16 %v7385
        %v7701 = vunpack.c.h.b16 %v7385
        %v7702 = vunpack.c.l.b16 %v7386
        %v7703 = vunpack.c.h.b16 %v7386
        %v7704 = vunpack.c.l.b16 %v7387
        %v7705 = vunpack.c.h.b16 %v7387
        %v7706 = vunpack.c.l.b16 %v7388
        %v7707 = vunpack.c.h.b16 %v7388
        %v7708 = vunpack.c.l.b16 %v7389
        %v7709 = vunpack.c.h.b16 %v7389
        %v7710 = vunpack.c.l.b16 %v7390
        %v7711 = vunpack.c.h.b16 %v7390
        %v7712 = vunpack.c.l.b16 %v7391
        %v7713 = vunpack.c.h.b16 %v7391
        %v7714 = vunpack.c.l.b16 %v7392
        %v7715 = vunpack.c.h.b16 %v7392
        %v7716 = vunpack.c.l.b16 %v7393
        %v7717 = vunpack.c.h.b16 %v7393
        %v7718 = vunpack.c.l.b16 %v7394
        %v7719 = vunpack.c.h.b16 %v7394
        %v7720 = vunpack.c.l.b16 %v7395
        %v7721 = vunpack.c.h.b16 %v7395
        %v7722 = vunpack.c.l.b16 %v7396
        %v7723 = vunpack.c.h.b16 %v7396
        %v7724 = vunpack.c.l.b16 %v7397
        %v7725 = vunpack.c.h.b16 %v7397
        %v7726 = vunpack.c.l.b16 %v7398
        %v7727 = vunpack.c.h.b16 %v7398
        %v7728 = vunpack.c.l.b16 %v7399
        %v7729 = vunpack.c.h.b16 %v7399
        %v7730 = vunpack.c.l.b16 %v7400
        %v7731 = vunpack.c.h.b16 %v7400
        %v7732 = vunpack.c.l.b16 %v7401
        %v7733 = vunpack.c.h.b16 %v7401
        %v7734 = vunpack.c.l.b16 %v7402
        %v7735 = vunpack.c.h.b16 %v7402
        %v7736 = vunpack.c.l.b16 %v7403
        %v7737 = vunpack.c.h.b16 %v7403
        %v7738 = vunpack.c.l.b16 %v7404
        %v7739 = vunpack.c.h.b16 %v7404
        %v7740 = vunpack.c.l.b16 %v7405
        %v7741 = vunpack.c.h.b16 %v7405
        %v7742 = vunpack.c.l.b16 %v7406
        %v7743 = vunpack.c.h.b16 %v7406
        %v7744 = vunpack.c.l.b16 %v7407
        %v7745 = vunpack.c.h.b16 %v7407
        %v7746 = vunpack.c.l.b16 %v7408
        %v7747 = vunpack.c.h.b16 %v7408
        %v7748 = vunpack.c.l.b16 %v7409
        %v7749 = vunpack.c.h.b16 %v7409
        %v7750 = vunpack.c.l.b16 %v7410
        %v7751 = vunpack.c.h.b16 %v7410
        %v7752 = vunpack.c.l.b16 %v7411
        %v7753 = vunpack.c.h.b16 %v7411
        %v7754 = vunpack.c.l.b16 %v7412
        %v7755 = vunpack.c.h.b16 %v7412
        %v7756 = vunpack.c.l.b16 %v7413
        %v7757 = vunpack.c.h.b16 %v7413
        %v7758 = vunpack.c.l.b16 %v7414
        %v7759 = vunpack.c.h.b16 %v7414
        %v7760 = vunpack.c.l.b16 %v7415
        %v7761 = vunpack.c.h.b16 %v7415
        %v7762 = vunpack.c.l.b16 %v7416
        %v7763 = vunpack.c.h.b16 %v7416
        %v7764 = vunpack.c.l.b16 %v7417
        %v7765 = vunpack.c.h.b16 %v7417
        %v7766 = vunpack.c.l.b16 %v7418
        %v7767 = vunpack.c.h.b16 %v7418
        %v7768 = vunpack.c.l.b16 %v7419
        %v7769 = vunpack.c.h.b16 %v7419
        %v7770 = vunpack.c.l.b16 %v7420
        %v7771 = vunpack.c.h.b16 %v7420
        %v7772 = vunpack.c.l.b16 %v7421
        %v7773 = vunpack.c.h.b16 %v7421
        %v7774 = vunpack.c.l.b16 %v7422
        %v7775 = vunpack.c.h.b16 %v7422
        %v7776 = vunpack.c.l.b16 %v7423
        %v7777 = vunpack.c.h.b16 %v7423
        %v7778 = vunpack.c.l.b16 %v7424
        %v7779 = vunpack.c.h.b16 %v7424
        %v7780 = vunpack.c.l.b16 %v7425
        %v7781 = vunpack.c.h.b16 %v7425
        %v7782 = vunpack.c.l.b16 %v7426
        %v7783 = vunpack.c.h.b16 %v7426
        %v7784 = vunpack.c.l.b16 %v7427
        %v7785 = vunpack.c.h.b16 %v7427
        %v7786 = vunpack.c.l.b16 %v7428
        %v7787 = vunpack.c.h.b16 %v7428
        %v7788 = vunpack.c.l.b16 %v7429
        %v7789 = vunpack.c.h.b16 %v7429
        %v7790 = vunpack.c.l.b16 %v7430
        %v7791 = vunpack.c.h.b16 %v7430
        %v7792 = vunpack.c.l.b16 %v7431
        %v7793 = vunpack.c.h.b16 %v7431
        %v7794 = vunpack.c.l.b16 %v7432
        %v7795 = vunpack.c.h.b16 %v7432
        %v7796 = vunpack.c.l.b16 %v7433
        %v7797 = vunpack.c.h.b16 %v7433
        %v7798 = vunpack.c.l.b16 %v7434
        %v7799 = vunpack.c.h.b16 %v7434
        %v7800 = vunpack.c.l.b16 %v7435
        %v7801 = vunpack.c.h.b16 %v7435
        %v7802 = vunpack.c.l.b16 %v7436
        %v7803 = vunpack.c.h.b16 %v7436
        %v7804 = vunpack.c.l.b16 %v7437
        %v7805 = vunpack.c.h.b16 %v7437
        %v7806 = vunpack.c.l.b16 %v7438
        %v7807 = vunpack.c.h.b16 %v7438
        %v7808 = vunpack.c.l.b16 %v7439
        %v7809 = vunpack.c.h.b16 %v7439
        %v7810 = vunpack.c.l.b16 %v7440
        %v7811 = vunpack.c.h.b16 %v7440
        %v7812 = vunpack.c.l.b16 %v7441
        %v7813 = vunpack.c.h.b16 %v7441
        %v7814 = vunpack.c.l.b16 %v7442
        %v7815 = vunpack.c.h.b16 %v7442
        %v7816 = vunpack.c.l.b16 %v7443
        %v7817 = vunpack.c.h.b16 %v7443
        %v7818 = vunpack.c.l.b16 %v7444
        %v7819 = vunpack.c.h.b16 %v7444
        %v7820 = vunpack.c.l.b16 %v7445
        %v7821 = vunpack.c.h.b16 %v7445
        %v7822 = vunpack.c.l.b16 %v7446
        %v7823 = vunpack.c.h.b16 %v7446
        %v7824 = vunpack.c.l.b16 %v7447
        %v7825 = vunpack.c.h.b16 %v7447
        %v7826 = vunpack.c.l.b16 %v7448
        %v7827 = vunpack.c.h.b16 %v7448
        %v7828 = vunpack.c.l.b16 %v7449
        %v7829 = vunpack.c.h.b16 %v7449
        %v7830 = vunpack.c.l.b16 %v7450
        %v7831 = vunpack.c.h.b16 %v7450
        %v7832 = vunpack.c.l.b16 %v7451
        %v7833 = vunpack.c.h.b16 %v7451
        %v7834 = vunpack.c.l.b16 %v7452
        %v7835 = vunpack.c.h.b16 %v7452
        %v7836 = vunpack.c.l.b16 %v7453
        %v7837 = vunpack.c.h.b16 %v7453
        %v7838 = vpack.c.b16 %v7586, %v7582
        %v7839 = vpack.c.b16 %v7587, %v7583
        %v7840 = vpack.c.b16 %v7588, %v7584
        %v7841 = vpack.c.b16 %v7589, %v7585
        %v7842 = vpack.c.b16 %v7594, %v7590
        %v7843 = vpack.c.b16 %v7595, %v7591
        %v7844 = vpack.c.b16 %v7596, %v7592
        %v7845 = vpack.c.b16 %v7597, %v7593
        %v7846 = vpack.c.b16 %v7602, %v7598
        %v7847 = vpack.c.b16 %v7603, %v7599
        %v7848 = vpack.c.b16 %v7604, %v7600
        %v7849 = vpack.c.b16 %v7605, %v7601
        %v7850 = vpack.c.b16 %v7610, %v7606
        %v7851 = vpack.c.b16 %v7611, %v7607
        %v7852 = vpack.c.b16 %v7612, %v7608
        %v7853 = vpack.c.b16 %v7613, %v7609
        %v7854 = vpack.c.b16 %v7618, %v7614
        %v7855 = vpack.c.b16 %v7619, %v7615
        %v7856 = vpack.c.b16 %v7620, %v7616
        %v7857 = vpack.c.b16 %v7621, %v7617
        %v7858 = vpack.c.b16 %v7626, %v7622
        %v7859 = vpack.c.b16 %v7627, %v7623
        %v7860 = vpack.c.b16 %v7628, %v7624
        %v7861 = vpack.c.b16 %v7629, %v7625
        %v7862 = vpack.c.b16 %v7634, %v7630
        %v7863 = vpack.c.b16 %v7635, %v7631
        %v7864 = vpack.c.b16 %v7636, %v7632
        %v7865 = vpack.c.b16 %v7637, %v7633
        %v7866 = vpack.c.b16 %v7642, %v7638
        %v7867 = vpack.c.b16 %v7643, %v7639
        %v7868 = vpack.c.b16 %v7644, %v7640
        %v7869 = vpack.c.b16 %v7645, %v7641
        %v7870 = vpack.c.b16 %v7650, %v7646
        %v7871 = vpack.c.b16 %v7651, %v7647
        %v7872 = vpack.c.b16 %v7652, %v7648
        %v7873 = vpack.c.b16 %v7653, %v7649
        %v7874 = vpack.c.b16 %v7658, %v7654
        %v7875 = vpack.c.b16 %v7659, %v7655
        %v7876 = vpack.c.b16 %v7660, %v7656
        %v7877 = vpack.c.b16 %v7661, %v7657
        %v7878 = vpack.c.b16 %v7666, %v7662
        %v7879 = vpack.c.b16 %v7667, %v7663
        %v7880 = vpack.c.b16 %v7668, %v7664
        %v7881 = vpack.c.b16 %v7669, %v7665
        %v7882 = vpack.c.b16 %v7674, %v7670
        %v7883 = vpack.c.b16 %v7675, %v7671
        %v7884 = vpack.c.b16 %v7676, %v7672
        %v7885 = vpack.c.b16 %v7677, %v7673
        %v7886 = vpack.c.b16 %v7682, %v7678
        %v7887 = vpack.c.b16 %v7683, %v7679
        %v7888 = vpack.c.b16 %v7684, %v7680
        %v7889 = vpack.c.b16 %v7685, %v7681
        %v7890 = vpack.c.b16 %v7690, %v7686
        %v7891 = vpack.c.b16 %v7691, %v7687
        %v7892 = vpack.c.b16 %v7692, %v7688
        %v7893 = vpack.c.b16 %v7693, %v7689
        %v7894 = vpack.c.b16 %v7698, %v7694
        %v7895 = vpack.c.b16 %v7699, %v7695
        %v7896 = vpack.c.b16 %v7700, %v7696
        %v7897 = vpack.c.b16 %v7701, %v7697
        %v7898 = vpack.c.b16 %v7706, %v7702
        %v7899 = vpack.c.b16 %v7707, %v7703
        %v7900 = vpack.c.b16 %v7708, %v7704
        %v7901 = vpack.c.b16 %v7709, %v7705
        %v7902 = vpack.c.b16 %v7714, %v7710
        %v7903 = vpack.c.b16 %v7715, %v7711
        %v7904 = vpack.c.b16 %v7716, %v7712
        %v7905 = vpack.c.b16 %v7717, %v7713
        %v7906 = vpack.c.b16 %v7722, %v7718
        %v7907 = vpack.c.b16 %v7723, %v7719
        %v7908 = vpack.c.b16 %v7724, %v7720
        %v7909 = vpack.c.b16 %v7725, %v7721
        %v7910 = vpack.c.b16 %v7730, %v7726
        %v7911 = vpack.c.b16 %v7731, %v7727
        %v7912 = vpack.c.b16 %v7732, %v7728
        %v7913 = vpack.c.b16 %v7733, %v7729
        %v7914 = vpack.c.b16 %v7738, %v7734
        %v7915 = vpack.c.b16 %v7739, %v7735
        %v7916 = vpack.c.b16 %v7740, %v7736
        %v7917 = vpack.c.b16 %v7741, %v7737
        %v7918 = vpack.c.b16 %v7746, %v7742
        %v7919 = vpack.c.b16 %v7747, %v7743
        %v7920 = vpack.c.b16 %v7748, %v7744
        %v7921 = vpack.c.b16 %v7749, %v7745
        %v7922 = vpack.c.b16 %v7754, %v7750
        %v7923 = vpack.c.b16 %v7755, %v7751
        %v7924 = vpack.c.b16 %v7756, %v7752
        %v7925 = vpack.c.b16 %v7757, %v7753
        %v7926 = vpack.c.b16 %v7762, %v7758
        %v7927 = vpack.c.b16 %v7763, %v7759
        %v7928 = vpack.c.b16 %v7764, %v7760
        %v7929 = vpack.c.b16 %v7765, %v7761
        %v7930 = vpack.c.b16 %v7770, %v7766
        %v7931 = vpack.c.b16 %v7771, %v7767
        %v7932 = vpack.c.b16 %v7772, %v7768
        %v7933 = vpack.c.b16 %v7773, %v7769
        %v7934 = vpack.c.b16 %v7778, %v7774
        %v7935 = vpack.c.b16 %v7779, %v7775
        %v7936 = vpack.c.b16 %v7780, %v7776
        %v7937 = vpack.c.b16 %v7781, %v7777
        %v7938 = vpack.c.b16 %v7786, %v7782
        %v7939 = vpack.c.b16 %v7787, %v7783
        %v7940 = vpack.c.b16 %v7788, %v7784
        %v7941 = vpack.c.b16 %v7789, %v7785
        %v7942 = vpack.c.b16 %v7794, %v7790
        %v7943 = vpack.c.b16 %v7795, %v7791
        %v7944 = vpack.c.b16 %v7796, %v7792
        %v7945 = vpack.c.b16 %v7797, %v7793
        %v7946 = vpack.c.b16 %v7802, %v7798
        %v7947 = vpack.c.b16 %v7803, %v7799
        %v7948 = vpack.c.b16 %v7804, %v7800
        %v7949 = vpack.c.b16 %v7805, %v7801
        %v7950 = vpack.c.b16 %v7810, %v7806
        %v7951 = vpack.c.b16 %v7811, %v7807
        %v7952 = vpack.c.b16 %v7812, %v7808
        %v7953 = vpack.c.b16 %v7813, %v7809
        %v7954 = vpack.c.b16 %v7818, %v7814
        %v7955 = vpack.c.b16 %v7819, %v7815
        %v7956 = vpack.c.b16 %v7820, %v7816
        %v7957 = vpack.c.b16 %v7821, %v7817
        %v7958 = vpack.c.b16 %v7826, %v7822
        %v7959 = vpack.c.b16 %v7827, %v7823
        %v7960 = vpack.c.b16 %v7828, %v7824
        %v7961 = vpack.c.b16 %v7829, %v7825
        %v7962 = vpack.c.b16 %v7834, %v7830
        %v7963 = vpack.c.b16 %v7835, %v7831
        %v7964 = vpack.c.b16 %v7836, %v7832
        %v7965 = vpack.c.b16 %v7837, %v7833
        %8094 = vmatprep.subr.bf16.mxu0 %v7867
        %8095 = vmatpush1.bf16.msra.mxu0 %v7866
        %8096 = vmatprep.subr.bf16.mxu0 %v7863
        %8097 = vmatpush1.bf16.msra.mxu0 %v7862
        %8098 = vmatprep.subr.bf16.mxu0 %v7859
        %8099 = vmatpush1.bf16.msra.mxu0 %v7858
        %8100 = vmatprep.subr.bf16.mxu0 %v7855
        %8101 = vmatpush1.bf16.msra.mxu0 %v7854
        %8102 = vmatprep.subr.bf16.mxu0 %v7851
        %8103 = vmatpush1.bf16.msra.mxu0 %v7850
        %8104 = vmatprep.subr.bf16.mxu0 %v7847
        %8105 = vmatpush1.bf16.msra.mxu0 %v7846
        %8106 = vmatprep.subr.bf16.mxu0 %v7843
        %8107 = vmatpush1.bf16.msra.mxu0 %v7842
        %8108 = vmatprep.subr.bf16.mxu0 %v7839
        %8109 = vmatpush1.bf16.msra.mxu0 %v7838
        %8110 = vmatprep.subr.bf16.mxu0 %v7899
        %8111 = vmatpush2.bf16.msra.mxu0 %v7898
        %8112 = vmatprep.subr.bf16.mxu0 %v7895
        %8113 = vmatpush2.bf16.msra.mxu0 %v7894
        %8114 = vmatprep.subr.bf16.mxu0 %v7891
        %8115 = vmatpush2.bf16.msra.mxu0 %v7890
        %8116 = vmatprep.subr.bf16.mxu0 %v7887
        %8117 = vmatpush2.bf16.msra.mxu0 %v7886
        %8118 = vmatprep.subr.bf16.mxu0 %v7883
        %8119 = vmatpush2.bf16.msra.mxu0 %v7882
        %8120 = vmatprep.subr.bf16.mxu0 %v7879
        %8121 = vmatpush2.bf16.msra.mxu0 %v7878
        %8122 = vmatprep.subr.bf16.mxu0 %v7875
        %8123 = vmatpush2.bf16.msra.mxu0 %v7874
        %8124 = vmatprep.subr.bf16.mxu0 %v7871
        %8125 = vmatpush2.bf16.msra.mxu0 %v7870
        %8126 = vmatprep.mubr.bf16.mxu0 %v5451
        %8127 = vmatmul.mubr.bf16.gmra.mxu0 %v5450
        %v8128 = vpop.f32.mrf.mxu0
        %v8129 = vadd.f32 0.0, %v8128
        %v8130 = vpop.f32.mrf.mxu0
        %v8131 = vadd.f32 0.0, %v8130
        %v8132 = vpop.f32.mrf.mxu0
        %v8133 = vadd.f32 0.0, %v8132
        %v8134 = vpop.f32.mrf.mxu0
        %v8135 = vadd.f32 0.0, %v8134
        %8136 = vdwg.mxu0
        %8137 = vmatprep.subr.bf16.mxu0 %v7931
        %8138 = vmatpush1.bf16.msra.mxu0 %v7930
        %8139 = vmatprep.subr.bf16.mxu0 %v7927
        %8140 = vmatpush1.bf16.msra.mxu0 %v7926
        %8141 = vmatprep.subr.bf16.mxu0 %v7923
        %8142 = vmatpush1.bf16.msra.mxu0 %v7922
        %8143 = vmatprep.subr.bf16.mxu0 %v7919
        %8144 = vmatpush1.bf16.msra.mxu0 %v7918
        %8145 = vmatprep.subr.bf16.mxu0 %v7915
        %8146 = vmatpush1.bf16.msra.mxu0 %v7914
        %8147 = vmatprep.subr.bf16.mxu0 %v7911
        %8148 = vmatpush1.bf16.msra.mxu0 %v7910
        %8149 = vmatprep.subr.bf16.mxu0 %v7907
        %8150 = vmatpush1.bf16.msra.mxu0 %v7906
        %8151 = vmatprep.subr.bf16.mxu0 %v7903
        %8152 = vmatpush1.bf16.msra.mxu0 %v7902
        %8153 = vmatprep.subr.bf16.mxu0 %v7963
        %8154 = vmatpush2.bf16.msra.mxu0 %v7962
        %8155 = vmatprep.subr.bf16.mxu0 %v7959
        %8156 = vmatpush2.bf16.msra.mxu0 %v7958
        %8157 = vmatprep.subr.bf16.mxu0 %v7955
        %8158 = vmatpush2.bf16.msra.mxu0 %v7954
        %8159 = vmatprep.subr.bf16.mxu0 %v7951
        %8160 = vmatpush2.bf16.msra.mxu0 %v7950
        %8161 = vmatprep.subr.bf16.mxu0 %v7947
        %8162 = vmatpush2.bf16.msra.mxu0 %v7946
        %8163 = vmatprep.subr.bf16.mxu0 %v7943
        %8164 = vmatpush2.bf16.msra.mxu0 %v7942
        %8165 = vmatprep.subr.bf16.mxu0 %v7939
        %8166 = vmatpush2.bf16.msra.mxu0 %v7938
        %8167 = vmatprep.subr.bf16.mxu0 %v7935
        %8168 = vmatpush2.bf16.msra.mxu0 %v7934
        %8169 = vmatprep.mubr.bf16.mxu0 %v5453
        %8170 = vmatmul.mubr.bf16.gmra.mxu0 %v5452
        %v8171 = vpop.f32.mrf.mxu0
        %v8172 = vadd.f32 %v8129, %v8171
        %v8173 = vpop.f32.mrf.mxu0
        %v8174 = vadd.f32 %v8131, %v8173
        %v8175 = vpop.f32.mrf.mxu0
        %v8176 = vadd.f32 %v8133, %v8175
        %v8177 = vpop.f32.mrf.mxu0
        %v8178 = vadd.f32 %v8135, %v8177
        %8179 = vdwg.mxu0
        %8180 = vmatprep.subr.bf16.mxu0 %v7869
        %8181 = vmatpush1.bf16.msra.mxu0 %v7868
        %8182 = vmatprep.subr.bf16.mxu0 %v7865
        %8183 = vmatpush1.bf16.msra.mxu0 %v7864
        %8184 = vmatprep.subr.bf16.mxu0 %v7861
        %8185 = vmatpush1.bf16.msra.mxu0 %v7860
        %8186 = vmatprep.subr.bf16.mxu0 %v7857
        %8187 = vmatpush1.bf16.msra.mxu0 %v7856
        %8188 = vmatprep.subr.bf16.mxu0 %v7853
        %8189 = vmatpush1.bf16.msra.mxu0 %v7852
        %8190 = vmatprep.subr.bf16.mxu0 %v7849
        %8191 = vmatpush1.bf16.msra.mxu0 %v7848
        %8192 = vmatprep.subr.bf16.mxu0 %v7845
        %8193 = vmatpush1.bf16.msra.mxu0 %v7844
        %8194 = vmatprep.subr.bf16.mxu0 %v7841
        %8195 = vmatpush1.bf16.msra.mxu0 %v7840
        %8196 = vmatprep.subr.bf16.mxu0 %v7901
        %8197 = vmatpush2.bf16.msra.mxu0 %v7900
        %8198 = vmatprep.subr.bf16.mxu0 %v7897
        %8199 = vmatpush2.bf16.msra.mxu0 %v7896
        %8200 = vmatprep.subr.bf16.mxu0 %v7893
        %8201 = vmatpush2.bf16.msra.mxu0 %v7892
        %8202 = vmatprep.subr.bf16.mxu0 %v7889
        %8203 = vmatpush2.bf16.msra.mxu0 %v7888
        %8204 = vmatprep.subr.bf16.mxu0 %v7885
        %8205 = vmatpush2.bf16.msra.mxu0 %v7884
        %8206 = vmatprep.subr.bf16.mxu0 %v7881
        %8207 = vmatpush2.bf16.msra.mxu0 %v7880
        %8208 = vmatprep.subr.bf16.mxu0 %v7877
        %8209 = vmatpush2.bf16.msra.mxu0 %v7876
        %8210 = vmatprep.subr.bf16.mxu0 %v7873
        %8211 = vmatpush2.bf16.msra.mxu0 %v7872
        %8212 = vmatprep.mubr.bf16.mxu0 %v5451
        %8213 = vmatmul.mubr.bf16.gmra.mxu0 %v5450
        %v8214 = vpop.f32.mrf.mxu0
        %v8215 = vadd.f32 0.0, %v8214
        %v8216 = vpop.f32.mrf.mxu0
        %v8217 = vadd.f32 0.0, %v8216
        %v8218 = vpop.f32.mrf.mxu0
        %v8219 = vadd.f32 0.0, %v8218
        %v8220 = vpop.f32.mrf.mxu0
        %v8221 = vadd.f32 0.0, %v8220
        %8222 = vdwg.mxu0
        %8223 = vmatprep.subr.bf16.mxu0 %v7933
        %8224 = vmatpush1.bf16.msra.mxu0 %v7932
        %8225 = vmatprep.subr.bf16.mxu0 %v7929
        %8226 = vmatpush1.bf16.msra.mxu0 %v7928
        %8227 = vmatprep.subr.bf16.mxu0 %v7925
        %8228 = vmatpush1.bf16.msra.mxu0 %v7924
        %8229 = vmatprep.subr.bf16.mxu0 %v7921
        %8230 = vmatpush1.bf16.msra.mxu0 %v7920
        %8231 = vmatprep.subr.bf16.mxu0 %v7917
        %8232 = vmatpush1.bf16.msra.mxu0 %v7916
        %8233 = vmatprep.subr.bf16.mxu0 %v7913
        %8234 = vmatpush1.bf16.msra.mxu0 %v7912
        %8235 = vmatprep.subr.bf16.mxu0 %v7909
        %8236 = vmatpush1.bf16.msra.mxu0 %v7908
        %8237 = vmatprep.subr.bf16.mxu0 %v7905
        %8238 = vmatpush1.bf16.msra.mxu0 %v7904
        %8239 = vmatprep.subr.bf16.mxu0 %v7965
        %8240 = vmatpush2.bf16.msra.mxu0 %v7964
        %8241 = vmatprep.subr.bf16.mxu0 %v7961
        %8242 = vmatpush2.bf16.msra.mxu0 %v7960
        %8243 = vmatprep.subr.bf16.mxu0 %v7957
        %8244 = vmatpush2.bf16.msra.mxu0 %v7956
        %8245 = vmatprep.subr.bf16.mxu0 %v7953
        %8246 = vmatpush2.bf16.msra.mxu0 %v7952
        %8247 = vmatprep.subr.bf16.mxu0 %v7949
        %8248 = vmatpush2.bf16.msra.mxu0 %v7948
        %8249 = vmatprep.subr.bf16.mxu0 %v7945
        %8250 = vmatpush2.bf16.msra.mxu0 %v7944
        %8251 = vmatprep.subr.bf16.mxu0 %v7941
        %8252 = vmatpush2.bf16.msra.mxu0 %v7940
        %8253 = vmatprep.subr.bf16.mxu0 %v7937
        %8254 = vmatpush2.bf16.msra.mxu0 %v7936
        %8255 = vmatprep.mubr.bf16.mxu0 %v5453
        %8256 = vmatmul.mubr.bf16.gmra.mxu0 %v5452
        %v8257 = vpop.f32.mrf.mxu0
        %v8258 = vadd.f32 %v8215, %v8257
        %v8259 = vpop.f32.mrf.mxu0
        %v8260 = vadd.f32 %v8217, %v8259
        %v8261 = vpop.f32.mrf.mxu0
        %v8262 = vadd.f32 %v8219, %v8261
        %v8263 = vpop.f32.mrf.mxu0
        %v8264 = vadd.f32 %v8221, %v8263
        %8265 = vdwg.mxu0
        %v8266 = vpack.c.bf16 %v6298, %v6298
        %v8267 = vpack.c.bf16 %v6300, %v6300
        %v8268 = vpack.c.bf16 %v6380, %v6380
        %v8269 = vpack.c.bf16 %v6382, %v6382
        %v8270 = vpack.c.bf16 %v7236, %v7232
        %v8271 = vpack.c.bf16 %v7238, %v7234
        %v8272 = vpack.c.bf16 %v7322, %v7318
        %v8273 = vpack.c.bf16 %v7324, %v7320
        %v8274 = vpack.c.bf16 %v8176, %v8172
        %v8275 = vpack.c.bf16 %v8178, %v8174
        %v8276 = vpack.c.bf16 %v8262, %v8258
        %v8277 = vpack.c.bf16 %v8264, %v8260
        %v8279 = vsel %vm3524, %v8266, 0
        %v8282 = vsel %vm3524, %v8270, 0
        %8284 = vmatprep.subr.bf16.mxu0 0
        %8285 = vmatpush1.bf16.xpose.msra.mxu0 0
        %8286 = vmatprep.subr.bf16.mxu0 0
        %8287 = vmatpush1.bf16.xpose.msra.mxu0 0
        %8288 = vmatprep.subr.bf16.mxu0 0
        %8289 = vmatpush1.bf16.xpose.msra.mxu0 0
        %8290 = vmatprep.subr.bf16.mxu0 0
        %8291 = vmatpush1.bf16.xpose.msra.mxu0 0
        %8292 = vmatprep.subr.bf16.mxu0 0
        %8293 = vmatpush1.bf16.xpose.msra.mxu0 0
        %8294 = vmatprep.subr.bf16.mxu0 0
        %8295 = vmatpush1.bf16.xpose.msra.mxu0 0
        %8296 = vmatprep.subr.bf16.mxu0 0
        %8297 = vmatpush1.bf16.xpose.msra.mxu0 0
        %8298 = vmatprep.subr.bf16.mxu0 0
        %8299 = vmatpush1.bf16.xpose.msra.mxu0 %v8282
        %8300 = vmatprep.subr.bf16.mxu0 0
        %8301 = vmatpush2.bf16.xpose.msra.mxu0 0
        %8302 = vmatprep.subr.bf16.mxu0 0
        %8303 = vmatpush2.bf16.xpose.msra.mxu0 0
        %8304 = vmatprep.subr.bf16.mxu0 0
        %8305 = vmatpush2.bf16.xpose.msra.mxu0 0
        %8306 = vmatprep.subr.bf16.mxu0 0
        %8307 = vmatpush2.bf16.xpose.msra.mxu0 0
        %8308 = vmatprep.subr.bf16.mxu0 0
        %8309 = vmatpush2.bf16.xpose.msra.mxu0 0
        %8310 = vmatprep.subr.bf16.mxu0 0
        %8311 = vmatpush2.bf16.xpose.msra.mxu0 0
        %8312 = vmatprep.subr.bf16.mxu0 0
        %8313 = vmatpush2.bf16.xpose.msra.mxu0 0
        %8314 = vmatprep.subr.bf16.mxu0 0
        %8315 = vmatpush2.bf16.xpose.msra.mxu0 0
        %8316 = vmatprep.mubr.bf16.mxu0 0
        %8317 = vmatmul.mubr.bf16.gmra.mxu0 %v8279
        %v8318 = vpop.f32.mrf.mxu0
        %v8319 = vadd.f32 0.0, %v8318
        %v8320 = vpop.f32.mrf.mxu0
        %v8321 = vpop.f32.mrf.mxu0
        %v8322 = vpop.f32.mrf.mxu0
        %8323 = vdwg.mxu0
        %v8324 = vmul.f32 %v8319, 0.125
        %v8325 = vadd.f32 %v8324, %v711
        %vm8326 = vcmask 130048
        %v8327 = vsel %vm8326, %v8325, -inf
        %8328 = vmax.xlane.f32.xlu0 %v8327
        %v8329 = vpop.xlane.xlu0 %8328
        %v8330 = vsub.f32 %v8325, %v8329
        %v8331 = vmul.f32 %v8330, 1.442695
        %v8332 = vpow.pop %v8331
        %v8333 = vsel %vm8326, %v8332, 0.0
        %8334 = vadd.xlane.f32.xlu0 %v8333
        %v8335 = vpop.xlane.xlu0 %8334
        %v8336 = vrcp.pop %v8335
        %v8337 = vmul.f32 %v8332, %v8336
        %8338 = vst.msk [vmem:[%s694] sm:$0xff] %vm8326, %v8337
        %v8339 = vpack.c.bf16 %v8337, %v8337
        %v8341 = vsel %vm8326, %v8339, 0
        %8343 = vmatprep.subr.bf16.mxu0 0
        %8344 = vmatpush1.bf16.msra.mxu0 0
        %8345 = vmatprep.subr.bf16.mxu0 0
        %8346 = vmatpush1.bf16.msra.mxu0 0
        %8347 = vmatprep.subr.bf16.mxu0 0
        %8348 = vmatpush1.bf16.msra.mxu0 0
        %8349 = vmatprep.subr.bf16.mxu0 0
        %8350 = vmatpush1.bf16.msra.mxu0 0
        %8351 = vmatprep.subr.bf16.mxu0 0
        %8352 = vmatpush1.bf16.msra.mxu0 0
        %8353 = vmatprep.subr.bf16.mxu0 0
        %8354 = vmatpush1.bf16.msra.mxu0 0
        %8355 = vmatprep.subr.bf16.mxu0 0
        %8356 = vmatpush1.bf16.msra.mxu0 0
        %8357 = vmatprep.subr.bf16.mxu0 0
        %8358 = vmatpush1.bf16.msra.mxu0 %v8274
        %8359 = vmatprep.subr.bf16.mxu0 0
        %8360 = vmatpush2.bf16.msra.mxu0 0
        %8361 = vmatprep.subr.bf16.mxu0 0
        %8362 = vmatpush2.bf16.msra.mxu0 0
        %8363 = vmatprep.subr.bf16.mxu0 0
        %8364 = vmatpush2.bf16.msra.mxu0 0
        %8365 = vmatprep.subr.bf16.mxu0 0
        %8366 = vmatpush2.bf16.msra.mxu0 0
        %8367 = vmatprep.subr.bf16.mxu0 0
        %8368 = vmatpush2.bf16.msra.mxu0 0
        %8369 = vmatprep.subr.bf16.mxu0 0
        %8370 = vmatpush2.bf16.msra.mxu0 0
        %8371 = vmatprep.subr.bf16.mxu0 0
        %8372 = vmatpush2.bf16.msra.mxu0 0
        %8373 = vmatprep.subr.bf16.mxu0 0
        %8374 = vmatpush2.bf16.msra.mxu0 0
        %8375 = vmatprep.mubr.bf16.mxu0 0
        %8376 = vmatmul.mubr.bf16.gmra.mxu0 %v8341
        %v8377 = vpop.f32.mrf.mxu0
        %v8378 = vadd.f32 0.0, %v8377
        %v8379 = vpop.f32.mrf.mxu0
        %v8380 = vpop.f32.mrf.mxu0
        %v8381 = vpop.f32.mrf.mxu0
        %8382 = vdwg.mxu0
        %8383 = vst.msk [vmem:[#allocation2] sm:$0xff] %vm3524, %v8378
        %8385 = vrot.lane.b32.xlu0 %v8266, 64
        %v8386 = vpop.permute.xlu0 %8385
        %8388 = vrot.lane.b32.xlu0 %v8270, 64
        %v8389 = vpop.permute.xlu0 %8388
        %v8391 = vsel %vm3524, %v8386, 0
        %v8394 = vsel %vm3524, %v8389, 0
        %8396 = vmatprep.subr.bf16.mxu0 0
        %8397 = vmatpush1.bf16.xpose.msra.mxu0 0
        %8398 = vmatprep.subr.bf16.mxu0 0
        %8399 = vmatpush1.bf16.xpose.msra.mxu0 0
        %8400 = vmatprep.subr.bf16.mxu0 0
        %8401 = vmatpush1.bf16.xpose.msra.mxu0 0
        %8402 = vmatprep.subr.bf16.mxu0 0
        %8403 = vmatpush1.bf16.xpose.msra.mxu0 0
        %8404 = vmatprep.subr.bf16.mxu0 0
        %8405 = vmatpush1.bf16.xpose.msra.mxu0 0
        %8406 = vmatprep.subr.bf16.mxu0 0
        %8407 = vmatpush1.bf16.xpose.msra.mxu0 0
        %8408 = vmatprep.subr.bf16.mxu0 0
        %8409 = vmatpush1.bf16.xpose.msra.mxu0 0
        %8410 = vmatprep.subr.bf16.mxu0 0
        %8411 = vmatpush1.bf16.xpose.msra.mxu0 %v8394
        %8412 = vmatprep.subr.bf16.mxu0 0
        %8413 = vmatpush2.bf16.xpose.msra.mxu0 0
        %8414 = vmatprep.subr.bf16.mxu0 0
        %8415 = vmatpush2.bf16.xpose.msra.mxu0 0
        %8416 = vmatprep.subr.bf16.mxu0 0
        %8417 = vmatpush2.bf16.xpose.msra.mxu0 0
        %8418 = vmatprep.subr.bf16.mxu0 0
        %8419 = vmatpush2.bf16.xpose.msra.mxu0 0
        %8420 = vmatprep.subr.bf16.mxu0 0
        %8421 = vmatpush2.bf16.xpose.msra.mxu0 0
        %8422 = vmatprep.subr.bf16.mxu0 0
        %8423 = vmatpush2.bf16.xpose.msra.mxu0 0
        %8424 = vmatprep.subr.bf16.mxu0 0
        %8425 = vmatpush2.bf16.xpose.msra.mxu0 0
        %8426 = vmatprep.subr.bf16.mxu0 0
        %8427 = vmatpush2.bf16.xpose.msra.mxu0 0
        %8428 = vmatprep.mubr.bf16.mxu0 0
        %8429 = vmatmul.mubr.bf16.gmra.mxu0 %v8391
        %v8430 = vpop.f32.mrf.mxu0
        %v8431 = vadd.f32 0.0, %v8430
        %v8432 = vpop.f32.mrf.mxu0
        %v8433 = vpop.f32.mrf.mxu0
        %v8434 = vpop.f32.mrf.mxu0
        %8435 = vdwg.mxu0
        %v8436 = vmul.f32 %v8431, 0.125
        %v8437 = vadd.f32 %v8436, %v711
        %v8438 = vsel %vm8326, %v8437, -inf
        %8439 = vmax.xlane.f32.xlu0 %v8438
        %v8440 = vpop.xlane.xlu0 %8439
        %v8441 = vsub.f32 %v8437, %v8440
        %v8442 = vmul.f32 %v8441, 1.442695
        %v8443 = vpow.pop %v8442
        %v8444 = vsel %vm8326, %v8443, 0.0
        %8445 = vadd.xlane.f32.xlu0 %v8444
        %v8446 = vpop.xlane.xlu0 %8445
        %v8447 = vrcp.pop %v8446
        %v8448 = vmul.f32 %v8443, %v8447
        %8450 = vrot.lane.b32.xlu0 %v8448, 16
        %v8451 = vpop.permute.xlu0 %8450
        %vm8453 = vcmask 261248
        %8454 = vst.msk [vmem:[%s694] sm:$0xff] %vm8453, %v8451
        %v8455 = vpack.c.bf16 %v8448, %v8448
        %8457 = vrot.lane.b32.xlu0 %v8274, 64
        %v8458 = vpop.permute.xlu0 %8457
        %v8461 = vsel %vm8326, %v8455, 0
        %8463 = vmatprep.subr.bf16.mxu0 0
        %8464 = vmatpush1.bf16.msra.mxu0 0
        %8465 = vmatprep.subr.bf16.mxu0 0
        %8466 = vmatpush1.bf16.msra.mxu0 0
        %8467 = vmatprep.subr.bf16.mxu0 0
        %8468 = vmatpush1.bf16.msra.mxu0 0
        %8469 = vmatprep.subr.bf16.mxu0 0
        %8470 = vmatpush1.bf16.msra.mxu0 0
        %8471 = vmatprep.subr.bf16.mxu0 0
        %8472 = vmatpush1.bf16.msra.mxu0 0
        %8473 = vmatprep.subr.bf16.mxu0 0
        %8474 = vmatpush1.bf16.msra.mxu0 0
        %8475 = vmatprep.subr.bf16.mxu0 0
        %8476 = vmatpush1.bf16.msra.mxu0 0
        %8477 = vmatprep.subr.bf16.mxu0 0
        %8478 = vmatpush1.bf16.msra.mxu0 %v8458
        %8479 = vmatprep.subr.bf16.mxu0 0
        %8480 = vmatpush2.bf16.msra.mxu0 0
        %8481 = vmatprep.subr.bf16.mxu0 0
        %8482 = vmatpush2.bf16.msra.mxu0 0
        %8483 = vmatprep.subr.bf16.mxu0 0
        %8484 = vmatpush2.bf16.msra.mxu0 0
        %8485 = vmatprep.subr.bf16.mxu0 0
        %8486 = vmatpush2.bf16.msra.mxu0 0
        %8487 = vmatprep.subr.bf16.mxu0 0
        %8488 = vmatpush2.bf16.msra.mxu0 0
        %8489 = vmatprep.subr.bf16.mxu0 0
        %8490 = vmatpush2.bf16.msra.mxu0 0
        %8491 = vmatprep.subr.bf16.mxu0 0
        %8492 = vmatpush2.bf16.msra.mxu0 0
        %8493 = vmatprep.subr.bf16.mxu0 0
        %8494 = vmatpush2.bf16.msra.mxu0 0
        %8495 = vmatprep.mubr.bf16.mxu0 0
        %8496 = vmatmul.mubr.bf16.gmra.mxu0 %v8461
        %v8497 = vpop.f32.mrf.mxu0
        %v8498 = vadd.f32 0.0, %v8497
        %v8499 = vpop.f32.mrf.mxu0
        %v8500 = vpop.f32.mrf.mxu0
        %v8501 = vpop.f32.mrf.mxu0
        %8502 = vdwg.mxu0
        %8504 = vrot.lane.b32.xlu0 %v8498, 64
        %v8505 = vpop.permute.xlu0 %8504
        %8507 = vst.msk [vmem:[#allocation2] sm:$0xff] %vm3760, %v8505
        %v8509 = vsel %vm3524, %v8267, 0
        %v8512 = vsel %vm3524, %v8271, 0
        %8514 = vmatprep.subr.bf16.mxu0 0
        %8515 = vmatpush1.bf16.xpose.msra.mxu0 0
        %8516 = vmatprep.subr.bf16.mxu0 0
        %8517 = vmatpush1.bf16.xpose.msra.mxu0 0
        %8518 = vmatprep.subr.bf16.mxu0 0
        %8519 = vmatpush1.bf16.xpose.msra.mxu0 0
        %8520 = vmatprep.subr.bf16.mxu0 0
        %8521 = vmatpush1.bf16.xpose.msra.mxu0 0
        %8522 = vmatprep.subr.bf16.mxu0 0
        %8523 = vmatpush1.bf16.xpose.msra.mxu0 0
        %8524 = vmatprep.subr.bf16.mxu0 0
        %8525 = vmatpush1.bf16.xpose.msra.mxu0 0
        %8526 = vmatprep.subr.bf16.mxu0 0
        %8527 = vmatpush1.bf16.xpose.msra.mxu0 0
        %8528 = vmatprep.subr.bf16.mxu0 0
        %8529 = vmatpush1.bf16.xpose.msra.mxu0 %v8512
        %8530 = vmatprep.subr.bf16.mxu0 0
        %8531 = vmatpush2.bf16.xpose.msra.mxu0 0
        %8532 = vmatprep.subr.bf16.mxu0 0
        %8533 = vmatpush2.bf16.xpose.msra.mxu0 0
        %8534 = vmatprep.subr.bf16.mxu0 0
        %8535 = vmatpush2.bf16.xpose.msra.mxu0 0
        %8536 = vmatprep.subr.bf16.mxu0 0
        %8537 = vmatpush2.bf16.xpose.msra.mxu0 0
        %8538 = vmatprep.subr.bf16.mxu0 0
        %8539 = vmatpush2.bf16.xpose.msra.mxu0 0
        %8540 = vmatprep.subr.bf16.mxu0 0
        %8541 = vmatpush2.bf16.xpose.msra.mxu0 0
        %8542 = vmatprep.subr.bf16.mxu0 0
        %8543 = vmatpush2.bf16.xpose.msra.mxu0 0
        %8544 = vmatprep.subr.bf16.mxu0 0
        %8545 = vmatpush2.bf16.xpose.msra.mxu0 0
        %8546 = vmatprep.mubr.bf16.mxu0 0
        %8547 = vmatmul.mubr.bf16.gmra.mxu0 %v8509
        %v8548 = vpop.f32.mrf.mxu0
        %v8549 = vadd.f32 0.0, %v8548
        %v8550 = vpop.f32.mrf.mxu0
        %v8551 = vpop.f32.mrf.mxu0
        %v8552 = vpop.f32.mrf.mxu0
        %8553 = vdwg.mxu0
        %v8554 = vmul.f32 %v8549, 0.125
        %v8555 = vadd.f32 %v8554, %v711
        %v8556 = vsel %vm8326, %v8555, -inf
        %8557 = vmax.xlane.f32.xlu0 %v8556
        %v8558 = vpop.xlane.xlu0 %8557
        %v8559 = vsub.f32 %v8555, %v8558
        %v8560 = vmul.f32 %v8559, 1.442695
        %v8561 = vpow.pop %v8560
        %v8562 = vsel %vm8326, %v8561, 0.0
        %8563 = vadd.xlane.f32.xlu0 %v8562
        %v8564 = vpop.xlane.xlu0 %8563
        %v8565 = vrcp.pop %v8564
        %v8566 = vmul.f32 %v8561, %v8565
        %8568 = vrot.lane.b32.xlu0 %v8566, 32
        %v8569 = vpop.permute.xlu0 %8568
        %vm8571 = vcmask 392448
        %8572 = vst.msk [vmem:[%s694] sm:$0xff] %vm8571, %v8569
        %v8573 = vpack.c.bf16 %v8566, %v8566
        %v8575 = vsel %vm8326, %v8573, 0
        %8577 = vmatprep.subr.bf16.mxu0 0
        %8578 = vmatpush1.bf16.msra.mxu0 0
        %8579 = vmatprep.subr.bf16.mxu0 0
        %8580 = vmatpush1.bf16.msra.mxu0 0
        %8581 = vmatprep.subr.bf16.mxu0 0
        %8582 = vmatpush1.bf16.msra.mxu0 0
        %8583 = vmatprep.subr.bf16.mxu0 0
        %8584 = vmatpush1.bf16.msra.mxu0 0
        %8585 = vmatprep.subr.bf16.mxu0 0
        %8586 = vmatpush1.bf16.msra.mxu0 0
        %8587 = vmatprep.subr.bf16.mxu0 0
        %8588 = vmatpush1.bf16.msra.mxu0 0
        %8589 = vmatprep.subr.bf16.mxu0 0
        %8590 = vmatpush1.bf16.msra.mxu0 0
        %8591 = vmatprep.subr.bf16.mxu0 0
        %8592 = vmatpush1.bf16.msra.mxu0 %v8275
        %8593 = vmatprep.subr.bf16.mxu0 0
        %8594 = vmatpush2.bf16.msra.mxu0 0
        %8595 = vmatprep.subr.bf16.mxu0 0
        %8596 = vmatpush2.bf16.msra.mxu0 0
        %8597 = vmatprep.subr.bf16.mxu0 0
        %8598 = vmatpush2.bf16.msra.mxu0 0
        %8599 = vmatprep.subr.bf16.mxu0 0
        %8600 = vmatpush2.bf16.msra.mxu0 0
        %8601 = vmatprep.subr.bf16.mxu0 0
        %8602 = vmatpush2.bf16.msra.mxu0 0
        %8603 = vmatprep.subr.bf16.mxu0 0
        %8604 = vmatpush2.bf16.msra.mxu0 0
        %8605 = vmatprep.subr.bf16.mxu0 0
        %8606 = vmatpush2.bf16.msra.mxu0 0
        %8607 = vmatprep.subr.bf16.mxu0 0
        %8608 = vmatpush2.bf16.msra.mxu0 0
        %8609 = vmatprep.mubr.bf16.mxu0 0
        %8610 = vmatmul.mubr.bf16.gmra.mxu0 %v8575
        %v8611 = vpop.f32.mrf.mxu0
        %v8612 = vadd.f32 0.0, %v8611
        %v8613 = vpop.f32.mrf.mxu0
        %v8614 = vpop.f32.mrf.mxu0
        %v8615 = vpop.f32.mrf.mxu0
        %8616 = vdwg.mxu0
        %8617 = vst.msk [vmem:[#allocation2 + $0x8] sm:$0xff] %vm3524, %v8612
        %8619 = vrot.lane.b32.xlu0 %v8267, 64
        %v8620 = vpop.permute.xlu0 %8619
        %8622 = vrot.lane.b32.xlu0 %v8271, 64
        %v8623 = vpop.permute.xlu0 %8622
        %v8625 = vsel %vm3524, %v8620, 0
        %v8628 = vsel %vm3524, %v8623, 0
        %8630 = vmatprep.subr.bf16.mxu0 0
        %8631 = vmatpush1.bf16.xpose.msra.mxu0 0
        %8632 = vmatprep.subr.bf16.mxu0 0
        %8633 = vmatpush1.bf16.xpose.msra.mxu0 0
        %8634 = vmatprep.subr.bf16.mxu0 0
        %8635 = vmatpush1.bf16.xpose.msra.mxu0 0
        %8636 = vmatprep.subr.bf16.mxu0 0
        %8637 = vmatpush1.bf16.xpose.msra.mxu0 0
        %8638 = vmatprep.subr.bf16.mxu0 0
        %8639 = vmatpush1.bf16.xpose.msra.mxu0 0
        %8640 = vmatprep.subr.bf16.mxu0 0
        %8641 = vmatpush1.bf16.xpose.msra.mxu0 0
        %8642 = vmatprep.subr.bf16.mxu0 0
        %8643 = vmatpush1.bf16.xpose.msra.mxu0 0
        %8644 = vmatprep.subr.bf16.mxu0 0
        %8645 = vmatpush1.bf16.xpose.msra.mxu0 %v8628
        %8646 = vmatprep.subr.bf16.mxu0 0
        %8647 = vmatpush2.bf16.xpose.msra.mxu0 0
        %8648 = vmatprep.subr.bf16.mxu0 0
        %8649 = vmatpush2.bf16.xpose.msra.mxu0 0
        %8650 = vmatprep.subr.bf16.mxu0 0
        %8651 = vmatpush2.bf16.xpose.msra.mxu0 0
        %8652 = vmatprep.subr.bf16.mxu0 0
        %8653 = vmatpush2.bf16.xpose.msra.mxu0 0
        %8654 = vmatprep.subr.bf16.mxu0 0
        %8655 = vmatpush2.bf16.xpose.msra.mxu0 0
        %8656 = vmatprep.subr.bf16.mxu0 0
        %8657 = vmatpush2.bf16.xpose.msra.mxu0 0
        %8658 = vmatprep.subr.bf16.mxu0 0
        %8659 = vmatpush2.bf16.xpose.msra.mxu0 0
        %8660 = vmatprep.subr.bf16.mxu0 0
        %8661 = vmatpush2.bf16.xpose.msra.mxu0 0
        %8662 = vmatprep.mubr.bf16.mxu0 0
        %8663 = vmatmul.mubr.bf16.gmra.mxu0 %v8625
        %v8664 = vpop.f32.mrf.mxu0
        %v8665 = vadd.f32 0.0, %v8664
        %v8666 = vpop.f32.mrf.mxu0
        %v8667 = vpop.f32.mrf.mxu0
        %v8668 = vpop.f32.mrf.mxu0
        %8669 = vdwg.mxu0
        %v8670 = vmul.f32 %v8665, 0.125
        %v8671 = vadd.f32 %v8670, %v711
        %v8672 = vsel %vm8326, %v8671, -inf
        %8673 = vmax.xlane.f32.xlu0 %v8672
        %v8674 = vpop.xlane.xlu0 %8673
        %v8675 = vsub.f32 %v8671, %v8674
        %v8676 = vmul.f32 %v8675, 1.442695
        %v8677 = vpow.pop %v8676
        %v8678 = vsel %vm8326, %v8677, 0.0
        %8679 = vadd.xlane.f32.xlu0 %v8678
        %v8680 = vpop.xlane.xlu0 %8679
        %v8681 = vrcp.pop %v8680
        %v8682 = vmul.f32 %v8677, %v8681
        %8684 = vrot.lane.b32.xlu0 %v8682, 48
        %v8685 = vpop.permute.xlu0 %8684
        %vm8687 = vcmask 523648
        %8688 = vst.msk [vmem:[%s694] sm:$0xff] %vm8687, %v8685
        %v8689 = vpack.c.bf16 %v8682, %v8682
        %8691 = vrot.lane.b32.xlu0 %v8275, 64
        %v8692 = vpop.permute.xlu0 %8691
        %v8695 = vsel %vm8326, %v8689, 0
        %8697 = vmatprep.subr.bf16.mxu0 0
        %8698 = vmatpush1.bf16.msra.mxu0 0
        %8699 = vmatprep.subr.bf16.mxu0 0
        %8700 = vmatpush1.bf16.msra.mxu0 0
        %8701 = vmatprep.subr.bf16.mxu0 0
        %8702 = vmatpush1.bf16.msra.mxu0 0
        %8703 = vmatprep.subr.bf16.mxu0 0
        %8704 = vmatpush1.bf16.msra.mxu0 0
        %8705 = vmatprep.subr.bf16.mxu0 0
        %8706 = vmatpush1.bf16.msra.mxu0 0
        %8707 = vmatprep.subr.bf16.mxu0 0
        %8708 = vmatpush1.bf16.msra.mxu0 0
        %8709 = vmatprep.subr.bf16.mxu0 0
        %8710 = vmatpush1.bf16.msra.mxu0 0
        %8711 = vmatprep.subr.bf16.mxu0 0
        %8712 = vmatpush1.bf16.msra.mxu0 %v8692
        %8713 = vmatprep.subr.bf16.mxu0 0
        %8714 = vmatpush2.bf16.msra.mxu0 0
        %8715 = vmatprep.subr.bf16.mxu0 0
        %8716 = vmatpush2.bf16.msra.mxu0 0
        %8717 = vmatprep.subr.bf16.mxu0 0
        %8718 = vmatpush2.bf16.msra.mxu0 0
        %8719 = vmatprep.subr.bf16.mxu0 0
        %8720 = vmatpush2.bf16.msra.mxu0 0
        %8721 = vmatprep.subr.bf16.mxu0 0
        %8722 = vmatpush2.bf16.msra.mxu0 0
        %8723 = vmatprep.subr.bf16.mxu0 0
        %8724 = vmatpush2.bf16.msra.mxu0 0
        %8725 = vmatprep.subr.bf16.mxu0 0
        %8726 = vmatpush2.bf16.msra.mxu0 0
        %8727 = vmatprep.subr.bf16.mxu0 0
        %8728 = vmatpush2.bf16.msra.mxu0 0
        %8729 = vmatprep.mubr.bf16.mxu0 0
        %8730 = vmatmul.mubr.bf16.gmra.mxu0 %v8695
        %v8731 = vpop.f32.mrf.mxu0
        %v8732 = vadd.f32 0.0, %v8731
        %v8733 = vpop.f32.mrf.mxu0
        %v8734 = vpop.f32.mrf.mxu0
        %v8735 = vpop.f32.mrf.mxu0
        %8736 = vdwg.mxu0
        %8738 = vrot.lane.b32.xlu0 %v8732, 64
        %v8739 = vpop.permute.xlu0 %8738
        %8741 = vst.msk [vmem:[#allocation2 + $0x8] sm:$0xff] %vm3760, %v8739
        %v8743 = vsel %vm3524, %v8268, 0
        %v8746 = vsel %vm3524, %v8272, 0
        %8748 = vmatprep.subr.bf16.mxu0 0
        %8749 = vmatpush1.bf16.xpose.msra.mxu0 0
        %8750 = vmatprep.subr.bf16.mxu0 0
        %8751 = vmatpush1.bf16.xpose.msra.mxu0 0
        %8752 = vmatprep.subr.bf16.mxu0 0
        %8753 = vmatpush1.bf16.xpose.msra.mxu0 0
        %8754 = vmatprep.subr.bf16.mxu0 0
        %8755 = vmatpush1.bf16.xpose.msra.mxu0 0
        %8756 = vmatprep.subr.bf16.mxu0 0
        %8757 = vmatpush1.bf16.xpose.msra.mxu0 0
        %8758 = vmatprep.subr.bf16.mxu0 0
        %8759 = vmatpush1.bf16.xpose.msra.mxu0 0
        %8760 = vmatprep.subr.bf16.mxu0 0
        %8761 = vmatpush1.bf16.xpose.msra.mxu0 0
        %8762 = vmatprep.subr.bf16.mxu0 0
        %8763 = vmatpush1.bf16.xpose.msra.mxu0 %v8746
        %8764 = vmatprep.subr.bf16.mxu0 0
        %8765 = vmatpush2.bf16.xpose.msra.mxu0 0
        %8766 = vmatprep.subr.bf16.mxu0 0
        %8767 = vmatpush2.bf16.xpose.msra.mxu0 0
        %8768 = vmatprep.subr.bf16.mxu0 0
        %8769 = vmatpush2.bf16.xpose.msra.mxu0 0
        %8770 = vmatprep.subr.bf16.mxu0 0
        %8771 = vmatpush2.bf16.xpose.msra.mxu0 0
        %8772 = vmatprep.subr.bf16.mxu0 0
        %8773 = vmatpush2.bf16.xpose.msra.mxu0 0
        %8774 = vmatprep.subr.bf16.mxu0 0
        %8775 = vmatpush2.bf16.xpose.msra.mxu0 0
        %8776 = vmatprep.subr.bf16.mxu0 0
        %8777 = vmatpush2.bf16.xpose.msra.mxu0 0
        %8778 = vmatprep.subr.bf16.mxu0 0
        %8779 = vmatpush2.bf16.xpose.msra.mxu0 0
        %8780 = vmatprep.mubr.bf16.mxu0 0
        %8781 = vmatmul.mubr.bf16.gmra.mxu0 %v8743
        %v8782 = vpop.f32.mrf.mxu0
        %v8783 = vadd.f32 0.0, %v8782
        %v8784 = vpop.f32.mrf.mxu0
        %v8785 = vpop.f32.mrf.mxu0
        %v8786 = vpop.f32.mrf.mxu0
        %8787 = vdwg.mxu0
        %v8788 = vmul.f32 %v8783, 0.125
        %v8789 = vadd.f32 %v8788, %v711
        %v8790 = vsel %vm8326, %v8789, -inf
        %8791 = vmax.xlane.f32.xlu0 %v8790
        %v8792 = vpop.xlane.xlu0 %8791
        %v8793 = vsub.f32 %v8789, %v8792
        %v8794 = vmul.f32 %v8793, 1.442695
        %v8795 = vpow.pop %v8794
        %v8796 = vsel %vm8326, %v8795, 0.0
        %8797 = vadd.xlane.f32.xlu0 %v8796
        %v8798 = vpop.xlane.xlu0 %8797
        %v8799 = vrcp.pop %v8798
        %v8800 = vmul.f32 %v8795, %v8799
        %8802 = vrot.lane.b32.xlu0 %v8800, 64
        %v8803 = vpop.permute.xlu0 %8802
        %vm8805 = vcmask 654848
        %8806 = vst.msk [vmem:[%s694] sm:$0xff] %vm8805, %v8803
        %v8807 = vpack.c.bf16 %v8800, %v8800
        %v8809 = vsel %vm8326, %v8807, 0
        %8811 = vmatprep.subr.bf16.mxu0 0
        %8812 = vmatpush1.bf16.msra.mxu0 0
        %8813 = vmatprep.subr.bf16.mxu0 0
        %8814 = vmatpush1.bf16.msra.mxu0 0
        %8815 = vmatprep.subr.bf16.mxu0 0
        %8816 = vmatpush1.bf16.msra.mxu0 0
        %8817 = vmatprep.subr.bf16.mxu0 0
        %8818 = vmatpush1.bf16.msra.mxu0 0
        %8819 = vmatprep.subr.bf16.mxu0 0
        %8820 = vmatpush1.bf16.msra.mxu0 0
        %8821 = vmatprep.subr.bf16.mxu0 0
        %8822 = vmatpush1.bf16.msra.mxu0 0
        %8823 = vmatprep.subr.bf16.mxu0 0
        %8824 = vmatpush1.bf16.msra.mxu0 0
        %8825 = vmatprep.subr.bf16.mxu0 0
        %8826 = vmatpush1.bf16.msra.mxu0 %v8276
        %8827 = vmatprep.subr.bf16.mxu0 0
        %8828 = vmatpush2.bf16.msra.mxu0 0
        %8829 = vmatprep.subr.bf16.mxu0 0
        %8830 = vmatpush2.bf16.msra.mxu0 0
        %8831 = vmatprep.subr.bf16.mxu0 0
        %8832 = vmatpush2.bf16.msra.mxu0 0
        %8833 = vmatprep.subr.bf16.mxu0 0
        %8834 = vmatpush2.bf16.msra.mxu0 0
        %8835 = vmatprep.subr.bf16.mxu0 0
        %8836 = vmatpush2.bf16.msra.mxu0 0
        %8837 = vmatprep.subr.bf16.mxu0 0
        %8838 = vmatpush2.bf16.msra.mxu0 0
        %8839 = vmatprep.subr.bf16.mxu0 0
        %8840 = vmatpush2.bf16.msra.mxu0 0
        %8841 = vmatprep.subr.bf16.mxu0 0
        %8842 = vmatpush2.bf16.msra.mxu0 0
        %8843 = vmatprep.mubr.bf16.mxu0 0
        %8844 = vmatmul.mubr.bf16.gmra.mxu0 %v8809
        %v8845 = vpop.f32.mrf.mxu0
        %v8846 = vadd.f32 0.0, %v8845
        %v8847 = vpop.f32.mrf.mxu0
        %v8848 = vpop.f32.mrf.mxu0
        %v8849 = vpop.f32.mrf.mxu0
        %8850 = vdwg.mxu0
        %8851 = vst.msk [vmem:[#allocation2 + $0x10] sm:$0xff] %vm3524, %v8846
        %8853 = vrot.lane.b32.xlu0 %v8268, 64
        %v8854 = vpop.permute.xlu0 %8853
        %8856 = vrot.lane.b32.xlu0 %v8272, 64
        %v8857 = vpop.permute.xlu0 %8856
        %v8859 = vsel %vm3524, %v8854, 0
        %v8862 = vsel %vm3524, %v8857, 0
        %8864 = vmatprep.subr.bf16.mxu0 0
        %8865 = vmatpush1.bf16.xpose.msra.mxu0 0
        %8866 = vmatprep.subr.bf16.mxu0 0
        %8867 = vmatpush1.bf16.xpose.msra.mxu0 0
        %8868 = vmatprep.subr.bf16.mxu0 0
        %8869 = vmatpush1.bf16.xpose.msra.mxu0 0
        %8870 = vmatprep.subr.bf16.mxu0 0
        %8871 = vmatpush1.bf16.xpose.msra.mxu0 0
        %8872 = vmatprep.subr.bf16.mxu0 0
        %8873 = vmatpush1.bf16.xpose.msra.mxu0 0
        %8874 = vmatprep.subr.bf16.mxu0 0
        %8875 = vmatpush1.bf16.xpose.msra.mxu0 0
        %8876 = vmatprep.subr.bf16.mxu0 0
        %8877 = vmatpush1.bf16.xpose.msra.mxu0 0
        %8878 = vmatprep.subr.bf16.mxu0 0
        %8879 = vmatpush1.bf16.xpose.msra.mxu0 %v8862
        %8880 = vmatprep.subr.bf16.mxu0 0
        %8881 = vmatpush2.bf16.xpose.msra.mxu0 0
        %8882 = vmatprep.subr.bf16.mxu0 0
        %8883 = vmatpush2.bf16.xpose.msra.mxu0 0
        %8884 = vmatprep.subr.bf16.mxu0 0
        %8885 = vmatpush2.bf16.xpose.msra.mxu0 0
        %8886 = vmatprep.subr.bf16.mxu0 0
        %8887 = vmatpush2.bf16.xpose.msra.mxu0 0
        %8888 = vmatprep.subr.bf16.mxu0 0
        %8889 = vmatpush2.bf16.xpose.msra.mxu0 0
        %8890 = vmatprep.subr.bf16.mxu0 0
        %8891 = vmatpush2.bf16.xpose.msra.mxu0 0
        %8892 = vmatprep.subr.bf16.mxu0 0
        %8893 = vmatpush2.bf16.xpose.msra.mxu0 0
        %8894 = vmatprep.subr.bf16.mxu0 0
        %8895 = vmatpush2.bf16.xpose.msra.mxu0 0
        %8896 = vmatprep.mubr.bf16.mxu0 0
        %8897 = vmatmul.mubr.bf16.gmra.mxu0 %v8859
        %v8898 = vpop.f32.mrf.mxu0
        %v8899 = vadd.f32 0.0, %v8898
        %v8900 = vpop.f32.mrf.mxu0
        %v8901 = vpop.f32.mrf.mxu0
        %v8902 = vpop.f32.mrf.mxu0
        %8903 = vdwg.mxu0
        %v8904 = vmul.f32 %v8899, 0.125
        %v8905 = vadd.f32 %v8904, %v711
        %v8906 = vsel %vm8326, %v8905, -inf
        %8907 = vmax.xlane.f32.xlu0 %v8906
        %v8908 = vpop.xlane.xlu0 %8907
        %v8909 = vsub.f32 %v8905, %v8908
        %v8910 = vmul.f32 %v8909, 1.442695
        %v8911 = vpow.pop %v8910
        %v8912 = vsel %vm8326, %v8911, 0.0
        %8913 = vadd.xlane.f32.xlu0 %v8912
        %v8914 = vpop.xlane.xlu0 %8913
        %v8915 = vrcp.pop %v8914
        %v8916 = vmul.f32 %v8911, %v8915
        %8918 = vrot.lane.b32.xlu0 %v8916, 80
        %v8919 = vpop.permute.xlu0 %8918
        %vm8921 = vcmask 786048
        %8922 = vst.msk [vmem:[%s694] sm:$0xff] %vm8921, %v8919
        %v8923 = vpack.c.bf16 %v8916, %v8916
        %8925 = vrot.lane.b32.xlu0 %v8276, 64
        %v8926 = vpop.permute.xlu0 %8925
        %v8929 = vsel %vm8326, %v8923, 0
        %8931 = vmatprep.subr.bf16.mxu0 0
        %8932 = vmatpush1.bf16.msra.mxu0 0
        %8933 = vmatprep.subr.bf16.mxu0 0
        %8934 = vmatpush1.bf16.msra.mxu0 0
        %8935 = vmatprep.subr.bf16.mxu0 0
        %8936 = vmatpush1.bf16.msra.mxu0 0
        %8937 = vmatprep.subr.bf16.mxu0 0
        %8938 = vmatpush1.bf16.msra.mxu0 0
        %8939 = vmatprep.subr.bf16.mxu0 0
        %8940 = vmatpush1.bf16.msra.mxu0 0
        %8941 = vmatprep.subr.bf16.mxu0 0
        %8942 = vmatpush1.bf16.msra.mxu0 0
        %8943 = vmatprep.subr.bf16.mxu0 0
        %8944 = vmatpush1.bf16.msra.mxu0 0
        %8945 = vmatprep.subr.bf16.mxu0 0
        %8946 = vmatpush1.bf16.msra.mxu0 %v8926
        %8947 = vmatprep.subr.bf16.mxu0 0
        %8948 = vmatpush2.bf16.msra.mxu0 0
        %8949 = vmatprep.subr.bf16.mxu0 0
        %8950 = vmatpush2.bf16.msra.mxu0 0
        %8951 = vmatprep.subr.bf16.mxu0 0
        %8952 = vmatpush2.bf16.msra.mxu0 0
        %8953 = vmatprep.subr.bf16.mxu0 0
        %8954 = vmatpush2.bf16.msra.mxu0 0
        %8955 = vmatprep.subr.bf16.mxu0 0
        %8956 = vmatpush2.bf16.msra.mxu0 0
        %8957 = vmatprep.subr.bf16.mxu0 0
        %8958 = vmatpush2.bf16.msra.mxu0 0
        %8959 = vmatprep.subr.bf16.mxu0 0
        %8960 = vmatpush2.bf16.msra.mxu0 0
        %8961 = vmatprep.subr.bf16.mxu0 0
        %8962 = vmatpush2.bf16.msra.mxu0 0
        %8963 = vmatprep.mubr.bf16.mxu0 0
        %8964 = vmatmul.mubr.bf16.gmra.mxu0 %v8929
        %v8965 = vpop.f32.mrf.mxu0
        %v8966 = vadd.f32 0.0, %v8965
        %v8967 = vpop.f32.mrf.mxu0
        %v8968 = vpop.f32.mrf.mxu0
        %v8969 = vpop.f32.mrf.mxu0
        %8970 = vdwg.mxu0
        %8972 = vrot.lane.b32.xlu0 %v8966, 64
        %v8973 = vpop.permute.xlu0 %8972
        %8975 = vst.msk [vmem:[#allocation2 + $0x10] sm:$0xff] %vm3760, %v8973
        %v8977 = vsel %vm3524, %v8269, 0
        %v8980 = vsel %vm3524, %v8273, 0
        %8982 = vmatprep.subr.bf16.mxu0 0
        %8983 = vmatpush1.bf16.xpose.msra.mxu0 0
        %8984 = vmatprep.subr.bf16.mxu0 0
        %8985 = vmatpush1.bf16.xpose.msra.mxu0 0
        %8986 = vmatprep.subr.bf16.mxu0 0
        %8987 = vmatpush1.bf16.xpose.msra.mxu0 0
        %8988 = vmatprep.subr.bf16.mxu0 0
        %8989 = vmatpush1.bf16.xpose.msra.mxu0 0
        %8990 = vmatprep.subr.bf16.mxu0 0
        %8991 = vmatpush1.bf16.xpose.msra.mxu0 0
        %8992 = vmatprep.subr.bf16.mxu0 0
        %8993 = vmatpush1.bf16.xpose.msra.mxu0 0
        %8994 = vmatprep.subr.bf16.mxu0 0
        %8995 = vmatpush1.bf16.xpose.msra.mxu0 0
        %8996 = vmatprep.subr.bf16.mxu0 0
        %8997 = vmatpush1.bf16.xpose.msra.mxu0 %v8980
        %8998 = vmatprep.subr.bf16.mxu0 0
        %8999 = vmatpush2.bf16.xpose.msra.mxu0 0
        %9000 = vmatprep.subr.bf16.mxu0 0
        %9001 = vmatpush2.bf16.xpose.msra.mxu0 0
        %9002 = vmatprep.subr.bf16.mxu0 0
        %9003 = vmatpush2.bf16.xpose.msra.mxu0 0
        %9004 = vmatprep.subr.bf16.mxu0 0
        %9005 = vmatpush2.bf16.xpose.msra.mxu0 0
        %9006 = vmatprep.subr.bf16.mxu0 0
        %9007 = vmatpush2.bf16.xpose.msra.mxu0 0
        %9008 = vmatprep.subr.bf16.mxu0 0
        %9009 = vmatpush2.bf16.xpose.msra.mxu0 0
        %9010 = vmatprep.subr.bf16.mxu0 0
        %9011 = vmatpush2.bf16.xpose.msra.mxu0 0
        %9012 = vmatprep.subr.bf16.mxu0 0
        %9013 = vmatpush2.bf16.xpose.msra.mxu0 0
        %9014 = vmatprep.mubr.bf16.mxu0 0
        %9015 = vmatmul.mubr.bf16.gmra.mxu0 %v8977
        %v9016 = vpop.f32.mrf.mxu0
        %v9017 = vadd.f32 0.0, %v9016
        %v9018 = vpop.f32.mrf.mxu0
        %v9019 = vpop.f32.mrf.mxu0
        %v9020 = vpop.f32.mrf.mxu0
        %9021 = vdwg.mxu0
        %v9022 = vmul.f32 %v9017, 0.125
        %v9023 = vadd.f32 %v9022, %v711
        %v9024 = vsel %vm8326, %v9023, -inf
        %9025 = vmax.xlane.f32.xlu0 %v9024
        %v9026 = vpop.xlane.xlu0 %9025
        %v9027 = vsub.f32 %v9023, %v9026
        %v9028 = vmul.f32 %v9027, 1.442695
        %v9029 = vpow.pop %v9028
        %v9030 = vsel %vm8326, %v9029, 0.0
        %9031 = vadd.xlane.f32.xlu0 %v9030
        %v9032 = vpop.xlane.xlu0 %9031
        %v9033 = vrcp.pop %v9032
        %v9034 = vmul.f32 %v9029, %v9033
        %9036 = vrot.lane.b32.xlu0 %v9034, 96
        %v9037 = vpop.permute.xlu0 %9036
        %vm9039 = vcmask 917248
        %9040 = vst.msk [vmem:[%s694] sm:$0xff] %vm9039, %v9037
        %v9041 = vpack.c.bf16 %v9034, %v9034
        %v9043 = vsel %vm8326, %v9041, 0
        %9045 = vmatprep.subr.bf16.mxu0 0
        %9046 = vmatpush1.bf16.msra.mxu0 0
        %9047 = vmatprep.subr.bf16.mxu0 0
        %9048 = vmatpush1.bf16.msra.mxu0 0
        %9049 = vmatprep.subr.bf16.mxu0 0
        %9050 = vmatpush1.bf16.msra.mxu0 0
        %9051 = vmatprep.subr.bf16.mxu0 0
        %9052 = vmatpush1.bf16.msra.mxu0 0
        %9053 = vmatprep.subr.bf16.mxu0 0
        %9054 = vmatpush1.bf16.msra.mxu0 0
        %9055 = vmatprep.subr.bf16.mxu0 0
        %9056 = vmatpush1.bf16.msra.mxu0 0
        %9057 = vmatprep.subr.bf16.mxu0 0
        %9058 = vmatpush1.bf16.msra.mxu0 0
        %9059 = vmatprep.subr.bf16.mxu0 0
        %9060 = vmatpush1.bf16.msra.mxu0 %v8277
        %9061 = vmatprep.subr.bf16.mxu0 0
        %9062 = vmatpush2.bf16.msra.mxu0 0
        %9063 = vmatprep.subr.bf16.mxu0 0
        %9064 = vmatpush2.bf16.msra.mxu0 0
        %9065 = vmatprep.subr.bf16.mxu0 0
        %9066 = vmatpush2.bf16.msra.mxu0 0
        %9067 = vmatprep.subr.bf16.mxu0 0
        %9068 = vmatpush2.bf16.msra.mxu0 0
        %9069 = vmatprep.subr.bf16.mxu0 0
        %9070 = vmatpush2.bf16.msra.mxu0 0
        %9071 = vmatprep.subr.bf16.mxu0 0
        %9072 = vmatpush2.bf16.msra.mxu0 0
        %9073 = vmatprep.subr.bf16.mxu0 0
        %9074 = vmatpush2.bf16.msra.mxu0 0
        %9075 = vmatprep.subr.bf16.mxu0 0
        %9076 = vmatpush2.bf16.msra.mxu0 0
        %9077 = vmatprep.mubr.bf16.mxu0 0
        %9078 = vmatmul.mubr.bf16.gmra.mxu0 %v9043
        %v9079 = vpop.f32.mrf.mxu0
        %v9080 = vadd.f32 0.0, %v9079
        %v9081 = vpop.f32.mrf.mxu0
        %v9082 = vpop.f32.mrf.mxu0
        %v9083 = vpop.f32.mrf.mxu0
        %9084 = vdwg.mxu0
        %9085 = vst.msk [vmem:[#allocation2 + $0x18] sm:$0xff] %vm3524, %v9080
        %9087 = vrot.lane.b32.xlu0 %v8269, 64
        %v9088 = vpop.permute.xlu0 %9087
        %9090 = vrot.lane.b32.xlu0 %v8273, 64
        %v9091 = vpop.permute.xlu0 %9090
        %v9093 = vsel %vm3524, %v9088, 0
        %v9096 = vsel %vm3524, %v9091, 0
        %9098 = vmatprep.subr.bf16.mxu0 0
        %9099 = vmatpush1.bf16.xpose.msra.mxu0 0
        %9100 = vmatprep.subr.bf16.mxu0 0
        %9101 = vmatpush1.bf16.xpose.msra.mxu0 0
        %9102 = vmatprep.subr.bf16.mxu0 0
        %9103 = vmatpush1.bf16.xpose.msra.mxu0 0
        %9104 = vmatprep.subr.bf16.mxu0 0
        %9105 = vmatpush1.bf16.xpose.msra.mxu0 0
        %9106 = vmatprep.subr.bf16.mxu0 0
        %9107 = vmatpush1.bf16.xpose.msra.mxu0 0
        %9108 = vmatprep.subr.bf16.mxu0 0
        %9109 = vmatpush1.bf16.xpose.msra.mxu0 0
        %9110 = vmatprep.subr.bf16.mxu0 0
        %9111 = vmatpush1.bf16.xpose.msra.mxu0 0
        %9112 = vmatprep.subr.bf16.mxu0 0
        %9113 = vmatpush1.bf16.xpose.msra.mxu0 %v9096
        %9114 = vmatprep.subr.bf16.mxu0 0
        %9115 = vmatpush2.bf16.xpose.msra.mxu0 0
        %9116 = vmatprep.subr.bf16.mxu0 0
        %9117 = vmatpush2.bf16.xpose.msra.mxu0 0
        %9118 = vmatprep.subr.bf16.mxu0 0
        %9119 = vmatpush2.bf16.xpose.msra.mxu0 0
        %9120 = vmatprep.subr.bf16.mxu0 0
        %9121 = vmatpush2.bf16.xpose.msra.mxu0 0
        %9122 = vmatprep.subr.bf16.mxu0 0
        %9123 = vmatpush2.bf16.xpose.msra.mxu0 0
        %9124 = vmatprep.subr.bf16.mxu0 0
        %9125 = vmatpush2.bf16.xpose.msra.mxu0 0
        %9126 = vmatprep.subr.bf16.mxu0 0
        %9127 = vmatpush2.bf16.xpose.msra.mxu0 0
        %9128 = vmatprep.subr.bf16.mxu0 0
        %9129 = vmatpush2.bf16.xpose.msra.mxu0 0
        %9130 = vmatprep.mubr.bf16.mxu0 0
        %9131 = vmatmul.mubr.bf16.gmra.mxu0 %v9093
        %v9132 = vpop.f32.mrf.mxu0
        %v9133 = vadd.f32 0.0, %v9132
        %v9134 = vpop.f32.mrf.mxu0
        %v9135 = vpop.f32.mrf.mxu0
        %v9136 = vpop.f32.mrf.mxu0
        %9137 = vdwg.mxu0
        %v9138 = vmul.f32 %v9133, 0.125
        %v9139 = vadd.f32 %v9138, %v711
        %v9140 = vsel %vm8326, %v9139, -inf
        %9141 = vmax.xlane.f32.xlu0 %v9140
        %v9142 = vpop.xlane.xlu0 %9141
        %v9143 = vsub.f32 %v9139, %v9142
        %v9144 = vmul.f32 %v9143, 1.442695
        %v9145 = vpow.pop %v9144
        %v9146 = vsel %vm8326, %v9145, 0.0
        %9147 = vadd.xlane.f32.xlu0 %v9146
        %v9148 = vpop.xlane.xlu0 %9147
        %v9149 = vrcp.pop %v9148
        %v9150 = vmul.f32 %v9145, %v9149
        %9152 = vrot.lane.b32.xlu0 %v9150, 112
        %v9153 = vpop.permute.xlu0 %9152
        %vm9155 = vcmask 1048448
        %9156 = vst.msk [vmem:[%s694] sm:$0xff] %vm9155, %v9153
        %v9157 = vpack.c.bf16 %v9150, %v9150
        %9159 = vrot.lane.b32.xlu0 %v8277, 64
        %v9160 = vpop.permute.xlu0 %9159
        %v9163 = vsel %vm8326, %v9157, 0
        %9165 = vmatprep.subr.bf16.mxu0 0
        %9166 = vmatpush1.bf16.msra.mxu0 0
        %9167 = vmatprep.subr.bf16.mxu0 0
        %9168 = vmatpush1.bf16.msra.mxu0 0
        %9169 = vmatprep.subr.bf16.mxu0 0
        %9170 = vmatpush1.bf16.msra.mxu0 0
        %9171 = vmatprep.subr.bf16.mxu0 0
        %9172 = vmatpush1.bf16.msra.mxu0 0
        %9173 = vmatprep.subr.bf16.mxu0 0
        %9174 = vmatpush1.bf16.msra.mxu0 0
        %9175 = vmatprep.subr.bf16.mxu0 0
        %9176 = vmatpush1.bf16.msra.mxu0 0
        %9177 = vmatprep.subr.bf16.mxu0 0
        %9178 = vmatpush1.bf16.msra.mxu0 0
        %9179 = vmatprep.subr.bf16.mxu0 0
        %9180 = vmatpush1.bf16.msra.mxu0 %v9160
        %9181 = vmatprep.subr.bf16.mxu0 0
        %9182 = vmatpush2.bf16.msra.mxu0 0
        %9183 = vmatprep.subr.bf16.mxu0 0
        %9184 = vmatpush2.bf16.msra.mxu0 0
        %9185 = vmatprep.subr.bf16.mxu0 0
        %9186 = vmatpush2.bf16.msra.mxu0 0
        %9187 = vmatprep.subr.bf16.mxu0 0
        %9188 = vmatpush2.bf16.msra.mxu0 0
        %9189 = vmatprep.subr.bf16.mxu0 0
        %9190 = vmatpush2.bf16.msra.mxu0 0
        %9191 = vmatprep.subr.bf16.mxu0 0
        %9192 = vmatpush2.bf16.msra.mxu0 0
        %9193 = vmatprep.subr.bf16.mxu0 0
        %9194 = vmatpush2.bf16.msra.mxu0 0
        %9195 = vmatprep.subr.bf16.mxu0 0
        %9196 = vmatpush2.bf16.msra.mxu0 0
        %9197 = vmatprep.mubr.bf16.mxu0 0
        %9198 = vmatmul.mubr.bf16.gmra.mxu0 %v9163
        %v9199 = vpop.f32.mrf.mxu0
        %v9200 = vadd.f32 0.0, %v9199
        %v9201 = vpop.f32.mrf.mxu0
        %v9202 = vpop.f32.mrf.mxu0
        %v9203 = vpop.f32.mrf.mxu0
        %9204 = vdwg.mxu0
        %9206 = vrot.lane.b32.xlu0 %v9200, 64
        %v9207 = vpop.permute.xlu0 %9206
        %9209 = vst.msk [vmem:[#allocation2 + $0x18] sm:$0xff] %vm3760, %v9207
        %v9210 = vld [vmem:[#allocation2] sm:$0xff]
        %v9211 = vld [vmem:[#allocation2 + $0x8] sm:$0xff]
        %v9212 = vld [vmem:[#allocation2 + $0x10] sm:$0xff]
        %v9213 = vld [vmem:[#allocation2 + $0x18] sm:$0xff]
        %v9214 = vpack.c.bf16 %v9210, %v9210
        %v9215 = vpack.c.bf16 %v9211, %v9211
        %v9216 = vpack.c.bf16 %v9212, %v9212
        %v9217 = vpack.c.bf16 %v9213, %v9213
        %v9218 = vld [vmem:[#allocation18] sm:$0xff]
        %v9219 = vld [vmem:[#allocation18 + $0x8] sm:$0xff]
        %v9220 = vld [vmem:[#allocation18 + $0x10] sm:$0xff]
        %v9221 = vld [vmem:[#allocation18 + $0x18] sm:$0xff]
        %v9222 = vld [vmem:[#allocation18 + $0x20] sm:$0xff]
        %v9223 = vld [vmem:[#allocation18 + $0x28] sm:$0xff]
        %v9224 = vld [vmem:[#allocation18 + $0x30] sm:$0xff]
        %v9225 = vld [vmem:[#allocation18 + $0x38] sm:$0xff]
        %v9226 = vld [vmem:[#allocation18 + $0x40] sm:$0xff]
        %v9227 = vld [vmem:[#allocation18 + $0x48] sm:$0xff]
        %v9228 = vld [vmem:[#allocation18 + $0x50] sm:$0xff]
        %v9229 = vld [vmem:[#allocation18 + $0x58] sm:$0xff]
        %v9230 = vld [vmem:[#allocation18 + $0x60] sm:$0xff]
        %v9231 = vld [vmem:[#allocation18 + $0x68] sm:$0xff]
        %v9232 = vld [vmem:[#allocation18 + $0x70] sm:$0xff]
        %v9233 = vld [vmem:[#allocation18 + $0x78] sm:$0xff]
        %v9234 = vld [vmem:[#allocation18 + $0x80] sm:$0xff]
        %v9235 = vld [vmem:[#allocation18 + $0x88] sm:$0xff]
        %v9236 = vld [vmem:[#allocation18 + $0x90] sm:$0xff]
        %v9237 = vld [vmem:[#allocation18 + $0x98] sm:$0xff]
        %v9238 = vld [vmem:[#allocation18 + $0xa0] sm:$0xff]
        %v9239 = vld [vmem:[#allocation18 + $0xa8] sm:$0xff]
        %v9240 = vld [vmem:[#allocation18 + $0xb0] sm:$0xff]
        %v9241 = vld [vmem:[#allocation18 + $0xb8] sm:$0xff]
        %v9242 = vld [vmem:[#allocation18 + $0xc0] sm:$0xff]
        %v9243 = vld [vmem:[#allocation18 + $0xc8] sm:$0xff]
        %v9244 = vld [vmem:[#allocation18 + $0xd0] sm:$0xff]
        %v9245 = vld [vmem:[#allocation18 + $0xd8] sm:$0xff]
        %v9246 = vld [vmem:[#allocation18 + $0xe0] sm:$0xff]
        %v9247 = vld [vmem:[#allocation18 + $0xe8] sm:$0xff]
        %v9248 = vld [vmem:[#allocation18 + $0xf0] sm:$0xff]
        %v9249 = vld [vmem:[#allocation18 + $0xf8] sm:$0xff]
        %v9250 = vld [vmem:[#allocation18 + $0x100] sm:$0xff]
        %v9251 = vld [vmem:[#allocation18 + $0x108] sm:$0xff]
        %v9252 = vld [vmem:[#allocation18 + $0x110] sm:$0xff]
        %v9253 = vld [vmem:[#allocation18 + $0x118] sm:$0xff]
        %v9254 = vld [vmem:[#allocation18 + $0x120] sm:$0xff]
        %v9255 = vld [vmem:[#allocation18 + $0x128] sm:$0xff]
        %v9256 = vld [vmem:[#allocation18 + $0x130] sm:$0xff]
        %v9257 = vld [vmem:[#allocation18 + $0x138] sm:$0xff]
        %v9258 = vld [vmem:[#allocation18 + $0x140] sm:$0xff]
        %v9259 = vld [vmem:[#allocation18 + $0x148] sm:$0xff]
        %v9260 = vld [vmem:[#allocation18 + $0x150] sm:$0xff]
        %v9261 = vld [vmem:[#allocation18 + $0x158] sm:$0xff]
        %v9262 = vld [vmem:[#allocation18 + $0x160] sm:$0xff]
        %v9263 = vld [vmem:[#allocation18 + $0x168] sm:$0xff]
        %v9264 = vld [vmem:[#allocation18 + $0x170] sm:$0xff]
        %v9265 = vld [vmem:[#allocation18 + $0x178] sm:$0xff]
        %v9266 = vld [vmem:[#allocation18 + $0x180] sm:$0xff]
        %v9267 = vld [vmem:[#allocation18 + $0x188] sm:$0xff]
        %v9268 = vld [vmem:[#allocation18 + $0x190] sm:$0xff]
        %v9269 = vld [vmem:[#allocation18 + $0x198] sm:$0xff]
        %v9270 = vld [vmem:[#allocation18 + $0x1a0] sm:$0xff]
        %v9271 = vld [vmem:[#allocation18 + $0x1a8] sm:$0xff]
        %v9272 = vld [vmem:[#allocation18 + $0x1b0] sm:$0xff]
        %v9273 = vld [vmem:[#allocation18 + $0x1b8] sm:$0xff]
        %v9274 = vld [vmem:[#allocation18 + $0x1c0] sm:$0xff]
        %v9275 = vld [vmem:[#allocation18 + $0x1c8] sm:$0xff]
        %v9276 = vld [vmem:[#allocation18 + $0x1d0] sm:$0xff]
        %v9277 = vld [vmem:[#allocation18 + $0x1d8] sm:$0xff]
        %v9278 = vld [vmem:[#allocation18 + $0x1e0] sm:$0xff]
        %v9279 = vld [vmem:[#allocation18 + $0x1e8] sm:$0xff]
        %v9280 = vld [vmem:[#allocation18 + $0x1f0] sm:$0xff]
        %v9281 = vld [vmem:[#allocation18 + $0x1f8] sm:$0xff]
        %v9282 = vld [vmem:[#allocation18 + $0x200] sm:$0xff]
        %v9283 = vld [vmem:[#allocation18 + $0x208] sm:$0xff]
        %v9284 = vld [vmem:[#allocation18 + $0x210] sm:$0xff]
        %v9285 = vld [vmem:[#allocation18 + $0x218] sm:$0xff]
        %v9286 = vld [vmem:[#allocation18 + $0x220] sm:$0xff]
        %v9287 = vld [vmem:[#allocation18 + $0x228] sm:$0xff]
        %v9288 = vld [vmem:[#allocation18 + $0x230] sm:$0xff]
        %v9289 = vld [vmem:[#allocation18 + $0x238] sm:$0xff]
        %v9290 = vld [vmem:[#allocation18 + $0x240] sm:$0xff]
        %v9291 = vld [vmem:[#allocation18 + $0x248] sm:$0xff]
        %v9292 = vld [vmem:[#allocation18 + $0x250] sm:$0xff]
        %v9293 = vld [vmem:[#allocation18 + $0x258] sm:$0xff]
        %v9294 = vld [vmem:[#allocation18 + $0x260] sm:$0xff]
        %v9295 = vld [vmem:[#allocation18 + $0x268] sm:$0xff]
        %v9296 = vld [vmem:[#allocation18 + $0x270] sm:$0xff]
        %v9297 = vld [vmem:[#allocation18 + $0x278] sm:$0xff]
        %v9298 = vld [vmem:[#allocation18 + $0x280] sm:$0xff]
        %v9299 = vld [vmem:[#allocation18 + $0x288] sm:$0xff]
        %v9300 = vld [vmem:[#allocation18 + $0x290] sm:$0xff]
        %v9301 = vld [vmem:[#allocation18 + $0x298] sm:$0xff]
        %v9302 = vld [vmem:[#allocation18 + $0x2a0] sm:$0xff]
        %v9303 = vld [vmem:[#allocation18 + $0x2a8] sm:$0xff]
        %v9304 = vld [vmem:[#allocation18 + $0x2b0] sm:$0xff]
        %v9305 = vld [vmem:[#allocation18 + $0x2b8] sm:$0xff]
        %v9306 = vld [vmem:[#allocation18 + $0x2c0] sm:$0xff]
        %v9307 = vld [vmem:[#allocation18 + $0x2c8] sm:$0xff]
        %v9308 = vld [vmem:[#allocation18 + $0x2d0] sm:$0xff]
        %v9309 = vld [vmem:[#allocation18 + $0x2d8] sm:$0xff]
        %v9310 = vld [vmem:[#allocation18 + $0x2e0] sm:$0xff]
        %v9311 = vld [vmem:[#allocation18 + $0x2e8] sm:$0xff]
        %v9312 = vld [vmem:[#allocation18 + $0x2f0] sm:$0xff]
        %v9313 = vld [vmem:[#allocation18 + $0x2f8] sm:$0xff]
        %v9314 = vld [vmem:[#allocation18 + $0x300] sm:$0xff]
        %v9315 = vld [vmem:[#allocation18 + $0x308] sm:$0xff]
        %v9316 = vld [vmem:[#allocation18 + $0x310] sm:$0xff]
        %v9317 = vld [vmem:[#allocation18 + $0x318] sm:$0xff]
        %v9318 = vld [vmem:[#allocation18 + $0x320] sm:$0xff]
        %v9319 = vld [vmem:[#allocation18 + $0x328] sm:$0xff]
        %v9320 = vld [vmem:[#allocation18 + $0x330] sm:$0xff]
        %v9321 = vld [vmem:[#allocation18 + $0x338] sm:$0xff]
        %v9322 = vld [vmem:[#allocation18 + $0x340] sm:$0xff]
        %v9323 = vld [vmem:[#allocation18 + $0x348] sm:$0xff]
        %v9324 = vld [vmem:[#allocation18 + $0x350] sm:$0xff]
        %v9325 = vld [vmem:[#allocation18 + $0x358] sm:$0xff]
        %v9326 = vld [vmem:[#allocation18 + $0x360] sm:$0xff]
        %v9327 = vld [vmem:[#allocation18 + $0x368] sm:$0xff]
        %v9328 = vld [vmem:[#allocation18 + $0x370] sm:$0xff]
        %v9329 = vld [vmem:[#allocation18 + $0x378] sm:$0xff]
        %v9330 = vld [vmem:[#allocation18 + $0x380] sm:$0xff]
        %v9331 = vld [vmem:[#allocation18 + $0x388] sm:$0xff]
        %v9332 = vld [vmem:[#allocation18 + $0x390] sm:$0xff]
        %v9333 = vld [vmem:[#allocation18 + $0x398] sm:$0xff]
        %v9334 = vld [vmem:[#allocation18 + $0x3a0] sm:$0xff]
        %v9335 = vld [vmem:[#allocation18 + $0x3a8] sm:$0xff]
        %v9336 = vld [vmem:[#allocation18 + $0x3b0] sm:$0xff]
        %v9337 = vld [vmem:[#allocation18 + $0x3b8] sm:$0xff]
        %v9338 = vld [vmem:[#allocation18 + $0x3c0] sm:$0xff]
        %v9339 = vld [vmem:[#allocation18 + $0x3c8] sm:$0xff]
        %v9340 = vld [vmem:[#allocation18 + $0x3d0] sm:$0xff]
        %v9341 = vld [vmem:[#allocation18 + $0x3d8] sm:$0xff]
        %v9342 = vld [vmem:[#allocation18 + $0x3e0] sm:$0xff]
        %v9343 = vld [vmem:[#allocation18 + $0x3e8] sm:$0xff]
        %v9344 = vld [vmem:[#allocation18 + $0x3f0] sm:$0xff]
        %v9345 = vld [vmem:[#allocation18 + $0x3f8] sm:$0xff]
        %v9474 = vunpack.c.l.b16 %v9218
        %v9475 = vunpack.c.h.b16 %v9218
        %v9476 = vunpack.c.l.b16 %v9219
        %v9477 = vunpack.c.h.b16 %v9219
        %v9478 = vunpack.c.l.b16 %v9220
        %v9479 = vunpack.c.h.b16 %v9220
        %v9480 = vunpack.c.l.b16 %v9221
        %v9481 = vunpack.c.h.b16 %v9221
        %v9482 = vunpack.c.l.b16 %v9222
        %v9483 = vunpack.c.h.b16 %v9222
        %v9484 = vunpack.c.l.b16 %v9223
        %v9485 = vunpack.c.h.b16 %v9223
        %v9486 = vunpack.c.l.b16 %v9224
        %v9487 = vunpack.c.h.b16 %v9224
        %v9488 = vunpack.c.l.b16 %v9225
        %v9489 = vunpack.c.h.b16 %v9225
        %v9490 = vunpack.c.l.b16 %v9226
        %v9491 = vunpack.c.h.b16 %v9226
        %v9492 = vunpack.c.l.b16 %v9227
        %v9493 = vunpack.c.h.b16 %v9227
        %v9494 = vunpack.c.l.b16 %v9228
        %v9495 = vunpack.c.h.b16 %v9228
        %v9496 = vunpack.c.l.b16 %v9229
        %v9497 = vunpack.c.h.b16 %v9229
        %v9498 = vunpack.c.l.b16 %v9230
        %v9499 = vunpack.c.h.b16 %v9230
        %v9500 = vunpack.c.l.b16 %v9231
        %v9501 = vunpack.c.h.b16 %v9231
        %v9502 = vunpack.c.l.b16 %v9232
        %v9503 = vunpack.c.h.b16 %v9232
        %v9504 = vunpack.c.l.b16 %v9233
        %v9505 = vunpack.c.h.b16 %v9233
        %v9506 = vunpack.c.l.b16 %v9234
        %v9507 = vunpack.c.h.b16 %v9234
        %v9508 = vunpack.c.l.b16 %v9235
        %v9509 = vunpack.c.h.b16 %v9235
        %v9510 = vunpack.c.l.b16 %v9236
        %v9511 = vunpack.c.h.b16 %v9236
        %v9512 = vunpack.c.l.b16 %v9237
        %v9513 = vunpack.c.h.b16 %v9237
        %v9514 = vunpack.c.l.b16 %v9238
        %v9515 = vunpack.c.h.b16 %v9238
        %v9516 = vunpack.c.l.b16 %v9239
        %v9517 = vunpack.c.h.b16 %v9239
        %v9518 = vunpack.c.l.b16 %v9240
        %v9519 = vunpack.c.h.b16 %v9240
        %v9520 = vunpack.c.l.b16 %v9241
        %v9521 = vunpack.c.h.b16 %v9241
        %v9522 = vunpack.c.l.b16 %v9242
        %v9523 = vunpack.c.h.b16 %v9242
        %v9524 = vunpack.c.l.b16 %v9243
        %v9525 = vunpack.c.h.b16 %v9243
        %v9526 = vunpack.c.l.b16 %v9244
        %v9527 = vunpack.c.h.b16 %v9244
        %v9528 = vunpack.c.l.b16 %v9245
        %v9529 = vunpack.c.h.b16 %v9245
        %v9530 = vunpack.c.l.b16 %v9246
        %v9531 = vunpack.c.h.b16 %v9246
        %v9532 = vunpack.c.l.b16 %v9247
        %v9533 = vunpack.c.h.b16 %v9247
        %v9534 = vunpack.c.l.b16 %v9248
        %v9535 = vunpack.c.h.b16 %v9248
        %v9536 = vunpack.c.l.b16 %v9249
        %v9537 = vunpack.c.h.b16 %v9249
        %v9538 = vunpack.c.l.b16 %v9250
        %v9539 = vunpack.c.h.b16 %v9250
        %v9540 = vunpack.c.l.b16 %v9251
        %v9541 = vunpack.c.h.b16 %v9251
        %v9542 = vunpack.c.l.b16 %v9252
        %v9543 = vunpack.c.h.b16 %v9252
        %v9544 = vunpack.c.l.b16 %v9253
        %v9545 = vunpack.c.h.b16 %v9253
        %v9546 = vunpack.c.l.b16 %v9254
        %v9547 = vunpack.c.h.b16 %v9254
        %v9548 = vunpack.c.l.b16 %v9255
        %v9549 = vunpack.c.h.b16 %v9255
        %v9550 = vunpack.c.l.b16 %v9256
        %v9551 = vunpack.c.h.b16 %v9256
        %v9552 = vunpack.c.l.b16 %v9257
        %v9553 = vunpack.c.h.b16 %v9257
        %v9554 = vunpack.c.l.b16 %v9258
        %v9555 = vunpack.c.h.b16 %v9258
        %v9556 = vunpack.c.l.b16 %v9259
        %v9557 = vunpack.c.h.b16 %v9259
        %v9558 = vunpack.c.l.b16 %v9260
        %v9559 = vunpack.c.h.b16 %v9260
        %v9560 = vunpack.c.l.b16 %v9261
        %v9561 = vunpack.c.h.b16 %v9261
        %v9562 = vunpack.c.l.b16 %v9262
        %v9563 = vunpack.c.h.b16 %v9262
        %v9564 = vunpack.c.l.b16 %v9263
        %v9565 = vunpack.c.h.b16 %v9263
        %v9566 = vunpack.c.l.b16 %v9264
        %v9567 = vunpack.c.h.b16 %v9264
        %v9568 = vunpack.c.l.b16 %v9265
        %v9569 = vunpack.c.h.b16 %v9265
        %v9570 = vunpack.c.l.b16 %v9266
        %v9571 = vunpack.c.h.b16 %v9266
        %v9572 = vunpack.c.l.b16 %v9267
        %v9573 = vunpack.c.h.b16 %v9267
        %v9574 = vunpack.c.l.b16 %v9268
        %v9575 = vunpack.c.h.b16 %v9268
        %v9576 = vunpack.c.l.b16 %v9269
        %v9577 = vunpack.c.h.b16 %v9269
        %v9578 = vunpack.c.l.b16 %v9270
        %v9579 = vunpack.c.h.b16 %v9270
        %v9580 = vunpack.c.l.b16 %v9271
        %v9581 = vunpack.c.h.b16 %v9271
        %v9582 = vunpack.c.l.b16 %v9272
        %v9583 = vunpack.c.h.b16 %v9272
        %v9584 = vunpack.c.l.b16 %v9273
        %v9585 = vunpack.c.h.b16 %v9273
        %v9586 = vunpack.c.l.b16 %v9274
        %v9587 = vunpack.c.h.b16 %v9274
        %v9588 = vunpack.c.l.b16 %v9275
        %v9589 = vunpack.c.h.b16 %v9275
        %v9590 = vunpack.c.l.b16 %v9276
        %v9591 = vunpack.c.h.b16 %v9276
        %v9592 = vunpack.c.l.b16 %v9277
        %v9593 = vunpack.c.h.b16 %v9277
        %v9594 = vunpack.c.l.b16 %v9278
        %v9595 = vunpack.c.h.b16 %v9278
        %v9596 = vunpack.c.l.b16 %v9279
        %v9597 = vunpack.c.h.b16 %v9279
        %v9598 = vunpack.c.l.b16 %v9280
        %v9599 = vunpack.c.h.b16 %v9280
        %v9600 = vunpack.c.l.b16 %v9281
        %v9601 = vunpack.c.h.b16 %v9281
        %v9602 = vunpack.c.l.b16 %v9282
        %v9603 = vunpack.c.h.b16 %v9282
        %v9604 = vunpack.c.l.b16 %v9283
        %v9605 = vunpack.c.h.b16 %v9283
        %v9606 = vunpack.c.l.b16 %v9284
        %v9607 = vunpack.c.h.b16 %v9284
        %v9608 = vunpack.c.l.b16 %v9285
        %v9609 = vunpack.c.h.b16 %v9285
        %v9610 = vunpack.c.l.b16 %v9286
        %v9611 = vunpack.c.h.b16 %v9286
        %v9612 = vunpack.c.l.b16 %v9287
        %v9613 = vunpack.c.h.b16 %v9287
        %v9614 = vunpack.c.l.b16 %v9288
        %v9615 = vunpack.c.h.b16 %v9288
        %v9616 = vunpack.c.l.b16 %v9289
        %v9617 = vunpack.c.h.b16 %v9289
        %v9618 = vunpack.c.l.b16 %v9290
        %v9619 = vunpack.c.h.b16 %v9290
        %v9620 = vunpack.c.l.b16 %v9291
        %v9621 = vunpack.c.h.b16 %v9291
        %v9622 = vunpack.c.l.b16 %v9292
        %v9623 = vunpack.c.h.b16 %v9292
        %v9624 = vunpack.c.l.b16 %v9293
        %v9625 = vunpack.c.h.b16 %v9293
        %v9626 = vunpack.c.l.b16 %v9294
        %v9627 = vunpack.c.h.b16 %v9294
        %v9628 = vunpack.c.l.b16 %v9295
        %v9629 = vunpack.c.h.b16 %v9295
        %v9630 = vunpack.c.l.b16 %v9296
        %v9631 = vunpack.c.h.b16 %v9296
        %v9632 = vunpack.c.l.b16 %v9297
        %v9633 = vunpack.c.h.b16 %v9297
        %v9634 = vunpack.c.l.b16 %v9298
        %v9635 = vunpack.c.h.b16 %v9298
        %v9636 = vunpack.c.l.b16 %v9299
        %v9637 = vunpack.c.h.b16 %v9299
        %v9638 = vunpack.c.l.b16 %v9300
        %v9639 = vunpack.c.h.b16 %v9300
        %v9640 = vunpack.c.l.b16 %v9301
        %v9641 = vunpack.c.h.b16 %v9301
        %v9642 = vunpack.c.l.b16 %v9302
        %v9643 = vunpack.c.h.b16 %v9302
        %v9644 = vunpack.c.l.b16 %v9303
        %v9645 = vunpack.c.h.b16 %v9303
        %v9646 = vunpack.c.l.b16 %v9304
        %v9647 = vunpack.c.h.b16 %v9304
        %v9648 = vunpack.c.l.b16 %v9305
        %v9649 = vunpack.c.h.b16 %v9305
        %v9650 = vunpack.c.l.b16 %v9306
        %v9651 = vunpack.c.h.b16 %v9306
        %v9652 = vunpack.c.l.b16 %v9307
        %v9653 = vunpack.c.h.b16 %v9307
        %v9654 = vunpack.c.l.b16 %v9308
        %v9655 = vunpack.c.h.b16 %v9308
        %v9656 = vunpack.c.l.b16 %v9309
        %v9657 = vunpack.c.h.b16 %v9309
        %v9658 = vunpack.c.l.b16 %v9310
        %v9659 = vunpack.c.h.b16 %v9310
        %v9660 = vunpack.c.l.b16 %v9311
        %v9661 = vunpack.c.h.b16 %v9311
        %v9662 = vunpack.c.l.b16 %v9312
        %v9663 = vunpack.c.h.b16 %v9312
        %v9664 = vunpack.c.l.b16 %v9313
        %v9665 = vunpack.c.h.b16 %v9313
        %v9666 = vunpack.c.l.b16 %v9314
        %v9667 = vunpack.c.h.b16 %v9314
        %v9668 = vunpack.c.l.b16 %v9315
        %v9669 = vunpack.c.h.b16 %v9315
        %v9670 = vunpack.c.l.b16 %v9316
        %v9671 = vunpack.c.h.b16 %v9316
        %v9672 = vunpack.c.l.b16 %v9317
        %v9673 = vunpack.c.h.b16 %v9317
        %v9674 = vunpack.c.l.b16 %v9318
        %v9675 = vunpack.c.h.b16 %v9318
        %v9676 = vunpack.c.l.b16 %v9319
        %v9677 = vunpack.c.h.b16 %v9319
        %v9678 = vunpack.c.l.b16 %v9320
        %v9679 = vunpack.c.h.b16 %v9320
        %v9680 = vunpack.c.l.b16 %v9321
        %v9681 = vunpack.c.h.b16 %v9321
        %v9682 = vunpack.c.l.b16 %v9322
        %v9683 = vunpack.c.h.b16 %v9322
        %v9684 = vunpack.c.l.b16 %v9323
        %v9685 = vunpack.c.h.b16 %v9323
        %v9686 = vunpack.c.l.b16 %v9324
        %v9687 = vunpack.c.h.b16 %v9324
        %v9688 = vunpack.c.l.b16 %v9325
        %v9689 = vunpack.c.h.b16 %v9325
        %v9690 = vunpack.c.l.b16 %v9326
        %v9691 = vunpack.c.h.b16 %v9326
        %v9692 = vunpack.c.l.b16 %v9327
        %v9693 = vunpack.c.h.b16 %v9327
        %v9694 = vunpack.c.l.b16 %v9328
        %v9695 = vunpack.c.h.b16 %v9328
        %v9696 = vunpack.c.l.b16 %v9329
        %v9697 = vunpack.c.h.b16 %v9329
        %v9698 = vunpack.c.l.b16 %v9330
        %v9699 = vunpack.c.h.b16 %v9330
        %v9700 = vunpack.c.l.b16 %v9331
        %v9701 = vunpack.c.h.b16 %v9331
        %v9702 = vunpack.c.l.b16 %v9332
        %v9703 = vunpack.c.h.b16 %v9332
        %v9704 = vunpack.c.l.b16 %v9333
        %v9705 = vunpack.c.h.b16 %v9333
        %v9706 = vunpack.c.l.b16 %v9334
        %v9707 = vunpack.c.h.b16 %v9334
        %v9708 = vunpack.c.l.b16 %v9335
        %v9709 = vunpack.c.h.b16 %v9335
        %v9710 = vunpack.c.l.b16 %v9336
        %v9711 = vunpack.c.h.b16 %v9336
        %v9712 = vunpack.c.l.b16 %v9337
        %v9713 = vunpack.c.h.b16 %v9337
        %v9714 = vunpack.c.l.b16 %v9338
        %v9715 = vunpack.c.h.b16 %v9338
        %v9716 = vunpack.c.l.b16 %v9339
        %v9717 = vunpack.c.h.b16 %v9339
        %v9718 = vunpack.c.l.b16 %v9340
        %v9719 = vunpack.c.h.b16 %v9340
        %v9720 = vunpack.c.l.b16 %v9341
        %v9721 = vunpack.c.h.b16 %v9341
        %v9722 = vunpack.c.l.b16 %v9342
        %v9723 = vunpack.c.h.b16 %v9342
        %v9724 = vunpack.c.l.b16 %v9343
        %v9725 = vunpack.c.h.b16 %v9343
        %v9726 = vunpack.c.l.b16 %v9344
        %v9727 = vunpack.c.h.b16 %v9344
        %v9728 = vunpack.c.l.b16 %v9345
        %v9729 = vunpack.c.h.b16 %v9345
        %v9730 = vpack.c.b16 %v9478, %v9474
        %v9731 = vpack.c.b16 %v9479, %v9475
        %v9732 = vpack.c.b16 %v9480, %v9476
        %v9733 = vpack.c.b16 %v9481, %v9477
        %v9734 = vpack.c.b16 %v9486, %v9482
        %v9735 = vpack.c.b16 %v9487, %v9483
        %v9736 = vpack.c.b16 %v9488, %v9484
        %v9737 = vpack.c.b16 %v9489, %v9485
        %v9738 = vpack.c.b16 %v9494, %v9490
        %v9739 = vpack.c.b16 %v9495, %v9491
        %v9740 = vpack.c.b16 %v9496, %v9492
        %v9741 = vpack.c.b16 %v9497, %v9493
        %v9742 = vpack.c.b16 %v9502, %v9498
        %v9743 = vpack.c.b16 %v9503, %v9499
        %v9744 = vpack.c.b16 %v9504, %v9500
        %v9745 = vpack.c.b16 %v9505, %v9501
        %v9746 = vpack.c.b16 %v9510, %v9506
        %v9747 = vpack.c.b16 %v9511, %v9507
        %v9748 = vpack.c.b16 %v9512, %v9508
        %v9749 = vpack.c.b16 %v9513, %v9509
        %v9750 = vpack.c.b16 %v9518, %v9514
        %v9751 = vpack.c.b16 %v9519, %v9515
        %v9752 = vpack.c.b16 %v9520, %v9516
        %v9753 = vpack.c.b16 %v9521, %v9517
        %v9754 = vpack.c.b16 %v9526, %v9522
        %v9755 = vpack.c.b16 %v9527, %v9523
        %v9756 = vpack.c.b16 %v9528, %v9524
        %v9757 = vpack.c.b16 %v9529, %v9525
        %v9758 = vpack.c.b16 %v9534, %v9530
        %v9759 = vpack.c.b16 %v9535, %v9531
        %v9760 = vpack.c.b16 %v9536, %v9532
        %v9761 = vpack.c.b16 %v9537, %v9533
        %v9762 = vpack.c.b16 %v9542, %v9538
        %v9763 = vpack.c.b16 %v9543, %v9539
        %v9764 = vpack.c.b16 %v9544, %v9540
        %v9765 = vpack.c.b16 %v9545, %v9541
        %v9766 = vpack.c.b16 %v9550, %v9546
        %v9767 = vpack.c.b16 %v9551, %v9547
        %v9768 = vpack.c.b16 %v9552, %v9548
        %v9769 = vpack.c.b16 %v9553, %v9549
        %v9770 = vpack.c.b16 %v9558, %v9554
        %v9771 = vpack.c.b16 %v9559, %v9555
        %v9772 = vpack.c.b16 %v9560, %v9556
        %v9773 = vpack.c.b16 %v9561, %v9557
        %v9774 = vpack.c.b16 %v9566, %v9562
        %v9775 = vpack.c.b16 %v9567, %v9563
        %v9776 = vpack.c.b16 %v9568, %v9564
        %v9777 = vpack.c.b16 %v9569, %v9565
        %v9778 = vpack.c.b16 %v9574, %v9570
        %v9779 = vpack.c.b16 %v9575, %v9571
        %v9780 = vpack.c.b16 %v9576, %v9572
        %v9781 = vpack.c.b16 %v9577, %v9573
        %v9782 = vpack.c.b16 %v9582, %v9578
        %v9783 = vpack.c.b16 %v9583, %v9579
        %v9784 = vpack.c.b16 %v9584, %v9580
        %v9785 = vpack.c.b16 %v9585, %v9581
        %v9786 = vpack.c.b16 %v9590, %v9586
        %v9787 = vpack.c.b16 %v9591, %v9587
        %v9788 = vpack.c.b16 %v9592, %v9588
        %v9789 = vpack.c.b16 %v9593, %v9589
        %v9790 = vpack.c.b16 %v9598, %v9594
        %v9791 = vpack.c.b16 %v9599, %v9595
        %v9792 = vpack.c.b16 %v9600, %v9596
        %v9793 = vpack.c.b16 %v9601, %v9597
        %v9794 = vpack.c.b16 %v9606, %v9602
        %v9795 = vpack.c.b16 %v9607, %v9603
        %v9796 = vpack.c.b16 %v9608, %v9604
        %v9797 = vpack.c.b16 %v9609, %v9605
        %v9798 = vpack.c.b16 %v9614, %v9610
        %v9799 = vpack.c.b16 %v9615, %v9611
        %v9800 = vpack.c.b16 %v9616, %v9612
        %v9801 = vpack.c.b16 %v9617, %v9613
        %v9802 = vpack.c.b16 %v9622, %v9618
        %v9803 = vpack.c.b16 %v9623, %v9619
        %v9804 = vpack.c.b16 %v9624, %v9620
        %v9805 = vpack.c.b16 %v9625, %v9621
        %v9806 = vpack.c.b16 %v9630, %v9626
        %v9807 = vpack.c.b16 %v9631, %v9627
        %v9808 = vpack.c.b16 %v9632, %v9628
        %v9809 = vpack.c.b16 %v9633, %v9629
        %v9810 = vpack.c.b16 %v9638, %v9634
        %v9811 = vpack.c.b16 %v9639, %v9635
        %v9812 = vpack.c.b16 %v9640, %v9636
        %v9813 = vpack.c.b16 %v9641, %v9637
        %v9814 = vpack.c.b16 %v9646, %v9642
        %v9815 = vpack.c.b16 %v9647, %v9643
        %v9816 = vpack.c.b16 %v9648, %v9644
        %v9817 = vpack.c.b16 %v9649, %v9645
        %v9818 = vpack.c.b16 %v9654, %v9650
        %v9819 = vpack.c.b16 %v9655, %v9651
        %v9820 = vpack.c.b16 %v9656, %v9652
        %v9821 = vpack.c.b16 %v9657, %v9653
        %v9822 = vpack.c.b16 %v9662, %v9658
        %v9823 = vpack.c.b16 %v9663, %v9659
        %v9824 = vpack.c.b16 %v9664, %v9660
        %v9825 = vpack.c.b16 %v9665, %v9661
        %v9826 = vpack.c.b16 %v9670, %v9666
        %v9827 = vpack.c.b16 %v9671, %v9667
        %v9828 = vpack.c.b16 %v9672, %v9668
        %v9829 = vpack.c.b16 %v9673, %v9669
        %v9830 = vpack.c.b16 %v9678, %v9674
        %v9831 = vpack.c.b16 %v9679, %v9675
        %v9832 = vpack.c.b16 %v9680, %v9676
        %v9833 = vpack.c.b16 %v9681, %v9677
        %v9834 = vpack.c.b16 %v9686, %v9682
        %v9835 = vpack.c.b16 %v9687, %v9683
        %v9836 = vpack.c.b16 %v9688, %v9684
        %v9837 = vpack.c.b16 %v9689, %v9685
        %v9838 = vpack.c.b16 %v9694, %v9690
        %v9839 = vpack.c.b16 %v9695, %v9691
        %v9840 = vpack.c.b16 %v9696, %v9692
        %v9841 = vpack.c.b16 %v9697, %v9693
        %v9842 = vpack.c.b16 %v9702, %v9698
        %v9843 = vpack.c.b16 %v9703, %v9699
        %v9844 = vpack.c.b16 %v9704, %v9700
        %v9845 = vpack.c.b16 %v9705, %v9701
        %v9846 = vpack.c.b16 %v9710, %v9706
        %v9847 = vpack.c.b16 %v9711, %v9707
        %v9848 = vpack.c.b16 %v9712, %v9708
        %v9849 = vpack.c.b16 %v9713, %v9709
        %v9850 = vpack.c.b16 %v9718, %v9714
        %v9851 = vpack.c.b16 %v9719, %v9715
        %v9852 = vpack.c.b16 %v9720, %v9716
        %v9853 = vpack.c.b16 %v9721, %v9717
        %v9854 = vpack.c.b16 %v9726, %v9722
        %v9855 = vpack.c.b16 %v9727, %v9723
        %v9856 = vpack.c.b16 %v9728, %v9724
        %v9857 = vpack.c.b16 %v9729, %v9725
        %9986 = vmatprep.subr.bf16.mxu0 %v9759
        %9987 = vmatpush1.bf16.msra.mxu0 %v9758
        %9988 = vmatprep.subr.bf16.mxu0 %v9755
        %9989 = vmatpush1.bf16.msra.mxu0 %v9754
        %9990 = vmatprep.subr.bf16.mxu0 %v9751
        %9991 = vmatpush1.bf16.msra.mxu0 %v9750
        %9992 = vmatprep.subr.bf16.mxu0 %v9747
        %9993 = vmatpush1.bf16.msra.mxu0 %v9746
        %9994 = vmatprep.subr.bf16.mxu0 %v9743
        %9995 = vmatpush1.bf16.msra.mxu0 %v9742
        %9996 = vmatprep.subr.bf16.mxu0 %v9739
        %9997 = vmatpush1.bf16.msra.mxu0 %v9738
        %9998 = vmatprep.subr.bf16.mxu0 %v9735
        %9999 = vmatpush1.bf16.msra.mxu0 %v9734
        %10000 = vmatprep.subr.bf16.mxu0 %v9731
        %10001 = vmatpush1.bf16.msra.mxu0 %v9730
        %10002 = vmatprep.subr.bf16.mxu0 %v9791
        %10003 = vmatpush2.bf16.msra.mxu0 %v9790
        %10004 = vmatprep.subr.bf16.mxu0 %v9787
        %10005 = vmatpush2.bf16.msra.mxu0 %v9786
        %10006 = vmatprep.subr.bf16.mxu0 %v9783
        %10007 = vmatpush2.bf16.msra.mxu0 %v9782
        %10008 = vmatprep.subr.bf16.mxu0 %v9779
        %10009 = vmatpush2.bf16.msra.mxu0 %v9778
        %10010 = vmatprep.subr.bf16.mxu0 %v9775
        %10011 = vmatpush2.bf16.msra.mxu0 %v9774
        %10012 = vmatprep.subr.bf16.mxu0 %v9771
        %10013 = vmatpush2.bf16.msra.mxu0 %v9770
        %10014 = vmatprep.subr.bf16.mxu0 %v9767
        %10015 = vmatpush2.bf16.msra.mxu0 %v9766
        %10016 = vmatprep.subr.bf16.mxu0 %v9763
        %10017 = vmatpush2.bf16.msra.mxu0 %v9762
        %10018 = vmatprep.mubr.bf16.mxu0 %v9215
        %10019 = vmatmul.mubr.bf16.gmra.mxu0 %v9214
        %v10020 = vpop.f32.mrf.mxu0
        %v10021 = vadd.f32 %v5442, %v10020
        %v10022 = vpop.f32.mrf.mxu0
        %v10023 = vadd.f32 %v5443, %v10022
        %v10024 = vpop.f32.mrf.mxu0
        %v10025 = vpop.f32.mrf.mxu0
        %10026 = vdwg.mxu0
        %10027 = vmatprep.subr.bf16.mxu0 %v9823
        %10028 = vmatpush1.bf16.msra.mxu0 %v9822
        %10029 = vmatprep.subr.bf16.mxu0 %v9819
        %10030 = vmatpush1.bf16.msra.mxu0 %v9818
        %10031 = vmatprep.subr.bf16.mxu0 %v9815
        %10032 = vmatpush1.bf16.msra.mxu0 %v9814
        %10033 = vmatprep.subr.bf16.mxu0 %v9811
        %10034 = vmatpush1.bf16.msra.mxu0 %v9810
        %10035 = vmatprep.subr.bf16.mxu0 %v9807
        %10036 = vmatpush1.bf16.msra.mxu0 %v9806
        %10037 = vmatprep.subr.bf16.mxu0 %v9803
        %10038 = vmatpush1.bf16.msra.mxu0 %v9802
        %10039 = vmatprep.subr.bf16.mxu0 %v9799
        %10040 = vmatpush1.bf16.msra.mxu0 %v9798
        %10041 = vmatprep.subr.bf16.mxu0 %v9795
        %10042 = vmatpush1.bf16.msra.mxu0 %v9794
        %10043 = vmatprep.subr.bf16.mxu0 %v9855
        %10044 = vmatpush2.bf16.msra.mxu0 %v9854
        %10045 = vmatprep.subr.bf16.mxu0 %v9851
        %10046 = vmatpush2.bf16.msra.mxu0 %v9850
        %10047 = vmatprep.subr.bf16.mxu0 %v9847
        %10048 = vmatpush2.bf16.msra.mxu0 %v9846
        %10049 = vmatprep.subr.bf16.mxu0 %v9843
        %10050 = vmatpush2.bf16.msra.mxu0 %v9842
        %10051 = vmatprep.subr.bf16.mxu0 %v9839
        %10052 = vmatpush2.bf16.msra.mxu0 %v9838
        %10053 = vmatprep.subr.bf16.mxu0 %v9835
        %10054 = vmatpush2.bf16.msra.mxu0 %v9834
        %10055 = vmatprep.subr.bf16.mxu0 %v9831
        %10056 = vmatpush2.bf16.msra.mxu0 %v9830
        %10057 = vmatprep.subr.bf16.mxu0 %v9827
        %10058 = vmatpush2.bf16.msra.mxu0 %v9826
        %10059 = vmatprep.mubr.bf16.mxu0 %v9217
        %10060 = vmatmul.mubr.bf16.gmra.mxu0 %v9216
        %v10061 = vpop.f32.mrf.mxu0
        %v10062 = vadd.f32 %v10021, %v10061
        %v10063 = vpop.f32.mrf.mxu0
        %v10064 = vadd.f32 %v10023, %v10063
        %v10065 = vpop.f32.mrf.mxu0
        %v10066 = vpop.f32.mrf.mxu0
        %10067 = vdwg.mxu0
        %10068 = vmatprep.subr.bf16.mxu0 %v9761
        %10069 = vmatpush1.bf16.msra.mxu0 %v9760
        %10070 = vmatprep.subr.bf16.mxu0 %v9757
        %10071 = vmatpush1.bf16.msra.mxu0 %v9756
        %10072 = vmatprep.subr.bf16.mxu0 %v9753
        %10073 = vmatpush1.bf16.msra.mxu0 %v9752
        %10074 = vmatprep.subr.bf16.mxu0 %v9749
        %10075 = vmatpush1.bf16.msra.mxu0 %v9748
        %10076 = vmatprep.subr.bf16.mxu0 %v9745
        %10077 = vmatpush1.bf16.msra.mxu0 %v9744
        %10078 = vmatprep.subr.bf16.mxu0 %v9741
        %10079 = vmatpush1.bf16.msra.mxu0 %v9740
        %10080 = vmatprep.subr.bf16.mxu0 %v9737
        %10081 = vmatpush1.bf16.msra.mxu0 %v9736
        %10082 = vmatprep.subr.bf16.mxu0 %v9733
        %10083 = vmatpush1.bf16.msra.mxu0 %v9732
        %10084 = vmatprep.subr.bf16.mxu0 %v9793
        %10085 = vmatpush2.bf16.msra.mxu0 %v9792
        %10086 = vmatprep.subr.bf16.mxu0 %v9789
        %10087 = vmatpush2.bf16.msra.mxu0 %v9788
        %10088 = vmatprep.subr.bf16.mxu0 %v9785
        %10089 = vmatpush2.bf16.msra.mxu0 %v9784
        %10090 = vmatprep.subr.bf16.mxu0 %v9781
        %10091 = vmatpush2.bf16.msra.mxu0 %v9780
        %10092 = vmatprep.subr.bf16.mxu0 %v9777
        %10093 = vmatpush2.bf16.msra.mxu0 %v9776
        %10094 = vmatprep.subr.bf16.mxu0 %v9773
        %10095 = vmatpush2.bf16.msra.mxu0 %v9772
        %10096 = vmatprep.subr.bf16.mxu0 %v9769
        %10097 = vmatpush2.bf16.msra.mxu0 %v9768
        %10098 = vmatprep.subr.bf16.mxu0 %v9765
        %10099 = vmatpush2.bf16.msra.mxu0 %v9764
        %10100 = vmatprep.mubr.bf16.mxu0 %v9215
        %10101 = vmatmul.mubr.bf16.gmra.mxu0 %v9214
        %v10102 = vpop.f32.mrf.mxu0
        %v10103 = vadd.f32 %v5444, %v10102
        %v10104 = vpop.f32.mrf.mxu0
        %v10105 = vadd.f32 %v5445, %v10104
        %v10106 = vpop.f32.mrf.mxu0
        %v10107 = vpop.f32.mrf.mxu0
        %10108 = vdwg.mxu0
        %10109 = vmatprep.subr.bf16.mxu0 %v9825
        %10110 = vmatpush1.bf16.msra.mxu0 %v9824
        %10111 = vmatprep.subr.bf16.mxu0 %v9821
        %10112 = vmatpush1.bf16.msra.mxu0 %v9820
        %10113 = vmatprep.subr.bf16.mxu0 %v9817
        %10114 = vmatpush1.bf16.msra.mxu0 %v9816
        %10115 = vmatprep.subr.bf16.mxu0 %v9813
        %10116 = vmatpush1.bf16.msra.mxu0 %v9812
        %10117 = vmatprep.subr.bf16.mxu0 %v9809
        %10118 = vmatpush1.bf16.msra.mxu0 %v9808
        %10119 = vmatprep.subr.bf16.mxu0 %v9805
        %10120 = vmatpush1.bf16.msra.mxu0 %v9804
        %10121 = vmatprep.subr.bf16.mxu0 %v9801
        %10122 = vmatpush1.bf16.msra.mxu0 %v9800
        %10123 = vmatprep.subr.bf16.mxu0 %v9797
        %10124 = vmatpush1.bf16.msra.mxu0 %v9796
        %10125 = vmatprep.subr.bf16.mxu0 %v9857
        %10126 = vmatpush2.bf16.msra.mxu0 %v9856
        %10127 = vmatprep.subr.bf16.mxu0 %v9853
        %10128 = vmatpush2.bf16.msra.mxu0 %v9852
        %10129 = vmatprep.subr.bf16.mxu0 %v9849
        %10130 = vmatpush2.bf16.msra.mxu0 %v9848
        %10131 = vmatprep.subr.bf16.mxu0 %v9845
        %10132 = vmatpush2.bf16.msra.mxu0 %v9844
        %10133 = vmatprep.subr.bf16.mxu0 %v9841
        %10134 = vmatpush2.bf16.msra.mxu0 %v9840
        %10135 = vmatprep.subr.bf16.mxu0 %v9837
        %10136 = vmatpush2.bf16.msra.mxu0 %v9836
        %10137 = vmatprep.subr.bf16.mxu0 %v9833
        %10138 = vmatpush2.bf16.msra.mxu0 %v9832
        %10139 = vmatprep.subr.bf16.mxu0 %v9829
        %10140 = vmatpush2.bf16.msra.mxu0 %v9828
        %10141 = vmatprep.mubr.bf16.mxu0 %v9217
        %10142 = vmatmul.mubr.bf16.gmra.mxu0 %v9216
        %v10143 = vpop.f32.mrf.mxu0
        %v10144 = vadd.f32 %v10103, %v10143
        %v10145 = vpop.f32.mrf.mxu0
        %v10146 = vadd.f32 %v10105, %v10145
        %v10147 = vpop.f32.mrf.mxu0
        %v10148 = vpop.f32.mrf.mxu0
        %10149 = vdwg.mxu0
        %v10150 = vadd.f32 %v10062, %v10064
        %v10151 = vadd.f32 %v10150, %v10144
        %v10152 = vadd.f32 %v10151, %v10146
        %10153 = vadd.xlane.f32.xlu0 %v10152
        %v10154 = vpop.xlane.xlu0 %10153
        %v10155 = vmul.f32 %v10154, %v5424
        %v10156 = vsub.f32 %v10062, %v10155
        %v10157 = vsub.f32 %v10064, %v10155
        %v10158 = vsub.f32 %v10144, %v10155
        %v10159 = vsub.f32 %v10146, %v10155
        %v10160 = vmul.f32 %v10156, %v10156
        %v10161 = vmul.f32 %v10157, %v10157
        %v10162 = vmul.f32 %v10158, %v10158
        %v10163 = vmul.f32 %v10159, %v10159
        %v10164 = vadd.f32 %v10160, %v10161
        %v10165 = vadd.f32 %v10164, %v10162
        %v10166 = vadd.f32 %v10165, %v10163
        %10167 = vadd.xlane.f32.xlu0 %v10166
        %v10168 = vpop.xlane.xlu0 %10167
        %v10169 = vmul.f32 %v10168, %v5424
        %v10170 = vadd.f32 %v10169, 1e-05
        %v10171 = vrsqrt.pop %v10170
        %v10172 = vmul.f32 %v10156, %v10171
        %v10173 = vmul.f32 %v10157, %v10171
        %v10174 = vmul.f32 %v10158, %v10171
        %v10175 = vmul.f32 %v10159, %v10171
        %10176 = vst [vmem:[%s666] sm:$0xff] %v10172
        %10177 = vst [vmem:[%s666 + $0x8] sm:$0xff] %v10173
        %10178 = vst [vmem:[%s666 + $0x10] sm:$0xff] %v10174
        %10179 = vst [vmem:[%s666 + $0x18] sm:$0xff] %v10175
        %s10180 = sand.u32 %s319, 1
        %s10181 = scalar_lea.sflag [#allocation5], %s10180
        %s10182 = sand.u32 %s319, 1
        %s10183 = smul.addr %s10182, 32
        %s10184 = scalar_lea.vmem [#allocation20], %s10183
        %p10185 = scmp.lt.s32.totalorder %s39, 1
        %s10186 = scalar_select %p10185, %s39, 1
        %s10187 = smul.addr %s10186, 8
        %s10188 = scalar_lea.vmem %s13, %s10187
        %p10189 = scmp.lt.s32.totalorder %s39, 1
        %s10190 = scalar_select %p10189, %s39, 1
        %s10191 = smul.addr %s10190, 8
        %s10192 = scalar_lea.vmem %s14, %s10191
        // Predicated region
        $region109: #{decoder_layer.1} parent=67 // pred_check
          %p10193 = pneg %p329
        $region110: #{decoder_layer.1} parent=67 // pred_check_branch
          %10195 = sbr.rel (%p10193) target = $region112
        $region111: #{decoder_layer.1} parent=67 // pred_region
          %s10197 = ssub.s32 512, 512
          %10198 = vsyncadd %s10181, %s10197
          %s10199 = smul.addr %s39, 4
          %s10200 = smul.addr %s10199, 128
          %s10201 = scalar_lea.hbm %s12, %s10200
          %s10203 = sshll.u32 %s10184, 4
          %s10204 = int_to_ptr.vmem [resolvable:$true] %s10203
          %10206 = dma.vmem_to_hbm [thread:$0]  %s10204, 512, %s10201, %s10181
        $region112: #{decoder_layer.1} parent=67 // pred_fallthru
          _
        // Predicated region
        $region113: #{decoder_layer.1} parent=67 // pred_check
          %p10207 = pneg %p355
        $region114: #{decoder_layer.1} parent=67 // pred_check_branch
          %10209 = sbr.rel (%p10207) target = $region116
        $region115: #{decoder_layer.1} parent=67 // pred_region
          _
        $region116: #{decoder_layer.1} parent=67 // pred_fallthru
          _
        // Predicated region
        $region117: #{decoder_layer.1} parent=67 // pred_check
          %p10210 = pneg %p381
        $region118: #{decoder_layer.1} parent=67 // pred_check_branch
          %10212 = sbr.rel (%p10210) target = $region120
        $region119: #{decoder_layer.1} parent=67 // pred_region
          _
        $region120: #{decoder_layer.1} parent=67 // pred_fallthru
          _
      $region68: #{decoder_layer.1} parent=5 // pred_fallthru
        _
      %p10213 = scmp.le.s32.totalorder 2, %s34
      // Predicated region
      $region121: #{decoder_layer.1} parent=5 // pred_check
        %p10214 = pneg %p10213
      $region122: #{decoder_layer.1} parent=5 // pred_check_branch
        %10216 = sbr.rel (%p10214) target = $region124
      $region123: #{decoder_layer.1} parent=5 // pred_region
        %s10217 = ssub.s32 %s34, 2
        // Predicated region
        $region125: #{decoder_layer.1} parent=123 // pred_check
          %p10218 = pneg %p335
        $region126: #{decoder_layer.1} parent=123 // pred_check_branch
          %10220 = sbr.rel (%p10218) target = $region128
        $region127: #{decoder_layer.1} parent=123 // pred_region
          %s10221 = sand.u32 %s320, 1
          %s10222 = scalar_lea.sflag [#allocation5], %s10221
          %s10223 = sand.u32 %s320, 1
          %s10224 = smul.addr %s10223, 32
          %s10225 = scalar_lea.vmem [#allocation20], %s10224
          %10226 = dma.done %s10222, 512
        $region128: #{decoder_layer.1} parent=123 // pred_fallthru
          _
        // Predicated region
        $region129: #{decoder_layer.1} parent=123 // pred_check
          %p10227 = pneg %p361
        $region130: #{decoder_layer.1} parent=123 // pred_check_branch
          %10229 = sbr.rel (%p10227) target = $region132
        $region131: #{decoder_layer.1} parent=123 // pred_region
          %p10230 = scmp.lt.s32.totalorder %s40, 1
          %s10231 = scalar_select %p10230, %s40, 1
          %s10232 = smul.addr %s10231, 8
          %s10233 = scalar_lea.vmem %s13, %s10232
        $region132: #{decoder_layer.1} parent=123 // pred_fallthru
          _
        // Predicated region
        $region133: #{decoder_layer.1} parent=123 // pred_check
          %p10234 = pneg %p387
        $region134: #{decoder_layer.1} parent=123 // pred_check_branch
          %10236 = sbr.rel (%p10234) target = $region136
        $region135: #{decoder_layer.1} parent=123 // pred_region
          %p10237 = scmp.lt.s32.totalorder %s40, 1
          %s10238 = scalar_select %p10237, %s40, 1
          %s10239 = smul.addr %s10238, 8
          %s10240 = scalar_lea.vmem %s14, %s10239
        $region136: #{decoder_layer.1} parent=123 // pred_fallthru
          _
      $region124: #{decoder_layer.1} parent=5 // pred_fallthru
        _
    $region6: #{decoder_layer.1} parent=1 // loop_footer
      %s38 = sadd.s32 1, %s34
    $region7: #{decoder_layer.1} parent=1 // loop_footer_branch
      %33 = sbr.rel target = $region3
    $region8: #{decoder_layer.1} parent=1 // loop_exit
      _
    %10241 = vsyncpa [#allocation4], 1
    %s10242 = scalar_lea.sflag [#allocation4], 1
    %10243 = vsyncpa %s10242, 1
    %10244 = vsyncpa [#allocation7], 1
    %s10245 = scalar_lea.sflag [#allocation7], 1
    %10246 = vsyncpa %s10245, 1
    %10247 = vsyncpa [#allocation10], 1
    %10248 = vsyncpa [#allocation13], 1
    %10249 = vsyncpa [#allocation16], 1
    %10250 = vsyncpa [#allocation19], 1
    %10251 = vsyncpa [#allocation5], 1
    %s10252 = scalar_lea.sflag [#allocation5], 1
    %10253 = vsyncpa %s10252, 1

</llo_original>
